<compile_context>
chip_gen: v7x
topology: tpu7x:2x2x1
jax: 0.10.0
libtpu: 0.0.40
codegen_flags: <defaults>
</compile_context>

<pallas_src>
import jax
import jax.numpy as jnp
from jax import lax
from jax.experimental import pallas as pl
from jax.experimental.pallas import tpu as pltpu


# --------------------------------------------------------------------------- #
# Kernel
# --------------------------------------------------------------------------- #
def _rcu_kernel(x_ref, w1_ref, b1_ref, w2_ref, b2_ref, out_ref, pad_ref, col_ref):
    """One batch element of ResidualConvUnit.

    x_ref   : (1, H, W, C)   NHWC input slice
    w*_ref  : (9*C, C)       im2col weight matrix, row index = (kh*3+kw)*C + c_in
    b*_ref  : (1, C)         f32 bias
    out_ref : (1, H, W, C)   NHWC output slice
    pad_ref : (H+2, W+2, C)  zero-padded activations (compute dtype, VMEM)
    col_ref : (H*W, 9*C)     im2col slab              (compute dtype, VMEM)
    """
    _, H, W, C = x_ref.shape
    cdt = pad_ref.dtype

    # Zero ONLY the border strips of the padded scratch (the interior is fully
    # overwritten below) instead of re-zeroing the whole scratch every step.
    zrow = jnp.zeros((1, W + 2, C), cdt)
    zcol = jnp.zeros((H + 2, 1, C), cdt)
    pad_ref[0:1, :, :] = zrow
    pad_ref[H + 1:H + 2, :, :] = zrow
    pad_ref[:, 0:1, :] = zcol
    pad_ref[:, W + 1:W + 2, :] = zcol

    def conv3x3(w_ref, b_ref):
        # Assemble the (H*W, 9*C) im2col slab (one static window copy per tap),
        # then a SINGLE MXU matmul with f32 accumulation.
        for kh in range(3):
            for kw in range(3):
                t = kh * 3 + kw
                win = pad_ref[kh:kh + H, kw:kw + W, :]         # (H, W, C)
                col_ref[:, t * C:(t + 1) * C] = win.reshape(H * W, C)
        acc = jnp.dot(col_ref[...], w_ref[...],
                      preferred_element_type=jnp.float32)       # (H*W, C) f32
        return acc + b_ref[...]                                  # bias broadcast

    # Stage 1: relu(x) -> padded interior (x is NOT kept live), conv1.
    pad_ref[1:H + 1, 1:W + 1, :] = (
        jnp.maximum(x_ref[0].astype(jnp.float32), 0.0).astype(cdt))
    h = conv3x3(w1_ref, b1_ref)

    # Stage 2: relu(conv1) -> padded interior (border still zero), conv2.
    pad_ref[1:H + 1, 1:W + 1, :] = (
        jnp.maximum(h, 0.0).astype(cdt).reshape(H, W, C))
    h = conv3x3(w2_ref, b2_ref)

    # Residual add with the ORIGINAL (pre-ReLU) x, re-read from VMEM.
    out_ref[0] = (h.reshape(H, W, C)
                  + x_ref[0].astype(jnp.float32)).astype(out_ref.dtype)


# --------------------------------------------------------------------------- #
# Wrappers
# --------------------------------------------------------------------------- #
def pack_weights(w_oihw, compute_dtype=jnp.bfloat16):
    """One-time packing: OIHW (Cout, Cin, 3, 3) -> (9*Cin, Cout) im2col matrix."""
    c_out, c_in, kh, kw = w_oihw.shape
    w_mat = jnp.transpose(w_oihw, (2, 3, 1, 0)).reshape(kh * kw * c_in, c_out)
    return w_mat.astype(compute_dtype)


def residual_conv_unit_nhwc(x_nhwc, w1_mat, b1, w2_mat, b2, *,
                            single_buffer_weights=True):
    """Fused ResidualConvUnit on channels-last activations.

    x_nhwc: (B, H, W, C).  w*_mat: (9*C, C) packed via pack_weights (their dtype
    selects the matmul operand dtype).  b*: (C,).  Returns (B, H, W, C).
    """
    B, H, W, C = x_nhwc.shape
    assert w1_mat.shape == (9 * C, C) and w2_mat.shape == (9 * C, C)
    cdt = w1_mat.dtype
    b1_2d = b1.reshape(1, C).astype(jnp.float32)
    b2_2d = b2.reshape(1, C).astype(jnp.float32)

    def run(single_buffer):
        def const_spec(shape):
            n = len(shape)
            index_map = lambda b: (0,) * n
            if single_buffer:
                # Constant-index weights/biases: one VMEM buffer is enough.
                return pl.BlockSpec(shape, index_map,
                                    pipeline_mode=pl.Buffered(1))
            return pl.BlockSpec(shape, index_map)

        return pl.pallas_call(
            _rcu_kernel,
            out_shape=jax.ShapeDtypeStruct((B, H, W, C), x_nhwc.dtype),
            grid_spec=pltpu.PrefetchScalarGridSpec(
                num_scalar_prefetch=0,
                grid=(B,),
                in_specs=[
                    pl.BlockSpec((1, H, W, C), lambda b: (b, 0, 0, 0)),
                    const_spec((9 * C, C)),
                    const_spec((1, C)),
                    const_spec((9 * C, C)),
                    const_spec((1, C)),
                ],
                out_specs=pl.BlockSpec((1, H, W, C), lambda b: (b, 0, 0, 0)),
                scratch_shapes=[
                    pltpu.VMEM((H + 2, W + 2, C), cdt),   # padded activations
                    pltpu.VMEM((H * W, 9 * C), cdt),      # im2col slab
                ],
            ),
            compiler_params=pltpu.CompilerParams(
                dimension_semantics=("parallel",),
                vmem_limit_bytes=32 * 1024 * 1024,
            ),
        )(x_nhwc, w1_mat, b1_2d, w2_mat, b2_2d)

    if single_buffer_weights:
        try:
            out = run(True)
            jax.block_until_ready(out)
            return out
        except Exception:
            # jax version without BlockSpec.pipeline_mode / Buffered(1):
            # fall back to default (double-buffered) constant specs.
            pass
    return run(False)


def residual_conv_unit_nchw(x, w1, b1, w2, b2, *, compute_dtype=jnp.bfloat16):
    """PyTorch-layout convenience wrapper: x (B,C,H,W), w* (C,C,3,3), b* (C,)."""
    # NOTE: in a real network keep activations NHWC end-to-end; these two
    # transposes exist only to match the PyTorch NCHW test harness.
    x_nhwc = jnp.transpose(x, (0, 2, 3, 1))
    out_nhwc = residual_conv_unit_nhwc(
        x_nhwc,
        pack_weights(w1, compute_dtype), b1,
        pack_weights(w2, compute_dtype), b2)
    return jnp.transpose(out_nhwc, (0, 3, 1, 2))


def residual_conv_unit_reference(x, w1, b1, w2, b2):
    """Pure-JAX NCHW reference mirroring the PyTorch forward (for verification)."""
    def conv(h, w, b):
        out = lax.conv_general_dilated(
            h, w, window_strides=(1, 1), padding=((1, 1), (1, 1)),
            dimension_numbers=("NCHW", "OIHW", "NCHW"),
            precision=lax.Precision.HIGHEST)
        return out + b[None, :, None, None]

    h = jnp.maximum(x, 0.0)
    h = conv(h, w1, b1)
    h = jnp.maximum(h, 0.0)
    h = conv(h, w2, b2)
    return h + x


if __name__ == "__main__":
    # Small shapes consistent with the module (features=64, 16x16 maps, B=2).
    B, C, H, W = 2, 64, 16, 16

    key = jax.random.PRNGKey(0)
    kx, kw1, kb1, kw2, kb2 = jax.random.split(key, 5)
    bound = 1.0 / (C * 9) ** 0.5          # PyTorch Conv2d default init scale
    x = jax.random.normal(kx, (B, C, H, W), dtype=jnp.float32)
    w1 = jax.random.uniform(kw1, (C, C, 3, 3), jnp.float32, -bound, bound)
    b1 = jax.random.uniform(kb1, (C,), jnp.float32, -bound, bound)
    w2 = jax.random.uniform(kw2, (C, C, 3, 3), jnp.float32, -bound, bound)
    b2 = jax.random.uniform(kb2, (C,), jnp.float32, -bound, bound)

    ref = residual_conv_unit_reference(x, w1, b1, w2, b2)

    # Strict-accuracy path: f32 matmul operands.
    out_f32 = residual_conv_unit_nchw(x, w1, b1, w2, b2, compute_dtype=jnp.float32)
    out_f32 = jax.block_until_ready(out_f32)
    assert out_f32.shape == (B, C, H, W)
    err_f32 = float(jnp.max(jnp.abs(out_f32 - ref)))
    assert jnp.allclose(out_f32, ref, atol=1e-3, rtol=1e-3), (
        f"f32 path mismatch vs reference (max abs err {err_f32})")

    # Production path: bf16 matmul operands, f32 accumulation (tolerance widened
    # for bf16 operand rounding accumulated over K = 9*C = 576).
    out_bf16 = residual_conv_unit_nchw(x, w1, b1, w2, b2, compute_dtype=jnp.bfloat16)
    out_bf16 = jax.block_until_ready(out_bf16)
    err_bf16 = float(jnp.max(jnp.abs(out_bf16 - ref)))
    assert jnp.allclose(out_bf16, ref, atol=2e-2, rtol=2e-2), (
        f"bf16 path mismatch vs reference (max abs err {err_bf16})")

    print("KERNEL_OK")
</pallas_src>

<mosaic_0001>
module attributes {stable_mosaic.version = 11 : i64} {
  func.func @_rcu_kernel(%arg0: i32, %arg1: memref<1x16x16x64xf32, #tpu.memory_space<vmem>>, %arg2: memref<576x64xf32, #tpu.memory_space<vmem>>, %arg3: memref<1x64xf32, #tpu.memory_space<vmem>>, %arg4: memref<576x64xf32, #tpu.memory_space<vmem>>, %arg5: memref<1x64xf32, #tpu.memory_space<vmem>>, %arg6: memref<1x16x16x64xf32, #tpu.memory_space<vmem>>, %arg7: memref<18x18x64xf32, #tpu.memory_space<vmem>>, %arg8: memref<256x576xf32, #tpu.memory_space<vmem>>) attributes {dimension_semantics = [#tpu.dimension_semantics<parallel>], iteration_bounds = array<i64: 2>, scalar_prefetch = 0 : i64, scratch_operands = 2 : i64, tpu.core_type = #tpu.core_type<tc>, window_params = [{transform_indices = @transform_0, window_bounds = array<i64: 1, 16, 16, 64>}, {pipeline_mode = #tpu.pipeline_mode<synchronous>, transform_indices = @transform_1, window_bounds = array<i64: 576, 64>}, {pipeline_mode = #tpu.pipeline_mode<synchronous>, transform_indices = @transform_2, window_bounds = array<i64: 1, 64>}, {pipeline_mode = #tpu.pipeline_mode<synchronous>, transform_indices = @transform_3, window_bounds = array<i64: 576, 64>}, {pipeline_mode = #tpu.pipeline_mode<synchronous>, transform_indices = @transform_4, window_bounds = array<i64: 1, 64>}, {transform_indices = @transform_5, window_bounds = array<i64: 1, 16, 16, 64>}]} {
    %cst = arith.constant 0.000000e+00 : f32
    %0 = vector.broadcast %cst : f32 to vector<1x18x64xf32>
    %cst_0 = arith.constant 0.000000e+00 : f32
    %1 = vector.broadcast %cst_0 : f32 to vector<18x1x64xf32>
    %c0 = arith.constant 0 : index
    %c0_1 = arith.constant 0 : index
    %c0_2 = arith.constant 0 : index
    %2 = vector.load %arg7[%c0, %c0_1, %c0_2] : memref<18x18x64xf32, #tpu.memory_space<vmem>>, vector<1x18x64xf32>
    tpu.vector_store %arg7[%c0, %c0_1, %c0_2], %0 {strides = array<i32>} : memref<18x18x64xf32, #tpu.memory_space<vmem>>, vector<1x18x64xf32>,
    %c17 = arith.constant 17 : index
    %c0_3 = arith.constant 0 : index
    %c0_4 = arith.constant 0 : index
    %3 = vector.load %arg7[%c17, %c0_3, %c0_4] : memref<18x18x64xf32, #tpu.memory_space<vmem>>, vector<1x18x64xf32>
    tpu.vector_store %arg7[%c17, %c0_3, %c0_4], %0 {strides = array<i32>} : memref<18x18x64xf32, #tpu.memory_space<vmem>>, vector<1x18x64xf32>,
    %c0_5 = arith.constant 0 : index
    %c0_6 = arith.constant 0 : index
    %c0_7 = arith.constant 0 : index
    %4 = vector.load %arg7[%c0_5, %c0_6, %c0_7] : memref<18x18x64xf32, #tpu.memory_space<vmem>>, vector<18x1x64xf32>
    tpu.vector_store %arg7[%c0_5, %c0_6, %c0_7], %1 {strides = array<i32>} : memref<18x18x64xf32, #tpu.memory_space<vmem>>, vector<18x1x64xf32>,
    %c0_8 = arith.constant 0 : index
    %c17_9 = arith.constant 17 : index
    %c0_10 = arith.constant 0 : index
    %5 = vector.load %arg7[%c0_8, %c17_9, %c0_10] : memref<18x18x64xf32, #tpu.memory_space<vmem>>, vector<18x1x64xf32>
    tpu.vector_store %arg7[%c0_8, %c17_9, %c0_10], %1 {strides = array<i32>} : memref<18x18x64xf32, #tpu.memory_space<vmem>>, vector<18x1x64xf32>,
    %c0_11 = arith.constant 0 : index
    %c0_12 = arith.constant 0 : index
    %c0_13 = arith.constant 0 : index
    %c0_14 = arith.constant 0 : index
    %6 = vector.load %arg1[%c0_11, %c0_12, %c0_13, %c0_14] : memref<1x16x16x64xf32, #tpu.memory_space<vmem>>, vector<1x16x16x64xf32>
    %7 = vector.shape_cast %6 : vector<1x16x16x64xf32> to vector<16x16x64xf32>
    %cst_15 = arith.constant 0.000000e+00 : f32
    %8 = vector.broadcast %cst_15 : f32 to vector<16x16x64xf32>
    %9 = arith.maximumf %7, %8 : vector<16x16x64xf32>
    %c1 = arith.constant 1 : index
    %c1_16 = arith.constant 1 : index
    %c0_17 = arith.constant 0 : index
    %10 = vector.load %arg7[%c1, %c1_16, %c0_17] : memref<18x18x64xf32, #tpu.memory_space<vmem>>, vector<16x16x64xf32>
    tpu.vector_store %arg7[%c1, %c1_16, %c0_17], %9 {strides = array<i32>} : memref<18x18x64xf32, #tpu.memory_space<vmem>>, vector<16x16x64xf32>,
    %c0_18 = arith.constant 0 : index
    %c0_19 = arith.constant 0 : index
    %c0_20 = arith.constant 0 : index
    %11 = vector.load %arg7[%c0_18, %c0_19, %c0_20] : memref<18x18x64xf32, #tpu.memory_space<vmem>>, vector<16x16x64xf32>
    %12 = vector.shape_cast %11 : vector<16x16x64xf32> to vector<256x64xf32>
    %c0_21 = arith.constant 0 : index
    %c0_22 = arith.constant 0 : index
    %13 = vector.load %arg8[%c0_21, %c0_22] : memref<256x576xf32, #tpu.memory_space<vmem>>, vector<256x64xf32>
    tpu.vector_store %arg8[%c0_21, %c0_22], %12 {strides = array<i32>} : memref<256x576xf32, #tpu.memory_space<vmem>>, vector<256x64xf32>,
    %c0_23 = arith.constant 0 : index
    %c1_24 = arith.constant 1 : index
    %c0_25 = arith.constant 0 : index
    %14 = vector.load %arg7[%c0_23, %c1_24, %c0_25] : memref<18x18x64xf32, #tpu.memory_space<vmem>>, vector<16x16x64xf32>
    %15 = vector.shape_cast %14 : vector<16x16x64xf32> to vector<256x64xf32>
    %c0_26 = arith.constant 0 : index
    %c64 = arith.constant 64 : index
    %16 = vector.load %arg8[%c0_26, %c64] : memref<256x576xf32, #tpu.memory_space<vmem>>, vector<256x64xf32>
    tpu.vector_store %arg8[%c0_26, %c64], %15 {strides = array<i32>} : memref<256x576xf32, #tpu.memory_space<vmem>>, vector<256x64xf32>,
    %c0_27 = arith.constant 0 : index
    %c2 = arith.constant 2 : index
    %c0_28 = arith.constant 0 : index
    %17 = vector.load %arg7[%c0_27, %c2, %c0_28] : memref<18x18x64xf32, #tpu.memory_space<vmem>>, vector<16x16x64xf32>
    %18 = vector.shape_cast %17 : vector<16x16x64xf32> to vector<256x64xf32>
    %c0_29 = arith.constant 0 : index
    %c128 = arith.constant 128 : index
    %19 = vector.load %arg8[%c0_29, %c128] : memref<256x576xf32, #tpu.memory_space<vmem>>, vector<256x64xf32>
    tpu.vector_store %arg8[%c0_29, %c128], %18 {strides = array<i32>} : memref<256x576xf32, #tpu.memory_space<vmem>>, vector<256x64xf32>,
    %c1_30 = arith.constant 1 : index
    %c0_31 = arith.constant 0 : index
    %c0_32 = arith.constant 0 : index
    %20 = vector.load %arg7[%c1_30, %c0_31, %c0_32] : memref<18x18x64xf32, #tpu.memory_space<vmem>>, vector<16x16x64xf32>
    %21 = vector.shape_cast %20 : vector<16x16x64xf32> to vector<256x64xf32>
    %c0_33 = arith.constant 0 : index
    %c192 = arith.constant 192 : index
    %22 = vector.load %arg8[%c0_33, %c192] : memref<256x576xf32, #tpu.memory_space<vmem>>, vector<256x64xf32>
    tpu.vector_store %arg8[%c0_33, %c192], %21 {strides = array<i32>} : memref<256x576xf32, #tpu.memory_space<vmem>>, vector<256x64xf32>,
    %c1_34 = arith.constant 1 : index
    %c1_35 = arith.constant 1 : index
    %c0_36 = arith.constant 0 : index
    %23 = vector.load %arg7[%c1_34, %c1_35, %c0_36] : memref<18x18x64xf32, #tpu.memory_space<vmem>>, vector<16x16x64xf32>
    %24 = vector.shape_cast %23 : vector<16x16x64xf32> to vector<256x64xf32>
    %c0_37 = arith.constant 0 : index
    %c256 = arith.constant 256 : index
    %25 = vector.load %arg8[%c0_37, %c256] : memref<256x576xf32, #tpu.memory_space<vmem>>, vector<256x64xf32>
    tpu.vector_store %arg8[%c0_37, %c256], %24 {strides = array<i32>} : memref<256x576xf32, #tpu.memory_space<vmem>>, vector<256x64xf32>,
    %c1_38 = arith.constant 1 : index
    %c2_39 = arith.constant 2 : index
    %c0_40 = arith.constant 0 : index
    %26 = vector.load %arg7[%c1_38, %c2_39, %c0_40] : memref<18x18x64xf32, #tpu.memory_space<vmem>>, vector<16x16x64xf32>
    %27 = vector.shape_cast %26 : vector<16x16x64xf32> to vector<256x64xf32>
    %c0_41 = arith.constant 0 : index
    %c320 = arith.constant 320 : index
    %28 = vector.load %arg8[%c0_41, %c320] : memref<256x576xf32, #tpu.memory_space<vmem>>, vector<256x64xf32>
    tpu.vector_store %arg8[%c0_41, %c320], %27 {strides = array<i32>} : memref<256x576xf32, #tpu.memory_space<vmem>>, vector<256x64xf32>,
    %c2_42 = arith.constant 2 : index
    %c0_43 = arith.constant 0 : index
    %c0_44 = arith.constant 0 : index
    %29 = vector.load %arg7[%c2_42, %c0_43, %c0_44] : memref<18x18x64xf32, #tpu.memory_space<vmem>>, vector<16x16x64xf32>
    %30 = vector.shape_cast %29 : vector<16x16x64xf32> to vector<256x64xf32>
    %c0_45 = arith.constant 0 : index
    %c384 = arith.constant 384 : index
    %31 = vector.load %arg8[%c0_45, %c384] : memref<256x576xf32, #tpu.memory_space<vmem>>, vector<256x64xf32>
    tpu.vector_store %arg8[%c0_45, %c384], %30 {strides = array<i32>} : memref<256x576xf32, #tpu.memory_space<vmem>>, vector<256x64xf32>,
    %c2_46 = arith.constant 2 : index
    %c1_47 = arith.constant 1 : index
    %c0_48 = arith.constant 0 : index
    %32 = vector.load %arg7[%c2_46, %c1_47, %c0_48] : memref<18x18x64xf32, #tpu.memory_space<vmem>>, vector<16x16x64xf32>
    %33 = vector.shape_cast %32 : vector<16x16x64xf32> to vector<256x64xf32>
    %c0_49 = arith.constant 0 : index
    %c448 = arith.constant 448 : index
    %34 = vector.load %arg8[%c0_49, %c448] : memref<256x576xf32, #tpu.memory_space<vmem>>, vector<256x64xf32>
    tpu.vector_store %arg8[%c0_49, %c448], %33 {strides = array<i32>} : memref<256x576xf32, #tpu.memory_space<vmem>>, vector<256x64xf32>,
    %c2_50 = arith.constant 2 : index
    %c2_51 = arith.constant 2 : index
    %c0_52 = arith.constant 0 : index
    %35 = vector.load %arg7[%c2_50, %c2_51, %c0_52] : memref<18x18x64xf32, #tpu.memory_space<vmem>>, vector<16x16x64xf32>
    %36 = vector.shape_cast %35 : vector<16x16x64xf32> to vector<256x64xf32>
    %c0_53 = arith.constant 0 : index
    %c512 = arith.constant 512 : index
    %37 = vector.load %arg8[%c0_53, %c512] : memref<256x576xf32, #tpu.memory_space<vmem>>, vector<256x64xf32>
    tpu.vector_store %arg8[%c0_53, %c512], %36 {strides = array<i32>} : memref<256x576xf32, #tpu.memory_space<vmem>>, vector<256x64xf32>,
    %c0_54 = arith.constant 0 : index
    %c0_55 = arith.constant 0 : index
    %38 = vector.load %arg8[%c0_54, %c0_55] : memref<256x576xf32, #tpu.memory_space<vmem>>, vector<256x576xf32>
    %c0_56 = arith.constant 0 : index
    %c0_57 = arith.constant 0 : index
    %39 = vector.load %arg2[%c0_56, %c0_57] : memref<576x64xf32, #tpu.memory_space<vmem>>, vector<576x64xf32>
    %cst_58 = arith.constant dense<0.000000e+00> : vector<256x64xf32>
    %40 = tpu.matmul %38, %39, %cst_58 {dimension_numbers = #tpu.dot_dimension_numbers<[1], [0], [0], [1], [0, 0, 1, 1], [], []>} : vector<256x576xf32>, vector<576x64xf32>, vector<256x64xf32> -> vector<256x64xf32>
    %c0_59 = arith.constant 0 : index
    %c0_60 = arith.constant 0 : index
    %41 = vector.load %arg3[%c0_59, %c0_60] : memref<1x64xf32, #tpu.memory_space<vmem>>, vector<1x64xf32>
    %42 = vector.broadcast %41 : vector<1x64xf32> to vector<256x64xf32>
    %43 = arith.addf %40, %42 : vector<256x64xf32>
    %cst_61 = arith.constant 0.000000e+00 : f32
    %44 = vector.broadcast %cst_61 : f32 to vector<256x64xf32>
    %45 = arith.maximumf %43, %44 : vector<256x64xf32>
    %46 = vector.shape_cast %45 : vector<256x64xf32> to vector<16x16x64xf32>
    %c1_62 = arith.constant 1 : index
    %c1_63 = arith.constant 1 : index
    %c0_64 = arith.constant 0 : index
    %47 = vector.load %arg7[%c1_62, %c1_63, %c0_64] : memref<18x18x64xf32, #tpu.memory_space<vmem>>, vector<16x16x64xf32>
    tpu.vector_store %arg7[%c1_62, %c1_63, %c0_64], %46 {strides = array<i32>} : memref<18x18x64xf32, #tpu.memory_space<vmem>>, vector<16x16x64xf32>,
    %c0_65 = arith.constant 0 : index
    %c0_66 = arith.constant 0 : index
    %c0_67 = arith.constant 0 : index
    %48 = vector.load %arg7[%c0_65, %c0_66, %c0_67] : memref<18x18x64xf32, #tpu.memory_space<vmem>>, vector<16x16x64xf32>
    %49 = vector.shape_cast %48 : vector<16x16x64xf32> to vector<256x64xf32>
    %c0_68 = arith.constant 0 : index
    %c0_69 = arith.constant 0 : index
    %50 = vector.load %arg8[%c0_68, %c0_69] : memref<256x576xf32, #tpu.memory_space<vmem>>, vector<256x64xf32>
    tpu.vector_store %arg8[%c0_68, %c0_69], %49 {strides = array<i32>} : memref<256x576xf32, #tpu.memory_space<vmem>>, vector<256x64xf32>,
    %c0_70 = arith.constant 0 : index
    %c1_71 = arith.constant 1 : index
    %c0_72 = arith.constant 0 : index
    %51 = vector.load %arg7[%c0_70, %c1_71, %c0_72] : memref<18x18x64xf32, #tpu.memory_space<vmem>>, vector<16x16x64xf32>
    %52 = vector.shape_cast %51 : vector<16x16x64xf32> to vector<256x64xf32>
    %c0_73 = arith.constant 0 : index
    %c64_74 = arith.constant 64 : index
    %53 = vector.load %arg8[%c0_73, %c64_74] : memref<256x576xf32, #tpu.memory_space<vmem>>, vector<256x64xf32>
    tpu.vector_store %arg8[%c0_73, %c64_74], %52 {strides = array<i32>} : memref<256x576xf32, #tpu.memory_space<vmem>>, vector<256x64xf32>,
    %c0_75 = arith.constant 0 : index
    %c2_76 = arith.constant 2 : index
    %c0_77 = arith.constant 0 : index
    %54 = vector.load %arg7[%c0_75, %c2_76, %c0_77] : memref<18x18x64xf32, #tpu.memory_space<vmem>>, vector<16x16x64xf32>
    %55 = vector.shape_cast %54 : vector<16x16x64xf32> to vector<256x64xf32>
    %c0_78 = arith.constant 0 : index
    %c128_79 = arith.constant 128 : index
    %56 = vector.load %arg8[%c0_78, %c128_79] : memref<256x576xf32, #tpu.memory_space<vmem>>, vector<256x64xf32>
    tpu.vector_store %arg8[%c0_78, %c128_79], %55 {strides = array<i32>} : memref<256x576xf32, #tpu.memory_space<vmem>>, vector<256x64xf32>,
    %c1_80 = arith.constant 1 : index
    %c0_81 = arith.constant 0 : index
    %c0_82 = arith.constant 0 : index
    %57 = vector.load %arg7[%c1_80, %c0_81, %c0_82] : memref<18x18x64xf32, #tpu.memory_space<vmem>>, vector<16x16x64xf32>
    %58 = vector.shape_cast %57 : vector<16x16x64xf32> to vector<256x64xf32>
    %c0_83 = arith.constant 0 : index
    %c192_84 = arith.constant 192 : index
    %59 = vector.load %arg8[%c0_83, %c192_84] : memref<256x576xf32, #tpu.memory_space<vmem>>, vector<256x64xf32>
    tpu.vector_store %arg8[%c0_83, %c192_84], %58 {strides = array<i32>} : memref<256x576xf32, #tpu.memory_space<vmem>>, vector<256x64xf32>,
    %c1_85 = arith.constant 1 : index
    %c1_86 = arith.constant 1 : index
    %c0_87 = arith.constant 0 : index
    %60 = vector.load %arg7[%c1_85, %c1_86, %c0_87] : memref<18x18x64xf32, #tpu.memory_space<vmem>>, vector<16x16x64xf32>
    %61 = vector.shape_cast %60 : vector<16x16x64xf32> to vector<256x64xf32>
    %c0_88 = arith.constant 0 : index
    %c256_89 = arith.constant 256 : index
    %62 = vector.load %arg8[%c0_88, %c256_89] : memref<256x576xf32, #tpu.memory_space<vmem>>, vector<256x64xf32>
    tpu.vector_store %arg8[%c0_88, %c256_89], %61 {strides = array<i32>} : memref<256x576xf32, #tpu.memory_space<vmem>>, vector<256x64xf32>,
    %c1_90 = arith.constant 1 : index
    %c2_91 = arith.constant 2 : index
    %c0_92 = arith.constant 0 : index
    %63 = vector.load %arg7[%c1_90, %c2_91, %c0_92] : memref<18x18x64xf32, #tpu.memory_space<vmem>>, vector<16x16x64xf32>
    %64 = vector.shape_cast %63 : vector<16x16x64xf32> to vector<256x64xf32>
    %c0_93 = arith.constant 0 : index
    %c320_94 = arith.constant 320 : index
    %65 = vector.load %arg8[%c0_93, %c320_94] : memref<256x576xf32, #tpu.memory_space<vmem>>, vector<256x64xf32>
    tpu.vector_store %arg8[%c0_93, %c320_94], %64 {strides = array<i32>} : memref<256x576xf32, #tpu.memory_space<vmem>>, vector<256x64xf32>,
    %c2_95 = arith.constant 2 : index
    %c0_96 = arith.constant 0 : index
    %c0_97 = arith.constant 0 : index
    %66 = vector.load %arg7[%c2_95, %c0_96, %c0_97] : memref<18x18x64xf32, #tpu.memory_space<vmem>>, vector<16x16x64xf32>
    %67 = vector.shape_cast %66 : vector<16x16x64xf32> to vector<256x64xf32>
    %c0_98 = arith.constant 0 : index
    %c384_99 = arith.constant 384 : index
    %68 = vector.load %arg8[%c0_98, %c384_99] : memref<256x576xf32, #tpu.memory_space<vmem>>, vector<256x64xf32>
    tpu.vector_store %arg8[%c0_98, %c384_99], %67 {strides = array<i32>} : memref<256x576xf32, #tpu.memory_space<vmem>>, vector<256x64xf32>,
    %c2_100 = arith.constant 2 : index
    %c1_101 = arith.constant 1 : index
    %c0_102 = arith.constant 0 : index
    %69 = vector.load %arg7[%c2_100, %c1_101, %c0_102] : memref<18x18x64xf32, #tpu.memory_space<vmem>>, vector<16x16x64xf32>
    %70 = vector.shape_cast %69 : vector<16x16x64xf32> to vector<256x64xf32>
    %c0_103 = arith.constant 0 : index
    %c448_104 = arith.constant 448 : index
    %71 = vector.load %arg8[%c0_103, %c448_104] : memref<256x576xf32, #tpu.memory_space<vmem>>, vector<256x64xf32>
    tpu.vector_store %arg8[%c0_103, %c448_104], %70 {strides = array<i32>} : memref<256x576xf32, #tpu.memory_space<vmem>>, vector<256x64xf32>,
    %c2_105 = arith.constant 2 : index
    %c2_106 = arith.constant 2 : index
    %c0_107 = arith.constant 0 : index
    %72 = vector.load %arg7[%c2_105, %c2_106, %c0_107] : memref<18x18x64xf32, #tpu.memory_space<vmem>>, vector<16x16x64xf32>
    %73 = vector.shape_cast %72 : vector<16x16x64xf32> to vector<256x64xf32>
    %c0_108 = arith.constant 0 : index
    %c512_109 = arith.constant 512 : index
    %74 = vector.load %arg8[%c0_108, %c512_109] : memref<256x576xf32, #tpu.memory_space<vmem>>, vector<256x64xf32>
    tpu.vector_store %arg8[%c0_108, %c512_109], %73 {strides = array<i32>} : memref<256x576xf32, #tpu.memory_space<vmem>>, vector<256x64xf32>,
    %c0_110 = arith.constant 0 : index
    %c0_111 = arith.constant 0 : index
    %75 = vector.load %arg8[%c0_110, %c0_111] : memref<256x576xf32, #tpu.memory_space<vmem>>, vector<256x576xf32>
    %c0_112 = arith.constant 0 : index
    %c0_113 = arith.constant 0 : index
    %76 = vector.load %arg4[%c0_112, %c0_113] : memref<576x64xf32, #tpu.memory_space<vmem>>, vector<576x64xf32>
    %cst_114 = arith.constant dense<0.000000e+00> : vector<256x64xf32>
    %77 = tpu.matmul %75, %76, %cst_114 {dimension_numbers = #tpu.dot_dimension_numbers<[1], [0], [0], [1], [0, 0, 1, 1], [], []>} : vector<256x576xf32>, vector<576x64xf32>, vector<256x64xf32> -> vector<256x64xf32>
    %c0_115 = arith.constant 0 : index
    %c0_116 = arith.constant 0 : index
    %78 = vector.load %arg5[%c0_115, %c0_116] : memref<1x64xf32, #tpu.memory_space<vmem>>, vector<1x64xf32>
    %79 = vector.broadcast %78 : vector<1x64xf32> to vector<256x64xf32>
    %80 = arith.addf %77, %79 : vector<256x64xf32>
    %81 = vector.shape_cast %80 : vector<256x64xf32> to vector<16x16x64xf32>
    %c0_117 = arith.constant 0 : index
    %c0_118 = arith.constant 0 : index
    %c0_119 = arith.constant 0 : index
    %c0_120 = arith.constant 0 : index
    %82 = vector.load %arg1[%c0_117, %c0_118, %c0_119, %c0_120] : memref<1x16x16x64xf32, #tpu.memory_space<vmem>>, vector<1x16x16x64xf32>
    %83 = vector.shape_cast %82 : vector<1x16x16x64xf32> to vector<16x16x64xf32>
    %84 = arith.addf %81, %83 : vector<16x16x64xf32>
    %c0_121 = arith.constant 0 : index
    %c0_122 = arith.constant 0 : index
    %c0_123 = arith.constant 0 : index
    %c0_124 = arith.constant 0 : index
    %85 = vector.load %arg6[%c0_121, %c0_122, %c0_123, %c0_124] : memref<1x16x16x64xf32, #tpu.memory_space<vmem>>, vector<1x16x16x64xf32>
    %86 = vector.shape_cast %85 : vector<1x16x16x64xf32> to vector<16x16x64xf32>
    %87 = vector.shape_cast %84 : vector<16x16x64xf32> to vector<1x16x16x64xf32>
    tpu.vector_store %arg6[%c0_121, %c0_122, %c0_123, %c0_124], %87 {strides = array<i32>} : memref<1x16x16x64xf32, #tpu.memory_space<vmem>>, vector<1x16x16x64xf32>,
    return
  }
  func.func @transform_0(%arg0: i32) -> (i32, i32, i32, i32) {
    %c0_i32 = arith.constant 0 : i32
    %c0_i32_0 = arith.constant 0 : i32
    %c0_i32_1 = arith.constant 0 : i32
    %c0_i32_2 = arith.constant 0 : i32
    return %arg0, %c0_i32, %c0_i32_0, %c0_i32_1 : i32, i32, i32, i32
  }
  func.func @transform_1(%arg0: i32) -> (i32, i32) {
    %c0_i32 = arith.constant 0 : i32
    %c0_i32_0 = arith.constant 0 : i32
    %c0_i32_1 = arith.constant 0 : i32
    return %c0_i32, %c0_i32_0 : i32, i32
  }
  func.func @transform_2(%arg0: i32) -> (i32, i32) {
    %c0_i32 = arith.constant 0 : i32
    %c0_i32_0 = arith.constant 0 : i32
    %c0_i32_1 = arith.constant 0 : i32
    return %c0_i32, %c0_i32_0 : i32, i32
  }
  func.func @transform_3(%arg0: i32) -> (i32, i32) {
    %c0_i32 = arith.constant 0 : i32
    %c0_i32_0 = arith.constant 0 : i32
    %c0_i32_1 = arith.constant 0 : i32
    return %c0_i32, %c0_i32_0 : i32, i32
  }
  func.func @transform_4(%arg0: i32) -> (i32, i32) {
    %c0_i32 = arith.constant 0 : i32
    %c0_i32_0 = arith.constant 0 : i32
    %c0_i32_1 = arith.constant 0 : i32
    return %c0_i32, %c0_i32_0 : i32, i32
  }
  func.func @transform_5(%arg0: i32) -> (i32, i32, i32, i32) {
    %c0_i32 = arith.constant 0 : i32
    %c0_i32_0 = arith.constant 0 : i32
    %c0_i32_1 = arith.constant 0 : i32
    %c0_i32_2 = arith.constant 0 : i32
    return %arg0, %c0_i32, %c0_i32_0, %c0_i32_1 : i32, i32, i32, i32
  }
}

module attributes {stable_mosaic.version = 11 : i64} {
  func.func @_rcu_kernel(%arg0: i32, %arg1: memref<1x16x16x64xf32, #tpu.memory_space<vmem>>, %arg2: memref<576x64xf32, #tpu.memory_space<vmem>>, %arg3: memref<1x64xf32, #tpu.memory_space<vmem>>, %arg4: memref<576x64xf32, #tpu.memory_space<vmem>>, %arg5: memref<1x64xf32, #tpu.memory_space<vmem>>, %arg6: memref<1x16x16x64xf32, #tpu.memory_space<vmem>>, %arg7: memref<18x18x64xf32, #tpu.memory_space<vmem>>, %arg8: memref<256x576xf32, #tpu.memory_space<vmem>>) attributes {dimension_semantics = [#tpu.dimension_semantics<parallel>], iteration_bounds = array<i64: 2>, scalar_prefetch = 0 : i64, scratch_operands = 2 : i64, tpu.core_type = #tpu.core_type<tc>, window_params = [{transform_indices = @transform_0, window_bounds = array<i64: 1, 16, 16, 64>}, {pipeline_mode = #tpu.pipeline_mode<synchronous>, transform_indices = @transform_1, window_bounds = array<i64: 576, 64>}, {pipeline_mode = #tpu.pipeline_mode<synchronous>, transform_indices = @transform_2, window_bounds = array<i64: 1, 64>}, {pipeline_mode = #tpu.pipeline_mode<synchronous>, transform_indices = @transform_3, window_bounds = array<i64: 576, 64>}, {pipeline_mode = #tpu.pipeline_mode<synchronous>, transform_indices = @transform_4, window_bounds = array<i64: 1, 64>}, {transform_indices = @transform_5, window_bounds = array<i64: 1, 16, 16, 64>}]} {
    %cst = arith.constant 0.000000e+00 : f32
    %0 = vector.broadcast %cst : f32 to vector<1x18x64xf32>
    %cst_0 = arith.constant 0.000000e+00 : f32
    %1 = vector.broadcast %cst_0 : f32 to vector<18x1x64xf32>
    %c0 = arith.constant 0 : index
    %c0_1 = arith.constant 0 : index
    %c0_2 = arith.constant 0 : index
    %2 = vector.load %arg7[%c0, %c0_1, %c0_2] : memref<18x18x64xf32, #tpu.memory_space<vmem>>, vector<1x18x64xf32>
    tpu.vector_store %arg7[%c0, %c0_1, %c0_2], %0 {strides = array<i32>} : memref<18x18x64xf32, #tpu.memory_space<vmem>>, vector<1x18x64xf32>,
    %c17 = arith.constant 17 : index
    %c0_3 = arith.constant 0 : index
    %c0_4 = arith.constant 0 : index
    %3 = vector.load %arg7[%c17, %c0_3, %c0_4] : memref<18x18x64xf32, #tpu.memory_space<vmem>>, vector<1x18x64xf32>
    tpu.vector_store %arg7[%c17, %c0_3, %c0_4], %0 {strides = array<i32>} : memref<18x18x64xf32, #tpu.memory_space<vmem>>, vector<1x18x64xf32>,
    %c0_5 = arith.constant 0 : index
    %c0_6 = arith.constant 0 : index
    %c0_7 = arith.constant 0 : index
    %4 = vector.load %arg7[%c0_5, %c0_6, %c0_7] : memref<18x18x64xf32, #tpu.memory_space<vmem>>, vector<18x1x64xf32>
    tpu.vector_store %arg7[%c0_5, %c0_6, %c0_7], %1 {strides = array<i32>} : memref<18x18x64xf32, #tpu.memory_space<vmem>>, vector<18x1x64xf32>,
    %c0_8 = arith.constant 0 : index
    %c17_9 = arith.constant 17 : index
    %c0_10 = arith.constant 0 : index
    %5 = vector.load %arg7[%c0_8, %c17_9, %c0_10] : memref<18x18x64xf32, #tpu.memory_space<vmem>>, vector<18x1x64xf32>
    tpu.vector_store %arg7[%c0_8, %c17_9, %c0_10], %1 {strides = array<i32>} : memref<18x18x64xf32, #tpu.memory_space<vmem>>, vector<18x1x64xf32>,
    %c0_11 = arith.constant 0 : index
    %c0_12 = arith.constant 0 : index
    %c0_13 = arith.constant 0 : index
    %c0_14 = arith.constant 0 : index
    %6 = vector.load %arg1[%c0_11, %c0_12, %c0_13, %c0_14] : memref<1x16x16x64xf32, #tpu.memory_space<vmem>>, vector<1x16x16x64xf32>
    %7 = vector.shape_cast %6 : vector<1x16x16x64xf32> to vector<16x16x64xf32>
    %cst_15 = arith.constant 0.000000e+00 : f32
    %8 = vector.broadcast %cst_15 : f32 to vector<16x16x64xf32>
    %9 = arith.maximumf %7, %8 : vector<16x16x64xf32>
    %c1 = arith.constant 1 : index
    %c1_16 = arith.constant 1 : index
    %c0_17 = arith.constant 0 : index
    %10 = vector.load %arg7[%c1, %c1_16, %c0_17] : memref<18x18x64xf32, #tpu.memory_space<vmem>>, vector<16x16x64xf32>
    tpu.vector_store %arg7[%c1, %c1_16, %c0_17], %9 {strides = array<i32>} : memref<18x18x64xf32, #tpu.memory_space<vmem>>, vector<16x16x64xf32>,
    %c0_18 = arith.constant 0 : index
    %c0_19 = arith.constant 0 : index
    %c0_20 = arith.constant 0 : index
    %11 = vector.load %arg7[%c0_18, %c0_19, %c0_20] : memref<18x18x64xf32, #tpu.memory_space<vmem>>, vector<16x16x64xf32>
    %12 = vector.shape_cast %11 : vector<16x16x64xf32> to vector<256x64xf32>
    %c0_21 = arith.constant 0 : index
    %c0_22 = arith.constant 0 : index
    %13 = vector.load %arg8[%c0_21, %c0_22] : memref<256x576xf32, #tpu.memory_space<vmem>>, vector<256x64xf32>
    tpu.vector_store %arg8[%c0_21, %c0_22], %12 {strides = array<i32>} : memref<256x576xf32, #tpu.memory_space<vmem>>, vector<256x64xf32>,
    %c0_23 = arith.constant 0 : index
    %c1_24 = arith.constant 1 : index
    %c0_25 = arith.constant 0 : index
    %14 = vector.load %arg7[%c0_23, %c1_24, %c0_25] : memref<18x18x64xf32, #tpu.memory_space<vmem>>, vector<16x16x64xf32>
    %15 = vector.shape_cast %14 : vector<16x16x64xf32> to vector<256x64xf32>
    %c0_26 = arith.constant 0 : index
    %c64 = arith.constant 64 : index
    %16 = vector.load %arg8[%c0_26, %c64] : memref<256x576xf32, #tpu.memory_space<vmem>>, vector<256x64xf32>
    tpu.vector_store %arg8[%c0_26, %c64], %15 {strides = array<i32>} : memref<256x576xf32, #tpu.memory_space<vmem>>, vector<256x64xf32>,
    %c0_27 = arith.constant 0 : index
    %c2 = arith.constant 2 : index
    %c0_28 = arith.constant 0 : index
    %17 = vector.load %arg7[%c0_27, %c2, %c0_28] : memref<18x18x64xf32, #tpu.memory_space<vmem>>, vector<16x16x64xf32>
    %18 = vector.shape_cast %17 : vector<16x16x64xf32> to vector<256x64xf32>
    %c0_29 = arith.constant 0 : index
    %c128 = arith.constant 128 : index
    %19 = vector.load %arg8[%c0_29, %c128] : memref<256x576xf32, #tpu.memory_space<vmem>>, vector<256x64xf32>
    tpu.vector_store %arg8[%c0_29, %c128], %18 {strides = array<i32>} : memref<256x576xf32, #tpu.memory_space<vmem>>, vector<256x64xf32>,
    %c1_30 = arith.constant 1 : index
    %c0_31 = arith.constant 0 : index
    %c0_32 = arith.constant 0 : index
    %20 = vector.load %arg7[%c1_30, %c0_31, %c0_32] : memref<18x18x64xf32, #tpu.memory_space<vmem>>, vector<16x16x64xf32>
    %21 = vector.shape_cast %20 : vector<16x16x64xf32> to vector<256x64xf32>
    %c0_33 = arith.constant 0 : index
    %c192 = arith.constant 192 : index
    %22 = vector.load %arg8[%c0_33, %c192] : memref<256x576xf32, #tpu.memory_space<vmem>>, vector<256x64xf32>
    tpu.vector_store %arg8[%c0_33, %c192], %21 {strides = array<i32>} : memref<256x576xf32, #tpu.memory_space<vmem>>, vector<256x64xf32>,
    %c1_34 = arith.constant 1 : index
    %c1_35 = arith.constant 1 : index
    %c0_36 = arith.constant 0 : index
    %23 = vector.load %arg7[%c1_34, %c1_35, %c0_36] : memref<18x18x64xf32, #tpu.memory_space<vmem>>, vector<16x16x64xf32>
    %24 = vector.shape_cast %23 : vector<16x16x64xf32> to vector<256x64xf32>
    %c0_37 = arith.constant 0 : index
    %c256 = arith.constant 256 : index
    %25 = vector.load %arg8[%c0_37, %c256] : memref<256x576xf32, #tpu.memory_space<vmem>>, vector<256x64xf32>
    tpu.vector_store %arg8[%c0_37, %c256], %24 {strides = array<i32>} : memref<256x576xf32, #tpu.memory_space<vmem>>, vector<256x64xf32>,
    %c1_38 = arith.constant 1 : index
    %c2_39 = arith.constant 2 : index
    %c0_40 = arith.constant 0 : index
    %26 = vector.load %arg7[%c1_38, %c2_39, %c0_40] : memref<18x18x64xf32, #tpu.memory_space<vmem>>, vector<16x16x64xf32>
    %27 = vector.shape_cast %26 : vector<16x16x64xf32> to vector<256x64xf32>
    %c0_41 = arith.constant 0 : index
    %c320 = arith.constant 320 : index
    %28 = vector.load %arg8[%c0_41, %c320] : memref<256x576xf32, #tpu.memory_space<vmem>>, vector<256x64xf32>
    tpu.vector_store %arg8[%c0_41, %c320], %27 {strides = array<i32>} : memref<256x576xf32, #tpu.memory_space<vmem>>, vector<256x64xf32>,
    %c2_42 = arith.constant 2 : index
    %c0_43 = arith.constant 0 : index
    %c0_44 = arith.constant 0 : index
    %29 = vector.load %arg7[%c2_42, %c0_43, %c0_44] : memref<18x18x64xf32, #tpu.memory_space<vmem>>, vector<16x16x64xf32>
    %30 = vector.shape_cast %29 : vector<16x16x64xf32> to vector<256x64xf32>
    %c0_45 = arith.constant 0 : index
    %c384 = arith.constant 384 : index
    %31 = vector.load %arg8[%c0_45, %c384] : memref<256x576xf32, #tpu.memory_space<vmem>>, vector<256x64xf32>
    tpu.vector_store %arg8[%c0_45, %c384], %30 {strides = array<i32>} : memref<256x576xf32, #tpu.memory_space<vmem>>, vector<256x64xf32>,
    %c2_46 = arith.constant 2 : index
    %c1_47 = arith.constant 1 : index
    %c0_48 = arith.constant 0 : index
    %32 = vector.load %arg7[%c2_46, %c1_47, %c0_48] : memref<18x18x64xf32, #tpu.memory_space<vmem>>, vector<16x16x64xf32>
    %33 = vector.shape_cast %32 : vector<16x16x64xf32> to vector<256x64xf32>
    %c0_49 = arith.constant 0 : index
    %c448 = arith.constant 448 : index
    %34 = vector.load %arg8[%c0_49, %c448] : memref<256x576xf32, #tpu.memory_space<vmem>>, vector<256x64xf32>
    tpu.vector_store %arg8[%c0_49, %c448], %33 {strides = array<i32>} : memref<256x576xf32, #tpu.memory_space<vmem>>, vector<256x64xf32>,
    %c2_50 = arith.constant 2 : index
    %c2_51 = arith.constant 2 : index
    %c0_52 = arith.constant 0 : index
    %35 = vector.load %arg7[%c2_50, %c2_51, %c0_52] : memref<18x18x64xf32, #tpu.memory_space<vmem>>, vector<16x16x64xf32>
    %36 = vector.shape_cast %35 : vector<16x16x64xf32> to vector<256x64xf32>
    %c0_53 = arith.constant 0 : index
    %c512 = arith.constant 512 : index
    %37 = vector.load %arg8[%c0_53, %c512] : memref<256x576xf32, #tpu.memory_space<vmem>>, vector<256x64xf32>
    tpu.vector_store %arg8[%c0_53, %c512], %36 {strides = array<i32>} : memref<256x576xf32, #tpu.memory_space<vmem>>, vector<256x64xf32>,
    %c0_54 = arith.constant 0 : index
    %c0_55 = arith.constant 0 : index
    %38 = vector.load %arg8[%c0_54, %c0_55] : memref<256x576xf32, #tpu.memory_space<vmem>>, vector<256x576xf32>
    %c0_56 = arith.constant 0 : index
    %c0_57 = arith.constant 0 : index
    %39 = vector.load %arg2[%c0_56, %c0_57] : memref<576x64xf32, #tpu.memory_space<vmem>>, vector<576x64xf32>
    %cst_58 = arith.constant dense<0.000000e+00> : vector<256x64xf32>
    %40 = tpu.matmul %38, %39, %cst_58 {dimension_numbers = #tpu.dot_dimension_numbers<[1], [0], [0], [1], [0, 0, 1, 1], [], []>} : vector<256x576xf32>, vector<576x64xf32>, vector<256x64xf32> -> vector<256x64xf32>
    %c0_59 = arith.constant 0 : index
    %c0_60 = arith.constant 0 : index
    %41 = vector.load %arg3[%c0_59, %c0_60] : memref<1x64xf32, #tpu.memory_space<vmem>>, vector<1x64xf32>
    %42 = vector.broadcast %41 : vector<1x64xf32> to vector<256x64xf32>
    %43 = arith.addf %40, %42 : vector<256x64xf32>
    %cst_61 = arith.constant 0.000000e+00 : f32
    %44 = vector.broadcast %cst_61 : f32 to vector<256x64xf32>
    %45 = arith.maximumf %43, %44 : vector<256x64xf32>
    %46 = vector.shape_cast %45 : vector<256x64xf32> to vector<16x16x64xf32>
    %c1_62 = arith.constant 1 : index
    %c1_63 = arith.constant 1 : index
    %c0_64 = arith.constant 0 : index
    %47 = vector.load %arg7[%c1_62, %c1_63, %c0_64] : memref<18x18x64xf32, #tpu.memory_space<vmem>>, vector<16x16x64xf32>
    tpu.vector_store %arg7[%c1_62, %c1_63, %c0_64], %46 {strides = array<i32>} : memref<18x18x64xf32, #tpu.memory_space<vmem>>, vector<16x16x64xf32>,
    %c0_65 = arith.constant 0 : index
    %c0_66 = arith.constant 0 : index
    %c0_67 = arith.constant 0 : index
    %48 = vector.load %arg7[%c0_65, %c0_66, %c0_67] : memref<18x18x64xf32, #tpu.memory_space<vmem>>, vector<16x16x64xf32>
    %49 = vector.shape_cast %48 : vector<16x16x64xf32> to vector<256x64xf32>
    %c0_68 = arith.constant 0 : index
    %c0_69 = arith.constant 0 : index
    %50 = vector.load %arg8[%c0_68, %c0_69] : memref<256x576xf32, #tpu.memory_space<vmem>>, vector<256x64xf32>
    tpu.vector_store %arg8[%c0_68, %c0_69], %49 {strides = array<i32>} : memref<256x576xf32, #tpu.memory_space<vmem>>, vector<256x64xf32>,
    %c0_70 = arith.constant 0 : index
    %c1_71 = arith.constant 1 : index
    %c0_72 = arith.constant 0 : index
    %51 = vector.load %arg7[%c0_70, %c1_71, %c0_72] : memref<18x18x64xf32, #tpu.memory_space<vmem>>, vector<16x16x64xf32>
    %52 = vector.shape_cast %51 : vector<16x16x64xf32> to vector<256x64xf32>
    %c0_73 = arith.constant 0 : index
    %c64_74 = arith.constant 64 : index
    %53 = vector.load %arg8[%c0_73, %c64_74] : memref<256x576xf32, #tpu.memory_space<vmem>>, vector<256x64xf32>
    tpu.vector_store %arg8[%c0_73, %c64_74], %52 {strides = array<i32>} : memref<256x576xf32, #tpu.memory_space<vmem>>, vector<256x64xf32>,
    %c0_75 = arith.constant 0 : index
    %c2_76 = arith.constant 2 : index
    %c0_77 = arith.constant 0 : index
    %54 = vector.load %arg7[%c0_75, %c2_76, %c0_77] : memref<18x18x64xf32, #tpu.memory_space<vmem>>, vector<16x16x64xf32>
    %55 = vector.shape_cast %54 : vector<16x16x64xf32> to vector<256x64xf32>
    %c0_78 = arith.constant 0 : index
    %c128_79 = arith.constant 128 : index
    %56 = vector.load %arg8[%c0_78, %c128_79] : memref<256x576xf32, #tpu.memory_space<vmem>>, vector<256x64xf32>
    tpu.vector_store %arg8[%c0_78, %c128_79], %55 {strides = array<i32>} : memref<256x576xf32, #tpu.memory_space<vmem>>, vector<256x64xf32>,
    %c1_80 = arith.constant 1 : index
    %c0_81 = arith.constant 0 : index
    %c0_82 = arith.constant 0 : index
    %57 = vector.load %arg7[%c1_80, %c0_81, %c0_82] : memref<18x18x64xf32, #tpu.memory_space<vmem>>, vector<16x16x64xf32>
    %58 = vector.shape_cast %57 : vector<16x16x64xf32> to vector<256x64xf32>
    %c0_83 = arith.constant 0 : index
    %c192_84 = arith.constant 192 : index
    %59 = vector.load %arg8[%c0_83, %c192_84] : memref<256x576xf32, #tpu.memory_space<vmem>>, vector<256x64xf32>
    tpu.vector_store %arg8[%c0_83, %c192_84], %58 {strides = array<i32>} : memref<256x576xf32, #tpu.memory_space<vmem>>, vector<256x64xf32>,
    %c1_85 = arith.constant 1 : index
    %c1_86 = arith.constant 1 : index
    %c0_87 = arith.constant 0 : index
    %60 = vector.load %arg7[%c1_85, %c1_86, %c0_87] : memref<18x18x64xf32, #tpu.memory_space<vmem>>, vector<16x16x64xf32>
    %61 = vector.shape_cast %60 : vector<16x16x64xf32> to vector<256x64xf32>
    %c0_88 = arith.constant 0 : index
    %c256_89 = arith.constant 256 : index
    %62 = vector.load %arg8[%c0_88, %c256_89] : memref<256x576xf32, #tpu.memory_space<vmem>>, vector<256x64xf32>
    tpu.vector_store %arg8[%c0_88, %c256_89], %61 {strides = array<i32>} : memref<256x576xf32, #tpu.memory_space<vmem>>, vector<256x64xf32>,
    %c1_90 = arith.constant 1 : index
    %c2_91 = arith.constant 2 : index
    %c0_92 = arith.constant 0 : index
    %63 = vector.load %arg7[%c1_90, %c2_91, %c0_92] : memref<18x18x64xf32, #tpu.memory_space<vmem>>, vector<16x16x64xf32>
    %64 = vector.shape_cast %63 : vector<16x16x64xf32> to vector<256x64xf32>
    %c0_93 = arith.constant 0 : index
    %c320_94 = arith.constant 320 : index
    %65 = vector.load %arg8[%c0_93, %c320_94] : memref<256x576xf32, #tpu.memory_space<vmem>>, vector<256x64xf32>
    tpu.vector_store %arg8[%c0_93, %c320_94], %64 {strides = array<i32>} : memref<256x576xf32, #tpu.memory_space<vmem>>, vector<256x64xf32>,
    %c2_95 = arith.constant 2 : index
    %c0_96 = arith.constant 0 : index
    %c0_97 = arith.constant 0 : index
    %66 = vector.load %arg7[%c2_95, %c0_96, %c0_97] : memref<18x18x64xf32, #tpu.memory_space<vmem>>, vector<16x16x64xf32>
    %67 = vector.shape_cast %66 : vector<16x16x64xf32> to vector<256x64xf32>
    %c0_98 = arith.constant 0 : index
    %c384_99 = arith.constant 384 : index
    %68 = vector.load %arg8[%c0_98, %c384_99] : memref<256x576xf32, #tpu.memory_space<vmem>>, vector<256x64xf32>
    tpu.vector_store %arg8[%c0_98, %c384_99], %67 {strides = array<i32>} : memref<256x576xf32, #tpu.memory_space<vmem>>, vector<256x64xf32>,
    %c2_100 = arith.constant 2 : index
    %c1_101 = arith.constant 1 : index
    %c0_102 = arith.constant 0 : index
    %69 = vector.load %arg7[%c2_100, %c1_101, %c0_102] : memref<18x18x64xf32, #tpu.memory_space<vmem>>, vector<16x16x64xf32>
    %70 = vector.shape_cast %69 : vector<16x16x64xf32> to vector<256x64xf32>
    %c0_103 = arith.constant 0 : index
    %c448_104 = arith.constant 448 : index
    %71 = vector.load %arg8[%c0_103, %c448_104] : memref<256x576xf32, #tpu.memory_space<vmem>>, vector<256x64xf32>
    tpu.vector_store %arg8[%c0_103, %c448_104], %70 {strides = array<i32>} : memref<256x576xf32, #tpu.memory_space<vmem>>, vector<256x64xf32>,
    %c2_105 = arith.constant 2 : index
    %c2_106 = arith.constant 2 : index
    %c0_107 = arith.constant 0 : index
    %72 = vector.load %arg7[%c2_105, %c2_106, %c0_107] : memref<18x18x64xf32, #tpu.memory_space<vmem>>, vector<16x16x64xf32>
    %73 = vector.shape_cast %72 : vector<16x16x64xf32> to vector<256x64xf32>
    %c0_108 = arith.constant 0 : index
    %c512_109 = arith.constant 512 : index
    %74 = vector.load %arg8[%c0_108, %c512_109] : memref<256x576xf32, #tpu.memory_space<vmem>>, vector<256x64xf32>
    tpu.vector_store %arg8[%c0_108, %c512_109], %73 {strides = array<i32>} : memref<256x576xf32, #tpu.memory_space<vmem>>, vector<256x64xf32>,
    %c0_110 = arith.constant 0 : index
    %c0_111 = arith.constant 0 : index
    %75 = vector.load %arg8[%c0_110, %c0_111] : memref<256x576xf32, #tpu.memory_space<vmem>>, vector<256x576xf32>
    %c0_112 = arith.constant 0 : index
    %c0_113 = arith.constant 0 : index
    %76 = vector.load %arg4[%c0_112, %c0_113] : memref<576x64xf32, #tpu.memory_space<vmem>>, vector<576x64xf32>
    %cst_114 = arith.constant dense<0.000000e+00> : vector<256x64xf32>
    %77 = tpu.matmul %75, %76, %cst_114 {dimension_numbers = #tpu.dot_dimension_numbers<[1], [0], [0], [1], [0, 0, 1, 1], [], []>} : vector<256x576xf32>, vector<576x64xf32>, vector<256x64xf32> -> vector<256x64xf32>
    %c0_115 = arith.constant 0 : index
    %c0_116 = arith.constant 0 : index
    %78 = vector.load %arg5[%c0_115, %c0_116] : memref<1x64xf32, #tpu.memory_space<vmem>>, vector<1x64xf32>
    %79 = vector.broadcast %78 : vector<1x64xf32> to vector<256x64xf32>
    %80 = arith.addf %77, %79 : vector<256x64xf32>
    %81 = vector.shape_cast %80 : vector<256x64xf32> to vector<16x16x64xf32>
    %c0_117 = arith.constant 0 : index
    %c0_118 = arith.constant 0 : index
    %c0_119 = arith.constant 0 : index
    %c0_120 = arith.constant 0 : index
    %82 = vector.load %arg1[%c0_117, %c0_118, %c0_119, %c0_120] : memref<1x16x16x64xf32, #tpu.memory_space<vmem>>, vector<1x16x16x64xf32>
    %83 = vector.shape_cast %82 : vector<1x16x16x64xf32> to vector<16x16x64xf32>
    %84 = arith.addf %81, %83 : vector<16x16x64xf32>
    %c0_121 = arith.constant 0 : index
    %c0_122 = arith.constant 0 : index
    %c0_123 = arith.constant 0 : index
    %c0_124 = arith.constant 0 : index
    %85 = vector.load %arg6[%c0_121, %c0_122, %c0_123, %c0_124] : memref<1x16x16x64xf32, #tpu.memory_space<vmem>>, vector<1x16x16x64xf32>
    %86 = vector.shape_cast %85 : vector<1x16x16x64xf32> to vector<16x16x64xf32>
    %87 = vector.shape_cast %84 : vector<16x16x64xf32> to vector<1x16x16x64xf32>
    tpu.vector_store %arg6[%c0_121, %c0_122, %c0_123, %c0_124], %87 {strides = array<i32>} : memref<1x16x16x64xf32, #tpu.memory_space<vmem>>, vector<1x16x16x64xf32>,
    return
  }
  func.func @transform_0(%arg0: i32) -> (i32, i32, i32, i32) {
    %c0_i32 = arith.constant 0 : i32
    %c0_i32_0 = arith.constant 0 : i32
    %c0_i32_1 = arith.constant 0 : i32
    %c0_i32_2 = arith.constant 0 : i32
    return %arg0, %c0_i32, %c0_i32_0, %c0_i32_1 : i32, i32, i32, i32
  }
  func.func @transform_1(%arg0: i32) -> (i32, i32) {
    %c0_i32 = arith.constant 0 : i32
    %c0_i32_0 = arith.constant 0 : i32
    %c0_i32_1 = arith.constant 0 : i32
    return %c0_i32, %c0_i32_0 : i32, i32
  }
  func.func @transform_2(%arg0: i32) -> (i32, i32) {
    %c0_i32 = arith.constant 0 : i32
    %c0_i32_0 = arith.constant 0 : i32
    %c0_i32_1 = arith.constant 0 : i32
    return %c0_i32, %c0_i32_0 : i32, i32
  }
  func.func @transform_3(%arg0: i32) -> (i32, i32) {
    %c0_i32 = arith.constant 0 : i32
    %c0_i32_0 = arith.constant 0 : i32
    %c0_i32_1 = arith.constant 0 : i32
    return %c0_i32, %c0_i32_0 : i32, i32
  }
  func.func @transform_4(%arg0: i32) -> (i32, i32) {
    %c0_i32 = arith.constant 0 : i32
    %c0_i32_0 = arith.constant 0 : i32
    %c0_i32_1 = arith.constant 0 : i32
    return %c0_i32, %c0_i32_0 : i32, i32
  }
  func.func @transform_5(%arg0: i32) -> (i32, i32, i32, i32) {
    %c0_i32 = arith.constant 0 : i32
    %c0_i32_0 = arith.constant 0 : i32
    %c0_i32_1 = arith.constant 0 : i32
    %c0_i32_2 = arith.constant 0 : i32
    return %arg0, %c0_i32, %c0_i32_0, %c0_i32_1 : i32, i32, i32, i32
  }
}

</mosaic_0001>

<llo_original>
// kernel: tpu_custom_call.1
$region0: #{tpu_custom_call.1}
  #allocation0 [shape = 'u32[]', space=smem, size = 0x4, offset = 0x4, fixed_abs, tag = 'smem constant byte address 0x4 - core index']
  #allocation1 [shape = 'u32[144,128]{1,0:T(1,128)}', space=vmem, size = 0x12000, scoped, tag = 'internal scratch']
  #allocation2 [shape = 'f32[18,18,64]{2,1,0:T(8,128)}', space=vmem, size = 0x36000, scoped, tag = 'scratch operand']
  #allocation3 [shape = 'f32[256,576]{1,0:T(8,128)}', space=vmem, size = 0xa0000, scoped, tag = 'scratch operand']
  %s0 = inlined_call_operand.vmem [shape: f32[2,16,16,64], index: 0, kind: input, shape index: {}]
  %s1 = inlined_call_operand.vmem [shape: f32[576,64], index: 1, kind: input, shape index: {}]
  %s2 = inlined_call_operand.vmem [shape: f32[1,64], index: 2, kind: input, shape index: {}]
  %s3 = inlined_call_operand.vmem [shape: f32[576,64], index: 3, kind: input, shape index: {}]
  %s4 = inlined_call_operand.vmem [shape: f32[1,64], index: 4, kind: input, shape index: {}]
  %s5 = inlined_call_operand.hbm [shape: f32[2,16,16,64], index: 5, kind: output, shape index: {}]
  %s6 = sld [smem:[#allocation0]]
  $region53: #{tpu_custom_call.1} parent=0
    _
  %s8 = ssub.s32 1, %s6
  %s9 = scalar_select 0, %s8, %s6
  $region1: #{tpu_custom_call.1} parent=0
    #allocation4 [shape = 'u8[262144]{0}', space=vmem, size = 0x40000, scoped, tag = 'output window, operand 0']
    #allocation5 [shape = 's32[2]{0}', space=sflag, size = 0x8, scoped, tag = 'scoped memory for tpu_custom_call.1']
    %10 = vsyncpa [#allocation5], 0
    %s11 = scalar_lea.sflag [#allocation5], 1
    %12 = vsyncpa %s11, 0
    loop: start=0, step=1, limit=4
    $region2: #{tpu_custom_call.1} parent=1 // loop_pre_header
      _
    $region3: #{tpu_custom_call.1} parent=1 // loop_header
      %s14 = sphi 0, %s18
      %p15 = scmp.ge.s32.totalorder %s14, 4
      %s24 = sphi 0, %s26
      %s27 = sphi 0, %s24
      %s28 = sphi 0, %s27
      %s44 = sphi 0, %s28
      %s48 = sphi 0, %s48
      %s50 = sphi 0, %s48
      %s51 = sphi 0, %s50
      %s65 = sphi 0, %s51
      %s69 = sphi 0, %s69
      %s71 = sphi 0, %s69
      %s72 = sphi 0, %s71
      %s86 = sphi 0, %s72
      %s90 = sphi 0, %s90
      %s92 = sphi 0, %s90
      %s93 = sphi 0, %s92
      %s107 = sphi 0, %s93
      %s111 = sphi 0, %s111
      %s113 = sphi 0, %s111
      %s114 = sphi 0, %s113
      %s128 = sphi 0, %s114
      %s134 = sphi 0, %s136
      %s137 = sphi 0, %s134
      %s138 = sphi 0, %s137
      %s154 = sphi 0, %s138
    $region4: #{tpu_custom_call.1} parent=1 // loop_header_branch
      %17 = sbr.rel (%p15) target = $region8
    $region5: #{tpu_custom_call.1} parent=1 // loop_body
      %s19 = ssub.s32 %s14, 1
      %s20 = ssub.s32 %s14, 2
      %s21 = sadd.s32 %s14, 1
      %s22 = ssub.s32 %s14, %s21
      %p23 = scmp.eq.s32.totalorder %s22, 0
      %s25 = sadd.s32 %s24, 1
      %s26 = scalar_select %p23, %s24, %s25
      %p29 = pneg %p23
      %p30 = scmp.eq.s32.totalorder %s14, 1
      %p31 = por %p29, %p30
      %p32 = scmp.ne.s32.totalorder %s24, %s27
      %p33 = scmp.eq.s32.totalorder %s14, 0
      %p34 = por %p32, %p33
      %p35 = scmp.ne.s32.totalorder %s24, %s27
      %p36 = scmp.eq.s32.totalorder %s19, 1
      %p37 = por %p35, %p36
      %p38 = scmp.ne.s32.totalorder %s27, %s28
      %p39 = scmp.eq.s32.totalorder %s19, 0
      %p40 = por %p38, %p39
      %p41 = scmp.ne.s32.totalorder %s27, %s28
      %p42 = scmp.eq.s32.totalorder %s20, 1
      %p43 = por %p41, %p42
      %p45 = scmp.ne.s32.totalorder %s28, %s44
      %p46 = scmp.eq.s32.totalorder %s20, 0
      %p47 = por %p45, %p46
      %s49 = sadd.s32 %s48, 1
      %p52 = scmp.eq.s32.totalorder %s14, 1
      %p53 = scmp.ne.s32.totalorder %s48, %s50
      %p54 = scmp.eq.s32.totalorder %s14, 0
      %p55 = por %p53, %p54
      %p56 = scmp.ne.s32.totalorder %s48, %s50
      %p57 = scmp.eq.s32.totalorder %s19, 1
      %p58 = por %p56, %p57
      %p59 = scmp.ne.s32.totalorder %s50, %s51
      %p60 = scmp.eq.s32.totalorder %s19, 0
      %p61 = por %p59, %p60
      %p62 = scmp.ne.s32.totalorder %s50, %s51
      %p63 = scmp.eq.s32.totalorder %s20, 1
      %p64 = por %p62, %p63
      %p66 = scmp.ne.s32.totalorder %s51, %s65
      %p67 = scmp.eq.s32.totalorder %s20, 0
      %p68 = por %p66, %p67
      %s70 = sadd.s32 %s69, 1
      %p73 = scmp.eq.s32.totalorder %s14, 1
      %p74 = scmp.ne.s32.totalorder %s69, %s71
      %p75 = scmp.eq.s32.totalorder %s14, 0
      %p76 = por %p74, %p75
      %p77 = scmp.ne.s32.totalorder %s69, %s71
      %p78 = scmp.eq.s32.totalorder %s19, 1
      %p79 = por %p77, %p78
      %p80 = scmp.ne.s32.totalorder %s71, %s72
      %p81 = scmp.eq.s32.totalorder %s19, 0
      %p82 = por %p80, %p81
      %p83 = scmp.ne.s32.totalorder %s71, %s72
      %p84 = scmp.eq.s32.totalorder %s20, 1
      %p85 = por %p83, %p84
      %p87 = scmp.ne.s32.totalorder %s72, %s86
      %p88 = scmp.eq.s32.totalorder %s20, 0
      %p89 = por %p87, %p88
      %s91 = sadd.s32 %s90, 1
      %p94 = scmp.eq.s32.totalorder %s14, 1
      %p95 = scmp.ne.s32.totalorder %s90, %s92
      %p96 = scmp.eq.s32.totalorder %s14, 0
      %p97 = por %p95, %p96
      %p98 = scmp.ne.s32.totalorder %s90, %s92
      %p99 = scmp.eq.s32.totalorder %s19, 1
      %p100 = por %p98, %p99
      %p101 = scmp.ne.s32.totalorder %s92, %s93
      %p102 = scmp.eq.s32.totalorder %s19, 0
      %p103 = por %p101, %p102
      %p104 = scmp.ne.s32.totalorder %s92, %s93
      %p105 = scmp.eq.s32.totalorder %s20, 1
      %p106 = por %p104, %p105
      %p108 = scmp.ne.s32.totalorder %s93, %s107
      %p109 = scmp.eq.s32.totalorder %s20, 0
      %p110 = por %p108, %p109
      %s112 = sadd.s32 %s111, 1
      %p115 = scmp.eq.s32.totalorder %s14, 1
      %p116 = scmp.ne.s32.totalorder %s111, %s113
      %p117 = scmp.eq.s32.totalorder %s14, 0
      %p118 = por %p116, %p117
      %p119 = scmp.ne.s32.totalorder %s111, %s113
      %p120 = scmp.eq.s32.totalorder %s19, 1
      %p121 = por %p119, %p120
      %p122 = scmp.ne.s32.totalorder %s113, %s114
      %p123 = scmp.eq.s32.totalorder %s19, 0
      %p124 = por %p122, %p123
      %p125 = scmp.ne.s32.totalorder %s113, %s114
      %p126 = scmp.eq.s32.totalorder %s20, 1
      %p127 = por %p125, %p126
      %p129 = scmp.ne.s32.totalorder %s114, %s128
      %p130 = scmp.eq.s32.totalorder %s20, 0
      %p131 = por %p129, %p130
      %s132 = ssub.s32 %s14, %s21
      %p133 = scmp.eq.s32.totalorder %s132, 0
      %s135 = sadd.s32 %s134, 1
      %s136 = scalar_select %p133, %s134, %s135
      %p139 = pneg %p133
      %p140 = scmp.eq.s32.totalorder %s14, 1
      %p141 = por %p139, %p140
      %p142 = scmp.ne.s32.totalorder %s134, %s137
      %p143 = scmp.eq.s32.totalorder %s14, 0
      %p144 = por %p142, %p143
      %p145 = scmp.ne.s32.totalorder %s134, %s137
      %p146 = scmp.eq.s32.totalorder %s19, 1
      %p147 = por %p145, %p146
      %p148 = scmp.ne.s32.totalorder %s137, %s138
      %p149 = scmp.eq.s32.totalorder %s19, 0
      %p150 = por %p148, %p149
      %p151 = scmp.ne.s32.totalorder %s137, %s138
      %p152 = scmp.eq.s32.totalorder %s20, 1
      %p153 = por %p151, %p152
      %p155 = scmp.ne.s32.totalorder %s138, %s154
      %p156 = scmp.eq.s32.totalorder %s20, 0
      %p157 = por %p155, %p156
      %p158 = scmp.le.s32.totalorder 1, %s14
      %p159 = scmp.lt.s32.totalorder %s14, 3
      %p160 = pnand %p158, %p159
      %p161 = pneg %p160
      // Predicated region
      $region9: #{tpu_custom_call.1} parent=5 // pred_check
        _
      $region10: #{tpu_custom_call.1} parent=5 // pred_check_branch
        %163 = sbr.rel (%p160) target = $region12
      $region11: #{tpu_custom_call.1} parent=5 // pred_region
        %s164 = ssub.s32 %s14, 1
        // Predicated region
        $region13: #{tpu_custom_call.1} parent=11 // pred_check
          %p165 = pneg %p61
        $region14: #{tpu_custom_call.1} parent=11 // pred_check_branch
          %167 = sbr.rel (%p165) target = $region16
        $region15: #{tpu_custom_call.1} parent=11 // pred_region
          _
        $region16: #{tpu_custom_call.1} parent=11 // pred_fallthru
          _
        // Predicated region
        $region17: #{tpu_custom_call.1} parent=11 // pred_check
          %p168 = pneg %p82
        $region18: #{tpu_custom_call.1} parent=11 // pred_check_branch
          %170 = sbr.rel (%p168) target = $region20
        $region19: #{tpu_custom_call.1} parent=11 // pred_region
          _
        $region20: #{tpu_custom_call.1} parent=11 // pred_fallthru
          _
        // Predicated region
        $region21: #{tpu_custom_call.1} parent=11 // pred_check
          %p171 = pneg %p103
        $region22: #{tpu_custom_call.1} parent=11 // pred_check_branch
          %173 = sbr.rel (%p171) target = $region24
        $region23: #{tpu_custom_call.1} parent=11 // pred_region
          _
        $region24: #{tpu_custom_call.1} parent=11 // pred_fallthru
          _
        // Predicated region
        $region25: #{tpu_custom_call.1} parent=11 // pred_check
          %p174 = pneg %p124
        $region26: #{tpu_custom_call.1} parent=11 // pred_check_branch
          %176 = sbr.rel (%p174) target = $region28
        $region27: #{tpu_custom_call.1} parent=11 // pred_region
          _
        $region28: #{tpu_custom_call.1} parent=11 // pred_fallthru
          _
      $region12: #{tpu_custom_call.1} parent=5 // pred_fallthru
        _
      %p177 = scmp.lt.s32.totalorder %s14, 2
      // Predicated region
      $region29: #{tpu_custom_call.1} parent=5 // pred_check
        %p178 = pneg %p177
      $region30: #{tpu_custom_call.1} parent=5 // pred_check_branch
        %180 = sbr.rel (%p178) target = $region32
      $region31: #{tpu_custom_call.1} parent=5 // pred_region
        // Predicated region
        $region33: #{tpu_custom_call.1} parent=31 // pred_check
          %p181 = pneg %p34
        $region34: #{tpu_custom_call.1} parent=31 // pred_check_branch
          %183 = sbr.rel (%p181) target = $region36
        $region35: #{tpu_custom_call.1} parent=31 // pred_region
          %p184 = scmp.lt.s32.totalorder %s14, 1
          %s185 = scalar_select %p184, %s14, 1
          %s186 = smul.addr %s185, 32
          %s187 = smul.addr %s186, 8
          %s188 = scalar_lea.vmem %s0, %s187
        $region36: #{tpu_custom_call.1} parent=31 // pred_fallthru
          _
      $region32: #{tpu_custom_call.1} parent=5 // pred_fallthru
        _
      %p189 = scmp.le.s32.totalorder 1, %s14
      %p190 = scmp.lt.s32.totalorder %s14, 3
      %p191 = pnand %p189, %p190
      %p192 = pneg %p191
      // Predicated region
      $region37: #{tpu_custom_call.1} parent=5 // pred_check
        _
      $region38: #{tpu_custom_call.1} parent=5 // pred_check_branch
        %194 = sbr.rel (%p191) target = $region40
      $region39: #{tpu_custom_call.1} parent=5 // pred_region
        %s195 = ssub.s32 %s14, 1
        %p196 = scmp.lt.s32.totalorder %s19, 1
        %s197 = scalar_select %p196, %s19, 1
        %s198 = smul.addr %s197, 32
        %s199 = smul.addr %s198, 8
        %s200 = scalar_lea.vmem %s0, %s199
        %p201 = pneg %p40
        %p202 = pneg %p37
        %p203 = pneg %p61
        %p204 = pneg %p58
        %p205 = pneg %p82
        %p206 = pneg %p79
        %p207 = pneg %p103
        %p208 = pneg %p100
        %p209 = pneg %p124
        %p210 = pneg %p121
        %p211 = pneg %p150
        %p212 = pneg %p147
        %s213 = sand.u32 %s137, 1
        %s214 = scalar_lea.sflag [#allocation5], %s213
        %s215 = sand.u32 %s137, 1
        %s216 = smul.addr %s215, 256
        %s217 = scalar_lea.vmem [#allocation4], %s216
        %p218 = scmp.lt.s32.totalorder %s19, 1
        %s219 = scalar_select %p218, %s19, 1
        %s220 = smul.addr %s219, 32
        %s221 = smul.addr %s220, 8
        %s222 = scalar_lea.vmem %s0, %s221
        %vm223 = vcmask 523264
        %224 = vst.msk [vmem:[#allocation2] sm:$0xff] %vm223, 0.0
        %225 = vst.msk [vmem:[#allocation2 + $0x8] sm:$0xff] %vm223, 0.0
        %vm226 = vcmask 517120
        %227 = vst.msk [vmem:[#allocation2 + $0x10] sm:$0x3] %vm226, 0.0
        %s228 = scalar_lea.vmem [#allocation2], 408
        %229 = vst.msk [vmem:[%s228] sm:$0xff] %vm223, 0.0
        %230 = vst.msk [vmem:[%s228 + $0x8] sm:$0xff] %vm223, 0.0
        %231 = vst.msk [vmem:[%s228 + $0x10] sm:$0x3] %vm226, 0.0
        %vm232 = vcmask 516096
        %233 = vst.msk [vmem:[#allocation2] sm:$0x1] %vm232, 0.0
        %234 = vst.msk [vmem:[#allocation2 + $0x18] sm:$0x1] %vm232, 0.0
        %235 = vst.msk [vmem:[#allocation2 + $0x30] sm:$0x1] %vm232, 0.0
        %236 = vst.msk [vmem:[#allocation2 + $0x48] sm:$0x1] %vm232, 0.0
        %237 = vst.msk [vmem:[#allocation2 + $0x60] sm:$0x1] %vm232, 0.0
        %238 = vst.msk [vmem:[#allocation2 + $0x78] sm:$0x1] %vm232, 0.0
        %239 = vst.msk [vmem:[#allocation2 + $0x90] sm:$0x1] %vm232, 0.0
        %240 = vst.msk [vmem:[#allocation2 + $0xa8] sm:$0x1] %vm232, 0.0
        %241 = vst.msk [vmem:[#allocation2 + $0xc0] sm:$0x1] %vm232, 0.0
        %242 = vst.msk [vmem:[#allocation2 + $0xd8] sm:$0x1] %vm232, 0.0
        %243 = vst.msk [vmem:[#allocation2 + $0xf0] sm:$0x1] %vm232, 0.0
        %244 = vst.msk [vmem:[#allocation2 + $0x108] sm:$0x1] %vm232, 0.0
        %245 = vst.msk [vmem:[#allocation2 + $0x120] sm:$0x1] %vm232, 0.0
        %246 = vst.msk [vmem:[#allocation2 + $0x138] sm:$0x1] %vm232, 0.0
        %247 = vst.msk [vmem:[#allocation2 + $0x150] sm:$0x1] %vm232, 0.0
        %248 = vst.msk [vmem:[#allocation2 + $0x168] sm:$0x1] %vm232, 0.0
        %249 = vst.msk [vmem:[#allocation2 + $0x180] sm:$0x1] %vm232, 0.0
        %250 = vst.msk [vmem:[#allocation2 + $0x198] sm:$0x1] %vm232, 0.0
        %251 = vst.msk [vmem:[#allocation2 + $0x11] sm:$0x1] %vm232, 0.0
        %252 = vst.msk [vmem:[#allocation2 + $0x29] sm:$0x1] %vm232, 0.0
        %253 = vst.msk [vmem:[#allocation2 + $0x41] sm:$0x1] %vm232, 0.0
        %254 = vst.msk [vmem:[#allocation2 + $0x59] sm:$0x1] %vm232, 0.0
        %255 = vst.msk [vmem:[#allocation2 + $0x71] sm:$0x1] %vm232, 0.0
        %256 = vst.msk [vmem:[#allocation2 + $0x89] sm:$0x1] %vm232, 0.0
        %257 = vst.msk [vmem:[#allocation2 + $0xa1] sm:$0x1] %vm232, 0.0
        %258 = vst.msk [vmem:[#allocation2 + $0xb9] sm:$0x1] %vm232, 0.0
        %259 = vst.msk [vmem:[#allocation2 + $0xd1] sm:$0x1] %vm232, 0.0
        %260 = vst.msk [vmem:[#allocation2 + $0xe9] sm:$0x1] %vm232, 0.0
        %261 = vst.msk [vmem:[#allocation2 + $0x101] sm:$0x1] %vm232, 0.0
        %262 = vst.msk [vmem:[#allocation2 + $0x119] sm:$0x1] %vm232, 0.0
        %263 = vst.msk [vmem:[#allocation2 + $0x131] sm:$0x1] %vm232, 0.0
        %264 = vst.msk [vmem:[#allocation2 + $0x149] sm:$0x1] %vm232, 0.0
        %265 = vst.msk [vmem:[#allocation2 + $0x161] sm:$0x1] %vm232, 0.0
        %266 = vst.msk [vmem:[#allocation2 + $0x179] sm:$0x1] %vm232, 0.0
        %267 = vst.msk [vmem:[#allocation2 + $0x191] sm:$0x1] %vm232, 0.0
        %268 = vst.msk [vmem:[#allocation2 + $0x1a9] sm:$0x1] %vm232, 0.0
        %v269 = vld [vmem:[%s222] sm:$0xff]
        %v270 = vld [vmem:[%s222 + $0x8] sm:$0xff]
        %v271 = vld [vmem:[%s222 + $0x10] sm:$0xff]
        %v272 = vld [vmem:[%s222 + $0x18] sm:$0xff]
        %v273 = vld [vmem:[%s222 + $0x20] sm:$0xff]
        %v274 = vld [vmem:[%s222 + $0x28] sm:$0xff]
        %v275 = vld [vmem:[%s222 + $0x30] sm:$0xff]
        %v276 = vld [vmem:[%s222 + $0x38] sm:$0xff]
        %v277 = vld [vmem:[%s222 + $0x40] sm:$0xff]
        %v278 = vld [vmem:[%s222 + $0x48] sm:$0xff]
        %v279 = vld [vmem:[%s222 + $0x50] sm:$0xff]
        %v280 = vld [vmem:[%s222 + $0x58] sm:$0xff]
        %v281 = vld [vmem:[%s222 + $0x60] sm:$0xff]
        %v282 = vld [vmem:[%s222 + $0x68] sm:$0xff]
        %v283 = vld [vmem:[%s222 + $0x70] sm:$0xff]
        %v284 = vld [vmem:[%s222 + $0x78] sm:$0xff]
        %v285 = vld [vmem:[%s222 + $0x80] sm:$0xff]
        %v286 = vld [vmem:[%s222 + $0x88] sm:$0xff]
        %v287 = vld [vmem:[%s222 + $0x90] sm:$0xff]
        %v288 = vld [vmem:[%s222 + $0x98] sm:$0xff]
        %v289 = vld [vmem:[%s222 + $0xa0] sm:$0xff]
        %v290 = vld [vmem:[%s222 + $0xa8] sm:$0xff]
        %v291 = vld [vmem:[%s222 + $0xb0] sm:$0xff]
        %v292 = vld [vmem:[%s222 + $0xb8] sm:$0xff]
        %v293 = vld [vmem:[%s222 + $0xc0] sm:$0xff]
        %v294 = vld [vmem:[%s222 + $0xc8] sm:$0xff]
        %v295 = vld [vmem:[%s222 + $0xd0] sm:$0xff]
        %v296 = vld [vmem:[%s222 + $0xd8] sm:$0xff]
        %v297 = vld [vmem:[%s222 + $0xe0] sm:$0xff]
        %v298 = vld [vmem:[%s222 + $0xe8] sm:$0xff]
        %v299 = vld [vmem:[%s222 + $0xf0] sm:$0xff]
        %v300 = vld [vmem:[%s222 + $0xf8] sm:$0xff]
        %v301 = vmax.f32 %v269, 0.0
        %v302 = vmax.f32 %v270, 0.0
        %v303 = vmax.f32 %v271, 0.0
        %v304 = vmax.f32 %v272, 0.0
        %v305 = vmax.f32 %v273, 0.0
        %v306 = vmax.f32 %v274, 0.0
        %v307 = vmax.f32 %v275, 0.0
        %v308 = vmax.f32 %v276, 0.0
        %v309 = vmax.f32 %v277, 0.0
        %v310 = vmax.f32 %v278, 0.0
        %v311 = vmax.f32 %v279, 0.0
        %v312 = vmax.f32 %v280, 0.0
        %v313 = vmax.f32 %v281, 0.0
        %v314 = vmax.f32 %v282, 0.0
        %v315 = vmax.f32 %v283, 0.0
        %v316 = vmax.f32 %v284, 0.0
        %v317 = vmax.f32 %v285, 0.0
        %v318 = vmax.f32 %v286, 0.0
        %v319 = vmax.f32 %v287, 0.0
        %v320 = vmax.f32 %v288, 0.0
        %v321 = vmax.f32 %v289, 0.0
        %v322 = vmax.f32 %v290, 0.0
        %v323 = vmax.f32 %v291, 0.0
        %v324 = vmax.f32 %v292, 0.0
        %v325 = vmax.f32 %v293, 0.0
        %v326 = vmax.f32 %v294, 0.0
        %v327 = vmax.f32 %v295, 0.0
        %v328 = vmax.f32 %v296, 0.0
        %v329 = vmax.f32 %v297, 0.0
        %v330 = vmax.f32 %v298, 0.0
        %v331 = vmax.f32 %v299, 0.0
        %v332 = vmax.f32 %v300, 0.0
        %s333 = scalar_lea.vmem [#allocation2], 24
        %334 = vst.msk [vmem:[%s333 + $0x1] sm:$0xff] %vm223, %v301
        %335 = vst.msk [vmem:[%s333 + $0x9] sm:$0xff] %vm223, %v302
        %336 = vst.msk [vmem:[%s333 + $0x19] sm:$0xff] %vm223, %v303
        %337 = vst.msk [vmem:[%s333 + $0x21] sm:$0xff] %vm223, %v304
        %338 = vst.msk [vmem:[%s333 + $0x31] sm:$0xff] %vm223, %v305
        %339 = vst.msk [vmem:[%s333 + $0x39] sm:$0xff] %vm223, %v306
        %340 = vst.msk [vmem:[%s333 + $0x49] sm:$0xff] %vm223, %v307
        %341 = vst.msk [vmem:[%s333 + $0x51] sm:$0xff] %vm223, %v308
        %342 = vst.msk [vmem:[%s333 + $0x61] sm:$0xff] %vm223, %v309
        %343 = vst.msk [vmem:[%s333 + $0x69] sm:$0xff] %vm223, %v310
        %344 = vst.msk [vmem:[%s333 + $0x79] sm:$0xff] %vm223, %v311
        %345 = vst.msk [vmem:[%s333 + $0x81] sm:$0xff] %vm223, %v312
        %346 = vst.msk [vmem:[%s333 + $0x91] sm:$0xff] %vm223, %v313
        %347 = vst.msk [vmem:[%s333 + $0x99] sm:$0xff] %vm223, %v314
        %348 = vst.msk [vmem:[%s333 + $0xa9] sm:$0xff] %vm223, %v315
        %349 = vst.msk [vmem:[%s333 + $0xb1] sm:$0xff] %vm223, %v316
        %350 = vst.msk [vmem:[%s333 + $0xc1] sm:$0xff] %vm223, %v317
        %351 = vst.msk [vmem:[%s333 + $0xc9] sm:$0xff] %vm223, %v318
        %352 = vst.msk [vmem:[%s333 + $0xd9] sm:$0xff] %vm223, %v319
        %353 = vst.msk [vmem:[%s333 + $0xe1] sm:$0xff] %vm223, %v320
        %354 = vst.msk [vmem:[%s333 + $0xf1] sm:$0xff] %vm223, %v321
        %355 = vst.msk [vmem:[%s333 + $0xf9] sm:$0xff] %vm223, %v322
        %356 = vst.msk [vmem:[%s333 + $0x109] sm:$0xff] %vm223, %v323
        %357 = vst.msk [vmem:[%s333 + $0x111] sm:$0xff] %vm223, %v324
        %358 = vst.msk [vmem:[%s333 + $0x121] sm:$0xff] %vm223, %v325
        %359 = vst.msk [vmem:[%s333 + $0x129] sm:$0xff] %vm223, %v326
        %360 = vst.msk [vmem:[%s333 + $0x139] sm:$0xff] %vm223, %v327
        %361 = vst.msk [vmem:[%s333 + $0x141] sm:$0xff] %vm223, %v328
        %362 = vst.msk [vmem:[%s333 + $0x151] sm:$0xff] %vm223, %v329
        %363 = vst.msk [vmem:[%s333 + $0x159] sm:$0xff] %vm223, %v330
        %364 = vst.msk [vmem:[%s333 + $0x169] sm:$0xff] %vm223, %v331
        %365 = vst.msk [vmem:[%s333 + $0x171] sm:$0xff] %vm223, %v332
        %v366 = vld [vmem:[#allocation2] sm:$0xff]
        %v367 = vld [vmem:[#allocation2 + $0x8] sm:$0xff]
        %v368 = vld [vmem:[#allocation2 + $0x18] sm:$0xff]
        %v369 = vld [vmem:[#allocation2 + $0x20] sm:$0xff]
        %v370 = vld [vmem:[#allocation2 + $0x30] sm:$0xff]
        %v371 = vld [vmem:[#allocation2 + $0x38] sm:$0xff]
        %v372 = vld [vmem:[#allocation2 + $0x48] sm:$0xff]
        %v373 = vld [vmem:[#allocation2 + $0x50] sm:$0xff]
        %v374 = vld [vmem:[#allocation2 + $0x60] sm:$0xff]
        %v375 = vld [vmem:[#allocation2 + $0x68] sm:$0xff]
        %v376 = vld [vmem:[#allocation2 + $0x78] sm:$0xff]
        %v377 = vld [vmem:[#allocation2 + $0x80] sm:$0xff]
        %v378 = vld [vmem:[#allocation2 + $0x90] sm:$0xff]
        %v379 = vld [vmem:[#allocation2 + $0x98] sm:$0xff]
        %v380 = vld [vmem:[#allocation2 + $0xa8] sm:$0xff]
        %v381 = vld [vmem:[#allocation2 + $0xb0] sm:$0xff]
        %v382 = vld [vmem:[#allocation2 + $0xc0] sm:$0xff]
        %v383 = vld [vmem:[#allocation2 + $0xc8] sm:$0xff]
        %v384 = vld [vmem:[#allocation2 + $0xd8] sm:$0xff]
        %v385 = vld [vmem:[#allocation2 + $0xe0] sm:$0xff]
        %v386 = vld [vmem:[#allocation2 + $0xf0] sm:$0xff]
        %v387 = vld [vmem:[#allocation2 + $0xf8] sm:$0xff]
        %v388 = vld [vmem:[#allocation2 + $0x108] sm:$0xff]
        %v389 = vld [vmem:[#allocation2 + $0x110] sm:$0xff]
        %v390 = vld [vmem:[#allocation2 + $0x120] sm:$0xff]
        %v391 = vld [vmem:[#allocation2 + $0x128] sm:$0xff]
        %v392 = vld [vmem:[#allocation2 + $0x138] sm:$0xff]
        %v393 = vld [vmem:[#allocation2 + $0x140] sm:$0xff]
        %v394 = vld [vmem:[#allocation2 + $0x150] sm:$0xff]
        %v395 = vld [vmem:[#allocation2 + $0x158] sm:$0xff]
        %v396 = vld [vmem:[#allocation2 + $0x168] sm:$0xff]
        %v397 = vld [vmem:[#allocation2 + $0x170] sm:$0xff]
        %398 = vst.msk [vmem:[#allocation3] sm:$0xff] %vm223, %v366
        %399 = vst.msk [vmem:[#allocation3 + $0x28] sm:$0xff] %vm223, %v367
        %400 = vst.msk [vmem:[#allocation3 + $0x50] sm:$0xff] %vm223, %v368
        %401 = vst.msk [vmem:[#allocation3 + $0x78] sm:$0xff] %vm223, %v369
        %402 = vst.msk [vmem:[#allocation3 + $0xa0] sm:$0xff] %vm223, %v370
        %403 = vst.msk [vmem:[#allocation3 + $0xc8] sm:$0xff] %vm223, %v371
        %404 = vst.msk [vmem:[#allocation3 + $0xf0] sm:$0xff] %vm223, %v372
        %405 = vst.msk [vmem:[#allocation3 + $0x118] sm:$0xff] %vm223, %v373
        %406 = vst.msk [vmem:[#allocation3 + $0x140] sm:$0xff] %vm223, %v374
        %407 = vst.msk [vmem:[#allocation3 + $0x168] sm:$0xff] %vm223, %v375
        %408 = vst.msk [vmem:[#allocation3 + $0x190] sm:$0xff] %vm223, %v376
        %409 = vst.msk [vmem:[#allocation3 + $0x1b8] sm:$0xff] %vm223, %v377
        %410 = vst.msk [vmem:[#allocation3 + $0x1e0] sm:$0xff] %vm223, %v378
        %411 = vst.msk [vmem:[#allocation3 + $0x208] sm:$0xff] %vm223, %v379
        %412 = vst.msk [vmem:[#allocation3 + $0x230] sm:$0xff] %vm223, %v380
        %413 = vst.msk [vmem:[#allocation3 + $0x258] sm:$0xff] %vm223, %v381
        %414 = vst.msk [vmem:[#allocation3 + $0x280] sm:$0xff] %vm223, %v382
        %415 = vst.msk [vmem:[#allocation3 + $0x2a8] sm:$0xff] %vm223, %v383
        %416 = vst.msk [vmem:[#allocation3 + $0x2d0] sm:$0xff] %vm223, %v384
        %417 = vst.msk [vmem:[#allocation3 + $0x2f8] sm:$0xff] %vm223, %v385
        %418 = vst.msk [vmem:[#allocation3 + $0x320] sm:$0xff] %vm223, %v386
        %419 = vst.msk [vmem:[#allocation3 + $0x348] sm:$0xff] %vm223, %v387
        %420 = vst.msk [vmem:[#allocation3 + $0x370] sm:$0xff] %vm223, %v388
        %421 = vst.msk [vmem:[#allocation3 + $0x398] sm:$0xff] %vm223, %v389
        %422 = vst.msk [vmem:[#allocation3 + $0x3c0] sm:$0xff] %vm223, %v390
        %423 = vst.msk [vmem:[#allocation3 + $0x3e8] sm:$0xff] %vm223, %v391
        %424 = vst.msk [vmem:[#allocation3 + $0x410] sm:$0xff] %vm223, %v392
        %425 = vst.msk [vmem:[#allocation3 + $0x438] sm:$0xff] %vm223, %v393
        %426 = vst.msk [vmem:[#allocation3 + $0x460] sm:$0xff] %vm223, %v394
        %427 = vst.msk [vmem:[#allocation3 + $0x488] sm:$0xff] %vm223, %v395
        %428 = vst.msk [vmem:[#allocation3 + $0x4b0] sm:$0xff] %vm223, %v396
        %429 = vst.msk [vmem:[#allocation3 + $0x4d8] sm:$0xff] %vm223, %v397
        %v430 = vld [vmem:[#allocation2 + $0x1] sm:$0xff]
        %v431 = vld [vmem:[#allocation2 + $0x9] sm:$0xff]
        %v432 = vld [vmem:[#allocation2 + $0x19] sm:$0xff]
        %v433 = vld [vmem:[#allocation2 + $0x21] sm:$0xff]
        %v434 = vld [vmem:[#allocation2 + $0x31] sm:$0xff]
        %v435 = vld [vmem:[#allocation2 + $0x39] sm:$0xff]
        %v436 = vld [vmem:[#allocation2 + $0x49] sm:$0xff]
        %v437 = vld [vmem:[#allocation2 + $0x51] sm:$0xff]
        %v438 = vld [vmem:[#allocation2 + $0x61] sm:$0xff]
        %v439 = vld [vmem:[#allocation2 + $0x69] sm:$0xff]
        %v440 = vld [vmem:[#allocation2 + $0x79] sm:$0xff]
        %v441 = vld [vmem:[#allocation2 + $0x81] sm:$0xff]
        %v442 = vld [vmem:[#allocation2 + $0x91] sm:$0xff]
        %v443 = vld [vmem:[#allocation2 + $0x99] sm:$0xff]
        %v444 = vld [vmem:[#allocation2 + $0xa9] sm:$0xff]
        %v445 = vld [vmem:[#allocation2 + $0xb1] sm:$0xff]
        %v446 = vld [vmem:[#allocation2 + $0xc1] sm:$0xff]
        %v447 = vld [vmem:[#allocation2 + $0xc9] sm:$0xff]
        %v448 = vld [vmem:[#allocation2 + $0xd9] sm:$0xff]
        %v449 = vld [vmem:[#allocation2 + $0xe1] sm:$0xff]
        %v450 = vld [vmem:[#allocation2 + $0xf1] sm:$0xff]
        %v451 = vld [vmem:[#allocation2 + $0xf9] sm:$0xff]
        %v452 = vld [vmem:[#allocation2 + $0x109] sm:$0xff]
        %v453 = vld [vmem:[#allocation2 + $0x111] sm:$0xff]
        %v454 = vld [vmem:[#allocation2 + $0x121] sm:$0xff]
        %v455 = vld [vmem:[#allocation2 + $0x129] sm:$0xff]
        %v456 = vld [vmem:[#allocation2 + $0x139] sm:$0xff]
        %v457 = vld [vmem:[#allocation2 + $0x141] sm:$0xff]
        %v458 = vld [vmem:[#allocation2 + $0x151] sm:$0xff]
        %v459 = vld [vmem:[#allocation2 + $0x159] sm:$0xff]
        %v460 = vld [vmem:[#allocation2 + $0x169] sm:$0xff]
        %v461 = vld [vmem:[#allocation2 + $0x171] sm:$0xff]
        %494 = vrot.lane.b32.xlu0 %v430, 64
        %v495 = vpop.permute.xlu0 %494
        %496 = vrot.lane.b32.xlu0 %v431, 64
        %v497 = vpop.permute.xlu0 %496
        %498 = vrot.lane.b32.xlu0 %v432, 64
        %v499 = vpop.permute.xlu0 %498
        %500 = vrot.lane.b32.xlu0 %v433, 64
        %v501 = vpop.permute.xlu0 %500
        %502 = vrot.lane.b32.xlu0 %v434, 64
        %v503 = vpop.permute.xlu0 %502
        %504 = vrot.lane.b32.xlu0 %v435, 64
        %v505 = vpop.permute.xlu0 %504
        %506 = vrot.lane.b32.xlu0 %v436, 64
        %v507 = vpop.permute.xlu0 %506
        %508 = vrot.lane.b32.xlu0 %v437, 64
        %v509 = vpop.permute.xlu0 %508
        %510 = vrot.lane.b32.xlu0 %v438, 64
        %v511 = vpop.permute.xlu0 %510
        %512 = vrot.lane.b32.xlu0 %v439, 64
        %v513 = vpop.permute.xlu0 %512
        %514 = vrot.lane.b32.xlu0 %v440, 64
        %v515 = vpop.permute.xlu0 %514
        %516 = vrot.lane.b32.xlu0 %v441, 64
        %v517 = vpop.permute.xlu0 %516
        %518 = vrot.lane.b32.xlu0 %v442, 64
        %v519 = vpop.permute.xlu0 %518
        %520 = vrot.lane.b32.xlu0 %v443, 64
        %v521 = vpop.permute.xlu0 %520
        %522 = vrot.lane.b32.xlu0 %v444, 64
        %v523 = vpop.permute.xlu0 %522
        %524 = vrot.lane.b32.xlu0 %v445, 64
        %v525 = vpop.permute.xlu0 %524
        %526 = vrot.lane.b32.xlu0 %v446, 64
        %v527 = vpop.permute.xlu0 %526
        %528 = vrot.lane.b32.xlu0 %v447, 64
        %v529 = vpop.permute.xlu0 %528
        %530 = vrot.lane.b32.xlu0 %v448, 64
        %v531 = vpop.permute.xlu0 %530
        %532 = vrot.lane.b32.xlu0 %v449, 64
        %v533 = vpop.permute.xlu0 %532
        %534 = vrot.lane.b32.xlu0 %v450, 64
        %v535 = vpop.permute.xlu0 %534
        %536 = vrot.lane.b32.xlu0 %v451, 64
        %v537 = vpop.permute.xlu0 %536
        %538 = vrot.lane.b32.xlu0 %v452, 64
        %v539 = vpop.permute.xlu0 %538
        %540 = vrot.lane.b32.xlu0 %v453, 64
        %v541 = vpop.permute.xlu0 %540
        %542 = vrot.lane.b32.xlu0 %v454, 64
        %v543 = vpop.permute.xlu0 %542
        %544 = vrot.lane.b32.xlu0 %v455, 64
        %v545 = vpop.permute.xlu0 %544
        %546 = vrot.lane.b32.xlu0 %v456, 64
        %v547 = vpop.permute.xlu0 %546
        %548 = vrot.lane.b32.xlu0 %v457, 64
        %v549 = vpop.permute.xlu0 %548
        %550 = vrot.lane.b32.xlu0 %v458, 64
        %v551 = vpop.permute.xlu0 %550
        %552 = vrot.lane.b32.xlu0 %v459, 64
        %v553 = vpop.permute.xlu0 %552
        %554 = vrot.lane.b32.xlu0 %v460, 64
        %v555 = vpop.permute.xlu0 %554
        %556 = vrot.lane.b32.xlu0 %v461, 64
        %v557 = vpop.permute.xlu0 %556
        %vm590 = vcmask 1048064
        %591 = vst.msk [vmem:[#allocation3] sm:$0xff] %vm590, %v495
        %592 = vst.msk [vmem:[#allocation3 + $0x28] sm:$0xff] %vm590, %v497
        %593 = vst.msk [vmem:[#allocation3 + $0x50] sm:$0xff] %vm590, %v499
        %594 = vst.msk [vmem:[#allocation3 + $0x78] sm:$0xff] %vm590, %v501
        %595 = vst.msk [vmem:[#allocation3 + $0xa0] sm:$0xff] %vm590, %v503
        %596 = vst.msk [vmem:[#allocation3 + $0xc8] sm:$0xff] %vm590, %v505
        %597 = vst.msk [vmem:[#allocation3 + $0xf0] sm:$0xff] %vm590, %v507
        %598 = vst.msk [vmem:[#allocation3 + $0x118] sm:$0xff] %vm590, %v509
        %599 = vst.msk [vmem:[#allocation3 + $0x140] sm:$0xff] %vm590, %v511
        %600 = vst.msk [vmem:[#allocation3 + $0x168] sm:$0xff] %vm590, %v513
        %601 = vst.msk [vmem:[#allocation3 + $0x190] sm:$0xff] %vm590, %v515
        %602 = vst.msk [vmem:[#allocation3 + $0x1b8] sm:$0xff] %vm590, %v517
        %603 = vst.msk [vmem:[#allocation3 + $0x1e0] sm:$0xff] %vm590, %v519
        %604 = vst.msk [vmem:[#allocation3 + $0x208] sm:$0xff] %vm590, %v521
        %605 = vst.msk [vmem:[#allocation3 + $0x230] sm:$0xff] %vm590, %v523
        %606 = vst.msk [vmem:[#allocation3 + $0x258] sm:$0xff] %vm590, %v525
        %607 = vst.msk [vmem:[#allocation3 + $0x280] sm:$0xff] %vm590, %v527
        %608 = vst.msk [vmem:[#allocation3 + $0x2a8] sm:$0xff] %vm590, %v529
        %609 = vst.msk [vmem:[#allocation3 + $0x2d0] sm:$0xff] %vm590, %v531
        %610 = vst.msk [vmem:[#allocation3 + $0x2f8] sm:$0xff] %vm590, %v533
        %611 = vst.msk [vmem:[#allocation3 + $0x320] sm:$0xff] %vm590, %v535
        %612 = vst.msk [vmem:[#allocation3 + $0x348] sm:$0xff] %vm590, %v537
        %613 = vst.msk [vmem:[#allocation3 + $0x370] sm:$0xff] %vm590, %v539
        %614 = vst.msk [vmem:[#allocation3 + $0x398] sm:$0xff] %vm590, %v541
        %615 = vst.msk [vmem:[#allocation3 + $0x3c0] sm:$0xff] %vm590, %v543
        %616 = vst.msk [vmem:[#allocation3 + $0x3e8] sm:$0xff] %vm590, %v545
        %617 = vst.msk [vmem:[#allocation3 + $0x410] sm:$0xff] %vm590, %v547
        %618 = vst.msk [vmem:[#allocation3 + $0x438] sm:$0xff] %vm590, %v549
        %619 = vst.msk [vmem:[#allocation3 + $0x460] sm:$0xff] %vm590, %v551
        %620 = vst.msk [vmem:[#allocation3 + $0x488] sm:$0xff] %vm590, %v553
        %621 = vst.msk [vmem:[#allocation3 + $0x4b0] sm:$0xff] %vm590, %v555
        %622 = vst.msk [vmem:[#allocation3 + $0x4d8] sm:$0xff] %vm590, %v557
        %v623 = vld [vmem:[#allocation2 + $0x2] sm:$0xff]
        %v624 = vld [vmem:[#allocation2 + $0xa] sm:$0xff]
        %v625 = vld [vmem:[#allocation2 + $0x1a] sm:$0xff]
        %v626 = vld [vmem:[#allocation2 + $0x22] sm:$0xff]
        %v627 = vld [vmem:[#allocation2 + $0x32] sm:$0xff]
        %v628 = vld [vmem:[#allocation2 + $0x3a] sm:$0xff]
        %v629 = vld [vmem:[#allocation2 + $0x4a] sm:$0xff]
        %v630 = vld [vmem:[#allocation2 + $0x52] sm:$0xff]
        %v631 = vld [vmem:[#allocation2 + $0x62] sm:$0xff]
        %v632 = vld [vmem:[#allocation2 + $0x6a] sm:$0xff]
        %v633 = vld [vmem:[#allocation2 + $0x7a] sm:$0xff]
        %v634 = vld [vmem:[#allocation2 + $0x82] sm:$0xff]
        %v635 = vld [vmem:[#allocation2 + $0x92] sm:$0xff]
        %v636 = vld [vmem:[#allocation2 + $0x9a] sm:$0xff]
        %v637 = vld [vmem:[#allocation2 + $0xaa] sm:$0xff]
        %v638 = vld [vmem:[#allocation2 + $0xb2] sm:$0xff]
        %v639 = vld [vmem:[#allocation2 + $0xc2] sm:$0xff]
        %v640 = vld [vmem:[#allocation2 + $0xca] sm:$0xff]
        %v641 = vld [vmem:[#allocation2 + $0xda] sm:$0xff]
        %v642 = vld [vmem:[#allocation2 + $0xe2] sm:$0xff]
        %v643 = vld [vmem:[#allocation2 + $0xf2] sm:$0xff]
        %v644 = vld [vmem:[#allocation2 + $0xfa] sm:$0xff]
        %v645 = vld [vmem:[#allocation2 + $0x10a] sm:$0xff]
        %v646 = vld [vmem:[#allocation2 + $0x112] sm:$0xff]
        %v647 = vld [vmem:[#allocation2 + $0x122] sm:$0xff]
        %v648 = vld [vmem:[#allocation2 + $0x12a] sm:$0xff]
        %v649 = vld [vmem:[#allocation2 + $0x13a] sm:$0xff]
        %v650 = vld [vmem:[#allocation2 + $0x142] sm:$0xff]
        %v651 = vld [vmem:[#allocation2 + $0x152] sm:$0xff]
        %v652 = vld [vmem:[#allocation2 + $0x15a] sm:$0xff]
        %v653 = vld [vmem:[#allocation2 + $0x16a] sm:$0xff]
        %v654 = vld [vmem:[#allocation2 + $0x172] sm:$0xff]
        %655 = vst.msk [vmem:[#allocation3 + $0x8] sm:$0xff] %vm223, %v623
        %656 = vst.msk [vmem:[#allocation3 + $0x30] sm:$0xff] %vm223, %v624
        %657 = vst.msk [vmem:[#allocation3 + $0x58] sm:$0xff] %vm223, %v625
        %658 = vst.msk [vmem:[#allocation3 + $0x80] sm:$0xff] %vm223, %v626
        %659 = vst.msk [vmem:[#allocation3 + $0xa8] sm:$0xff] %vm223, %v627
        %660 = vst.msk [vmem:[#allocation3 + $0xd0] sm:$0xff] %vm223, %v628
        %661 = vst.msk [vmem:[#allocation3 + $0xf8] sm:$0xff] %vm223, %v629
        %662 = vst.msk [vmem:[#allocation3 + $0x120] sm:$0xff] %vm223, %v630
        %663 = vst.msk [vmem:[#allocation3 + $0x148] sm:$0xff] %vm223, %v631
        %664 = vst.msk [vmem:[#allocation3 + $0x170] sm:$0xff] %vm223, %v632
        %665 = vst.msk [vmem:[#allocation3 + $0x198] sm:$0xff] %vm223, %v633
        %666 = vst.msk [vmem:[#allocation3 + $0x1c0] sm:$0xff] %vm223, %v634
        %667 = vst.msk [vmem:[#allocation3 + $0x1e8] sm:$0xff] %vm223, %v635
        %668 = vst.msk [vmem:[#allocation3 + $0x210] sm:$0xff] %vm223, %v636
        %669 = vst.msk [vmem:[#allocation3 + $0x238] sm:$0xff] %vm223, %v637
        %670 = vst.msk [vmem:[#allocation3 + $0x260] sm:$0xff] %vm223, %v638
        %671 = vst.msk [vmem:[#allocation3 + $0x288] sm:$0xff] %vm223, %v639
        %672 = vst.msk [vmem:[#allocation3 + $0x2b0] sm:$0xff] %vm223, %v640
        %673 = vst.msk [vmem:[#allocation3 + $0x2d8] sm:$0xff] %vm223, %v641
        %674 = vst.msk [vmem:[#allocation3 + $0x300] sm:$0xff] %vm223, %v642
        %675 = vst.msk [vmem:[#allocation3 + $0x328] sm:$0xff] %vm223, %v643
        %676 = vst.msk [vmem:[#allocation3 + $0x350] sm:$0xff] %vm223, %v644
        %677 = vst.msk [vmem:[#allocation3 + $0x378] sm:$0xff] %vm223, %v645
        %678 = vst.msk [vmem:[#allocation3 + $0x3a0] sm:$0xff] %vm223, %v646
        %679 = vst.msk [vmem:[#allocation3 + $0x3c8] sm:$0xff] %vm223, %v647
        %680 = vst.msk [vmem:[#allocation3 + $0x3f0] sm:$0xff] %vm223, %v648
        %681 = vst.msk [vmem:[#allocation3 + $0x418] sm:$0xff] %vm223, %v649
        %682 = vst.msk [vmem:[#allocation3 + $0x440] sm:$0xff] %vm223, %v650
        %683 = vst.msk [vmem:[#allocation3 + $0x468] sm:$0xff] %vm223, %v651
        %684 = vst.msk [vmem:[#allocation3 + $0x490] sm:$0xff] %vm223, %v652
        %685 = vst.msk [vmem:[#allocation3 + $0x4b8] sm:$0xff] %vm223, %v653
        %686 = vst.msk [vmem:[#allocation3 + $0x4e0] sm:$0xff] %vm223, %v654
        %v687 = vld [vmem:[%s333] sm:$0xff]
        %v688 = vld [vmem:[%s333 + $0x8] sm:$0xff]
        %v689 = vld [vmem:[%s333 + $0x18] sm:$0xff]
        %v690 = vld [vmem:[%s333 + $0x20] sm:$0xff]
        %v691 = vld [vmem:[%s333 + $0x30] sm:$0xff]
        %v692 = vld [vmem:[%s333 + $0x38] sm:$0xff]
        %v693 = vld [vmem:[%s333 + $0x48] sm:$0xff]
        %v694 = vld [vmem:[%s333 + $0x50] sm:$0xff]
        %v695 = vld [vmem:[%s333 + $0x60] sm:$0xff]
        %v696 = vld [vmem:[%s333 + $0x68] sm:$0xff]
        %v697 = vld [vmem:[%s333 + $0x78] sm:$0xff]
        %v698 = vld [vmem:[%s333 + $0x80] sm:$0xff]
        %v699 = vld [vmem:[%s333 + $0x90] sm:$0xff]
        %v700 = vld [vmem:[%s333 + $0x98] sm:$0xff]
        %v701 = vld [vmem:[%s333 + $0xa8] sm:$0xff]
        %v702 = vld [vmem:[%s333 + $0xb0] sm:$0xff]
        %v703 = vld [vmem:[%s333 + $0xc0] sm:$0xff]
        %v704 = vld [vmem:[%s333 + $0xc8] sm:$0xff]
        %v705 = vld [vmem:[%s333 + $0xd8] sm:$0xff]
        %v706 = vld [vmem:[%s333 + $0xe0] sm:$0xff]
        %v707 = vld [vmem:[%s333 + $0xf0] sm:$0xff]
        %v708 = vld [vmem:[%s333 + $0xf8] sm:$0xff]
        %v709 = vld [vmem:[%s333 + $0x108] sm:$0xff]
        %v710 = vld [vmem:[%s333 + $0x110] sm:$0xff]
        %v711 = vld [vmem:[%s333 + $0x120] sm:$0xff]
        %v712 = vld [vmem:[%s333 + $0x128] sm:$0xff]
        %v713 = vld [vmem:[%s333 + $0x138] sm:$0xff]
        %v714 = vld [vmem:[%s333 + $0x140] sm:$0xff]
        %v715 = vld [vmem:[%s333 + $0x150] sm:$0xff]
        %v716 = vld [vmem:[%s333 + $0x158] sm:$0xff]
        %v717 = vld [vmem:[%s333 + $0x168] sm:$0xff]
        %v718 = vld [vmem:[%s333 + $0x170] sm:$0xff]
        %751 = vrot.lane.b32.xlu0 %v687, 64
        %v752 = vpop.permute.xlu0 %751
        %753 = vrot.lane.b32.xlu0 %v688, 64
        %v754 = vpop.permute.xlu0 %753
        %755 = vrot.lane.b32.xlu0 %v689, 64
        %v756 = vpop.permute.xlu0 %755
        %757 = vrot.lane.b32.xlu0 %v690, 64
        %v758 = vpop.permute.xlu0 %757
        %759 = vrot.lane.b32.xlu0 %v691, 64
        %v760 = vpop.permute.xlu0 %759
        %761 = vrot.lane.b32.xlu0 %v692, 64
        %v762 = vpop.permute.xlu0 %761
        %763 = vrot.lane.b32.xlu0 %v693, 64
        %v764 = vpop.permute.xlu0 %763
        %765 = vrot.lane.b32.xlu0 %v694, 64
        %v766 = vpop.permute.xlu0 %765
        %767 = vrot.lane.b32.xlu0 %v695, 64
        %v768 = vpop.permute.xlu0 %767
        %769 = vrot.lane.b32.xlu0 %v696, 64
        %v770 = vpop.permute.xlu0 %769
        %771 = vrot.lane.b32.xlu0 %v697, 64
        %v772 = vpop.permute.xlu0 %771
        %773 = vrot.lane.b32.xlu0 %v698, 64
        %v774 = vpop.permute.xlu0 %773
        %775 = vrot.lane.b32.xlu0 %v699, 64
        %v776 = vpop.permute.xlu0 %775
        %777 = vrot.lane.b32.xlu0 %v700, 64
        %v778 = vpop.permute.xlu0 %777
        %779 = vrot.lane.b32.xlu0 %v701, 64
        %v780 = vpop.permute.xlu0 %779
        %781 = vrot.lane.b32.xlu0 %v702, 64
        %v782 = vpop.permute.xlu0 %781
        %783 = vrot.lane.b32.xlu0 %v703, 64
        %v784 = vpop.permute.xlu0 %783
        %785 = vrot.lane.b32.xlu0 %v704, 64
        %v786 = vpop.permute.xlu0 %785
        %787 = vrot.lane.b32.xlu0 %v705, 64
        %v788 = vpop.permute.xlu0 %787
        %789 = vrot.lane.b32.xlu0 %v706, 64
        %v790 = vpop.permute.xlu0 %789
        %791 = vrot.lane.b32.xlu0 %v707, 64
        %v792 = vpop.permute.xlu0 %791
        %793 = vrot.lane.b32.xlu0 %v708, 64
        %v794 = vpop.permute.xlu0 %793
        %795 = vrot.lane.b32.xlu0 %v709, 64
        %v796 = vpop.permute.xlu0 %795
        %797 = vrot.lane.b32.xlu0 %v710, 64
        %v798 = vpop.permute.xlu0 %797
        %799 = vrot.lane.b32.xlu0 %v711, 64
        %v800 = vpop.permute.xlu0 %799
        %801 = vrot.lane.b32.xlu0 %v712, 64
        %v802 = vpop.permute.xlu0 %801
        %803 = vrot.lane.b32.xlu0 %v713, 64
        %v804 = vpop.permute.xlu0 %803
        %805 = vrot.lane.b32.xlu0 %v714, 64
        %v806 = vpop.permute.xlu0 %805
        %807 = vrot.lane.b32.xlu0 %v715, 64
        %v808 = vpop.permute.xlu0 %807
        %809 = vrot.lane.b32.xlu0 %v716, 64
        %v810 = vpop.permute.xlu0 %809
        %811 = vrot.lane.b32.xlu0 %v717, 64
        %v812 = vpop.permute.xlu0 %811
        %813 = vrot.lane.b32.xlu0 %v718, 64
        %v814 = vpop.permute.xlu0 %813
        %847 = vst.msk [vmem:[#allocation3 + $0x8] sm:$0xff] %vm590, %v752
        %848 = vst.msk [vmem:[#allocation3 + $0x30] sm:$0xff] %vm590, %v754
        %849 = vst.msk [vmem:[#allocation3 + $0x58] sm:$0xff] %vm590, %v756
        %850 = vst.msk [vmem:[#allocation3 + $0x80] sm:$0xff] %vm590, %v758
        %851 = vst.msk [vmem:[#allocation3 + $0xa8] sm:$0xff] %vm590, %v760
        %852 = vst.msk [vmem:[#allocation3 + $0xd0] sm:$0xff] %vm590, %v762
        %853 = vst.msk [vmem:[#allocation3 + $0xf8] sm:$0xff] %vm590, %v764
        %854 = vst.msk [vmem:[#allocation3 + $0x120] sm:$0xff] %vm590, %v766
        %855 = vst.msk [vmem:[#allocation3 + $0x148] sm:$0xff] %vm590, %v768
        %856 = vst.msk [vmem:[#allocation3 + $0x170] sm:$0xff] %vm590, %v770
        %857 = vst.msk [vmem:[#allocation3 + $0x198] sm:$0xff] %vm590, %v772
        %858 = vst.msk [vmem:[#allocation3 + $0x1c0] sm:$0xff] %vm590, %v774
        %859 = vst.msk [vmem:[#allocation3 + $0x1e8] sm:$0xff] %vm590, %v776
        %860 = vst.msk [vmem:[#allocation3 + $0x210] sm:$0xff] %vm590, %v778
        %861 = vst.msk [vmem:[#allocation3 + $0x238] sm:$0xff] %vm590, %v780
        %862 = vst.msk [vmem:[#allocation3 + $0x260] sm:$0xff] %vm590, %v782
        %863 = vst.msk [vmem:[#allocation3 + $0x288] sm:$0xff] %vm590, %v784
        %864 = vst.msk [vmem:[#allocation3 + $0x2b0] sm:$0xff] %vm590, %v786
        %865 = vst.msk [vmem:[#allocation3 + $0x2d8] sm:$0xff] %vm590, %v788
        %866 = vst.msk [vmem:[#allocation3 + $0x300] sm:$0xff] %vm590, %v790
        %867 = vst.msk [vmem:[#allocation3 + $0x328] sm:$0xff] %vm590, %v792
        %868 = vst.msk [vmem:[#allocation3 + $0x350] sm:$0xff] %vm590, %v794
        %869 = vst.msk [vmem:[#allocation3 + $0x378] sm:$0xff] %vm590, %v796
        %870 = vst.msk [vmem:[#allocation3 + $0x3a0] sm:$0xff] %vm590, %v798
        %871 = vst.msk [vmem:[#allocation3 + $0x3c8] sm:$0xff] %vm590, %v800
        %872 = vst.msk [vmem:[#allocation3 + $0x3f0] sm:$0xff] %vm590, %v802
        %873 = vst.msk [vmem:[#allocation3 + $0x418] sm:$0xff] %vm590, %v804
        %874 = vst.msk [vmem:[#allocation3 + $0x440] sm:$0xff] %vm590, %v806
        %875 = vst.msk [vmem:[#allocation3 + $0x468] sm:$0xff] %vm590, %v808
        %876 = vst.msk [vmem:[#allocation3 + $0x490] sm:$0xff] %vm590, %v810
        %877 = vst.msk [vmem:[#allocation3 + $0x4b8] sm:$0xff] %vm590, %v812
        %878 = vst.msk [vmem:[#allocation3 + $0x4e0] sm:$0xff] %vm590, %v814
        %v879 = vld [vmem:[%s333 + $0x1] sm:$0xff]
        %v880 = vld [vmem:[%s333 + $0x9] sm:$0xff]
        %v881 = vld [vmem:[%s333 + $0x19] sm:$0xff]
        %v882 = vld [vmem:[%s333 + $0x21] sm:$0xff]
        %v883 = vld [vmem:[%s333 + $0x31] sm:$0xff]
        %v884 = vld [vmem:[%s333 + $0x39] sm:$0xff]
        %v885 = vld [vmem:[%s333 + $0x49] sm:$0xff]
        %v886 = vld [vmem:[%s333 + $0x51] sm:$0xff]
        %v887 = vld [vmem:[%s333 + $0x61] sm:$0xff]
        %v888 = vld [vmem:[%s333 + $0x69] sm:$0xff]
        %v889 = vld [vmem:[%s333 + $0x79] sm:$0xff]
        %v890 = vld [vmem:[%s333 + $0x81] sm:$0xff]
        %v891 = vld [vmem:[%s333 + $0x91] sm:$0xff]
        %v892 = vld [vmem:[%s333 + $0x99] sm:$0xff]
        %v893 = vld [vmem:[%s333 + $0xa9] sm:$0xff]
        %v894 = vld [vmem:[%s333 + $0xb1] sm:$0xff]
        %v895 = vld [vmem:[%s333 + $0xc1] sm:$0xff]
        %v896 = vld [vmem:[%s333 + $0xc9] sm:$0xff]
        %v897 = vld [vmem:[%s333 + $0xd9] sm:$0xff]
        %v898 = vld [vmem:[%s333 + $0xe1] sm:$0xff]
        %v899 = vld [vmem:[%s333 + $0xf1] sm:$0xff]
        %v900 = vld [vmem:[%s333 + $0xf9] sm:$0xff]
        %v901 = vld [vmem:[%s333 + $0x109] sm:$0xff]
        %v902 = vld [vmem:[%s333 + $0x111] sm:$0xff]
        %v903 = vld [vmem:[%s333 + $0x121] sm:$0xff]
        %v904 = vld [vmem:[%s333 + $0x129] sm:$0xff]
        %v905 = vld [vmem:[%s333 + $0x139] sm:$0xff]
        %v906 = vld [vmem:[%s333 + $0x141] sm:$0xff]
        %v907 = vld [vmem:[%s333 + $0x151] sm:$0xff]
        %v908 = vld [vmem:[%s333 + $0x159] sm:$0xff]
        %v909 = vld [vmem:[%s333 + $0x169] sm:$0xff]
        %v910 = vld [vmem:[%s333 + $0x171] sm:$0xff]
        %911 = vst.msk [vmem:[#allocation3 + $0x10] sm:$0xff] %vm223, %v879
        %912 = vst.msk [vmem:[#allocation3 + $0x38] sm:$0xff] %vm223, %v880
        %913 = vst.msk [vmem:[#allocation3 + $0x60] sm:$0xff] %vm223, %v881
        %914 = vst.msk [vmem:[#allocation3 + $0x88] sm:$0xff] %vm223, %v882
        %915 = vst.msk [vmem:[#allocation3 + $0xb0] sm:$0xff] %vm223, %v883
        %916 = vst.msk [vmem:[#allocation3 + $0xd8] sm:$0xff] %vm223, %v884
        %917 = vst.msk [vmem:[#allocation3 + $0x100] sm:$0xff] %vm223, %v885
        %918 = vst.msk [vmem:[#allocation3 + $0x128] sm:$0xff] %vm223, %v886
        %919 = vst.msk [vmem:[#allocation3 + $0x150] sm:$0xff] %vm223, %v887
        %920 = vst.msk [vmem:[#allocation3 + $0x178] sm:$0xff] %vm223, %v888
        %921 = vst.msk [vmem:[#allocation3 + $0x1a0] sm:$0xff] %vm223, %v889
        %922 = vst.msk [vmem:[#allocation3 + $0x1c8] sm:$0xff] %vm223, %v890
        %923 = vst.msk [vmem:[#allocation3 + $0x1f0] sm:$0xff] %vm223, %v891
        %924 = vst.msk [vmem:[#allocation3 + $0x218] sm:$0xff] %vm223, %v892
        %925 = vst.msk [vmem:[#allocation3 + $0x240] sm:$0xff] %vm223, %v893
        %926 = vst.msk [vmem:[#allocation3 + $0x268] sm:$0xff] %vm223, %v894
        %927 = vst.msk [vmem:[#allocation3 + $0x290] sm:$0xff] %vm223, %v895
        %928 = vst.msk [vmem:[#allocation3 + $0x2b8] sm:$0xff] %vm223, %v896
        %929 = vst.msk [vmem:[#allocation3 + $0x2e0] sm:$0xff] %vm223, %v897
        %930 = vst.msk [vmem:[#allocation3 + $0x308] sm:$0xff] %vm223, %v898
        %931 = vst.msk [vmem:[#allocation3 + $0x330] sm:$0xff] %vm223, %v899
        %932 = vst.msk [vmem:[#allocation3 + $0x358] sm:$0xff] %vm223, %v900
        %933 = vst.msk [vmem:[#allocation3 + $0x380] sm:$0xff] %vm223, %v901
        %934 = vst.msk [vmem:[#allocation3 + $0x3a8] sm:$0xff] %vm223, %v902
        %935 = vst.msk [vmem:[#allocation3 + $0x3d0] sm:$0xff] %vm223, %v903
        %936 = vst.msk [vmem:[#allocation3 + $0x3f8] sm:$0xff] %vm223, %v904
        %937 = vst.msk [vmem:[#allocation3 + $0x420] sm:$0xff] %vm223, %v905
        %938 = vst.msk [vmem:[#allocation3 + $0x448] sm:$0xff] %vm223, %v906
        %939 = vst.msk [vmem:[#allocation3 + $0x470] sm:$0xff] %vm223, %v907
        %940 = vst.msk [vmem:[#allocation3 + $0x498] sm:$0xff] %vm223, %v908
        %941 = vst.msk [vmem:[#allocation3 + $0x4c0] sm:$0xff] %vm223, %v909
        %942 = vst.msk [vmem:[#allocation3 + $0x4e8] sm:$0xff] %vm223, %v910
        %v943 = vld [vmem:[%s333 + $0x2] sm:$0xff]
        %v944 = vld [vmem:[%s333 + $0xa] sm:$0xff]
        %v945 = vld [vmem:[%s333 + $0x1a] sm:$0xff]
        %v946 = vld [vmem:[%s333 + $0x22] sm:$0xff]
        %v947 = vld [vmem:[%s333 + $0x32] sm:$0xff]
        %v948 = vld [vmem:[%s333 + $0x3a] sm:$0xff]
        %v949 = vld [vmem:[%s333 + $0x4a] sm:$0xff]
        %v950 = vld [vmem:[%s333 + $0x52] sm:$0xff]
        %v951 = vld [vmem:[%s333 + $0x62] sm:$0xff]
        %v952 = vld [vmem:[%s333 + $0x6a] sm:$0xff]
        %v953 = vld [vmem:[%s333 + $0x7a] sm:$0xff]
        %v954 = vld [vmem:[%s333 + $0x82] sm:$0xff]
        %v955 = vld [vmem:[%s333 + $0x92] sm:$0xff]
        %v956 = vld [vmem:[%s333 + $0x9a] sm:$0xff]
        %v957 = vld [vmem:[%s333 + $0xaa] sm:$0xff]
        %v958 = vld [vmem:[%s333 + $0xb2] sm:$0xff]
        %v959 = vld [vmem:[%s333 + $0xc2] sm:$0xff]
        %v960 = vld [vmem:[%s333 + $0xca] sm:$0xff]
        %v961 = vld [vmem:[%s333 + $0xda] sm:$0xff]
        %v962 = vld [vmem:[%s333 + $0xe2] sm:$0xff]
        %v963 = vld [vmem:[%s333 + $0xf2] sm:$0xff]
        %v964 = vld [vmem:[%s333 + $0xfa] sm:$0xff]
        %v965 = vld [vmem:[%s333 + $0x10a] sm:$0xff]
        %v966 = vld [vmem:[%s333 + $0x112] sm:$0xff]
        %v967 = vld [vmem:[%s333 + $0x122] sm:$0xff]
        %v968 = vld [vmem:[%s333 + $0x12a] sm:$0xff]
        %v969 = vld [vmem:[%s333 + $0x13a] sm:$0xff]
        %v970 = vld [vmem:[%s333 + $0x142] sm:$0xff]
        %v971 = vld [vmem:[%s333 + $0x152] sm:$0xff]
        %v972 = vld [vmem:[%s333 + $0x15a] sm:$0xff]
        %v973 = vld [vmem:[%s333 + $0x16a] sm:$0xff]
        %v974 = vld [vmem:[%s333 + $0x172] sm:$0xff]
        %1007 = vrot.lane.b32.xlu0 %v943, 64
        %v1008 = vpop.permute.xlu0 %1007
        %1009 = vrot.lane.b32.xlu0 %v944, 64
        %v1010 = vpop.permute.xlu0 %1009
        %1011 = vrot.lane.b32.xlu0 %v945, 64
        %v1012 = vpop.permute.xlu0 %1011
        %1013 = vrot.lane.b32.xlu0 %v946, 64
        %v1014 = vpop.permute.xlu0 %1013
        %1015 = vrot.lane.b32.xlu0 %v947, 64
        %v1016 = vpop.permute.xlu0 %1015
        %1017 = vrot.lane.b32.xlu0 %v948, 64
        %v1018 = vpop.permute.xlu0 %1017
        %1019 = vrot.lane.b32.xlu0 %v949, 64
        %v1020 = vpop.permute.xlu0 %1019
        %1021 = vrot.lane.b32.xlu0 %v950, 64
        %v1022 = vpop.permute.xlu0 %1021
        %1023 = vrot.lane.b32.xlu0 %v951, 64
        %v1024 = vpop.permute.xlu0 %1023
        %1025 = vrot.lane.b32.xlu0 %v952, 64
        %v1026 = vpop.permute.xlu0 %1025
        %1027 = vrot.lane.b32.xlu0 %v953, 64
        %v1028 = vpop.permute.xlu0 %1027
        %1029 = vrot.lane.b32.xlu0 %v954, 64
        %v1030 = vpop.permute.xlu0 %1029
        %1031 = vrot.lane.b32.xlu0 %v955, 64
        %v1032 = vpop.permute.xlu0 %1031
        %1033 = vrot.lane.b32.xlu0 %v956, 64
        %v1034 = vpop.permute.xlu0 %1033
        %1035 = vrot.lane.b32.xlu0 %v957, 64
        %v1036 = vpop.permute.xlu0 %1035
        %1037 = vrot.lane.b32.xlu0 %v958, 64
        %v1038 = vpop.permute.xlu0 %1037
        %1039 = vrot.lane.b32.xlu0 %v959, 64
        %v1040 = vpop.permute.xlu0 %1039
        %1041 = vrot.lane.b32.xlu0 %v960, 64
        %v1042 = vpop.permute.xlu0 %1041
        %1043 = vrot.lane.b32.xlu0 %v961, 64
        %v1044 = vpop.permute.xlu0 %1043
        %1045 = vrot.lane.b32.xlu0 %v962, 64
        %v1046 = vpop.permute.xlu0 %1045
        %1047 = vrot.lane.b32.xlu0 %v963, 64
        %v1048 = vpop.permute.xlu0 %1047
        %1049 = vrot.lane.b32.xlu0 %v964, 64
        %v1050 = vpop.permute.xlu0 %1049
        %1051 = vrot.lane.b32.xlu0 %v965, 64
        %v1052 = vpop.permute.xlu0 %1051
        %1053 = vrot.lane.b32.xlu0 %v966, 64
        %v1054 = vpop.permute.xlu0 %1053
        %1055 = vrot.lane.b32.xlu0 %v967, 64
        %v1056 = vpop.permute.xlu0 %1055
        %1057 = vrot.lane.b32.xlu0 %v968, 64
        %v1058 = vpop.permute.xlu0 %1057
        %1059 = vrot.lane.b32.xlu0 %v969, 64
        %v1060 = vpop.permute.xlu0 %1059
        %1061 = vrot.lane.b32.xlu0 %v970, 64
        %v1062 = vpop.permute.xlu0 %1061
        %1063 = vrot.lane.b32.xlu0 %v971, 64
        %v1064 = vpop.permute.xlu0 %1063
        %1065 = vrot.lane.b32.xlu0 %v972, 64
        %v1066 = vpop.permute.xlu0 %1065
        %1067 = vrot.lane.b32.xlu0 %v973, 64
        %v1068 = vpop.permute.xlu0 %1067
        %1069 = vrot.lane.b32.xlu0 %v974, 64
        %v1070 = vpop.permute.xlu0 %1069
        %1103 = vst.msk [vmem:[#allocation3 + $0x10] sm:$0xff] %vm590, %v1008
        %1104 = vst.msk [vmem:[#allocation3 + $0x38] sm:$0xff] %vm590, %v1010
        %1105 = vst.msk [vmem:[#allocation3 + $0x60] sm:$0xff] %vm590, %v1012
        %1106 = vst.msk [vmem:[#allocation3 + $0x88] sm:$0xff] %vm590, %v1014
        %1107 = vst.msk [vmem:[#allocation3 + $0xb0] sm:$0xff] %vm590, %v1016
        %1108 = vst.msk [vmem:[#allocation3 + $0xd8] sm:$0xff] %vm590, %v1018
        %1109 = vst.msk [vmem:[#allocation3 + $0x100] sm:$0xff] %vm590, %v1020
        %1110 = vst.msk [vmem:[#allocation3 + $0x128] sm:$0xff] %vm590, %v1022
        %1111 = vst.msk [vmem:[#allocation3 + $0x150] sm:$0xff] %vm590, %v1024
        %1112 = vst.msk [vmem:[#allocation3 + $0x178] sm:$0xff] %vm590, %v1026
        %1113 = vst.msk [vmem:[#allocation3 + $0x1a0] sm:$0xff] %vm590, %v1028
        %1114 = vst.msk [vmem:[#allocation3 + $0x1c8] sm:$0xff] %vm590, %v1030
        %1115 = vst.msk [vmem:[#allocation3 + $0x1f0] sm:$0xff] %vm590, %v1032
        %1116 = vst.msk [vmem:[#allocation3 + $0x218] sm:$0xff] %vm590, %v1034
        %1117 = vst.msk [vmem:[#allocation3 + $0x240] sm:$0xff] %vm590, %v1036
        %1118 = vst.msk [vmem:[#allocation3 + $0x268] sm:$0xff] %vm590, %v1038
        %1119 = vst.msk [vmem:[#allocation3 + $0x290] sm:$0xff] %vm590, %v1040
        %1120 = vst.msk [vmem:[#allocation3 + $0x2b8] sm:$0xff] %vm590, %v1042
        %1121 = vst.msk [vmem:[#allocation3 + $0x2e0] sm:$0xff] %vm590, %v1044
        %1122 = vst.msk [vmem:[#allocation3 + $0x308] sm:$0xff] %vm590, %v1046
        %1123 = vst.msk [vmem:[#allocation3 + $0x330] sm:$0xff] %vm590, %v1048
        %1124 = vst.msk [vmem:[#allocation3 + $0x358] sm:$0xff] %vm590, %v1050
        %1125 = vst.msk [vmem:[#allocation3 + $0x380] sm:$0xff] %vm590, %v1052
        %1126 = vst.msk [vmem:[#allocation3 + $0x3a8] sm:$0xff] %vm590, %v1054
        %1127 = vst.msk [vmem:[#allocation3 + $0x3d0] sm:$0xff] %vm590, %v1056
        %1128 = vst.msk [vmem:[#allocation3 + $0x3f8] sm:$0xff] %vm590, %v1058
        %1129 = vst.msk [vmem:[#allocation3 + $0x420] sm:$0xff] %vm590, %v1060
        %1130 = vst.msk [vmem:[#allocation3 + $0x448] sm:$0xff] %vm590, %v1062
        %1131 = vst.msk [vmem:[#allocation3 + $0x470] sm:$0xff] %vm590, %v1064
        %1132 = vst.msk [vmem:[#allocation3 + $0x498] sm:$0xff] %vm590, %v1066
        %1133 = vst.msk [vmem:[#allocation3 + $0x4c0] sm:$0xff] %vm590, %v1068
        %1134 = vst.msk [vmem:[#allocation3 + $0x4e8] sm:$0xff] %vm590, %v1070
        %s1135 = scalar_lea.vmem [#allocation2], 48
        %v1136 = vld [vmem:[%s1135] sm:$0xff]
        %v1137 = vld [vmem:[%s1135 + $0x8] sm:$0xff]
        %v1138 = vld [vmem:[%s1135 + $0x18] sm:$0xff]
        %v1139 = vld [vmem:[%s1135 + $0x20] sm:$0xff]
        %v1140 = vld [vmem:[%s1135 + $0x30] sm:$0xff]
        %v1141 = vld [vmem:[%s1135 + $0x38] sm:$0xff]
        %v1142 = vld [vmem:[%s1135 + $0x48] sm:$0xff]
        %v1143 = vld [vmem:[%s1135 + $0x50] sm:$0xff]
        %v1144 = vld [vmem:[%s1135 + $0x60] sm:$0xff]
        %v1145 = vld [vmem:[%s1135 + $0x68] sm:$0xff]
        %v1146 = vld [vmem:[%s1135 + $0x78] sm:$0xff]
        %v1147 = vld [vmem:[%s1135 + $0x80] sm:$0xff]
        %v1148 = vld [vmem:[%s1135 + $0x90] sm:$0xff]
        %v1149 = vld [vmem:[%s1135 + $0x98] sm:$0xff]
        %v1150 = vld [vmem:[%s1135 + $0xa8] sm:$0xff]
        %v1151 = vld [vmem:[%s1135 + $0xb0] sm:$0xff]
        %v1152 = vld [vmem:[%s1135 + $0xc0] sm:$0xff]
        %v1153 = vld [vmem:[%s1135 + $0xc8] sm:$0xff]
        %v1154 = vld [vmem:[%s1135 + $0xd8] sm:$0xff]
        %v1155 = vld [vmem:[%s1135 + $0xe0] sm:$0xff]
        %v1156 = vld [vmem:[%s1135 + $0xf0] sm:$0xff]
        %v1157 = vld [vmem:[%s1135 + $0xf8] sm:$0xff]
        %v1158 = vld [vmem:[%s1135 + $0x108] sm:$0xff]
        %v1159 = vld [vmem:[%s1135 + $0x110] sm:$0xff]
        %v1160 = vld [vmem:[%s1135 + $0x120] sm:$0xff]
        %v1161 = vld [vmem:[%s1135 + $0x128] sm:$0xff]
        %v1162 = vld [vmem:[%s1135 + $0x138] sm:$0xff]
        %v1163 = vld [vmem:[%s1135 + $0x140] sm:$0xff]
        %v1164 = vld [vmem:[%s1135 + $0x150] sm:$0xff]
        %v1165 = vld [vmem:[%s1135 + $0x158] sm:$0xff]
        %v1166 = vld [vmem:[%s1135 + $0x168] sm:$0xff]
        %v1167 = vld [vmem:[%s1135 + $0x170] sm:$0xff]
        %1168 = vst.msk [vmem:[#allocation3 + $0x18] sm:$0xff] %vm223, %v1136
        %1169 = vst.msk [vmem:[#allocation3 + $0x40] sm:$0xff] %vm223, %v1137
        %1170 = vst.msk [vmem:[#allocation3 + $0x68] sm:$0xff] %vm223, %v1138
        %1171 = vst.msk [vmem:[#allocation3 + $0x90] sm:$0xff] %vm223, %v1139
        %1172 = vst.msk [vmem:[#allocation3 + $0xb8] sm:$0xff] %vm223, %v1140
        %1173 = vst.msk [vmem:[#allocation3 + $0xe0] sm:$0xff] %vm223, %v1141
        %1174 = vst.msk [vmem:[#allocation3 + $0x108] sm:$0xff] %vm223, %v1142
        %1175 = vst.msk [vmem:[#allocation3 + $0x130] sm:$0xff] %vm223, %v1143
        %1176 = vst.msk [vmem:[#allocation3 + $0x158] sm:$0xff] %vm223, %v1144
        %1177 = vst.msk [vmem:[#allocation3 + $0x180] sm:$0xff] %vm223, %v1145
        %1178 = vst.msk [vmem:[#allocation3 + $0x1a8] sm:$0xff] %vm223, %v1146
        %1179 = vst.msk [vmem:[#allocation3 + $0x1d0] sm:$0xff] %vm223, %v1147
        %1180 = vst.msk [vmem:[#allocation3 + $0x1f8] sm:$0xff] %vm223, %v1148
        %1181 = vst.msk [vmem:[#allocation3 + $0x220] sm:$0xff] %vm223, %v1149
        %1182 = vst.msk [vmem:[#allocation3 + $0x248] sm:$0xff] %vm223, %v1150
        %1183 = vst.msk [vmem:[#allocation3 + $0x270] sm:$0xff] %vm223, %v1151
        %1184 = vst.msk [vmem:[#allocation3 + $0x298] sm:$0xff] %vm223, %v1152
        %1185 = vst.msk [vmem:[#allocation3 + $0x2c0] sm:$0xff] %vm223, %v1153
        %1186 = vst.msk [vmem:[#allocation3 + $0x2e8] sm:$0xff] %vm223, %v1154
        %1187 = vst.msk [vmem:[#allocation3 + $0x310] sm:$0xff] %vm223, %v1155
        %1188 = vst.msk [vmem:[#allocation3 + $0x338] sm:$0xff] %vm223, %v1156
        %1189 = vst.msk [vmem:[#allocation3 + $0x360] sm:$0xff] %vm223, %v1157
        %1190 = vst.msk [vmem:[#allocation3 + $0x388] sm:$0xff] %vm223, %v1158
        %1191 = vst.msk [vmem:[#allocation3 + $0x3b0] sm:$0xff] %vm223, %v1159
        %1192 = vst.msk [vmem:[#allocation3 + $0x3d8] sm:$0xff] %vm223, %v1160
        %1193 = vst.msk [vmem:[#allocation3 + $0x400] sm:$0xff] %vm223, %v1161
        %1194 = vst.msk [vmem:[#allocation3 + $0x428] sm:$0xff] %vm223, %v1162
        %1195 = vst.msk [vmem:[#allocation3 + $0x450] sm:$0xff] %vm223, %v1163
        %1196 = vst.msk [vmem:[#allocation3 + $0x478] sm:$0xff] %vm223, %v1164
        %1197 = vst.msk [vmem:[#allocation3 + $0x4a0] sm:$0xff] %vm223, %v1165
        %1198 = vst.msk [vmem:[#allocation3 + $0x4c8] sm:$0xff] %vm223, %v1166
        %1199 = vst.msk [vmem:[#allocation3 + $0x4f0] sm:$0xff] %vm223, %v1167
        %v1200 = vld [vmem:[%s1135 + $0x1] sm:$0xff]
        %v1201 = vld [vmem:[%s1135 + $0x9] sm:$0xff]
        %v1202 = vld [vmem:[%s1135 + $0x19] sm:$0xff]
        %v1203 = vld [vmem:[%s1135 + $0x21] sm:$0xff]
        %v1204 = vld [vmem:[%s1135 + $0x31] sm:$0xff]
        %v1205 = vld [vmem:[%s1135 + $0x39] sm:$0xff]
        %v1206 = vld [vmem:[%s1135 + $0x49] sm:$0xff]
        %v1207 = vld [vmem:[%s1135 + $0x51] sm:$0xff]
        %v1208 = vld [vmem:[%s1135 + $0x61] sm:$0xff]
        %v1209 = vld [vmem:[%s1135 + $0x69] sm:$0xff]
        %v1210 = vld [vmem:[%s1135 + $0x79] sm:$0xff]
        %v1211 = vld [vmem:[%s1135 + $0x81] sm:$0xff]
        %v1212 = vld [vmem:[%s1135 + $0x91] sm:$0xff]
        %v1213 = vld [vmem:[%s1135 + $0x99] sm:$0xff]
        %v1214 = vld [vmem:[%s1135 + $0xa9] sm:$0xff]
        %v1215 = vld [vmem:[%s1135 + $0xb1] sm:$0xff]
        %v1216 = vld [vmem:[%s1135 + $0xc1] sm:$0xff]
        %v1217 = vld [vmem:[%s1135 + $0xc9] sm:$0xff]
        %v1218 = vld [vmem:[%s1135 + $0xd9] sm:$0xff]
        %v1219 = vld [vmem:[%s1135 + $0xe1] sm:$0xff]
        %v1220 = vld [vmem:[%s1135 + $0xf1] sm:$0xff]
        %v1221 = vld [vmem:[%s1135 + $0xf9] sm:$0xff]
        %v1222 = vld [vmem:[%s1135 + $0x109] sm:$0xff]
        %v1223 = vld [vmem:[%s1135 + $0x111] sm:$0xff]
        %v1224 = vld [vmem:[%s1135 + $0x121] sm:$0xff]
        %v1225 = vld [vmem:[%s1135 + $0x129] sm:$0xff]
        %v1226 = vld [vmem:[%s1135 + $0x139] sm:$0xff]
        %v1227 = vld [vmem:[%s1135 + $0x141] sm:$0xff]
        %v1228 = vld [vmem:[%s1135 + $0x151] sm:$0xff]
        %v1229 = vld [vmem:[%s1135 + $0x159] sm:$0xff]
        %v1230 = vld [vmem:[%s1135 + $0x169] sm:$0xff]
        %v1231 = vld [vmem:[%s1135 + $0x171] sm:$0xff]
        %1264 = vrot.lane.b32.xlu0 %v1200, 64
        %v1265 = vpop.permute.xlu0 %1264
        %1266 = vrot.lane.b32.xlu0 %v1201, 64
        %v1267 = vpop.permute.xlu0 %1266
        %1268 = vrot.lane.b32.xlu0 %v1202, 64
        %v1269 = vpop.permute.xlu0 %1268
        %1270 = vrot.lane.b32.xlu0 %v1203, 64
        %v1271 = vpop.permute.xlu0 %1270
        %1272 = vrot.lane.b32.xlu0 %v1204, 64
        %v1273 = vpop.permute.xlu0 %1272
        %1274 = vrot.lane.b32.xlu0 %v1205, 64
        %v1275 = vpop.permute.xlu0 %1274
        %1276 = vrot.lane.b32.xlu0 %v1206, 64
        %v1277 = vpop.permute.xlu0 %1276
        %1278 = vrot.lane.b32.xlu0 %v1207, 64
        %v1279 = vpop.permute.xlu0 %1278
        %1280 = vrot.lane.b32.xlu0 %v1208, 64
        %v1281 = vpop.permute.xlu0 %1280
        %1282 = vrot.lane.b32.xlu0 %v1209, 64
        %v1283 = vpop.permute.xlu0 %1282
        %1284 = vrot.lane.b32.xlu0 %v1210, 64
        %v1285 = vpop.permute.xlu0 %1284
        %1286 = vrot.lane.b32.xlu0 %v1211, 64
        %v1287 = vpop.permute.xlu0 %1286
        %1288 = vrot.lane.b32.xlu0 %v1212, 64
        %v1289 = vpop.permute.xlu0 %1288
        %1290 = vrot.lane.b32.xlu0 %v1213, 64
        %v1291 = vpop.permute.xlu0 %1290
        %1292 = vrot.lane.b32.xlu0 %v1214, 64
        %v1293 = vpop.permute.xlu0 %1292
        %1294 = vrot.lane.b32.xlu0 %v1215, 64
        %v1295 = vpop.permute.xlu0 %1294
        %1296 = vrot.lane.b32.xlu0 %v1216, 64
        %v1297 = vpop.permute.xlu0 %1296
        %1298 = vrot.lane.b32.xlu0 %v1217, 64
        %v1299 = vpop.permute.xlu0 %1298
        %1300 = vrot.lane.b32.xlu0 %v1218, 64
        %v1301 = vpop.permute.xlu0 %1300
        %1302 = vrot.lane.b32.xlu0 %v1219, 64
        %v1303 = vpop.permute.xlu0 %1302
        %1304 = vrot.lane.b32.xlu0 %v1220, 64
        %v1305 = vpop.permute.xlu0 %1304
        %1306 = vrot.lane.b32.xlu0 %v1221, 64
        %v1307 = vpop.permute.xlu0 %1306
        %1308 = vrot.lane.b32.xlu0 %v1222, 64
        %v1309 = vpop.permute.xlu0 %1308
        %1310 = vrot.lane.b32.xlu0 %v1223, 64
        %v1311 = vpop.permute.xlu0 %1310
        %1312 = vrot.lane.b32.xlu0 %v1224, 64
        %v1313 = vpop.permute.xlu0 %1312
        %1314 = vrot.lane.b32.xlu0 %v1225, 64
        %v1315 = vpop.permute.xlu0 %1314
        %1316 = vrot.lane.b32.xlu0 %v1226, 64
        %v1317 = vpop.permute.xlu0 %1316
        %1318 = vrot.lane.b32.xlu0 %v1227, 64
        %v1319 = vpop.permute.xlu0 %1318
        %1320 = vrot.lane.b32.xlu0 %v1228, 64
        %v1321 = vpop.permute.xlu0 %1320
        %1322 = vrot.lane.b32.xlu0 %v1229, 64
        %v1323 = vpop.permute.xlu0 %1322
        %1324 = vrot.lane.b32.xlu0 %v1230, 64
        %v1325 = vpop.permute.xlu0 %1324
        %1326 = vrot.lane.b32.xlu0 %v1231, 64
        %v1327 = vpop.permute.xlu0 %1326
        %1360 = vst.msk [vmem:[#allocation3 + $0x18] sm:$0xff] %vm590, %v1265
        %1361 = vst.msk [vmem:[#allocation3 + $0x40] sm:$0xff] %vm590, %v1267
        %1362 = vst.msk [vmem:[#allocation3 + $0x68] sm:$0xff] %vm590, %v1269
        %1363 = vst.msk [vmem:[#allocation3 + $0x90] sm:$0xff] %vm590, %v1271
        %1364 = vst.msk [vmem:[#allocation3 + $0xb8] sm:$0xff] %vm590, %v1273
        %1365 = vst.msk [vmem:[#allocation3 + $0xe0] sm:$0xff] %vm590, %v1275
        %1366 = vst.msk [vmem:[#allocation3 + $0x108] sm:$0xff] %vm590, %v1277
        %1367 = vst.msk [vmem:[#allocation3 + $0x130] sm:$0xff] %vm590, %v1279
        %1368 = vst.msk [vmem:[#allocation3 + $0x158] sm:$0xff] %vm590, %v1281
        %1369 = vst.msk [vmem:[#allocation3 + $0x180] sm:$0xff] %vm590, %v1283
        %1370 = vst.msk [vmem:[#allocation3 + $0x1a8] sm:$0xff] %vm590, %v1285
        %1371 = vst.msk [vmem:[#allocation3 + $0x1d0] sm:$0xff] %vm590, %v1287
        %1372 = vst.msk [vmem:[#allocation3 + $0x1f8] sm:$0xff] %vm590, %v1289
        %1373 = vst.msk [vmem:[#allocation3 + $0x220] sm:$0xff] %vm590, %v1291
        %1374 = vst.msk [vmem:[#allocation3 + $0x248] sm:$0xff] %vm590, %v1293
        %1375 = vst.msk [vmem:[#allocation3 + $0x270] sm:$0xff] %vm590, %v1295
        %1376 = vst.msk [vmem:[#allocation3 + $0x298] sm:$0xff] %vm590, %v1297
        %1377 = vst.msk [vmem:[#allocation3 + $0x2c0] sm:$0xff] %vm590, %v1299
        %1378 = vst.msk [vmem:[#allocation3 + $0x2e8] sm:$0xff] %vm590, %v1301
        %1379 = vst.msk [vmem:[#allocation3 + $0x310] sm:$0xff] %vm590, %v1303
        %1380 = vst.msk [vmem:[#allocation3 + $0x338] sm:$0xff] %vm590, %v1305
        %1381 = vst.msk [vmem:[#allocation3 + $0x360] sm:$0xff] %vm590, %v1307
        %1382 = vst.msk [vmem:[#allocation3 + $0x388] sm:$0xff] %vm590, %v1309
        %1383 = vst.msk [vmem:[#allocation3 + $0x3b0] sm:$0xff] %vm590, %v1311
        %1384 = vst.msk [vmem:[#allocation3 + $0x3d8] sm:$0xff] %vm590, %v1313
        %1385 = vst.msk [vmem:[#allocation3 + $0x400] sm:$0xff] %vm590, %v1315
        %1386 = vst.msk [vmem:[#allocation3 + $0x428] sm:$0xff] %vm590, %v1317
        %1387 = vst.msk [vmem:[#allocation3 + $0x450] sm:$0xff] %vm590, %v1319
        %1388 = vst.msk [vmem:[#allocation3 + $0x478] sm:$0xff] %vm590, %v1321
        %1389 = vst.msk [vmem:[#allocation3 + $0x4a0] sm:$0xff] %vm590, %v1323
        %1390 = vst.msk [vmem:[#allocation3 + $0x4c8] sm:$0xff] %vm590, %v1325
        %1391 = vst.msk [vmem:[#allocation3 + $0x4f0] sm:$0xff] %vm590, %v1327
        %v1392 = vld [vmem:[%s1135 + $0x2] sm:$0xff]
        %v1393 = vld [vmem:[%s1135 + $0xa] sm:$0xff]
        %v1394 = vld [vmem:[%s1135 + $0x1a] sm:$0xff]
        %v1395 = vld [vmem:[%s1135 + $0x22] sm:$0xff]
        %v1396 = vld [vmem:[%s1135 + $0x32] sm:$0xff]
        %v1397 = vld [vmem:[%s1135 + $0x3a] sm:$0xff]
        %v1398 = vld [vmem:[%s1135 + $0x4a] sm:$0xff]
        %v1399 = vld [vmem:[%s1135 + $0x52] sm:$0xff]
        %v1400 = vld [vmem:[%s1135 + $0x62] sm:$0xff]
        %v1401 = vld [vmem:[%s1135 + $0x6a] sm:$0xff]
        %v1402 = vld [vmem:[%s1135 + $0x7a] sm:$0xff]
        %v1403 = vld [vmem:[%s1135 + $0x82] sm:$0xff]
        %v1404 = vld [vmem:[%s1135 + $0x92] sm:$0xff]
        %v1405 = vld [vmem:[%s1135 + $0x9a] sm:$0xff]
        %v1406 = vld [vmem:[%s1135 + $0xaa] sm:$0xff]
        %v1407 = vld [vmem:[%s1135 + $0xb2] sm:$0xff]
        %v1408 = vld [vmem:[%s1135 + $0xc2] sm:$0xff]
        %v1409 = vld [vmem:[%s1135 + $0xca] sm:$0xff]
        %v1410 = vld [vmem:[%s1135 + $0xda] sm:$0xff]
        %v1411 = vld [vmem:[%s1135 + $0xe2] sm:$0xff]
        %v1412 = vld [vmem:[%s1135 + $0xf2] sm:$0xff]
        %v1413 = vld [vmem:[%s1135 + $0xfa] sm:$0xff]
        %v1414 = vld [vmem:[%s1135 + $0x10a] sm:$0xff]
        %v1415 = vld [vmem:[%s1135 + $0x112] sm:$0xff]
        %v1416 = vld [vmem:[%s1135 + $0x122] sm:$0xff]
        %v1417 = vld [vmem:[%s1135 + $0x12a] sm:$0xff]
        %v1418 = vld [vmem:[%s1135 + $0x13a] sm:$0xff]
        %v1419 = vld [vmem:[%s1135 + $0x142] sm:$0xff]
        %v1420 = vld [vmem:[%s1135 + $0x152] sm:$0xff]
        %v1421 = vld [vmem:[%s1135 + $0x15a] sm:$0xff]
        %v1422 = vld [vmem:[%s1135 + $0x16a] sm:$0xff]
        %v1423 = vld [vmem:[%s1135 + $0x172] sm:$0xff]
        %1424 = vst.msk [vmem:[#allocation3 + $0x20] sm:$0xff] %vm223, %v1392
        %1425 = vst.msk [vmem:[#allocation3 + $0x48] sm:$0xff] %vm223, %v1393
        %1426 = vst.msk [vmem:[#allocation3 + $0x70] sm:$0xff] %vm223, %v1394
        %1427 = vst.msk [vmem:[#allocation3 + $0x98] sm:$0xff] %vm223, %v1395
        %1428 = vst.msk [vmem:[#allocation3 + $0xc0] sm:$0xff] %vm223, %v1396
        %1429 = vst.msk [vmem:[#allocation3 + $0xe8] sm:$0xff] %vm223, %v1397
        %1430 = vst.msk [vmem:[#allocation3 + $0x110] sm:$0xff] %vm223, %v1398
        %1431 = vst.msk [vmem:[#allocation3 + $0x138] sm:$0xff] %vm223, %v1399
        %1432 = vst.msk [vmem:[#allocation3 + $0x160] sm:$0xff] %vm223, %v1400
        %1433 = vst.msk [vmem:[#allocation3 + $0x188] sm:$0xff] %vm223, %v1401
        %1434 = vst.msk [vmem:[#allocation3 + $0x1b0] sm:$0xff] %vm223, %v1402
        %1435 = vst.msk [vmem:[#allocation3 + $0x1d8] sm:$0xff] %vm223, %v1403
        %1436 = vst.msk [vmem:[#allocation3 + $0x200] sm:$0xff] %vm223, %v1404
        %1437 = vst.msk [vmem:[#allocation3 + $0x228] sm:$0xff] %vm223, %v1405
        %1438 = vst.msk [vmem:[#allocation3 + $0x250] sm:$0xff] %vm223, %v1406
        %1439 = vst.msk [vmem:[#allocation3 + $0x278] sm:$0xff] %vm223, %v1407
        %1440 = vst.msk [vmem:[#allocation3 + $0x2a0] sm:$0xff] %vm223, %v1408
        %1441 = vst.msk [vmem:[#allocation3 + $0x2c8] sm:$0xff] %vm223, %v1409
        %1442 = vst.msk [vmem:[#allocation3 + $0x2f0] sm:$0xff] %vm223, %v1410
        %1443 = vst.msk [vmem:[#allocation3 + $0x318] sm:$0xff] %vm223, %v1411
        %1444 = vst.msk [vmem:[#allocation3 + $0x340] sm:$0xff] %vm223, %v1412
        %1445 = vst.msk [vmem:[#allocation3 + $0x368] sm:$0xff] %vm223, %v1413
        %1446 = vst.msk [vmem:[#allocation3 + $0x390] sm:$0xff] %vm223, %v1414
        %1447 = vst.msk [vmem:[#allocation3 + $0x3b8] sm:$0xff] %vm223, %v1415
        %1448 = vst.msk [vmem:[#allocation3 + $0x3e0] sm:$0xff] %vm223, %v1416
        %1449 = vst.msk [vmem:[#allocation3 + $0x408] sm:$0xff] %vm223, %v1417
        %1450 = vst.msk [vmem:[#allocation3 + $0x430] sm:$0xff] %vm223, %v1418
        %1451 = vst.msk [vmem:[#allocation3 + $0x458] sm:$0xff] %vm223, %v1419
        %1452 = vst.msk [vmem:[#allocation3 + $0x480] sm:$0xff] %vm223, %v1420
        %1453 = vst.msk [vmem:[#allocation3 + $0x4a8] sm:$0xff] %vm223, %v1421
        %1454 = vst.msk [vmem:[#allocation3 + $0x4d0] sm:$0xff] %vm223, %v1422
        %1455 = vst.msk [vmem:[#allocation3 + $0x4f8] sm:$0xff] %vm223, %v1423
        %v1456 = vld [vmem:[#allocation3] sm:$0xff]
        %v1457 = vld [vmem:[#allocation3 + $0x8] sm:$0xff]
        %v1458 = vld [vmem:[#allocation3 + $0x10] sm:$0xff]
        %v1459 = vld [vmem:[#allocation3 + $0x18] sm:$0xff]
        %v1460 = vld [vmem:[#allocation3 + $0x20] sm:$0xff]
        %v1461 = vld [vmem:[#allocation3 + $0x28] sm:$0xff]
        %v1462 = vld [vmem:[#allocation3 + $0x30] sm:$0xff]
        %v1463 = vld [vmem:[#allocation3 + $0x38] sm:$0xff]
        %v1464 = vld [vmem:[#allocation3 + $0x40] sm:$0xff]
        %v1465 = vld [vmem:[#allocation3 + $0x48] sm:$0xff]
        %v1466 = vld [vmem:[#allocation3 + $0x50] sm:$0xff]
        %v1467 = vld [vmem:[#allocation3 + $0x58] sm:$0xff]
        %v1468 = vld [vmem:[#allocation3 + $0x60] sm:$0xff]
        %v1469 = vld [vmem:[#allocation3 + $0x68] sm:$0xff]
        %v1470 = vld [vmem:[#allocation3 + $0x70] sm:$0xff]
        %v1471 = vld [vmem:[#allocation3 + $0x78] sm:$0xff]
        %v1472 = vld [vmem:[#allocation3 + $0x80] sm:$0xff]
        %v1473 = vld [vmem:[#allocation3 + $0x88] sm:$0xff]
        %v1474 = vld [vmem:[#allocation3 + $0x90] sm:$0xff]
        %v1475 = vld [vmem:[#allocation3 + $0x98] sm:$0xff]
        %v1476 = vld [vmem:[#allocation3 + $0xa0] sm:$0xff]
        %v1477 = vld [vmem:[#allocation3 + $0xa8] sm:$0xff]
        %v1478 = vld [vmem:[#allocation3 + $0xb0] sm:$0xff]
        %v1479 = vld [vmem:[#allocation3 + $0xb8] sm:$0xff]
        %v1480 = vld [vmem:[#allocation3 + $0xc0] sm:$0xff]
        %v1481 = vld [vmem:[#allocation3 + $0xc8] sm:$0xff]
        %v1482 = vld [vmem:[#allocation3 + $0xd0] sm:$0xff]
        %v1483 = vld [vmem:[#allocation3 + $0xd8] sm:$0xff]
        %v1484 = vld [vmem:[#allocation3 + $0xe0] sm:$0xff]
        %v1485 = vld [vmem:[#allocation3 + $0xe8] sm:$0xff]
        %v1486 = vld [vmem:[#allocation3 + $0xf0] sm:$0xff]
        %v1487 = vld [vmem:[#allocation3 + $0xf8] sm:$0xff]
        %v1488 = vld [vmem:[#allocation3 + $0x100] sm:$0xff]
        %v1489 = vld [vmem:[#allocation3 + $0x108] sm:$0xff]
        %v1490 = vld [vmem:[#allocation3 + $0x110] sm:$0xff]
        %v1491 = vld [vmem:[#allocation3 + $0x118] sm:$0xff]
        %v1492 = vld [vmem:[#allocation3 + $0x120] sm:$0xff]
        %v1493 = vld [vmem:[#allocation3 + $0x128] sm:$0xff]
        %v1494 = vld [vmem:[#allocation3 + $0x130] sm:$0xff]
        %v1495 = vld [vmem:[#allocation3 + $0x138] sm:$0xff]
        %v1496 = vld [vmem:[#allocation3 + $0x140] sm:$0xff]
        %v1497 = vld [vmem:[#allocation3 + $0x148] sm:$0xff]
        %v1498 = vld [vmem:[#allocation3 + $0x150] sm:$0xff]
        %v1499 = vld [vmem:[#allocation3 + $0x158] sm:$0xff]
        %v1500 = vld [vmem:[#allocation3 + $0x160] sm:$0xff]
        %v1501 = vld [vmem:[#allocation3 + $0x168] sm:$0xff]
        %v1502 = vld [vmem:[#allocation3 + $0x170] sm:$0xff]
        %v1503 = vld [vmem:[#allocation3 + $0x178] sm:$0xff]
        %v1504 = vld [vmem:[#allocation3 + $0x180] sm:$0xff]
        %v1505 = vld [vmem:[#allocation3 + $0x188] sm:$0xff]
        %v1506 = vld [vmem:[#allocation3 + $0x190] sm:$0xff]
        %v1507 = vld [vmem:[#allocation3 + $0x198] sm:$0xff]
        %v1508 = vld [vmem:[#allocation3 + $0x1a0] sm:$0xff]
        %v1509 = vld [vmem:[#allocation3 + $0x1a8] sm:$0xff]
        %v1510 = vld [vmem:[#allocation3 + $0x1b0] sm:$0xff]
        %v1511 = vld [vmem:[#allocation3 + $0x1b8] sm:$0xff]
        %v1512 = vld [vmem:[#allocation3 + $0x1c0] sm:$0xff]
        %v1513 = vld [vmem:[#allocation3 + $0x1c8] sm:$0xff]
        %v1514 = vld [vmem:[#allocation3 + $0x1d0] sm:$0xff]
        %v1515 = vld [vmem:[#allocation3 + $0x1d8] sm:$0xff]
        %v1516 = vld [vmem:[#allocation3 + $0x1e0] sm:$0xff]
        %v1517 = vld [vmem:[#allocation3 + $0x1e8] sm:$0xff]
        %v1518 = vld [vmem:[#allocation3 + $0x1f0] sm:$0xff]
        %v1519 = vld [vmem:[#allocation3 + $0x1f8] sm:$0xff]
        %v1520 = vld [vmem:[#allocation3 + $0x200] sm:$0xff]
        %v1521 = vld [vmem:[#allocation3 + $0x208] sm:$0xff]
        %v1522 = vld [vmem:[#allocation3 + $0x210] sm:$0xff]
        %v1523 = vld [vmem:[#allocation3 + $0x218] sm:$0xff]
        %v1524 = vld [vmem:[#allocation3 + $0x220] sm:$0xff]
        %v1525 = vld [vmem:[#allocation3 + $0x228] sm:$0xff]
        %v1526 = vld [vmem:[#allocation3 + $0x230] sm:$0xff]
        %v1527 = vld [vmem:[#allocation3 + $0x238] sm:$0xff]
        %v1528 = vld [vmem:[#allocation3 + $0x240] sm:$0xff]
        %v1529 = vld [vmem:[#allocation3 + $0x248] sm:$0xff]
        %v1530 = vld [vmem:[#allocation3 + $0x250] sm:$0xff]
        %v1531 = vld [vmem:[#allocation3 + $0x258] sm:$0xff]
        %v1532 = vld [vmem:[#allocation3 + $0x260] sm:$0xff]
        %v1533 = vld [vmem:[#allocation3 + $0x268] sm:$0xff]
        %v1534 = vld [vmem:[#allocation3 + $0x270] sm:$0xff]
        %v1535 = vld [vmem:[#allocation3 + $0x278] sm:$0xff]
        %v1536 = vld [vmem:[#allocation3 + $0x280] sm:$0xff]
        %v1537 = vld [vmem:[#allocation3 + $0x288] sm:$0xff]
        %v1538 = vld [vmem:[#allocation3 + $0x290] sm:$0xff]
        %v1539 = vld [vmem:[#allocation3 + $0x298] sm:$0xff]
        %v1540 = vld [vmem:[#allocation3 + $0x2a0] sm:$0xff]
        %v1541 = vld [vmem:[#allocation3 + $0x2a8] sm:$0xff]
        %v1542 = vld [vmem:[#allocation3 + $0x2b0] sm:$0xff]
        %v1543 = vld [vmem:[#allocation3 + $0x2b8] sm:$0xff]
        %v1544 = vld [vmem:[#allocation3 + $0x2c0] sm:$0xff]
        %v1545 = vld [vmem:[#allocation3 + $0x2c8] sm:$0xff]
        %v1546 = vld [vmem:[#allocation3 + $0x2d0] sm:$0xff]
        %v1547 = vld [vmem:[#allocation3 + $0x2d8] sm:$0xff]
        %v1548 = vld [vmem:[#allocation3 + $0x2e0] sm:$0xff]
        %v1549 = vld [vmem:[#allocation3 + $0x2e8] sm:$0xff]
        %v1550 = vld [vmem:[#allocation3 + $0x2f0] sm:$0xff]
        %v1551 = vld [vmem:[#allocation3 + $0x2f8] sm:$0xff]
        %v1552 = vld [vmem:[#allocation3 + $0x300] sm:$0xff]
        %v1553 = vld [vmem:[#allocation3 + $0x308] sm:$0xff]
        %v1554 = vld [vmem:[#allocation3 + $0x310] sm:$0xff]
        %v1555 = vld [vmem:[#allocation3 + $0x318] sm:$0xff]
        %v1556 = vld [vmem:[#allocation3 + $0x320] sm:$0xff]
        %v1557 = vld [vmem:[#allocation3 + $0x328] sm:$0xff]
        %v1558 = vld [vmem:[#allocation3 + $0x330] sm:$0xff]
        %v1559 = vld [vmem:[#allocation3 + $0x338] sm:$0xff]
        %v1560 = vld [vmem:[#allocation3 + $0x340] sm:$0xff]
        %v1561 = vld [vmem:[#allocation3 + $0x348] sm:$0xff]
        %v1562 = vld [vmem:[#allocation3 + $0x350] sm:$0xff]
        %v1563 = vld [vmem:[#allocation3 + $0x358] sm:$0xff]
        %v1564 = vld [vmem:[#allocation3 + $0x360] sm:$0xff]
        %v1565 = vld [vmem:[#allocation3 + $0x368] sm:$0xff]
        %v1566 = vld [vmem:[#allocation3 + $0x370] sm:$0xff]
        %v1567 = vld [vmem:[#allocation3 + $0x378] sm:$0xff]
        %v1568 = vld [vmem:[#allocation3 + $0x380] sm:$0xff]
        %v1569 = vld [vmem:[#allocation3 + $0x388] sm:$0xff]
        %v1570 = vld [vmem:[#allocation3 + $0x390] sm:$0xff]
        %v1571 = vld [vmem:[#allocation3 + $0x398] sm:$0xff]
        %v1572 = vld [vmem:[#allocation3 + $0x3a0] sm:$0xff]
        %v1573 = vld [vmem:[#allocation3 + $0x3a8] sm:$0xff]
        %v1574 = vld [vmem:[#allocation3 + $0x3b0] sm:$0xff]
        %v1575 = vld [vmem:[#allocation3 + $0x3b8] sm:$0xff]
        %v1576 = vld [vmem:[#allocation3 + $0x3c0] sm:$0xff]
        %v1577 = vld [vmem:[#allocation3 + $0x3c8] sm:$0xff]
        %v1578 = vld [vmem:[#allocation3 + $0x3d0] sm:$0xff]
        %v1579 = vld [vmem:[#allocation3 + $0x3d8] sm:$0xff]
        %v1580 = vld [vmem:[#allocation3 + $0x3e0] sm:$0xff]
        %v1581 = vld [vmem:[#allocation3 + $0x3e8] sm:$0xff]
        %v1582 = vld [vmem:[#allocation3 + $0x3f0] sm:$0xff]
        %v1583 = vld [vmem:[#allocation3 + $0x3f8] sm:$0xff]
        %v1584 = vld [vmem:[#allocation3 + $0x400] sm:$0xff]
        %v1585 = vld [vmem:[#allocation3 + $0x408] sm:$0xff]
        %v1586 = vld [vmem:[#allocation3 + $0x410] sm:$0xff]
        %v1587 = vld [vmem:[#allocation3 + $0x418] sm:$0xff]
        %v1588 = vld [vmem:[#allocation3 + $0x420] sm:$0xff]
        %v1589 = vld [vmem:[#allocation3 + $0x428] sm:$0xff]
        %v1590 = vld [vmem:[#allocation3 + $0x430] sm:$0xff]
        %v1591 = vld [vmem:[#allocation3 + $0x438] sm:$0xff]
        %v1592 = vld [vmem:[#allocation3 + $0x440] sm:$0xff]
        %v1593 = vld [vmem:[#allocation3 + $0x448] sm:$0xff]
        %v1594 = vld [vmem:[#allocation3 + $0x450] sm:$0xff]
        %v1595 = vld [vmem:[#allocation3 + $0x458] sm:$0xff]
        %v1596 = vld [vmem:[#allocation3 + $0x460] sm:$0xff]
        %v1597 = vld [vmem:[#allocation3 + $0x468] sm:$0xff]
        %v1598 = vld [vmem:[#allocation3 + $0x470] sm:$0xff]
        %v1599 = vld [vmem:[#allocation3 + $0x478] sm:$0xff]
        %v1600 = vld [vmem:[#allocation3 + $0x480] sm:$0xff]
        %v1601 = vld [vmem:[#allocation3 + $0x488] sm:$0xff]
        %v1602 = vld [vmem:[#allocation3 + $0x490] sm:$0xff]
        %v1603 = vld [vmem:[#allocation3 + $0x498] sm:$0xff]
        %v1604 = vld [vmem:[#allocation3 + $0x4a0] sm:$0xff]
        %v1605 = vld [vmem:[#allocation3 + $0x4a8] sm:$0xff]
        %v1606 = vld [vmem:[#allocation3 + $0x4b0] sm:$0xff]
        %v1607 = vld [vmem:[#allocation3 + $0x4b8] sm:$0xff]
        %v1608 = vld [vmem:[#allocation3 + $0x4c0] sm:$0xff]
        %v1609 = vld [vmem:[#allocation3 + $0x4c8] sm:$0xff]
        %v1610 = vld [vmem:[#allocation3 + $0x4d0] sm:$0xff]
        %v1611 = vld [vmem:[#allocation3 + $0x4d8] sm:$0xff]
        %v1612 = vld [vmem:[#allocation3 + $0x4e0] sm:$0xff]
        %v1613 = vld [vmem:[#allocation3 + $0x4e8] sm:$0xff]
        %v1614 = vld [vmem:[#allocation3 + $0x4f0] sm:$0xff]
        %v1615 = vld [vmem:[#allocation3 + $0x4f8] sm:$0xff]
        %v1616 = vld [vmem:[%s1] sm:$0xff]
        %v1617 = vld [vmem:[%s1 + $0x8] sm:$0xff]
        %v1618 = vld [vmem:[%s1 + $0x10] sm:$0xff]
        %v1619 = vld [vmem:[%s1 + $0x18] sm:$0xff]
        %v1620 = vld [vmem:[%s1 + $0x20] sm:$0xff]
        %v1621 = vld [vmem:[%s1 + $0x28] sm:$0xff]
        %v1622 = vld [vmem:[%s1 + $0x30] sm:$0xff]
        %v1623 = vld [vmem:[%s1 + $0x38] sm:$0xff]
        %v1624 = vld [vmem:[%s1 + $0x40] sm:$0xff]
        %v1625 = vld [vmem:[%s1 + $0x48] sm:$0xff]
        %v1626 = vld [vmem:[%s1 + $0x50] sm:$0xff]
        %v1627 = vld [vmem:[%s1 + $0x58] sm:$0xff]
        %v1628 = vld [vmem:[%s1 + $0x60] sm:$0xff]
        %v1629 = vld [vmem:[%s1 + $0x68] sm:$0xff]
        %v1630 = vld [vmem:[%s1 + $0x70] sm:$0xff]
        %v1631 = vld [vmem:[%s1 + $0x78] sm:$0xff]
        %v1632 = vld [vmem:[%s1 + $0x80] sm:$0xff]
        %v1633 = vld [vmem:[%s1 + $0x88] sm:$0xff]
        %v1634 = vld [vmem:[%s1 + $0x90] sm:$0xff]
        %v1635 = vld [vmem:[%s1 + $0x98] sm:$0xff]
        %v1636 = vld [vmem:[%s1 + $0xa0] sm:$0xff]
        %v1637 = vld [vmem:[%s1 + $0xa8] sm:$0xff]
        %v1638 = vld [vmem:[%s1 + $0xb0] sm:$0xff]
        %v1639 = vld [vmem:[%s1 + $0xb8] sm:$0xff]
        %v1640 = vld [vmem:[%s1 + $0xc0] sm:$0xff]
        %v1641 = vld [vmem:[%s1 + $0xc8] sm:$0xff]
        %v1642 = vld [vmem:[%s1 + $0xd0] sm:$0xff]
        %v1643 = vld [vmem:[%s1 + $0xd8] sm:$0xff]
        %v1644 = vld [vmem:[%s1 + $0xe0] sm:$0xff]
        %v1645 = vld [vmem:[%s1 + $0xe8] sm:$0xff]
        %v1646 = vld [vmem:[%s1 + $0xf0] sm:$0xff]
        %v1647 = vld [vmem:[%s1 + $0xf8] sm:$0xff]
        %v1648 = vld [vmem:[%s1 + $0x100] sm:$0xff]
        %v1649 = vld [vmem:[%s1 + $0x108] sm:$0xff]
        %v1650 = vld [vmem:[%s1 + $0x110] sm:$0xff]
        %v1651 = vld [vmem:[%s1 + $0x118] sm:$0xff]
        %v1652 = vld [vmem:[%s1 + $0x120] sm:$0xff]
        %v1653 = vld [vmem:[%s1 + $0x128] sm:$0xff]
        %v1654 = vld [vmem:[%s1 + $0x130] sm:$0xff]
        %v1655 = vld [vmem:[%s1 + $0x138] sm:$0xff]
        %v1656 = vld [vmem:[%s1 + $0x140] sm:$0xff]
        %v1657 = vld [vmem:[%s1 + $0x148] sm:$0xff]
        %v1658 = vld [vmem:[%s1 + $0x150] sm:$0xff]
        %v1659 = vld [vmem:[%s1 + $0x158] sm:$0xff]
        %v1660 = vld [vmem:[%s1 + $0x160] sm:$0xff]
        %v1661 = vld [vmem:[%s1 + $0x168] sm:$0xff]
        %v1662 = vld [vmem:[%s1 + $0x170] sm:$0xff]
        %v1663 = vld [vmem:[%s1 + $0x178] sm:$0xff]
        %v1664 = vld [vmem:[%s1 + $0x180] sm:$0xff]
        %v1665 = vld [vmem:[%s1 + $0x188] sm:$0xff]
        %v1666 = vld [vmem:[%s1 + $0x190] sm:$0xff]
        %v1667 = vld [vmem:[%s1 + $0x198] sm:$0xff]
        %v1668 = vld [vmem:[%s1 + $0x1a0] sm:$0xff]
        %v1669 = vld [vmem:[%s1 + $0x1a8] sm:$0xff]
        %v1670 = vld [vmem:[%s1 + $0x1b0] sm:$0xff]
        %v1671 = vld [vmem:[%s1 + $0x1b8] sm:$0xff]
        %v1672 = vld [vmem:[%s1 + $0x1c0] sm:$0xff]
        %v1673 = vld [vmem:[%s1 + $0x1c8] sm:$0xff]
        %v1674 = vld [vmem:[%s1 + $0x1d0] sm:$0xff]
        %v1675 = vld [vmem:[%s1 + $0x1d8] sm:$0xff]
        %v1676 = vld [vmem:[%s1 + $0x1e0] sm:$0xff]
        %v1677 = vld [vmem:[%s1 + $0x1e8] sm:$0xff]
        %v1678 = vld [vmem:[%s1 + $0x1f0] sm:$0xff]
        %v1679 = vld [vmem:[%s1 + $0x1f8] sm:$0xff]
        %v1680 = vld [vmem:[%s1 + $0x200] sm:$0xff]
        %v1681 = vld [vmem:[%s1 + $0x208] sm:$0xff]
        %v1682 = vld [vmem:[%s1 + $0x210] sm:$0xff]
        %v1683 = vld [vmem:[%s1 + $0x218] sm:$0xff]
        %v1684 = vld [vmem:[%s1 + $0x220] sm:$0xff]
        %v1685 = vld [vmem:[%s1 + $0x228] sm:$0xff]
        %v1686 = vld [vmem:[%s1 + $0x230] sm:$0xff]
        %v1687 = vld [vmem:[%s1 + $0x238] sm:$0xff]
        %v1688 = vld [vmem:[%s2] sm:$0x1]
        %v1690 = vlaneseq
        %v1691 = vshrl.u32 %v1690, 7
        %v1692 = vsub.s32 0, %v1691
        %v1693 = vrot.slane %v1688, %v1692
        %v1696 = vsel %vm223, %v1460, 0
        %v1699 = vsel %vm223, %v1465, 0
        %v1702 = vsel %vm223, %v1470, 0
        %v1705 = vsel %vm223, %v1475, 0
        %v1708 = vsel %vm223, %v1480, 0
        %v1711 = vsel %vm223, %v1485, 0
        %v1714 = vsel %vm223, %v1490, 0
        %v1717 = vsel %vm223, %v1495, 0
        %v1720 = vsel %vm223, %v1500, 0
        %v1723 = vsel %vm223, %v1505, 0
        %v1726 = vsel %vm223, %v1510, 0
        %v1729 = vsel %vm223, %v1515, 0
        %v1732 = vsel %vm223, %v1520, 0
        %v1735 = vsel %vm223, %v1525, 0
        %v1738 = vsel %vm223, %v1530, 0
        %v1741 = vsel %vm223, %v1535, 0
        %v1744 = vsel %vm223, %v1540, 0
        %v1747 = vsel %vm223, %v1545, 0
        %v1750 = vsel %vm223, %v1550, 0
        %v1753 = vsel %vm223, %v1555, 0
        %v1756 = vsel %vm223, %v1560, 0
        %v1759 = vsel %vm223, %v1565, 0
        %v1762 = vsel %vm223, %v1570, 0
        %v1765 = vsel %vm223, %v1575, 0
        %v1768 = vsel %vm223, %v1580, 0
        %v1771 = vsel %vm223, %v1585, 0
        %v1774 = vsel %vm223, %v1590, 0
        %v1777 = vsel %vm223, %v1595, 0
        %v1780 = vsel %vm223, %v1600, 0
        %v1783 = vsel %vm223, %v1605, 0
        %v1786 = vsel %vm223, %v1610, 0
        %v1789 = vsel %vm223, %v1615, 0
        %1791 = vmatprep.subr.mxu0 0.0
        %1792 = vmatpush1.msra.mxu0 %v1616
        %1793 = vmatprep.subr.mxu0 0.0
        %1794 = vmatpush1.msra.mxu0 %v1617
        %1795 = vmatprep.subr.mxu0 0.0
        %1796 = vmatpush1.msra.mxu0 %v1618
        %1797 = vmatprep.subr.mxu0 0.0
        %1798 = vmatpush1.msra.mxu0 %v1619
        %1799 = vmatprep.subr.mxu0 0.0
        %1800 = vmatpush1.msra.mxu0 %v1620
        %1801 = vmatprep.subr.mxu0 0.0
        %1802 = vmatpush1.msra.mxu0 %v1621
        %1803 = vmatprep.subr.mxu0 0.0
        %1804 = vmatpush1.msra.mxu0 %v1622
        %1805 = vmatprep.subr.mxu0 0.0
        %1806 = vmatpush1.msra.mxu0 %v1623
        %1807 = vmatprep.subr.mxu0 0.0
        %1808 = vmatpush1.msra.mxu0 %v1624
        %1809 = vmatprep.subr.mxu0 0.0
        %1810 = vmatpush1.msra.mxu0 %v1625
        %1811 = vmatprep.subr.mxu0 0.0
        %1812 = vmatpush1.msra.mxu0 %v1626
        %1813 = vmatprep.subr.mxu0 0.0
        %1814 = vmatpush1.msra.mxu0 %v1627
        %1815 = vmatprep.subr.mxu0 0.0
        %1816 = vmatpush1.msra.mxu0 %v1628
        %1817 = vmatprep.subr.mxu0 0.0
        %1818 = vmatpush1.msra.mxu0 %v1629
        %1819 = vmatprep.subr.mxu0 0.0
        %1820 = vmatpush1.msra.mxu0 %v1630
        %1821 = vmatprep.subr.mxu0 0.0
        %1822 = vmatpush1.msra.mxu0 %v1631
        %1823 = vmatprep.subr.mxu0 0.0
        %1824 = vmatpush1.msra.mxu0 %v1632
        %1825 = vmatprep.subr.mxu0 0.0
        %1826 = vmatpush1.msra.mxu0 %v1633
        %1827 = vmatprep.subr.mxu0 0.0
        %1828 = vmatpush1.msra.mxu0 %v1634
        %1829 = vmatprep.subr.mxu0 0.0
        %1830 = vmatpush1.msra.mxu0 %v1635
        %1831 = vmatprep.subr.mxu0 0.0
        %1832 = vmatpush1.msra.mxu0 %v1636
        %1833 = vmatprep.subr.mxu0 0.0
        %1834 = vmatpush1.msra.mxu0 %v1637
        %1835 = vmatprep.subr.mxu0 0.0
        %1836 = vmatpush1.msra.mxu0 %v1638
        %1837 = vmatprep.subr.mxu0 0.0
        %1838 = vmatpush1.msra.mxu0 %v1639
        %1839 = vmatprep.subr.mxu0 0.0
        %1840 = vmatpush1.msra.mxu0 %v1640
        %1841 = vmatprep.subr.mxu0 0.0
        %1842 = vmatpush1.msra.mxu0 %v1641
        %1843 = vmatprep.subr.mxu0 0.0
        %1844 = vmatpush1.msra.mxu0 %v1642
        %1845 = vmatprep.subr.mxu0 0.0
        %1846 = vmatpush1.msra.mxu0 %v1643
        %1847 = vmatprep.subr.mxu0 0.0
        %1848 = vmatpush1.msra.mxu0 %v1644
        %1849 = vmatprep.subr.mxu0 0.0
        %1850 = vmatpush1.msra.mxu0 %v1645
        %1851 = vmatprep.subr.mxu0 0.0
        %1852 = vmatpush1.msra.mxu0 %v1646
        %1853 = vmatprep.subr.mxu0 0.0
        %1854 = vmatpush1.msra.mxu0 %v1647
        %1855 = vmatprep.mubr.f32.mxu0 %v1457
        %1856 = vmatmul.mubr.f32.gmra.mrb[0].mxu0 %v1456
        %v1857 = vpop.f32.mrb[0].mxu0
        %v1858 = vadd.f32 %v1693, %v1857
        %v1859 = vpop.f32.mrb[0].mxu0
        %1860 = vmatprep.mubr.f32.mxu0 %v1462
        %1861 = vmatmul.mubr.f32.gmra.mrb[0].mxu0 %v1461
        %v1862 = vpop.f32.mrb[0].mxu0
        %v1863 = vadd.f32 %v1693, %v1862
        %v1864 = vpop.f32.mrb[0].mxu0
        %1865 = vmatprep.mubr.f32.mxu0 %v1467
        %1866 = vmatmul.mubr.f32.gmra.mrb[0].mxu0 %v1466
        %v1867 = vpop.f32.mrb[0].mxu0
        %v1868 = vadd.f32 %v1693, %v1867
        %v1869 = vpop.f32.mrb[0].mxu0
        %1870 = vmatprep.mubr.f32.mxu0 %v1472
        %1871 = vmatmul.mubr.f32.gmra.mrb[0].mxu0 %v1471
        %v1872 = vpop.f32.mrb[0].mxu0
        %v1873 = vadd.f32 %v1693, %v1872
        %v1874 = vpop.f32.mrb[0].mxu0
        %1875 = vmatprep.mubr.f32.mxu0 %v1477
        %1876 = vmatmul.mubr.f32.gmra.mrb[0].mxu0 %v1476
        %v1877 = vpop.f32.mrb[0].mxu0
        %v1878 = vadd.f32 %v1693, %v1877
        %v1879 = vpop.f32.mrb[0].mxu0
        %1880 = vmatprep.mubr.f32.mxu0 %v1482
        %1881 = vmatmul.mubr.f32.gmra.mrb[0].mxu0 %v1481
        %v1882 = vpop.f32.mrb[0].mxu0
        %v1883 = vadd.f32 %v1693, %v1882
        %v1884 = vpop.f32.mrb[0].mxu0
        %1885 = vmatprep.mubr.f32.mxu0 %v1487
        %1886 = vmatmul.mubr.f32.gmra.mrb[0].mxu0 %v1486
        %v1887 = vpop.f32.mrb[0].mxu0
        %v1888 = vadd.f32 %v1693, %v1887
        %v1889 = vpop.f32.mrb[0].mxu0
        %1890 = vmatprep.mubr.f32.mxu0 %v1492
        %1891 = vmatmul.mubr.f32.gmra.mrb[0].mxu0 %v1491
        %v1892 = vpop.f32.mrb[0].mxu0
        %v1893 = vadd.f32 %v1693, %v1892
        %v1894 = vpop.f32.mrb[0].mxu0
        %1895 = vmatprep.mubr.f32.mxu0 %v1497
        %1896 = vmatmul.mubr.f32.gmra.mrb[0].mxu0 %v1496
        %v1897 = vpop.f32.mrb[0].mxu0
        %v1898 = vadd.f32 %v1693, %v1897
        %v1899 = vpop.f32.mrb[0].mxu0
        %1900 = vmatprep.mubr.f32.mxu0 %v1502
        %1901 = vmatmul.mubr.f32.gmra.mrb[0].mxu0 %v1501
        %v1902 = vpop.f32.mrb[0].mxu0
        %v1903 = vadd.f32 %v1693, %v1902
        %v1904 = vpop.f32.mrb[0].mxu0
        %1905 = vmatprep.mubr.f32.mxu0 %v1507
        %1906 = vmatmul.mubr.f32.gmra.mrb[0].mxu0 %v1506
        %v1907 = vpop.f32.mrb[0].mxu0
        %v1908 = vadd.f32 %v1693, %v1907
        %v1909 = vpop.f32.mrb[0].mxu0
        %1910 = vmatprep.mubr.f32.mxu0 %v1512
        %1911 = vmatmul.mubr.f32.gmra.mrb[0].mxu0 %v1511
        %v1912 = vpop.f32.mrb[0].mxu0
        %v1913 = vadd.f32 %v1693, %v1912
        %v1914 = vpop.f32.mrb[0].mxu0
        %1915 = vmatprep.mubr.f32.mxu0 %v1517
        %1916 = vmatmul.mubr.f32.gmra.mrb[0].mxu0 %v1516
        %v1917 = vpop.f32.mrb[0].mxu0
        %v1918 = vadd.f32 %v1693, %v1917
        %v1919 = vpop.f32.mrb[0].mxu0
        %1920 = vmatprep.mubr.f32.mxu0 %v1522
        %1921 = vmatmul.mubr.f32.gmra.mrb[0].mxu0 %v1521
        %v1922 = vpop.f32.mrb[0].mxu0
        %v1923 = vadd.f32 %v1693, %v1922
        %v1924 = vpop.f32.mrb[0].mxu0
        %1925 = vmatprep.mubr.f32.mxu0 %v1527
        %1926 = vmatmul.mubr.f32.gmra.mrb[0].mxu0 %v1526
        %v1927 = vpop.f32.mrb[0].mxu0
        %v1928 = vadd.f32 %v1693, %v1927
        %v1929 = vpop.f32.mrb[0].mxu0
        %1930 = vmatprep.mubr.f32.mxu0 %v1532
        %1931 = vmatmul.mubr.f32.gmra.mrb[0].mxu0 %v1531
        %v1932 = vpop.f32.mrb[0].mxu0
        %v1933 = vadd.f32 %v1693, %v1932
        %v1934 = vpop.f32.mrb[0].mxu0
        %1935 = vmatprep.mubr.f32.mxu0 %v1537
        %1936 = vmatmul.mubr.f32.gmra.mrb[0].mxu0 %v1536
        %v1937 = vpop.f32.mrb[0].mxu0
        %v1938 = vadd.f32 %v1693, %v1937
        %v1939 = vpop.f32.mrb[0].mxu0
        %1940 = vmatprep.mubr.f32.mxu0 %v1542
        %1941 = vmatmul.mubr.f32.gmra.mrb[0].mxu0 %v1541
        %v1942 = vpop.f32.mrb[0].mxu0
        %v1943 = vadd.f32 %v1693, %v1942
        %v1944 = vpop.f32.mrb[0].mxu0
        %1945 = vmatprep.mubr.f32.mxu0 %v1547
        %1946 = vmatmul.mubr.f32.gmra.mrb[0].mxu0 %v1546
        %v1947 = vpop.f32.mrb[0].mxu0
        %v1948 = vadd.f32 %v1693, %v1947
        %v1949 = vpop.f32.mrb[0].mxu0
        %1950 = vmatprep.mubr.f32.mxu0 %v1552
        %1951 = vmatmul.mubr.f32.gmra.mrb[0].mxu0 %v1551
        %v1952 = vpop.f32.mrb[0].mxu0
        %v1953 = vadd.f32 %v1693, %v1952
        %v1954 = vpop.f32.mrb[0].mxu0
        %1955 = vmatprep.mubr.f32.mxu0 %v1557
        %1956 = vmatmul.mubr.f32.gmra.mrb[0].mxu0 %v1556
        %v1957 = vpop.f32.mrb[0].mxu0
        %v1958 = vadd.f32 %v1693, %v1957
        %v1959 = vpop.f32.mrb[0].mxu0
        %1960 = vmatprep.mubr.f32.mxu0 %v1562
        %1961 = vmatmul.mubr.f32.gmra.mrb[0].mxu0 %v1561
        %v1962 = vpop.f32.mrb[0].mxu0
        %v1963 = vadd.f32 %v1693, %v1962
        %v1964 = vpop.f32.mrb[0].mxu0
        %1965 = vmatprep.mubr.f32.mxu0 %v1567
        %1966 = vmatmul.mubr.f32.gmra.mrb[0].mxu0 %v1566
        %v1967 = vpop.f32.mrb[0].mxu0
        %v1968 = vadd.f32 %v1693, %v1967
        %v1969 = vpop.f32.mrb[0].mxu0
        %1970 = vmatprep.mubr.f32.mxu0 %v1572
        %1971 = vmatmul.mubr.f32.gmra.mrb[0].mxu0 %v1571
        %v1972 = vpop.f32.mrb[0].mxu0
        %v1973 = vadd.f32 %v1693, %v1972
        %v1974 = vpop.f32.mrb[0].mxu0
        %1975 = vmatprep.mubr.f32.mxu0 %v1577
        %1976 = vmatmul.mubr.f32.gmra.mrb[0].mxu0 %v1576
        %v1977 = vpop.f32.mrb[0].mxu0
        %v1978 = vadd.f32 %v1693, %v1977
        %v1979 = vpop.f32.mrb[0].mxu0
        %1980 = vmatprep.mubr.f32.mxu0 %v1582
        %1981 = vmatmul.mubr.f32.gmra.mrb[0].mxu0 %v1581
        %v1982 = vpop.f32.mrb[0].mxu0
        %v1983 = vadd.f32 %v1693, %v1982
        %v1984 = vpop.f32.mrb[0].mxu0
        %1985 = vmatprep.mubr.f32.mxu0 %v1587
        %1986 = vmatmul.mubr.f32.gmra.mrb[0].mxu0 %v1586
        %v1987 = vpop.f32.mrb[0].mxu0
        %v1988 = vadd.f32 %v1693, %v1987
        %v1989 = vpop.f32.mrb[0].mxu0
        %1990 = vmatprep.mubr.f32.mxu0 %v1592
        %1991 = vmatmul.mubr.f32.gmra.mrb[0].mxu0 %v1591
        %v1992 = vpop.f32.mrb[0].mxu0
        %v1993 = vadd.f32 %v1693, %v1992
        %v1994 = vpop.f32.mrb[0].mxu0
        %1995 = vmatprep.mubr.f32.mxu0 %v1597
        %1996 = vmatmul.mubr.f32.gmra.mrb[0].mxu0 %v1596
        %v1997 = vpop.f32.mrb[0].mxu0
        %v1998 = vadd.f32 %v1693, %v1997
        %v1999 = vpop.f32.mrb[0].mxu0
        %2000 = vmatprep.mubr.f32.mxu0 %v1602
        %2001 = vmatmul.mubr.f32.gmra.mrb[0].mxu0 %v1601
        %v2002 = vpop.f32.mrb[0].mxu0
        %v2003 = vadd.f32 %v1693, %v2002
        %v2004 = vpop.f32.mrb[0].mxu0
        %2005 = vmatprep.mubr.f32.mxu0 %v1607
        %2006 = vmatmul.mubr.f32.gmra.mrb[0].mxu0 %v1606
        %v2007 = vpop.f32.mrb[0].mxu0
        %v2008 = vadd.f32 %v1693, %v2007
        %v2009 = vpop.f32.mrb[0].mxu0
        %2010 = vmatprep.mubr.f32.mxu0 %v1612
        %2011 = vmatmul.mubr.f32.gmra.mrb[0].mxu0 %v1611
        %v2012 = vpop.f32.mrb[0].mxu0
        %v2013 = vadd.f32 %v1693, %v2012
        %v2014 = vpop.f32.mrb[0].mxu0
        %2015 = vdwg.mxu0
        %2016 = vmatprep.subr.mxu0 0.0
        %2017 = vmatpush1.msra.mxu0 %v1648
        %2018 = vmatprep.subr.mxu0 0.0
        %2019 = vmatpush1.msra.mxu0 %v1649
        %2020 = vmatprep.subr.mxu0 0.0
        %2021 = vmatpush1.msra.mxu0 %v1650
        %2022 = vmatprep.subr.mxu0 0.0
        %2023 = vmatpush1.msra.mxu0 %v1651
        %2024 = vmatprep.subr.mxu0 0.0
        %2025 = vmatpush1.msra.mxu0 %v1652
        %2026 = vmatprep.subr.mxu0 0.0
        %2027 = vmatpush1.msra.mxu0 %v1653
        %2028 = vmatprep.subr.mxu0 0.0
        %2029 = vmatpush1.msra.mxu0 %v1654
        %2030 = vmatprep.subr.mxu0 0.0
        %2031 = vmatpush1.msra.mxu0 %v1655
        %2032 = vmatprep.subr.mxu0 0.0
        %2033 = vmatpush1.msra.mxu0 %v1656
        %2034 = vmatprep.subr.mxu0 0.0
        %2035 = vmatpush1.msra.mxu0 %v1657
        %2036 = vmatprep.subr.mxu0 0.0
        %2037 = vmatpush1.msra.mxu0 %v1658
        %2038 = vmatprep.subr.mxu0 0.0
        %2039 = vmatpush1.msra.mxu0 %v1659
        %2040 = vmatprep.subr.mxu0 0.0
        %2041 = vmatpush1.msra.mxu0 %v1660
        %2042 = vmatprep.subr.mxu0 0.0
        %2043 = vmatpush1.msra.mxu0 %v1661
        %2044 = vmatprep.subr.mxu0 0.0
        %2045 = vmatpush1.msra.mxu0 %v1662
        %2046 = vmatprep.subr.mxu0 0.0
        %2047 = vmatpush1.msra.mxu0 %v1663
        %2048 = vmatprep.subr.mxu0 0.0
        %2049 = vmatpush1.msra.mxu0 %v1664
        %2050 = vmatprep.subr.mxu0 0.0
        %2051 = vmatpush1.msra.mxu0 %v1665
        %2052 = vmatprep.subr.mxu0 0.0
        %2053 = vmatpush1.msra.mxu0 %v1666
        %2054 = vmatprep.subr.mxu0 0.0
        %2055 = vmatpush1.msra.mxu0 %v1667
        %2056 = vmatprep.subr.mxu0 0.0
        %2057 = vmatpush1.msra.mxu0 %v1668
        %2058 = vmatprep.subr.mxu0 0.0
        %2059 = vmatpush1.msra.mxu0 %v1669
        %2060 = vmatprep.subr.mxu0 0.0
        %2061 = vmatpush1.msra.mxu0 %v1670
        %2062 = vmatprep.subr.mxu0 0.0
        %2063 = vmatpush1.msra.mxu0 %v1671
        %2064 = vmatprep.subr.mxu0 0.0
        %2065 = vmatpush1.msra.mxu0 %v1672
        %2066 = vmatprep.subr.mxu0 0.0
        %2067 = vmatpush1.msra.mxu0 %v1673
        %2068 = vmatprep.subr.mxu0 0.0
        %2069 = vmatpush1.msra.mxu0 %v1674
        %2070 = vmatprep.subr.mxu0 0.0
        %2071 = vmatpush1.msra.mxu0 %v1675
        %2072 = vmatprep.subr.mxu0 0.0
        %2073 = vmatpush1.msra.mxu0 %v1676
        %2074 = vmatprep.subr.mxu0 0.0
        %2075 = vmatpush1.msra.mxu0 %v1677
        %2076 = vmatprep.subr.mxu0 0.0
        %2077 = vmatpush1.msra.mxu0 %v1678
        %2078 = vmatprep.subr.mxu0 0.0
        %2079 = vmatpush1.msra.mxu0 %v1679
        %2080 = vmatprep.mubr.f32.mxu0 %v1459
        %2081 = vmatmul.mubr.f32.gmra.mrb[0].mxu0 %v1458
        %v2082 = vpop.f32.mrb[0].mxu0
        %v2083 = vadd.f32 %v1858, %v2082
        %v2084 = vpop.f32.mrb[0].mxu0
        %2085 = vmatprep.mubr.f32.mxu0 %v1464
        %2086 = vmatmul.mubr.f32.gmra.mrb[0].mxu0 %v1463
        %v2087 = vpop.f32.mrb[0].mxu0
        %v2088 = vadd.f32 %v1863, %v2087
        %v2089 = vpop.f32.mrb[0].mxu0
        %2090 = vmatprep.mubr.f32.mxu0 %v1469
        %2091 = vmatmul.mubr.f32.gmra.mrb[0].mxu0 %v1468
        %v2092 = vpop.f32.mrb[0].mxu0
        %v2093 = vadd.f32 %v1868, %v2092
        %v2094 = vpop.f32.mrb[0].mxu0
        %2095 = vmatprep.mubr.f32.mxu0 %v1474
        %2096 = vmatmul.mubr.f32.gmra.mrb[0].mxu0 %v1473
        %v2097 = vpop.f32.mrb[0].mxu0
        %v2098 = vadd.f32 %v1873, %v2097
        %v2099 = vpop.f32.mrb[0].mxu0
        %2100 = vmatprep.mubr.f32.mxu0 %v1479
        %2101 = vmatmul.mubr.f32.gmra.mrb[0].mxu0 %v1478
        %v2102 = vpop.f32.mrb[0].mxu0
        %v2103 = vadd.f32 %v1878, %v2102
        %v2104 = vpop.f32.mrb[0].mxu0
        %2105 = vmatprep.mubr.f32.mxu0 %v1484
        %2106 = vmatmul.mubr.f32.gmra.mrb[0].mxu0 %v1483
        %v2107 = vpop.f32.mrb[0].mxu0
        %v2108 = vadd.f32 %v1883, %v2107
        %v2109 = vpop.f32.mrb[0].mxu0
        %2110 = vmatprep.mubr.f32.mxu0 %v1489
        %2111 = vmatmul.mubr.f32.gmra.mrb[0].mxu0 %v1488
        %v2112 = vpop.f32.mrb[0].mxu0
        %v2113 = vadd.f32 %v1888, %v2112
        %v2114 = vpop.f32.mrb[0].mxu0
        %2115 = vmatprep.mubr.f32.mxu0 %v1494
        %2116 = vmatmul.mubr.f32.gmra.mrb[0].mxu0 %v1493
        %v2117 = vpop.f32.mrb[0].mxu0
        %v2118 = vadd.f32 %v1893, %v2117
        %v2119 = vpop.f32.mrb[0].mxu0
        %2120 = vmatprep.mubr.f32.mxu0 %v1499
        %2121 = vmatmul.mubr.f32.gmra.mrb[0].mxu0 %v1498
        %v2122 = vpop.f32.mrb[0].mxu0
        %v2123 = vadd.f32 %v1898, %v2122
        %v2124 = vpop.f32.mrb[0].mxu0
        %2125 = vmatprep.mubr.f32.mxu0 %v1504
        %2126 = vmatmul.mubr.f32.gmra.mrb[0].mxu0 %v1503
        %v2127 = vpop.f32.mrb[0].mxu0
        %v2128 = vadd.f32 %v1903, %v2127
        %v2129 = vpop.f32.mrb[0].mxu0
        %2130 = vmatprep.mubr.f32.mxu0 %v1509
        %2131 = vmatmul.mubr.f32.gmra.mrb[0].mxu0 %v1508
        %v2132 = vpop.f32.mrb[0].mxu0
        %v2133 = vadd.f32 %v1908, %v2132
        %v2134 = vpop.f32.mrb[0].mxu0
        %2135 = vmatprep.mubr.f32.mxu0 %v1514
        %2136 = vmatmul.mubr.f32.gmra.mrb[0].mxu0 %v1513
        %v2137 = vpop.f32.mrb[0].mxu0
        %v2138 = vadd.f32 %v1913, %v2137
        %v2139 = vpop.f32.mrb[0].mxu0
        %2140 = vmatprep.mubr.f32.mxu0 %v1519
        %2141 = vmatmul.mubr.f32.gmra.mrb[0].mxu0 %v1518
        %v2142 = vpop.f32.mrb[0].mxu0
        %v2143 = vadd.f32 %v1918, %v2142
        %v2144 = vpop.f32.mrb[0].mxu0
        %2145 = vmatprep.mubr.f32.mxu0 %v1524
        %2146 = vmatmul.mubr.f32.gmra.mrb[0].mxu0 %v1523
        %v2147 = vpop.f32.mrb[0].mxu0
        %v2148 = vadd.f32 %v1923, %v2147
        %v2149 = vpop.f32.mrb[0].mxu0
        %2150 = vmatprep.mubr.f32.mxu0 %v1529
        %2151 = vmatmul.mubr.f32.gmra.mrb[0].mxu0 %v1528
        %v2152 = vpop.f32.mrb[0].mxu0
        %v2153 = vadd.f32 %v1928, %v2152
        %v2154 = vpop.f32.mrb[0].mxu0
        %2155 = vmatprep.mubr.f32.mxu0 %v1534
        %2156 = vmatmul.mubr.f32.gmra.mrb[0].mxu0 %v1533
        %v2157 = vpop.f32.mrb[0].mxu0
        %v2158 = vadd.f32 %v1933, %v2157
        %v2159 = vpop.f32.mrb[0].mxu0
        %2160 = vmatprep.mubr.f32.mxu0 %v1539
        %2161 = vmatmul.mubr.f32.gmra.mrb[0].mxu0 %v1538
        %v2162 = vpop.f32.mrb[0].mxu0
        %v2163 = vadd.f32 %v1938, %v2162
        %v2164 = vpop.f32.mrb[0].mxu0
        %2165 = vmatprep.mubr.f32.mxu0 %v1544
        %2166 = vmatmul.mubr.f32.gmra.mrb[0].mxu0 %v1543
        %v2167 = vpop.f32.mrb[0].mxu0
        %v2168 = vadd.f32 %v1943, %v2167
        %v2169 = vpop.f32.mrb[0].mxu0
        %2170 = vmatprep.mubr.f32.mxu0 %v1549
        %2171 = vmatmul.mubr.f32.gmra.mrb[0].mxu0 %v1548
        %v2172 = vpop.f32.mrb[0].mxu0
        %v2173 = vadd.f32 %v1948, %v2172
        %v2174 = vpop.f32.mrb[0].mxu0
        %2175 = vmatprep.mubr.f32.mxu0 %v1554
        %2176 = vmatmul.mubr.f32.gmra.mrb[0].mxu0 %v1553
        %v2177 = vpop.f32.mrb[0].mxu0
        %v2178 = vadd.f32 %v1953, %v2177
        %v2179 = vpop.f32.mrb[0].mxu0
        %2180 = vmatprep.mubr.f32.mxu0 %v1559
        %2181 = vmatmul.mubr.f32.gmra.mrb[0].mxu0 %v1558
        %v2182 = vpop.f32.mrb[0].mxu0
        %v2183 = vadd.f32 %v1958, %v2182
        %v2184 = vpop.f32.mrb[0].mxu0
        %2185 = vmatprep.mubr.f32.mxu0 %v1564
        %2186 = vmatmul.mubr.f32.gmra.mrb[0].mxu0 %v1563
        %v2187 = vpop.f32.mrb[0].mxu0
        %v2188 = vadd.f32 %v1963, %v2187
        %v2189 = vpop.f32.mrb[0].mxu0
        %2190 = vmatprep.mubr.f32.mxu0 %v1569
        %2191 = vmatmul.mubr.f32.gmra.mrb[0].mxu0 %v1568
        %v2192 = vpop.f32.mrb[0].mxu0
        %v2193 = vadd.f32 %v1968, %v2192
        %v2194 = vpop.f32.mrb[0].mxu0
        %2195 = vmatprep.mubr.f32.mxu0 %v1574
        %2196 = vmatmul.mubr.f32.gmra.mrb[0].mxu0 %v1573
        %v2197 = vpop.f32.mrb[0].mxu0
        %v2198 = vadd.f32 %v1973, %v2197
        %v2199 = vpop.f32.mrb[0].mxu0
        %2200 = vmatprep.mubr.f32.mxu0 %v1579
        %2201 = vmatmul.mubr.f32.gmra.mrb[0].mxu0 %v1578
        %v2202 = vpop.f32.mrb[0].mxu0
        %v2203 = vadd.f32 %v1978, %v2202
        %v2204 = vpop.f32.mrb[0].mxu0
        %2205 = vmatprep.mubr.f32.mxu0 %v1584
        %2206 = vmatmul.mubr.f32.gmra.mrb[0].mxu0 %v1583
        %v2207 = vpop.f32.mrb[0].mxu0
        %v2208 = vadd.f32 %v1983, %v2207
        %v2209 = vpop.f32.mrb[0].mxu0
        %2210 = vmatprep.mubr.f32.mxu0 %v1589
        %2211 = vmatmul.mubr.f32.gmra.mrb[0].mxu0 %v1588
        %v2212 = vpop.f32.mrb[0].mxu0
        %v2213 = vadd.f32 %v1988, %v2212
        %v2214 = vpop.f32.mrb[0].mxu0
        %2215 = vmatprep.mubr.f32.mxu0 %v1594
        %2216 = vmatmul.mubr.f32.gmra.mrb[0].mxu0 %v1593
        %v2217 = vpop.f32.mrb[0].mxu0
        %v2218 = vadd.f32 %v1993, %v2217
        %v2219 = vpop.f32.mrb[0].mxu0
        %2220 = vmatprep.mubr.f32.mxu0 %v1599
        %2221 = vmatmul.mubr.f32.gmra.mrb[0].mxu0 %v1598
        %v2222 = vpop.f32.mrb[0].mxu0
        %v2223 = vadd.f32 %v1998, %v2222
        %v2224 = vpop.f32.mrb[0].mxu0
        %2225 = vmatprep.mubr.f32.mxu0 %v1604
        %2226 = vmatmul.mubr.f32.gmra.mrb[0].mxu0 %v1603
        %v2227 = vpop.f32.mrb[0].mxu0
        %v2228 = vadd.f32 %v2003, %v2227
        %v2229 = vpop.f32.mrb[0].mxu0
        %2230 = vmatprep.mubr.f32.mxu0 %v1609
        %2231 = vmatmul.mubr.f32.gmra.mrb[0].mxu0 %v1608
        %v2232 = vpop.f32.mrb[0].mxu0
        %v2233 = vadd.f32 %v2008, %v2232
        %v2234 = vpop.f32.mrb[0].mxu0
        %2235 = vmatprep.mubr.f32.mxu0 %v1614
        %2236 = vmatmul.mubr.f32.gmra.mrb[0].mxu0 %v1613
        %v2237 = vpop.f32.mrb[0].mxu0
        %v2238 = vadd.f32 %v2013, %v2237
        %v2239 = vpop.f32.mrb[0].mxu0
        %2240 = vdwg.mxu0
        %2241 = vmatprep.subr.mxu0 0.0
        %2242 = vmatpush1.msra.mxu0 %v1680
        %2243 = vmatprep.subr.mxu0 0.0
        %2244 = vmatpush1.msra.mxu0 %v1681
        %2245 = vmatprep.subr.mxu0 0.0
        %2246 = vmatpush1.msra.mxu0 %v1682
        %2247 = vmatprep.subr.mxu0 0.0
        %2248 = vmatpush1.msra.mxu0 %v1683
        %2249 = vmatprep.subr.mxu0 0.0
        %2250 = vmatpush1.msra.mxu0 %v1684
        %2251 = vmatprep.subr.mxu0 0.0
        %2252 = vmatpush1.msra.mxu0 %v1685
        %2253 = vmatprep.subr.mxu0 0.0
        %2254 = vmatpush1.msra.mxu0 %v1686
        %2255 = vmatprep.subr.mxu0 0.0
        %2256 = vmatpush1.msra.mxu0 %v1687
        %2257 = vmatprep.subr.mxu0 0.0
        %2258 = vmatpush1.msra.mxu0 0.0
        %2259 = vmatprep.subr.mxu0 0.0
        %2260 = vmatpush1.msra.mxu0 0.0
        %2261 = vmatprep.subr.mxu0 0.0
        %2262 = vmatpush1.msra.mxu0 0.0
        %2263 = vmatprep.subr.mxu0 0.0
        %2264 = vmatpush1.msra.mxu0 0.0
        %2265 = vmatprep.subr.mxu0 0.0
        %2266 = vmatpush1.msra.mxu0 0.0
        %2267 = vmatprep.subr.mxu0 0.0
        %2268 = vmatpush1.msra.mxu0 0.0
        %2269 = vmatprep.subr.mxu0 0.0
        %2270 = vmatpush1.msra.mxu0 0.0
        %2271 = vmatprep.subr.mxu0 0.0
        %2272 = vmatpush1.msra.mxu0 0.0
        %2273 = vmatprep.subr.mxu0 0.0
        %2274 = vmatpush1.msra.mxu0 0.0
        %2275 = vmatprep.subr.mxu0 0.0
        %2276 = vmatpush1.msra.mxu0 0.0
        %2277 = vmatprep.subr.mxu0 0.0
        %2278 = vmatpush1.msra.mxu0 0.0
        %2279 = vmatprep.subr.mxu0 0.0
        %2280 = vmatpush1.msra.mxu0 0.0
        %2281 = vmatprep.subr.mxu0 0.0
        %2282 = vmatpush1.msra.mxu0 0.0
        %2283 = vmatprep.subr.mxu0 0.0
        %2284 = vmatpush1.msra.mxu0 0.0
        %2285 = vmatprep.subr.mxu0 0.0
        %2286 = vmatpush1.msra.mxu0 0.0
        %2287 = vmatprep.subr.mxu0 0.0
        %2288 = vmatpush1.msra.mxu0 0.0
        %2289 = vmatprep.subr.mxu0 0.0
        %2290 = vmatpush1.msra.mxu0 0.0
        %2291 = vmatprep.subr.mxu0 0.0
        %2292 = vmatpush1.msra.mxu0 0.0
        %2293 = vmatprep.subr.mxu0 0.0
        %2294 = vmatpush1.msra.mxu0 0.0
        %2295 = vmatprep.subr.mxu0 0.0
        %2296 = vmatpush1.msra.mxu0 0.0
        %2297 = vmatprep.subr.mxu0 0.0
        %2298 = vmatpush1.msra.mxu0 0.0
        %2299 = vmatprep.subr.mxu0 0.0
        %2300 = vmatpush1.msra.mxu0 0.0
        %2301 = vmatprep.subr.mxu0 0.0
        %2302 = vmatpush1.msra.mxu0 0.0
        %2303 = vmatprep.subr.mxu0 0.0
        %2304 = vmatpush1.msra.mxu0 0.0
        %2305 = vmatprep.mubr.f32.mxu0 0.0
        %2306 = vmatmul.mubr.f32.gmra.mrb[0].mxu0 %v1696
        %v2307 = vpop.f32.mrb[0].mxu0
        %v2308 = vadd.f32 %v2083, %v2307
        %v2309 = vpop.f32.mrb[0].mxu0
        %2310 = vmatprep.mubr.f32.mxu0 0.0
        %2311 = vmatmul.mubr.f32.gmra.mrb[0].mxu0 %v1699
        %v2312 = vpop.f32.mrb[0].mxu0
        %v2313 = vadd.f32 %v2088, %v2312
        %v2314 = vpop.f32.mrb[0].mxu0
        %2315 = vmatprep.mubr.f32.mxu0 0.0
        %2316 = vmatmul.mubr.f32.gmra.mrb[0].mxu0 %v1702
        %v2317 = vpop.f32.mrb[0].mxu0
        %v2318 = vadd.f32 %v2093, %v2317
        %v2319 = vpop.f32.mrb[0].mxu0
        %2320 = vmatprep.mubr.f32.mxu0 0.0
        %2321 = vmatmul.mubr.f32.gmra.mrb[0].mxu0 %v1705
        %v2322 = vpop.f32.mrb[0].mxu0
        %v2323 = vadd.f32 %v2098, %v2322
        %v2324 = vpop.f32.mrb[0].mxu0
        %2325 = vmatprep.mubr.f32.mxu0 0.0
        %2326 = vmatmul.mubr.f32.gmra.mrb[0].mxu0 %v1708
        %v2327 = vpop.f32.mrb[0].mxu0
        %v2328 = vadd.f32 %v2103, %v2327
        %v2329 = vpop.f32.mrb[0].mxu0
        %2330 = vmatprep.mubr.f32.mxu0 0.0
        %2331 = vmatmul.mubr.f32.gmra.mrb[0].mxu0 %v1711
        %v2332 = vpop.f32.mrb[0].mxu0
        %v2333 = vadd.f32 %v2108, %v2332
        %v2334 = vpop.f32.mrb[0].mxu0
        %2335 = vmatprep.mubr.f32.mxu0 0.0
        %2336 = vmatmul.mubr.f32.gmra.mrb[0].mxu0 %v1714
        %v2337 = vpop.f32.mrb[0].mxu0
        %v2338 = vadd.f32 %v2113, %v2337
        %v2339 = vpop.f32.mrb[0].mxu0
        %2340 = vmatprep.mubr.f32.mxu0 0.0
        %2341 = vmatmul.mubr.f32.gmra.mrb[0].mxu0 %v1717
        %v2342 = vpop.f32.mrb[0].mxu0
        %v2343 = vadd.f32 %v2118, %v2342
        %v2344 = vpop.f32.mrb[0].mxu0
        %2345 = vmatprep.mubr.f32.mxu0 0.0
        %2346 = vmatmul.mubr.f32.gmra.mrb[0].mxu0 %v1720
        %v2347 = vpop.f32.mrb[0].mxu0
        %v2348 = vadd.f32 %v2123, %v2347
        %v2349 = vpop.f32.mrb[0].mxu0
        %2350 = vmatprep.mubr.f32.mxu0 0.0
        %2351 = vmatmul.mubr.f32.gmra.mrb[0].mxu0 %v1723
        %v2352 = vpop.f32.mrb[0].mxu0
        %v2353 = vadd.f32 %v2128, %v2352
        %v2354 = vpop.f32.mrb[0].mxu0
        %2355 = vmatprep.mubr.f32.mxu0 0.0
        %2356 = vmatmul.mubr.f32.gmra.mrb[0].mxu0 %v1726
        %v2357 = vpop.f32.mrb[0].mxu0
        %v2358 = vadd.f32 %v2133, %v2357
        %v2359 = vpop.f32.mrb[0].mxu0
        %2360 = vmatprep.mubr.f32.mxu0 0.0
        %2361 = vmatmul.mubr.f32.gmra.mrb[0].mxu0 %v1729
        %v2362 = vpop.f32.mrb[0].mxu0
        %v2363 = vadd.f32 %v2138, %v2362
        %v2364 = vpop.f32.mrb[0].mxu0
        %2365 = vmatprep.mubr.f32.mxu0 0.0
        %2366 = vmatmul.mubr.f32.gmra.mrb[0].mxu0 %v1732
        %v2367 = vpop.f32.mrb[0].mxu0
        %v2368 = vadd.f32 %v2143, %v2367
        %v2369 = vpop.f32.mrb[0].mxu0
        %2370 = vmatprep.mubr.f32.mxu0 0.0
        %2371 = vmatmul.mubr.f32.gmra.mrb[0].mxu0 %v1735
        %v2372 = vpop.f32.mrb[0].mxu0
        %v2373 = vadd.f32 %v2148, %v2372
        %v2374 = vpop.f32.mrb[0].mxu0
        %2375 = vmatprep.mubr.f32.mxu0 0.0
        %2376 = vmatmul.mubr.f32.gmra.mrb[0].mxu0 %v1738
        %v2377 = vpop.f32.mrb[0].mxu0
        %v2378 = vadd.f32 %v2153, %v2377
        %v2379 = vpop.f32.mrb[0].mxu0
        %2380 = vmatprep.mubr.f32.mxu0 0.0
        %2381 = vmatmul.mubr.f32.gmra.mrb[0].mxu0 %v1741
        %v2382 = vpop.f32.mrb[0].mxu0
        %v2383 = vadd.f32 %v2158, %v2382
        %v2384 = vpop.f32.mrb[0].mxu0
        %2385 = vmatprep.mubr.f32.mxu0 0.0
        %2386 = vmatmul.mubr.f32.gmra.mrb[0].mxu0 %v1744
        %v2387 = vpop.f32.mrb[0].mxu0
        %v2388 = vadd.f32 %v2163, %v2387
        %v2389 = vpop.f32.mrb[0].mxu0
        %2390 = vmatprep.mubr.f32.mxu0 0.0
        %2391 = vmatmul.mubr.f32.gmra.mrb[0].mxu0 %v1747
        %v2392 = vpop.f32.mrb[0].mxu0
        %v2393 = vadd.f32 %v2168, %v2392
        %v2394 = vpop.f32.mrb[0].mxu0
        %2395 = vmatprep.mubr.f32.mxu0 0.0
        %2396 = vmatmul.mubr.f32.gmra.mrb[0].mxu0 %v1750
        %v2397 = vpop.f32.mrb[0].mxu0
        %v2398 = vadd.f32 %v2173, %v2397
        %v2399 = vpop.f32.mrb[0].mxu0
        %2400 = vmatprep.mubr.f32.mxu0 0.0
        %2401 = vmatmul.mubr.f32.gmra.mrb[0].mxu0 %v1753
        %v2402 = vpop.f32.mrb[0].mxu0
        %v2403 = vadd.f32 %v2178, %v2402
        %v2404 = vpop.f32.mrb[0].mxu0
        %2405 = vmatprep.mubr.f32.mxu0 0.0
        %2406 = vmatmul.mubr.f32.gmra.mrb[0].mxu0 %v1756
        %v2407 = vpop.f32.mrb[0].mxu0
        %v2408 = vadd.f32 %v2183, %v2407
        %v2409 = vpop.f32.mrb[0].mxu0
        %2410 = vmatprep.mubr.f32.mxu0 0.0
        %2411 = vmatmul.mubr.f32.gmra.mrb[0].mxu0 %v1759
        %v2412 = vpop.f32.mrb[0].mxu0
        %v2413 = vadd.f32 %v2188, %v2412
        %v2414 = vpop.f32.mrb[0].mxu0
        %2415 = vmatprep.mubr.f32.mxu0 0.0
        %2416 = vmatmul.mubr.f32.gmra.mrb[0].mxu0 %v1762
        %v2417 = vpop.f32.mrb[0].mxu0
        %v2418 = vadd.f32 %v2193, %v2417
        %v2419 = vpop.f32.mrb[0].mxu0
        %2420 = vmatprep.mubr.f32.mxu0 0.0
        %2421 = vmatmul.mubr.f32.gmra.mrb[0].mxu0 %v1765
        %v2422 = vpop.f32.mrb[0].mxu0
        %v2423 = vadd.f32 %v2198, %v2422
        %v2424 = vpop.f32.mrb[0].mxu0
        %2425 = vmatprep.mubr.f32.mxu0 0.0
        %2426 = vmatmul.mubr.f32.gmra.mrb[0].mxu0 %v1768
        %v2427 = vpop.f32.mrb[0].mxu0
        %v2428 = vadd.f32 %v2203, %v2427
        %v2429 = vpop.f32.mrb[0].mxu0
        %2430 = vmatprep.mubr.f32.mxu0 0.0
        %2431 = vmatmul.mubr.f32.gmra.mrb[0].mxu0 %v1771
        %v2432 = vpop.f32.mrb[0].mxu0
        %v2433 = vadd.f32 %v2208, %v2432
        %v2434 = vpop.f32.mrb[0].mxu0
        %2435 = vmatprep.mubr.f32.mxu0 0.0
        %2436 = vmatmul.mubr.f32.gmra.mrb[0].mxu0 %v1774
        %v2437 = vpop.f32.mrb[0].mxu0
        %v2438 = vadd.f32 %v2213, %v2437
        %v2439 = vpop.f32.mrb[0].mxu0
        %2440 = vmatprep.mubr.f32.mxu0 0.0
        %2441 = vmatmul.mubr.f32.gmra.mrb[0].mxu0 %v1777
        %v2442 = vpop.f32.mrb[0].mxu0
        %v2443 = vadd.f32 %v2218, %v2442
        %v2444 = vpop.f32.mrb[0].mxu0
        %2445 = vmatprep.mubr.f32.mxu0 0.0
        %2446 = vmatmul.mubr.f32.gmra.mrb[0].mxu0 %v1780
        %v2447 = vpop.f32.mrb[0].mxu0
        %v2448 = vadd.f32 %v2223, %v2447
        %v2449 = vpop.f32.mrb[0].mxu0
        %2450 = vmatprep.mubr.f32.mxu0 0.0
        %2451 = vmatmul.mubr.f32.gmra.mrb[0].mxu0 %v1783
        %v2452 = vpop.f32.mrb[0].mxu0
        %v2453 = vadd.f32 %v2228, %v2452
        %v2454 = vpop.f32.mrb[0].mxu0
        %2455 = vmatprep.mubr.f32.mxu0 0.0
        %2456 = vmatmul.mubr.f32.gmra.mrb[0].mxu0 %v1786
        %v2457 = vpop.f32.mrb[0].mxu0
        %v2458 = vadd.f32 %v2233, %v2457
        %v2459 = vpop.f32.mrb[0].mxu0
        %2460 = vmatprep.mubr.f32.mxu0 0.0
        %2461 = vmatmul.mubr.f32.gmra.mrb[0].mxu0 %v1789
        %v2462 = vpop.f32.mrb[0].mxu0
        %v2463 = vadd.f32 %v2238, %v2462
        %v2464 = vpop.f32.mrb[0].mxu0
        %2465 = vdwg.mxu0
        %v2466 = vmax.f32 %v2308, 0.0
        %v2467 = vmax.f32 %v2313, 0.0
        %v2468 = vmax.f32 %v2318, 0.0
        %v2469 = vmax.f32 %v2323, 0.0
        %v2470 = vmax.f32 %v2328, 0.0
        %v2471 = vmax.f32 %v2333, 0.0
        %v2472 = vmax.f32 %v2338, 0.0
        %v2473 = vmax.f32 %v2343, 0.0
        %v2474 = vmax.f32 %v2348, 0.0
        %v2475 = vmax.f32 %v2353, 0.0
        %v2476 = vmax.f32 %v2358, 0.0
        %v2477 = vmax.f32 %v2363, 0.0
        %v2478 = vmax.f32 %v2368, 0.0
        %v2479 = vmax.f32 %v2373, 0.0
        %v2480 = vmax.f32 %v2378, 0.0
        %v2481 = vmax.f32 %v2383, 0.0
        %v2482 = vmax.f32 %v2388, 0.0
        %v2483 = vmax.f32 %v2393, 0.0
        %v2484 = vmax.f32 %v2398, 0.0
        %v2485 = vmax.f32 %v2403, 0.0
        %v2486 = vmax.f32 %v2408, 0.0
        %v2487 = vmax.f32 %v2413, 0.0
        %v2488 = vmax.f32 %v2418, 0.0
        %v2489 = vmax.f32 %v2423, 0.0
        %v2490 = vmax.f32 %v2428, 0.0
        %v2491 = vmax.f32 %v2433, 0.0
        %v2492 = vmax.f32 %v2438, 0.0
        %v2493 = vmax.f32 %v2443, 0.0
        %v2494 = vmax.f32 %v2448, 0.0
        %v2495 = vmax.f32 %v2453, 0.0
        %v2496 = vmax.f32 %v2458, 0.0
        %v2497 = vmax.f32 %v2463, 0.0
        %2498 = vst.msk [vmem:[%s333 + $0x1] sm:$0xff] %vm223, %v2466
        %2499 = vst.msk [vmem:[%s333 + $0x9] sm:$0xff] %vm223, %v2467
        %2500 = vst.msk [vmem:[%s333 + $0x19] sm:$0xff] %vm223, %v2468
        %2501 = vst.msk [vmem:[%s333 + $0x21] sm:$0xff] %vm223, %v2469
        %2502 = vst.msk [vmem:[%s333 + $0x31] sm:$0xff] %vm223, %v2470
        %2503 = vst.msk [vmem:[%s333 + $0x39] sm:$0xff] %vm223, %v2471
        %2504 = vst.msk [vmem:[%s333 + $0x49] sm:$0xff] %vm223, %v2472
        %2505 = vst.msk [vmem:[%s333 + $0x51] sm:$0xff] %vm223, %v2473
        %2506 = vst.msk [vmem:[%s333 + $0x61] sm:$0xff] %vm223, %v2474
        %2507 = vst.msk [vmem:[%s333 + $0x69] sm:$0xff] %vm223, %v2475
        %2508 = vst.msk [vmem:[%s333 + $0x79] sm:$0xff] %vm223, %v2476
        %2509 = vst.msk [vmem:[%s333 + $0x81] sm:$0xff] %vm223, %v2477
        %2510 = vst.msk [vmem:[%s333 + $0x91] sm:$0xff] %vm223, %v2478
        %2511 = vst.msk [vmem:[%s333 + $0x99] sm:$0xff] %vm223, %v2479
        %2512 = vst.msk [vmem:[%s333 + $0xa9] sm:$0xff] %vm223, %v2480
        %2513 = vst.msk [vmem:[%s333 + $0xb1] sm:$0xff] %vm223, %v2481
        %2514 = vst.msk [vmem:[%s333 + $0xc1] sm:$0xff] %vm223, %v2482
        %2515 = vst.msk [vmem:[%s333 + $0xc9] sm:$0xff] %vm223, %v2483
        %2516 = vst.msk [vmem:[%s333 + $0xd9] sm:$0xff] %vm223, %v2484
        %2517 = vst.msk [vmem:[%s333 + $0xe1] sm:$0xff] %vm223, %v2485
        %2518 = vst.msk [vmem:[%s333 + $0xf1] sm:$0xff] %vm223, %v2486
        %2519 = vst.msk [vmem:[%s333 + $0xf9] sm:$0xff] %vm223, %v2487
        %2520 = vst.msk [vmem:[%s333 + $0x109] sm:$0xff] %vm223, %v2488
        %2521 = vst.msk [vmem:[%s333 + $0x111] sm:$0xff] %vm223, %v2489
        %2522 = vst.msk [vmem:[%s333 + $0x121] sm:$0xff] %vm223, %v2490
        %2523 = vst.msk [vmem:[%s333 + $0x129] sm:$0xff] %vm223, %v2491
        %2524 = vst.msk [vmem:[%s333 + $0x139] sm:$0xff] %vm223, %v2492
        %2525 = vst.msk [vmem:[%s333 + $0x141] sm:$0xff] %vm223, %v2493
        %2526 = vst.msk [vmem:[%s333 + $0x151] sm:$0xff] %vm223, %v2494
        %2527 = vst.msk [vmem:[%s333 + $0x159] sm:$0xff] %vm223, %v2495
        %2528 = vst.msk [vmem:[%s333 + $0x169] sm:$0xff] %vm223, %v2496
        %2529 = vst.msk [vmem:[%s333 + $0x171] sm:$0xff] %vm223, %v2497
        %v2530 = vld [vmem:[#allocation2] sm:$0xff]
        %v2531 = vld [vmem:[#allocation2 + $0x8] sm:$0xff]
        %v2532 = vld [vmem:[#allocation2 + $0x18] sm:$0xff]
        %v2533 = vld [vmem:[#allocation2 + $0x20] sm:$0xff]
        %v2534 = vld [vmem:[#allocation2 + $0x30] sm:$0xff]
        %v2535 = vld [vmem:[#allocation2 + $0x38] sm:$0xff]
        %v2536 = vld [vmem:[#allocation2 + $0x48] sm:$0xff]
        %v2537 = vld [vmem:[#allocation2 + $0x50] sm:$0xff]
        %v2538 = vld [vmem:[#allocation2 + $0x60] sm:$0xff]
        %v2539 = vld [vmem:[#allocation2 + $0x68] sm:$0xff]
        %v2540 = vld [vmem:[#allocation2 + $0x78] sm:$0xff]
        %v2541 = vld [vmem:[#allocation2 + $0x80] sm:$0xff]
        %v2542 = vld [vmem:[#allocation2 + $0x90] sm:$0xff]
        %v2543 = vld [vmem:[#allocation2 + $0x98] sm:$0xff]
        %v2544 = vld [vmem:[#allocation2 + $0xa8] sm:$0xff]
        %v2545 = vld [vmem:[#allocation2 + $0xb0] sm:$0xff]
        %v2546 = vld [vmem:[#allocation2 + $0xc0] sm:$0xff]
        %v2547 = vld [vmem:[#allocation2 + $0xc8] sm:$0xff]
        %v2548 = vld [vmem:[#allocation2 + $0xd8] sm:$0xff]
        %v2549 = vld [vmem:[#allocation2 + $0xe0] sm:$0xff]
        %v2550 = vld [vmem:[#allocation2 + $0xf0] sm:$0xff]
        %v2551 = vld [vmem:[#allocation2 + $0xf8] sm:$0xff]
        %v2552 = vld [vmem:[#allocation2 + $0x108] sm:$0xff]
        %v2553 = vld [vmem:[#allocation2 + $0x110] sm:$0xff]
        %v2554 = vld [vmem:[#allocation2 + $0x120] sm:$0xff]
        %v2555 = vld [vmem:[#allocation2 + $0x128] sm:$0xff]
        %v2556 = vld [vmem:[#allocation2 + $0x138] sm:$0xff]
        %v2557 = vld [vmem:[#allocation2 + $0x140] sm:$0xff]
        %v2558 = vld [vmem:[#allocation2 + $0x150] sm:$0xff]
        %v2559 = vld [vmem:[#allocation2 + $0x158] sm:$0xff]
        %v2560 = vld [vmem:[#allocation2 + $0x168] sm:$0xff]
        %v2561 = vld [vmem:[#allocation2 + $0x170] sm:$0xff]
        %2562 = vst.msk [vmem:[#allocation3] sm:$0xff] %vm223, %v2530
        %2563 = vst.msk [vmem:[#allocation3 + $0x28] sm:$0xff] %vm223, %v2531
        %2564 = vst.msk [vmem:[#allocation3 + $0x50] sm:$0xff] %vm223, %v2532
        %2565 = vst.msk [vmem:[#allocation3 + $0x78] sm:$0xff] %vm223, %v2533
        %2566 = vst.msk [vmem:[#allocation3 + $0xa0] sm:$0xff] %vm223, %v2534
        %2567 = vst.msk [vmem:[#allocation3 + $0xc8] sm:$0xff] %vm223, %v2535
        %2568 = vst.msk [vmem:[#allocation3 + $0xf0] sm:$0xff] %vm223, %v2536
        %2569 = vst.msk [vmem:[#allocation3 + $0x118] sm:$0xff] %vm223, %v2537
        %2570 = vst.msk [vmem:[#allocation3 + $0x140] sm:$0xff] %vm223, %v2538
        %2571 = vst.msk [vmem:[#allocation3 + $0x168] sm:$0xff] %vm223, %v2539
        %2572 = vst.msk [vmem:[#allocation3 + $0x190] sm:$0xff] %vm223, %v2540
        %2573 = vst.msk [vmem:[#allocation3 + $0x1b8] sm:$0xff] %vm223, %v2541
        %2574 = vst.msk [vmem:[#allocation3 + $0x1e0] sm:$0xff] %vm223, %v2542
        %2575 = vst.msk [vmem:[#allocation3 + $0x208] sm:$0xff] %vm223, %v2543
        %2576 = vst.msk [vmem:[#allocation3 + $0x230] sm:$0xff] %vm223, %v2544
        %2577 = vst.msk [vmem:[#allocation3 + $0x258] sm:$0xff] %vm223, %v2545
        %2578 = vst.msk [vmem:[#allocation3 + $0x280] sm:$0xff] %vm223, %v2546
        %2579 = vst.msk [vmem:[#allocation3 + $0x2a8] sm:$0xff] %vm223, %v2547
        %2580 = vst.msk [vmem:[#allocation3 + $0x2d0] sm:$0xff] %vm223, %v2548
        %2581 = vst.msk [vmem:[#allocation3 + $0x2f8] sm:$0xff] %vm223, %v2549
        %2582 = vst.msk [vmem:[#allocation3 + $0x320] sm:$0xff] %vm223, %v2550
        %2583 = vst.msk [vmem:[#allocation3 + $0x348] sm:$0xff] %vm223, %v2551
        %2584 = vst.msk [vmem:[#allocation3 + $0x370] sm:$0xff] %vm223, %v2552
        %2585 = vst.msk [vmem:[#allocation3 + $0x398] sm:$0xff] %vm223, %v2553
        %2586 = vst.msk [vmem:[#allocation3 + $0x3c0] sm:$0xff] %vm223, %v2554
        %2587 = vst.msk [vmem:[#allocation3 + $0x3e8] sm:$0xff] %vm223, %v2555
        %2588 = vst.msk [vmem:[#allocation3 + $0x410] sm:$0xff] %vm223, %v2556
        %2589 = vst.msk [vmem:[#allocation3 + $0x438] sm:$0xff] %vm223, %v2557
        %2590 = vst.msk [vmem:[#allocation3 + $0x460] sm:$0xff] %vm223, %v2558
        %2591 = vst.msk [vmem:[#allocation3 + $0x488] sm:$0xff] %vm223, %v2559
        %2592 = vst.msk [vmem:[#allocation3 + $0x4b0] sm:$0xff] %vm223, %v2560
        %2593 = vst.msk [vmem:[#allocation3 + $0x4d8] sm:$0xff] %vm223, %v2561
        %v2594 = vld [vmem:[#allocation2 + $0x1] sm:$0xff]
        %v2595 = vld [vmem:[#allocation2 + $0x9] sm:$0xff]
        %v2596 = vld [vmem:[#allocation2 + $0x19] sm:$0xff]
        %v2597 = vld [vmem:[#allocation2 + $0x21] sm:$0xff]
        %v2598 = vld [vmem:[#allocation2 + $0x31] sm:$0xff]
        %v2599 = vld [vmem:[#allocation2 + $0x39] sm:$0xff]
        %v2600 = vld [vmem:[#allocation2 + $0x49] sm:$0xff]
        %v2601 = vld [vmem:[#allocation2 + $0x51] sm:$0xff]
        %v2602 = vld [vmem:[#allocation2 + $0x61] sm:$0xff]
        %v2603 = vld [vmem:[#allocation2 + $0x69] sm:$0xff]
        %v2604 = vld [vmem:[#allocation2 + $0x79] sm:$0xff]
        %v2605 = vld [vmem:[#allocation2 + $0x81] sm:$0xff]
        %v2606 = vld [vmem:[#allocation2 + $0x91] sm:$0xff]
        %v2607 = vld [vmem:[#allocation2 + $0x99] sm:$0xff]
        %v2608 = vld [vmem:[#allocation2 + $0xa9] sm:$0xff]
        %v2609 = vld [vmem:[#allocation2 + $0xb1] sm:$0xff]
        %v2610 = vld [vmem:[#allocation2 + $0xc1] sm:$0xff]
        %v2611 = vld [vmem:[#allocation2 + $0xc9] sm:$0xff]
        %v2612 = vld [vmem:[#allocation2 + $0xd9] sm:$0xff]
        %v2613 = vld [vmem:[#allocation2 + $0xe1] sm:$0xff]
        %v2614 = vld [vmem:[#allocation2 + $0xf1] sm:$0xff]
        %v2615 = vld [vmem:[#allocation2 + $0xf9] sm:$0xff]
        %v2616 = vld [vmem:[#allocation2 + $0x109] sm:$0xff]
        %v2617 = vld [vmem:[#allocation2 + $0x111] sm:$0xff]
        %v2618 = vld [vmem:[#allocation2 + $0x121] sm:$0xff]
        %v2619 = vld [vmem:[#allocation2 + $0x129] sm:$0xff]
        %v2620 = vld [vmem:[#allocation2 + $0x139] sm:$0xff]
        %v2621 = vld [vmem:[#allocation2 + $0x141] sm:$0xff]
        %v2622 = vld [vmem:[#allocation2 + $0x151] sm:$0xff]
        %v2623 = vld [vmem:[#allocation2 + $0x159] sm:$0xff]
        %v2624 = vld [vmem:[#allocation2 + $0x169] sm:$0xff]
        %v2625 = vld [vmem:[#allocation2 + $0x171] sm:$0xff]
        %2658 = vrot.lane.b32.xlu0 %v2594, 64
        %v2659 = vpop.permute.xlu0 %2658
        %2660 = vrot.lane.b32.xlu0 %v2595, 64
        %v2661 = vpop.permute.xlu0 %2660
        %2662 = vrot.lane.b32.xlu0 %v2596, 64
        %v2663 = vpop.permute.xlu0 %2662
        %2664 = vrot.lane.b32.xlu0 %v2597, 64
        %v2665 = vpop.permute.xlu0 %2664
        %2666 = vrot.lane.b32.xlu0 %v2598, 64
        %v2667 = vpop.permute.xlu0 %2666
        %2668 = vrot.lane.b32.xlu0 %v2599, 64
        %v2669 = vpop.permute.xlu0 %2668
        %2670 = vrot.lane.b32.xlu0 %v2600, 64
        %v2671 = vpop.permute.xlu0 %2670
        %2672 = vrot.lane.b32.xlu0 %v2601, 64
        %v2673 = vpop.permute.xlu0 %2672
        %2674 = vrot.lane.b32.xlu0 %v2602, 64
        %v2675 = vpop.permute.xlu0 %2674
        %2676 = vrot.lane.b32.xlu0 %v2603, 64
        %v2677 = vpop.permute.xlu0 %2676
        %2678 = vrot.lane.b32.xlu0 %v2604, 64
        %v2679 = vpop.permute.xlu0 %2678
        %2680 = vrot.lane.b32.xlu0 %v2605, 64
        %v2681 = vpop.permute.xlu0 %2680
        %2682 = vrot.lane.b32.xlu0 %v2606, 64
        %v2683 = vpop.permute.xlu0 %2682
        %2684 = vrot.lane.b32.xlu0 %v2607, 64
        %v2685 = vpop.permute.xlu0 %2684
        %2686 = vrot.lane.b32.xlu0 %v2608, 64
        %v2687 = vpop.permute.xlu0 %2686
        %2688 = vrot.lane.b32.xlu0 %v2609, 64
        %v2689 = vpop.permute.xlu0 %2688
        %2690 = vrot.lane.b32.xlu0 %v2610, 64
        %v2691 = vpop.permute.xlu0 %2690
        %2692 = vrot.lane.b32.xlu0 %v2611, 64
        %v2693 = vpop.permute.xlu0 %2692
        %2694 = vrot.lane.b32.xlu0 %v2612, 64
        %v2695 = vpop.permute.xlu0 %2694
        %2696 = vrot.lane.b32.xlu0 %v2613, 64
        %v2697 = vpop.permute.xlu0 %2696
        %2698 = vrot.lane.b32.xlu0 %v2614, 64
        %v2699 = vpop.permute.xlu0 %2698
        %2700 = vrot.lane.b32.xlu0 %v2615, 64
        %v2701 = vpop.permute.xlu0 %2700
        %2702 = vrot.lane.b32.xlu0 %v2616, 64
        %v2703 = vpop.permute.xlu0 %2702
        %2704 = vrot.lane.b32.xlu0 %v2617, 64
        %v2705 = vpop.permute.xlu0 %2704
        %2706 = vrot.lane.b32.xlu0 %v2618, 64
        %v2707 = vpop.permute.xlu0 %2706
        %2708 = vrot.lane.b32.xlu0 %v2619, 64
        %v2709 = vpop.permute.xlu0 %2708
        %2710 = vrot.lane.b32.xlu0 %v2620, 64
        %v2711 = vpop.permute.xlu0 %2710
        %2712 = vrot.lane.b32.xlu0 %v2621, 64
        %v2713 = vpop.permute.xlu0 %2712
        %2714 = vrot.lane.b32.xlu0 %v2622, 64
        %v2715 = vpop.permute.xlu0 %2714
        %2716 = vrot.lane.b32.xlu0 %v2623, 64
        %v2717 = vpop.permute.xlu0 %2716
        %2718 = vrot.lane.b32.xlu0 %v2624, 64
        %v2719 = vpop.permute.xlu0 %2718
        %2720 = vrot.lane.b32.xlu0 %v2625, 64
        %v2721 = vpop.permute.xlu0 %2720
        %2754 = vst.msk [vmem:[#allocation3] sm:$0xff] %vm590, %v2659
        %2755 = vst.msk [vmem:[#allocation3 + $0x28] sm:$0xff] %vm590, %v2661
        %2756 = vst.msk [vmem:[#allocation3 + $0x50] sm:$0xff] %vm590, %v2663
        %2757 = vst.msk [vmem:[#allocation3 + $0x78] sm:$0xff] %vm590, %v2665
        %2758 = vst.msk [vmem:[#allocation3 + $0xa0] sm:$0xff] %vm590, %v2667
        %2759 = vst.msk [vmem:[#allocation3 + $0xc8] sm:$0xff] %vm590, %v2669
        %2760 = vst.msk [vmem:[#allocation3 + $0xf0] sm:$0xff] %vm590, %v2671
        %2761 = vst.msk [vmem:[#allocation3 + $0x118] sm:$0xff] %vm590, %v2673
        %2762 = vst.msk [vmem:[#allocation3 + $0x140] sm:$0xff] %vm590, %v2675
        %2763 = vst.msk [vmem:[#allocation3 + $0x168] sm:$0xff] %vm590, %v2677
        %2764 = vst.msk [vmem:[#allocation3 + $0x190] sm:$0xff] %vm590, %v2679
        %2765 = vst.msk [vmem:[#allocation3 + $0x1b8] sm:$0xff] %vm590, %v2681
        %2766 = vst.msk [vmem:[#allocation3 + $0x1e0] sm:$0xff] %vm590, %v2683
        %2767 = vst.msk [vmem:[#allocation3 + $0x208] sm:$0xff] %vm590, %v2685
        %2768 = vst.msk [vmem:[#allocation3 + $0x230] sm:$0xff] %vm590, %v2687
        %2769 = vst.msk [vmem:[#allocation3 + $0x258] sm:$0xff] %vm590, %v2689
        %2770 = vst.msk [vmem:[#allocation3 + $0x280] sm:$0xff] %vm590, %v2691
        %2771 = vst.msk [vmem:[#allocation3 + $0x2a8] sm:$0xff] %vm590, %v2693
        %2772 = vst.msk [vmem:[#allocation3 + $0x2d0] sm:$0xff] %vm590, %v2695
        %2773 = vst.msk [vmem:[#allocation3 + $0x2f8] sm:$0xff] %vm590, %v2697
        %2774 = vst.msk [vmem:[#allocation3 + $0x320] sm:$0xff] %vm590, %v2699
        %2775 = vst.msk [vmem:[#allocation3 + $0x348] sm:$0xff] %vm590, %v2701
        %2776 = vst.msk [vmem:[#allocation3 + $0x370] sm:$0xff] %vm590, %v2703
        %2777 = vst.msk [vmem:[#allocation3 + $0x398] sm:$0xff] %vm590, %v2705
        %2778 = vst.msk [vmem:[#allocation3 + $0x3c0] sm:$0xff] %vm590, %v2707
        %2779 = vst.msk [vmem:[#allocation3 + $0x3e8] sm:$0xff] %vm590, %v2709
        %2780 = vst.msk [vmem:[#allocation3 + $0x410] sm:$0xff] %vm590, %v2711
        %2781 = vst.msk [vmem:[#allocation3 + $0x438] sm:$0xff] %vm590, %v2713
        %2782 = vst.msk [vmem:[#allocation3 + $0x460] sm:$0xff] %vm590, %v2715
        %2783 = vst.msk [vmem:[#allocation3 + $0x488] sm:$0xff] %vm590, %v2717
        %2784 = vst.msk [vmem:[#allocation3 + $0x4b0] sm:$0xff] %vm590, %v2719
        %2785 = vst.msk [vmem:[#allocation3 + $0x4d8] sm:$0xff] %vm590, %v2721
        %v2786 = vld [vmem:[#allocation2 + $0x2] sm:$0xff]
        %v2787 = vld [vmem:[#allocation2 + $0xa] sm:$0xff]
        %v2788 = vld [vmem:[#allocation2 + $0x1a] sm:$0xff]
        %v2789 = vld [vmem:[#allocation2 + $0x22] sm:$0xff]
        %v2790 = vld [vmem:[#allocation2 + $0x32] sm:$0xff]
        %v2791 = vld [vmem:[#allocation2 + $0x3a] sm:$0xff]
        %v2792 = vld [vmem:[#allocation2 + $0x4a] sm:$0xff]
        %v2793 = vld [vmem:[#allocation2 + $0x52] sm:$0xff]
        %v2794 = vld [vmem:[#allocation2 + $0x62] sm:$0xff]
        %v2795 = vld [vmem:[#allocation2 + $0x6a] sm:$0xff]
        %v2796 = vld [vmem:[#allocation2 + $0x7a] sm:$0xff]
        %v2797 = vld [vmem:[#allocation2 + $0x82] sm:$0xff]
        %v2798 = vld [vmem:[#allocation2 + $0x92] sm:$0xff]
        %v2799 = vld [vmem:[#allocation2 + $0x9a] sm:$0xff]
        %v2800 = vld [vmem:[#allocation2 + $0xaa] sm:$0xff]
        %v2801 = vld [vmem:[#allocation2 + $0xb2] sm:$0xff]
        %v2802 = vld [vmem:[#allocation2 + $0xc2] sm:$0xff]
        %v2803 = vld [vmem:[#allocation2 + $0xca] sm:$0xff]
        %v2804 = vld [vmem:[#allocation2 + $0xda] sm:$0xff]
        %v2805 = vld [vmem:[#allocation2 + $0xe2] sm:$0xff]
        %v2806 = vld [vmem:[#allocation2 + $0xf2] sm:$0xff]
        %v2807 = vld [vmem:[#allocation2 + $0xfa] sm:$0xff]
        %v2808 = vld [vmem:[#allocation2 + $0x10a] sm:$0xff]
        %v2809 = vld [vmem:[#allocation2 + $0x112] sm:$0xff]
        %v2810 = vld [vmem:[#allocation2 + $0x122] sm:$0xff]
        %v2811 = vld [vmem:[#allocation2 + $0x12a] sm:$0xff]
        %v2812 = vld [vmem:[#allocation2 + $0x13a] sm:$0xff]
        %v2813 = vld [vmem:[#allocation2 + $0x142] sm:$0xff]
        %v2814 = vld [vmem:[#allocation2 + $0x152] sm:$0xff]
        %v2815 = vld [vmem:[#allocation2 + $0x15a] sm:$0xff]
        %v2816 = vld [vmem:[#allocation2 + $0x16a] sm:$0xff]
        %v2817 = vld [vmem:[#allocation2 + $0x172] sm:$0xff]
        %2818 = vst.msk [vmem:[#allocation3 + $0x8] sm:$0xff] %vm223, %v2786
        %2819 = vst.msk [vmem:[#allocation3 + $0x30] sm:$0xff] %vm223, %v2787
        %2820 = vst.msk [vmem:[#allocation3 + $0x58] sm:$0xff] %vm223, %v2788
        %2821 = vst.msk [vmem:[#allocation3 + $0x80] sm:$0xff] %vm223, %v2789
        %2822 = vst.msk [vmem:[#allocation3 + $0xa8] sm:$0xff] %vm223, %v2790
        %2823 = vst.msk [vmem:[#allocation3 + $0xd0] sm:$0xff] %vm223, %v2791
        %2824 = vst.msk [vmem:[#allocation3 + $0xf8] sm:$0xff] %vm223, %v2792
        %2825 = vst.msk [vmem:[#allocation3 + $0x120] sm:$0xff] %vm223, %v2793
        %2826 = vst.msk [vmem:[#allocation3 + $0x148] sm:$0xff] %vm223, %v2794
        %2827 = vst.msk [vmem:[#allocation3 + $0x170] sm:$0xff] %vm223, %v2795
        %2828 = vst.msk [vmem:[#allocation3 + $0x198] sm:$0xff] %vm223, %v2796
        %2829 = vst.msk [vmem:[#allocation3 + $0x1c0] sm:$0xff] %vm223, %v2797
        %2830 = vst.msk [vmem:[#allocation3 + $0x1e8] sm:$0xff] %vm223, %v2798
        %2831 = vst.msk [vmem:[#allocation3 + $0x210] sm:$0xff] %vm223, %v2799
        %2832 = vst.msk [vmem:[#allocation3 + $0x238] sm:$0xff] %vm223, %v2800
        %2833 = vst.msk [vmem:[#allocation3 + $0x260] sm:$0xff] %vm223, %v2801
        %2834 = vst.msk [vmem:[#allocation3 + $0x288] sm:$0xff] %vm223, %v2802
        %2835 = vst.msk [vmem:[#allocation3 + $0x2b0] sm:$0xff] %vm223, %v2803
        %2836 = vst.msk [vmem:[#allocation3 + $0x2d8] sm:$0xff] %vm223, %v2804
        %2837 = vst.msk [vmem:[#allocation3 + $0x300] sm:$0xff] %vm223, %v2805
        %2838 = vst.msk [vmem:[#allocation3 + $0x328] sm:$0xff] %vm223, %v2806
        %2839 = vst.msk [vmem:[#allocation3 + $0x350] sm:$0xff] %vm223, %v2807
        %2840 = vst.msk [vmem:[#allocation3 + $0x378] sm:$0xff] %vm223, %v2808
        %2841 = vst.msk [vmem:[#allocation3 + $0x3a0] sm:$0xff] %vm223, %v2809
        %2842 = vst.msk [vmem:[#allocation3 + $0x3c8] sm:$0xff] %vm223, %v2810
        %2843 = vst.msk [vmem:[#allocation3 + $0x3f0] sm:$0xff] %vm223, %v2811
        %2844 = vst.msk [vmem:[#allocation3 + $0x418] sm:$0xff] %vm223, %v2812
        %2845 = vst.msk [vmem:[#allocation3 + $0x440] sm:$0xff] %vm223, %v2813
        %2846 = vst.msk [vmem:[#allocation3 + $0x468] sm:$0xff] %vm223, %v2814
        %2847 = vst.msk [vmem:[#allocation3 + $0x490] sm:$0xff] %vm223, %v2815
        %2848 = vst.msk [vmem:[#allocation3 + $0x4b8] sm:$0xff] %vm223, %v2816
        %2849 = vst.msk [vmem:[#allocation3 + $0x4e0] sm:$0xff] %vm223, %v2817
        %v2850 = vld [vmem:[%s333] sm:$0xff]
        %v2851 = vld [vmem:[%s333 + $0x8] sm:$0xff]
        %v2852 = vld [vmem:[%s333 + $0x18] sm:$0xff]
        %v2853 = vld [vmem:[%s333 + $0x20] sm:$0xff]
        %v2854 = vld [vmem:[%s333 + $0x30] sm:$0xff]
        %v2855 = vld [vmem:[%s333 + $0x38] sm:$0xff]
        %v2856 = vld [vmem:[%s333 + $0x48] sm:$0xff]
        %v2857 = vld [vmem:[%s333 + $0x50] sm:$0xff]
        %v2858 = vld [vmem:[%s333 + $0x60] sm:$0xff]
        %v2859 = vld [vmem:[%s333 + $0x68] sm:$0xff]
        %v2860 = vld [vmem:[%s333 + $0x78] sm:$0xff]
        %v2861 = vld [vmem:[%s333 + $0x80] sm:$0xff]
        %v2862 = vld [vmem:[%s333 + $0x90] sm:$0xff]
        %v2863 = vld [vmem:[%s333 + $0x98] sm:$0xff]
        %v2864 = vld [vmem:[%s333 + $0xa8] sm:$0xff]
        %v2865 = vld [vmem:[%s333 + $0xb0] sm:$0xff]
        %v2866 = vld [vmem:[%s333 + $0xc0] sm:$0xff]
        %v2867 = vld [vmem:[%s333 + $0xc8] sm:$0xff]
        %v2868 = vld [vmem:[%s333 + $0xd8] sm:$0xff]
        %v2869 = vld [vmem:[%s333 + $0xe0] sm:$0xff]
        %v2870 = vld [vmem:[%s333 + $0xf0] sm:$0xff]
        %v2871 = vld [vmem:[%s333 + $0xf8] sm:$0xff]
        %v2872 = vld [vmem:[%s333 + $0x108] sm:$0xff]
        %v2873 = vld [vmem:[%s333 + $0x110] sm:$0xff]
        %v2874 = vld [vmem:[%s333 + $0x120] sm:$0xff]
        %v2875 = vld [vmem:[%s333 + $0x128] sm:$0xff]
        %v2876 = vld [vmem:[%s333 + $0x138] sm:$0xff]
        %v2877 = vld [vmem:[%s333 + $0x140] sm:$0xff]
        %v2878 = vld [vmem:[%s333 + $0x150] sm:$0xff]
        %v2879 = vld [vmem:[%s333 + $0x158] sm:$0xff]
        %v2880 = vld [vmem:[%s333 + $0x168] sm:$0xff]
        %v2881 = vld [vmem:[%s333 + $0x170] sm:$0xff]
        %2914 = vrot.lane.b32.xlu0 %v2850, 64
        %v2915 = vpop.permute.xlu0 %2914
        %2916 = vrot.lane.b32.xlu0 %v2851, 64
        %v2917 = vpop.permute.xlu0 %2916
        %2918 = vrot.lane.b32.xlu0 %v2852, 64
        %v2919 = vpop.permute.xlu0 %2918
        %2920 = vrot.lane.b32.xlu0 %v2853, 64
        %v2921 = vpop.permute.xlu0 %2920
        %2922 = vrot.lane.b32.xlu0 %v2854, 64
        %v2923 = vpop.permute.xlu0 %2922
        %2924 = vrot.lane.b32.xlu0 %v2855, 64
        %v2925 = vpop.permute.xlu0 %2924
        %2926 = vrot.lane.b32.xlu0 %v2856, 64
        %v2927 = vpop.permute.xlu0 %2926
        %2928 = vrot.lane.b32.xlu0 %v2857, 64
        %v2929 = vpop.permute.xlu0 %2928
        %2930 = vrot.lane.b32.xlu0 %v2858, 64
        %v2931 = vpop.permute.xlu0 %2930
        %2932 = vrot.lane.b32.xlu0 %v2859, 64
        %v2933 = vpop.permute.xlu0 %2932
        %2934 = vrot.lane.b32.xlu0 %v2860, 64
        %v2935 = vpop.permute.xlu0 %2934
        %2936 = vrot.lane.b32.xlu0 %v2861, 64
        %v2937 = vpop.permute.xlu0 %2936
        %2938 = vrot.lane.b32.xlu0 %v2862, 64
        %v2939 = vpop.permute.xlu0 %2938
        %2940 = vrot.lane.b32.xlu0 %v2863, 64
        %v2941 = vpop.permute.xlu0 %2940
        %2942 = vrot.lane.b32.xlu0 %v2864, 64
        %v2943 = vpop.permute.xlu0 %2942
        %2944 = vrot.lane.b32.xlu0 %v2865, 64
        %v2945 = vpop.permute.xlu0 %2944
        %2946 = vrot.lane.b32.xlu0 %v2866, 64
        %v2947 = vpop.permute.xlu0 %2946
        %2948 = vrot.lane.b32.xlu0 %v2867, 64
        %v2949 = vpop.permute.xlu0 %2948
        %2950 = vrot.lane.b32.xlu0 %v2868, 64
        %v2951 = vpop.permute.xlu0 %2950
        %2952 = vrot.lane.b32.xlu0 %v2869, 64
        %v2953 = vpop.permute.xlu0 %2952
        %2954 = vrot.lane.b32.xlu0 %v2870, 64
        %v2955 = vpop.permute.xlu0 %2954
        %2956 = vrot.lane.b32.xlu0 %v2871, 64
        %v2957 = vpop.permute.xlu0 %2956
        %2958 = vrot.lane.b32.xlu0 %v2872, 64
        %v2959 = vpop.permute.xlu0 %2958
        %2960 = vrot.lane.b32.xlu0 %v2873, 64
        %v2961 = vpop.permute.xlu0 %2960
        %2962 = vrot.lane.b32.xlu0 %v2874, 64
        %v2963 = vpop.permute.xlu0 %2962
        %2964 = vrot.lane.b32.xlu0 %v2875, 64
        %v2965 = vpop.permute.xlu0 %2964
        %2966 = vrot.lane.b32.xlu0 %v2876, 64
        %v2967 = vpop.permute.xlu0 %2966
        %2968 = vrot.lane.b32.xlu0 %v2877, 64
        %v2969 = vpop.permute.xlu0 %2968
        %2970 = vrot.lane.b32.xlu0 %v2878, 64
        %v2971 = vpop.permute.xlu0 %2970
        %2972 = vrot.lane.b32.xlu0 %v2879, 64
        %v2973 = vpop.permute.xlu0 %2972
        %2974 = vrot.lane.b32.xlu0 %v2880, 64
        %v2975 = vpop.permute.xlu0 %2974
        %2976 = vrot.lane.b32.xlu0 %v2881, 64
        %v2977 = vpop.permute.xlu0 %2976
        %3010 = vst.msk [vmem:[#allocation3 + $0x8] sm:$0xff] %vm590, %v2915
        %3011 = vst.msk [vmem:[#allocation3 + $0x30] sm:$0xff] %vm590, %v2917
        %3012 = vst.msk [vmem:[#allocation3 + $0x58] sm:$0xff] %vm590, %v2919
        %3013 = vst.msk [vmem:[#allocation3 + $0x80] sm:$0xff] %vm590, %v2921
        %3014 = vst.msk [vmem:[#allocation3 + $0xa8] sm:$0xff] %vm590, %v2923
        %3015 = vst.msk [vmem:[#allocation3 + $0xd0] sm:$0xff] %vm590, %v2925
        %3016 = vst.msk [vmem:[#allocation3 + $0xf8] sm:$0xff] %vm590, %v2927
        %3017 = vst.msk [vmem:[#allocation3 + $0x120] sm:$0xff] %vm590, %v2929
        %3018 = vst.msk [vmem:[#allocation3 + $0x148] sm:$0xff] %vm590, %v2931
        %3019 = vst.msk [vmem:[#allocation3 + $0x170] sm:$0xff] %vm590, %v2933
        %3020 = vst.msk [vmem:[#allocation3 + $0x198] sm:$0xff] %vm590, %v2935
        %3021 = vst.msk [vmem:[#allocation3 + $0x1c0] sm:$0xff] %vm590, %v2937
        %3022 = vst.msk [vmem:[#allocation3 + $0x1e8] sm:$0xff] %vm590, %v2939
        %3023 = vst.msk [vmem:[#allocation3 + $0x210] sm:$0xff] %vm590, %v2941
        %3024 = vst.msk [vmem:[#allocation3 + $0x238] sm:$0xff] %vm590, %v2943
        %3025 = vst.msk [vmem:[#allocation3 + $0x260] sm:$0xff] %vm590, %v2945
        %3026 = vst.msk [vmem:[#allocation3 + $0x288] sm:$0xff] %vm590, %v2947
        %3027 = vst.msk [vmem:[#allocation3 + $0x2b0] sm:$0xff] %vm590, %v2949
        %3028 = vst.msk [vmem:[#allocation3 + $0x2d8] sm:$0xff] %vm590, %v2951
        %3029 = vst.msk [vmem:[#allocation3 + $0x300] sm:$0xff] %vm590, %v2953
        %3030 = vst.msk [vmem:[#allocation3 + $0x328] sm:$0xff] %vm590, %v2955
        %3031 = vst.msk [vmem:[#allocation3 + $0x350] sm:$0xff] %vm590, %v2957
        %3032 = vst.msk [vmem:[#allocation3 + $0x378] sm:$0xff] %vm590, %v2959
        %3033 = vst.msk [vmem:[#allocation3 + $0x3a0] sm:$0xff] %vm590, %v2961
        %3034 = vst.msk [vmem:[#allocation3 + $0x3c8] sm:$0xff] %vm590, %v2963
        %3035 = vst.msk [vmem:[#allocation3 + $0x3f0] sm:$0xff] %vm590, %v2965
        %3036 = vst.msk [vmem:[#allocation3 + $0x418] sm:$0xff] %vm590, %v2967
        %3037 = vst.msk [vmem:[#allocation3 + $0x440] sm:$0xff] %vm590, %v2969
        %3038 = vst.msk [vmem:[#allocation3 + $0x468] sm:$0xff] %vm590, %v2971
        %3039 = vst.msk [vmem:[#allocation3 + $0x490] sm:$0xff] %vm590, %v2973
        %3040 = vst.msk [vmem:[#allocation3 + $0x4b8] sm:$0xff] %vm590, %v2975
        %3041 = vst.msk [vmem:[#allocation3 + $0x4e0] sm:$0xff] %vm590, %v2977
        %v3042 = vld [vmem:[%s333 + $0x1] sm:$0xff]
        %v3043 = vld [vmem:[%s333 + $0x9] sm:$0xff]
        %v3044 = vld [vmem:[%s333 + $0x19] sm:$0xff]
        %v3045 = vld [vmem:[%s333 + $0x21] sm:$0xff]
        %v3046 = vld [vmem:[%s333 + $0x31] sm:$0xff]
        %v3047 = vld [vmem:[%s333 + $0x39] sm:$0xff]
        %v3048 = vld [vmem:[%s333 + $0x49] sm:$0xff]
        %v3049 = vld [vmem:[%s333 + $0x51] sm:$0xff]
        %v3050 = vld [vmem:[%s333 + $0x61] sm:$0xff]
        %v3051 = vld [vmem:[%s333 + $0x69] sm:$0xff]
        %v3052 = vld [vmem:[%s333 + $0x79] sm:$0xff]
        %v3053 = vld [vmem:[%s333 + $0x81] sm:$0xff]
        %v3054 = vld [vmem:[%s333 + $0x91] sm:$0xff]
        %v3055 = vld [vmem:[%s333 + $0x99] sm:$0xff]
        %v3056 = vld [vmem:[%s333 + $0xa9] sm:$0xff]
        %v3057 = vld [vmem:[%s333 + $0xb1] sm:$0xff]
        %v3058 = vld [vmem:[%s333 + $0xc1] sm:$0xff]
        %v3059 = vld [vmem:[%s333 + $0xc9] sm:$0xff]
        %v3060 = vld [vmem:[%s333 + $0xd9] sm:$0xff]
        %v3061 = vld [vmem:[%s333 + $0xe1] sm:$0xff]
        %v3062 = vld [vmem:[%s333 + $0xf1] sm:$0xff]
        %v3063 = vld [vmem:[%s333 + $0xf9] sm:$0xff]
        %v3064 = vld [vmem:[%s333 + $0x109] sm:$0xff]
        %v3065 = vld [vmem:[%s333 + $0x111] sm:$0xff]
        %v3066 = vld [vmem:[%s333 + $0x121] sm:$0xff]
        %v3067 = vld [vmem:[%s333 + $0x129] sm:$0xff]
        %v3068 = vld [vmem:[%s333 + $0x139] sm:$0xff]
        %v3069 = vld [vmem:[%s333 + $0x141] sm:$0xff]
        %v3070 = vld [vmem:[%s333 + $0x151] sm:$0xff]
        %v3071 = vld [vmem:[%s333 + $0x159] sm:$0xff]
        %v3072 = vld [vmem:[%s333 + $0x169] sm:$0xff]
        %v3073 = vld [vmem:[%s333 + $0x171] sm:$0xff]
        %3074 = vst.msk [vmem:[#allocation3 + $0x10] sm:$0xff] %vm223, %v3042
        %3075 = vst.msk [vmem:[#allocation3 + $0x38] sm:$0xff] %vm223, %v3043
        %3076 = vst.msk [vmem:[#allocation3 + $0x60] sm:$0xff] %vm223, %v3044
        %3077 = vst.msk [vmem:[#allocation3 + $0x88] sm:$0xff] %vm223, %v3045
        %3078 = vst.msk [vmem:[#allocation3 + $0xb0] sm:$0xff] %vm223, %v3046
        %3079 = vst.msk [vmem:[#allocation3 + $0xd8] sm:$0xff] %vm223, %v3047
        %3080 = vst.msk [vmem:[#allocation3 + $0x100] sm:$0xff] %vm223, %v3048
        %3081 = vst.msk [vmem:[#allocation3 + $0x128] sm:$0xff] %vm223, %v3049
        %3082 = vst.msk [vmem:[#allocation3 + $0x150] sm:$0xff] %vm223, %v3050
        %3083 = vst.msk [vmem:[#allocation3 + $0x178] sm:$0xff] %vm223, %v3051
        %3084 = vst.msk [vmem:[#allocation3 + $0x1a0] sm:$0xff] %vm223, %v3052
        %3085 = vst.msk [vmem:[#allocation3 + $0x1c8] sm:$0xff] %vm223, %v3053
        %3086 = vst.msk [vmem:[#allocation3 + $0x1f0] sm:$0xff] %vm223, %v3054
        %3087 = vst.msk [vmem:[#allocation3 + $0x218] sm:$0xff] %vm223, %v3055
        %3088 = vst.msk [vmem:[#allocation3 + $0x240] sm:$0xff] %vm223, %v3056
        %3089 = vst.msk [vmem:[#allocation3 + $0x268] sm:$0xff] %vm223, %v3057
        %3090 = vst.msk [vmem:[#allocation3 + $0x290] sm:$0xff] %vm223, %v3058
        %3091 = vst.msk [vmem:[#allocation3 + $0x2b8] sm:$0xff] %vm223, %v3059
        %3092 = vst.msk [vmem:[#allocation3 + $0x2e0] sm:$0xff] %vm223, %v3060
        %3093 = vst.msk [vmem:[#allocation3 + $0x308] sm:$0xff] %vm223, %v3061
        %3094 = vst.msk [vmem:[#allocation3 + $0x330] sm:$0xff] %vm223, %v3062
        %3095 = vst.msk [vmem:[#allocation3 + $0x358] sm:$0xff] %vm223, %v3063
        %3096 = vst.msk [vmem:[#allocation3 + $0x380] sm:$0xff] %vm223, %v3064
        %3097 = vst.msk [vmem:[#allocation3 + $0x3a8] sm:$0xff] %vm223, %v3065
        %3098 = vst.msk [vmem:[#allocation3 + $0x3d0] sm:$0xff] %vm223, %v3066
        %3099 = vst.msk [vmem:[#allocation3 + $0x3f8] sm:$0xff] %vm223, %v3067
        %3100 = vst.msk [vmem:[#allocation3 + $0x420] sm:$0xff] %vm223, %v3068
        %3101 = vst.msk [vmem:[#allocation3 + $0x448] sm:$0xff] %vm223, %v3069
        %3102 = vst.msk [vmem:[#allocation3 + $0x470] sm:$0xff] %vm223, %v3070
        %3103 = vst.msk [vmem:[#allocation3 + $0x498] sm:$0xff] %vm223, %v3071
        %3104 = vst.msk [vmem:[#allocation3 + $0x4c0] sm:$0xff] %vm223, %v3072
        %3105 = vst.msk [vmem:[#allocation3 + $0x4e8] sm:$0xff] %vm223, %v3073
        %v3106 = vld [vmem:[%s333 + $0x2] sm:$0xff]
        %v3107 = vld [vmem:[%s333 + $0xa] sm:$0xff]
        %v3108 = vld [vmem:[%s333 + $0x1a] sm:$0xff]
        %v3109 = vld [vmem:[%s333 + $0x22] sm:$0xff]
        %v3110 = vld [vmem:[%s333 + $0x32] sm:$0xff]
        %v3111 = vld [vmem:[%s333 + $0x3a] sm:$0xff]
        %v3112 = vld [vmem:[%s333 + $0x4a] sm:$0xff]
        %v3113 = vld [vmem:[%s333 + $0x52] sm:$0xff]
        %v3114 = vld [vmem:[%s333 + $0x62] sm:$0xff]
        %v3115 = vld [vmem:[%s333 + $0x6a] sm:$0xff]
        %v3116 = vld [vmem:[%s333 + $0x7a] sm:$0xff]
        %v3117 = vld [vmem:[%s333 + $0x82] sm:$0xff]
        %v3118 = vld [vmem:[%s333 + $0x92] sm:$0xff]
        %v3119 = vld [vmem:[%s333 + $0x9a] sm:$0xff]
        %v3120 = vld [vmem:[%s333 + $0xaa] sm:$0xff]
        %v3121 = vld [vmem:[%s333 + $0xb2] sm:$0xff]
        %v3122 = vld [vmem:[%s333 + $0xc2] sm:$0xff]
        %v3123 = vld [vmem:[%s333 + $0xca] sm:$0xff]
        %v3124 = vld [vmem:[%s333 + $0xda] sm:$0xff]
        %v3125 = vld [vmem:[%s333 + $0xe2] sm:$0xff]
        %v3126 = vld [vmem:[%s333 + $0xf2] sm:$0xff]
        %v3127 = vld [vmem:[%s333 + $0xfa] sm:$0xff]
        %v3128 = vld [vmem:[%s333 + $0x10a] sm:$0xff]
        %v3129 = vld [vmem:[%s333 + $0x112] sm:$0xff]
        %v3130 = vld [vmem:[%s333 + $0x122] sm:$0xff]
        %v3131 = vld [vmem:[%s333 + $0x12a] sm:$0xff]
        %v3132 = vld [vmem:[%s333 + $0x13a] sm:$0xff]
        %v3133 = vld [vmem:[%s333 + $0x142] sm:$0xff]
        %v3134 = vld [vmem:[%s333 + $0x152] sm:$0xff]
        %v3135 = vld [vmem:[%s333 + $0x15a] sm:$0xff]
        %v3136 = vld [vmem:[%s333 + $0x16a] sm:$0xff]
        %v3137 = vld [vmem:[%s333 + $0x172] sm:$0xff]
        %3170 = vrot.lane.b32.xlu0 %v3106, 64
        %v3171 = vpop.permute.xlu0 %3170
        %3172 = vrot.lane.b32.xlu0 %v3107, 64
        %v3173 = vpop.permute.xlu0 %3172
        %3174 = vrot.lane.b32.xlu0 %v3108, 64
        %v3175 = vpop.permute.xlu0 %3174
        %3176 = vrot.lane.b32.xlu0 %v3109, 64
        %v3177 = vpop.permute.xlu0 %3176
        %3178 = vrot.lane.b32.xlu0 %v3110, 64
        %v3179 = vpop.permute.xlu0 %3178
        %3180 = vrot.lane.b32.xlu0 %v3111, 64
        %v3181 = vpop.permute.xlu0 %3180
        %3182 = vrot.lane.b32.xlu0 %v3112, 64
        %v3183 = vpop.permute.xlu0 %3182
        %3184 = vrot.lane.b32.xlu0 %v3113, 64
        %v3185 = vpop.permute.xlu0 %3184
        %3186 = vrot.lane.b32.xlu0 %v3114, 64
        %v3187 = vpop.permute.xlu0 %3186
        %3188 = vrot.lane.b32.xlu0 %v3115, 64
        %v3189 = vpop.permute.xlu0 %3188
        %3190 = vrot.lane.b32.xlu0 %v3116, 64
        %v3191 = vpop.permute.xlu0 %3190
        %3192 = vrot.lane.b32.xlu0 %v3117, 64
        %v3193 = vpop.permute.xlu0 %3192
        %3194 = vrot.lane.b32.xlu0 %v3118, 64
        %v3195 = vpop.permute.xlu0 %3194
        %3196 = vrot.lane.b32.xlu0 %v3119, 64
        %v3197 = vpop.permute.xlu0 %3196
        %3198 = vrot.lane.b32.xlu0 %v3120, 64
        %v3199 = vpop.permute.xlu0 %3198
        %3200 = vrot.lane.b32.xlu0 %v3121, 64
        %v3201 = vpop.permute.xlu0 %3200
        %3202 = vrot.lane.b32.xlu0 %v3122, 64
        %v3203 = vpop.permute.xlu0 %3202
        %3204 = vrot.lane.b32.xlu0 %v3123, 64
        %v3205 = vpop.permute.xlu0 %3204
        %3206 = vrot.lane.b32.xlu0 %v3124, 64
        %v3207 = vpop.permute.xlu0 %3206
        %3208 = vrot.lane.b32.xlu0 %v3125, 64
        %v3209 = vpop.permute.xlu0 %3208
        %3210 = vrot.lane.b32.xlu0 %v3126, 64
        %v3211 = vpop.permute.xlu0 %3210
        %3212 = vrot.lane.b32.xlu0 %v3127, 64
        %v3213 = vpop.permute.xlu0 %3212
        %3214 = vrot.lane.b32.xlu0 %v3128, 64
        %v3215 = vpop.permute.xlu0 %3214
        %3216 = vrot.lane.b32.xlu0 %v3129, 64
        %v3217 = vpop.permute.xlu0 %3216
        %3218 = vrot.lane.b32.xlu0 %v3130, 64
        %v3219 = vpop.permute.xlu0 %3218
        %3220 = vrot.lane.b32.xlu0 %v3131, 64
        %v3221 = vpop.permute.xlu0 %3220
        %3222 = vrot.lane.b32.xlu0 %v3132, 64
        %v3223 = vpop.permute.xlu0 %3222
        %3224 = vrot.lane.b32.xlu0 %v3133, 64
        %v3225 = vpop.permute.xlu0 %3224
        %3226 = vrot.lane.b32.xlu0 %v3134, 64
        %v3227 = vpop.permute.xlu0 %3226
        %3228 = vrot.lane.b32.xlu0 %v3135, 64
        %v3229 = vpop.permute.xlu0 %3228
        %3230 = vrot.lane.b32.xlu0 %v3136, 64
        %v3231 = vpop.permute.xlu0 %3230
        %3232 = vrot.lane.b32.xlu0 %v3137, 64
        %v3233 = vpop.permute.xlu0 %3232
        %3266 = vst.msk [vmem:[#allocation3 + $0x10] sm:$0xff] %vm590, %v3171
        %3267 = vst.msk [vmem:[#allocation3 + $0x38] sm:$0xff] %vm590, %v3173
        %3268 = vst.msk [vmem:[#allocation3 + $0x60] sm:$0xff] %vm590, %v3175
        %3269 = vst.msk [vmem:[#allocation3 + $0x88] sm:$0xff] %vm590, %v3177
        %3270 = vst.msk [vmem:[#allocation3 + $0xb0] sm:$0xff] %vm590, %v3179
        %3271 = vst.msk [vmem:[#allocation3 + $0xd8] sm:$0xff] %vm590, %v3181
        %3272 = vst.msk [vmem:[#allocation3 + $0x100] sm:$0xff] %vm590, %v3183
        %3273 = vst.msk [vmem:[#allocation3 + $0x128] sm:$0xff] %vm590, %v3185
        %3274 = vst.msk [vmem:[#allocation3 + $0x150] sm:$0xff] %vm590, %v3187
        %3275 = vst.msk [vmem:[#allocation3 + $0x178] sm:$0xff] %vm590, %v3189
        %3276 = vst.msk [vmem:[#allocation3 + $0x1a0] sm:$0xff] %vm590, %v3191
        %3277 = vst.msk [vmem:[#allocation3 + $0x1c8] sm:$0xff] %vm590, %v3193
        %3278 = vst.msk [vmem:[#allocation3 + $0x1f0] sm:$0xff] %vm590, %v3195
        %3279 = vst.msk [vmem:[#allocation3 + $0x218] sm:$0xff] %vm590, %v3197
        %3280 = vst.msk [vmem:[#allocation3 + $0x240] sm:$0xff] %vm590, %v3199
        %3281 = vst.msk [vmem:[#allocation3 + $0x268] sm:$0xff] %vm590, %v3201
        %3282 = vst.msk [vmem:[#allocation3 + $0x290] sm:$0xff] %vm590, %v3203
        %3283 = vst.msk [vmem:[#allocation3 + $0x2b8] sm:$0xff] %vm590, %v3205
        %3284 = vst.msk [vmem:[#allocation3 + $0x2e0] sm:$0xff] %vm590, %v3207
        %3285 = vst.msk [vmem:[#allocation3 + $0x308] sm:$0xff] %vm590, %v3209
        %3286 = vst.msk [vmem:[#allocation3 + $0x330] sm:$0xff] %vm590, %v3211
        %3287 = vst.msk [vmem:[#allocation3 + $0x358] sm:$0xff] %vm590, %v3213
        %3288 = vst.msk [vmem:[#allocation3 + $0x380] sm:$0xff] %vm590, %v3215
        %3289 = vst.msk [vmem:[#allocation3 + $0x3a8] sm:$0xff] %vm590, %v3217
        %3290 = vst.msk [vmem:[#allocation3 + $0x3d0] sm:$0xff] %vm590, %v3219
        %3291 = vst.msk [vmem:[#allocation3 + $0x3f8] sm:$0xff] %vm590, %v3221
        %3292 = vst.msk [vmem:[#allocation3 + $0x420] sm:$0xff] %vm590, %v3223
        %3293 = vst.msk [vmem:[#allocation3 + $0x448] sm:$0xff] %vm590, %v3225
        %3294 = vst.msk [vmem:[#allocation3 + $0x470] sm:$0xff] %vm590, %v3227
        %3295 = vst.msk [vmem:[#allocation3 + $0x498] sm:$0xff] %vm590, %v3229
        %3296 = vst.msk [vmem:[#allocation3 + $0x4c0] sm:$0xff] %vm590, %v3231
        %3297 = vst.msk [vmem:[#allocation3 + $0x4e8] sm:$0xff] %vm590, %v3233
        %v3298 = vld [vmem:[%s1135] sm:$0xff]
        %v3299 = vld [vmem:[%s1135 + $0x8] sm:$0xff]
        %v3300 = vld [vmem:[%s1135 + $0x18] sm:$0xff]
        %v3301 = vld [vmem:[%s1135 + $0x20] sm:$0xff]
        %v3302 = vld [vmem:[%s1135 + $0x30] sm:$0xff]
        %v3303 = vld [vmem:[%s1135 + $0x38] sm:$0xff]
        %v3304 = vld [vmem:[%s1135 + $0x48] sm:$0xff]
        %v3305 = vld [vmem:[%s1135 + $0x50] sm:$0xff]
        %v3306 = vld [vmem:[%s1135 + $0x60] sm:$0xff]
        %v3307 = vld [vmem:[%s1135 + $0x68] sm:$0xff]
        %v3308 = vld [vmem:[%s1135 + $0x78] sm:$0xff]
        %v3309 = vld [vmem:[%s1135 + $0x80] sm:$0xff]
        %v3310 = vld [vmem:[%s1135 + $0x90] sm:$0xff]
        %v3311 = vld [vmem:[%s1135 + $0x98] sm:$0xff]
        %v3312 = vld [vmem:[%s1135 + $0xa8] sm:$0xff]
        %v3313 = vld [vmem:[%s1135 + $0xb0] sm:$0xff]
        %v3314 = vld [vmem:[%s1135 + $0xc0] sm:$0xff]
        %v3315 = vld [vmem:[%s1135 + $0xc8] sm:$0xff]
        %v3316 = vld [vmem:[%s1135 + $0xd8] sm:$0xff]
        %v3317 = vld [vmem:[%s1135 + $0xe0] sm:$0xff]
        %v3318 = vld [vmem:[%s1135 + $0xf0] sm:$0xff]
        %v3319 = vld [vmem:[%s1135 + $0xf8] sm:$0xff]
        %v3320 = vld [vmem:[%s1135 + $0x108] sm:$0xff]
        %v3321 = vld [vmem:[%s1135 + $0x110] sm:$0xff]
        %v3322 = vld [vmem:[%s1135 + $0x120] sm:$0xff]
        %v3323 = vld [vmem:[%s1135 + $0x128] sm:$0xff]
        %v3324 = vld [vmem:[%s1135 + $0x138] sm:$0xff]
        %v3325 = vld [vmem:[%s1135 + $0x140] sm:$0xff]
        %v3326 = vld [vmem:[%s1135 + $0x150] sm:$0xff]
        %v3327 = vld [vmem:[%s1135 + $0x158] sm:$0xff]
        %v3328 = vld [vmem:[%s1135 + $0x168] sm:$0xff]
        %v3329 = vld [vmem:[%s1135 + $0x170] sm:$0xff]
        %3330 = vst.msk [vmem:[#allocation3 + $0x18] sm:$0xff] %vm223, %v3298
        %3331 = vst.msk [vmem:[#allocation3 + $0x40] sm:$0xff] %vm223, %v3299
        %3332 = vst.msk [vmem:[#allocation3 + $0x68] sm:$0xff] %vm223, %v3300
        %3333 = vst.msk [vmem:[#allocation3 + $0x90] sm:$0xff] %vm223, %v3301
        %3334 = vst.msk [vmem:[#allocation3 + $0xb8] sm:$0xff] %vm223, %v3302
        %3335 = vst.msk [vmem:[#allocation3 + $0xe0] sm:$0xff] %vm223, %v3303
        %3336 = vst.msk [vmem:[#allocation3 + $0x108] sm:$0xff] %vm223, %v3304
        %3337 = vst.msk [vmem:[#allocation3 + $0x130] sm:$0xff] %vm223, %v3305
        %3338 = vst.msk [vmem:[#allocation3 + $0x158] sm:$0xff] %vm223, %v3306
        %3339 = vst.msk [vmem:[#allocation3 + $0x180] sm:$0xff] %vm223, %v3307
        %3340 = vst.msk [vmem:[#allocation3 + $0x1a8] sm:$0xff] %vm223, %v3308
        %3341 = vst.msk [vmem:[#allocation3 + $0x1d0] sm:$0xff] %vm223, %v3309
        %3342 = vst.msk [vmem:[#allocation3 + $0x1f8] sm:$0xff] %vm223, %v3310
        %3343 = vst.msk [vmem:[#allocation3 + $0x220] sm:$0xff] %vm223, %v3311
        %3344 = vst.msk [vmem:[#allocation3 + $0x248] sm:$0xff] %vm223, %v3312
        %3345 = vst.msk [vmem:[#allocation3 + $0x270] sm:$0xff] %vm223, %v3313
        %3346 = vst.msk [vmem:[#allocation3 + $0x298] sm:$0xff] %vm223, %v3314
        %3347 = vst.msk [vmem:[#allocation3 + $0x2c0] sm:$0xff] %vm223, %v3315
        %3348 = vst.msk [vmem:[#allocation3 + $0x2e8] sm:$0xff] %vm223, %v3316
        %3349 = vst.msk [vmem:[#allocation3 + $0x310] sm:$0xff] %vm223, %v3317
        %3350 = vst.msk [vmem:[#allocation3 + $0x338] sm:$0xff] %vm223, %v3318
        %3351 = vst.msk [vmem:[#allocation3 + $0x360] sm:$0xff] %vm223, %v3319
        %3352 = vst.msk [vmem:[#allocation3 + $0x388] sm:$0xff] %vm223, %v3320
        %3353 = vst.msk [vmem:[#allocation3 + $0x3b0] sm:$0xff] %vm223, %v3321
        %3354 = vst.msk [vmem:[#allocation3 + $0x3d8] sm:$0xff] %vm223, %v3322
        %3355 = vst.msk [vmem:[#allocation3 + $0x400] sm:$0xff] %vm223, %v3323
        %3356 = vst.msk [vmem:[#allocation3 + $0x428] sm:$0xff] %vm223, %v3324
        %3357 = vst.msk [vmem:[#allocation3 + $0x450] sm:$0xff] %vm223, %v3325
        %3358 = vst.msk [vmem:[#allocation3 + $0x478] sm:$0xff] %vm223, %v3326
        %3359 = vst.msk [vmem:[#allocation3 + $0x4a0] sm:$0xff] %vm223, %v3327
        %3360 = vst.msk [vmem:[#allocation3 + $0x4c8] sm:$0xff] %vm223, %v3328
        %3361 = vst.msk [vmem:[#allocation3 + $0x4f0] sm:$0xff] %vm223, %v3329
        %v3362 = vld [vmem:[%s1135 + $0x1] sm:$0xff]
        %v3363 = vld [vmem:[%s1135 + $0x9] sm:$0xff]
        %v3364 = vld [vmem:[%s1135 + $0x19] sm:$0xff]
        %v3365 = vld [vmem:[%s1135 + $0x21] sm:$0xff]
        %v3366 = vld [vmem:[%s1135 + $0x31] sm:$0xff]
        %v3367 = vld [vmem:[%s1135 + $0x39] sm:$0xff]
        %v3368 = vld [vmem:[%s1135 + $0x49] sm:$0xff]
        %v3369 = vld [vmem:[%s1135 + $0x51] sm:$0xff]
        %v3370 = vld [vmem:[%s1135 + $0x61] sm:$0xff]
        %v3371 = vld [vmem:[%s1135 + $0x69] sm:$0xff]
        %v3372 = vld [vmem:[%s1135 + $0x79] sm:$0xff]
        %v3373 = vld [vmem:[%s1135 + $0x81] sm:$0xff]
        %v3374 = vld [vmem:[%s1135 + $0x91] sm:$0xff]
        %v3375 = vld [vmem:[%s1135 + $0x99] sm:$0xff]
        %v3376 = vld [vmem:[%s1135 + $0xa9] sm:$0xff]
        %v3377 = vld [vmem:[%s1135 + $0xb1] sm:$0xff]
        %v3378 = vld [vmem:[%s1135 + $0xc1] sm:$0xff]
        %v3379 = vld [vmem:[%s1135 + $0xc9] sm:$0xff]
        %v3380 = vld [vmem:[%s1135 + $0xd9] sm:$0xff]
        %v3381 = vld [vmem:[%s1135 + $0xe1] sm:$0xff]
        %v3382 = vld [vmem:[%s1135 + $0xf1] sm:$0xff]
        %v3383 = vld [vmem:[%s1135 + $0xf9] sm:$0xff]
        %v3384 = vld [vmem:[%s1135 + $0x109] sm:$0xff]
        %v3385 = vld [vmem:[%s1135 + $0x111] sm:$0xff]
        %v3386 = vld [vmem:[%s1135 + $0x121] sm:$0xff]
        %v3387 = vld [vmem:[%s1135 + $0x129] sm:$0xff]
        %v3388 = vld [vmem:[%s1135 + $0x139] sm:$0xff]
        %v3389 = vld [vmem:[%s1135 + $0x141] sm:$0xff]
        %v3390 = vld [vmem:[%s1135 + $0x151] sm:$0xff]
        %v3391 = vld [vmem:[%s1135 + $0x159] sm:$0xff]
        %v3392 = vld [vmem:[%s1135 + $0x169] sm:$0xff]
        %v3393 = vld [vmem:[%s1135 + $0x171] sm:$0xff]
        %3426 = vrot.lane.b32.xlu0 %v3362, 64
        %v3427 = vpop.permute.xlu0 %3426
        %3428 = vrot.lane.b32.xlu0 %v3363, 64
        %v3429 = vpop.permute.xlu0 %3428
        %3430 = vrot.lane.b32.xlu0 %v3364, 64
        %v3431 = vpop.permute.xlu0 %3430
        %3432 = vrot.lane.b32.xlu0 %v3365, 64
        %v3433 = vpop.permute.xlu0 %3432
        %3434 = vrot.lane.b32.xlu0 %v3366, 64
        %v3435 = vpop.permute.xlu0 %3434
        %3436 = vrot.lane.b32.xlu0 %v3367, 64
        %v3437 = vpop.permute.xlu0 %3436
        %3438 = vrot.lane.b32.xlu0 %v3368, 64
        %v3439 = vpop.permute.xlu0 %3438
        %3440 = vrot.lane.b32.xlu0 %v3369, 64
        %v3441 = vpop.permute.xlu0 %3440
        %3442 = vrot.lane.b32.xlu0 %v3370, 64
        %v3443 = vpop.permute.xlu0 %3442
        %3444 = vrot.lane.b32.xlu0 %v3371, 64
        %v3445 = vpop.permute.xlu0 %3444
        %3446 = vrot.lane.b32.xlu0 %v3372, 64
        %v3447 = vpop.permute.xlu0 %3446
        %3448 = vrot.lane.b32.xlu0 %v3373, 64
        %v3449 = vpop.permute.xlu0 %3448
        %3450 = vrot.lane.b32.xlu0 %v3374, 64
        %v3451 = vpop.permute.xlu0 %3450
        %3452 = vrot.lane.b32.xlu0 %v3375, 64
        %v3453 = vpop.permute.xlu0 %3452
        %3454 = vrot.lane.b32.xlu0 %v3376, 64
        %v3455 = vpop.permute.xlu0 %3454
        %3456 = vrot.lane.b32.xlu0 %v3377, 64
        %v3457 = vpop.permute.xlu0 %3456
        %3458 = vrot.lane.b32.xlu0 %v3378, 64
        %v3459 = vpop.permute.xlu0 %3458
        %3460 = vrot.lane.b32.xlu0 %v3379, 64
        %v3461 = vpop.permute.xlu0 %3460
        %3462 = vrot.lane.b32.xlu0 %v3380, 64
        %v3463 = vpop.permute.xlu0 %3462
        %3464 = vrot.lane.b32.xlu0 %v3381, 64
        %v3465 = vpop.permute.xlu0 %3464
        %3466 = vrot.lane.b32.xlu0 %v3382, 64
        %v3467 = vpop.permute.xlu0 %3466
        %3468 = vrot.lane.b32.xlu0 %v3383, 64
        %v3469 = vpop.permute.xlu0 %3468
        %3470 = vrot.lane.b32.xlu0 %v3384, 64
        %v3471 = vpop.permute.xlu0 %3470
        %3472 = vrot.lane.b32.xlu0 %v3385, 64
        %v3473 = vpop.permute.xlu0 %3472
        %3474 = vrot.lane.b32.xlu0 %v3386, 64
        %v3475 = vpop.permute.xlu0 %3474
        %3476 = vrot.lane.b32.xlu0 %v3387, 64
        %v3477 = vpop.permute.xlu0 %3476
        %3478 = vrot.lane.b32.xlu0 %v3388, 64
        %v3479 = vpop.permute.xlu0 %3478
        %3480 = vrot.lane.b32.xlu0 %v3389, 64
        %v3481 = vpop.permute.xlu0 %3480
        %3482 = vrot.lane.b32.xlu0 %v3390, 64
        %v3483 = vpop.permute.xlu0 %3482
        %3484 = vrot.lane.b32.xlu0 %v3391, 64
        %v3485 = vpop.permute.xlu0 %3484
        %3486 = vrot.lane.b32.xlu0 %v3392, 64
        %v3487 = vpop.permute.xlu0 %3486
        %3488 = vrot.lane.b32.xlu0 %v3393, 64
        %v3489 = vpop.permute.xlu0 %3488
        %3522 = vst.msk [vmem:[#allocation3 + $0x18] sm:$0xff] %vm590, %v3427
        %3523 = vst.msk [vmem:[#allocation3 + $0x40] sm:$0xff] %vm590, %v3429
        %3524 = vst.msk [vmem:[#allocation3 + $0x68] sm:$0xff] %vm590, %v3431
        %3525 = vst.msk [vmem:[#allocation3 + $0x90] sm:$0xff] %vm590, %v3433
        %3526 = vst.msk [vmem:[#allocation3 + $0xb8] sm:$0xff] %vm590, %v3435
        %3527 = vst.msk [vmem:[#allocation3 + $0xe0] sm:$0xff] %vm590, %v3437
        %3528 = vst.msk [vmem:[#allocation3 + $0x108] sm:$0xff] %vm590, %v3439
        %3529 = vst.msk [vmem:[#allocation3 + $0x130] sm:$0xff] %vm590, %v3441
        %3530 = vst.msk [vmem:[#allocation3 + $0x158] sm:$0xff] %vm590, %v3443
        %3531 = vst.msk [vmem:[#allocation3 + $0x180] sm:$0xff] %vm590, %v3445
        %3532 = vst.msk [vmem:[#allocation3 + $0x1a8] sm:$0xff] %vm590, %v3447
        %3533 = vst.msk [vmem:[#allocation3 + $0x1d0] sm:$0xff] %vm590, %v3449
        %3534 = vst.msk [vmem:[#allocation3 + $0x1f8] sm:$0xff] %vm590, %v3451
        %3535 = vst.msk [vmem:[#allocation3 + $0x220] sm:$0xff] %vm590, %v3453
        %3536 = vst.msk [vmem:[#allocation3 + $0x248] sm:$0xff] %vm590, %v3455
        %3537 = vst.msk [vmem:[#allocation3 + $0x270] sm:$0xff] %vm590, %v3457
        %3538 = vst.msk [vmem:[#allocation3 + $0x298] sm:$0xff] %vm590, %v3459
        %3539 = vst.msk [vmem:[#allocation3 + $0x2c0] sm:$0xff] %vm590, %v3461
        %3540 = vst.msk [vmem:[#allocation3 + $0x2e8] sm:$0xff] %vm590, %v3463
        %3541 = vst.msk [vmem:[#allocation3 + $0x310] sm:$0xff] %vm590, %v3465
        %3542 = vst.msk [vmem:[#allocation3 + $0x338] sm:$0xff] %vm590, %v3467
        %3543 = vst.msk [vmem:[#allocation3 + $0x360] sm:$0xff] %vm590, %v3469
        %3544 = vst.msk [vmem:[#allocation3 + $0x388] sm:$0xff] %vm590, %v3471
        %3545 = vst.msk [vmem:[#allocation3 + $0x3b0] sm:$0xff] %vm590, %v3473
        %3546 = vst.msk [vmem:[#allocation3 + $0x3d8] sm:$0xff] %vm590, %v3475
        %3547 = vst.msk [vmem:[#allocation3 + $0x400] sm:$0xff] %vm590, %v3477
        %3548 = vst.msk [vmem:[#allocation3 + $0x428] sm:$0xff] %vm590, %v3479
        %3549 = vst.msk [vmem:[#allocation3 + $0x450] sm:$0xff] %vm590, %v3481
        %3550 = vst.msk [vmem:[#allocation3 + $0x478] sm:$0xff] %vm590, %v3483
        %3551 = vst.msk [vmem:[#allocation3 + $0x4a0] sm:$0xff] %vm590, %v3485
        %3552 = vst.msk [vmem:[#allocation3 + $0x4c8] sm:$0xff] %vm590, %v3487
        %3553 = vst.msk [vmem:[#allocation3 + $0x4f0] sm:$0xff] %vm590, %v3489
        %v3554 = vld [vmem:[%s1135 + $0x2] sm:$0xff]
        %v3555 = vld [vmem:[%s1135 + $0xa] sm:$0xff]
        %v3556 = vld [vmem:[%s1135 + $0x1a] sm:$0xff]
        %v3557 = vld [vmem:[%s1135 + $0x22] sm:$0xff]
        %v3558 = vld [vmem:[%s1135 + $0x32] sm:$0xff]
        %v3559 = vld [vmem:[%s1135 + $0x3a] sm:$0xff]
        %v3560 = vld [vmem:[%s1135 + $0x4a] sm:$0xff]
        %v3561 = vld [vmem:[%s1135 + $0x52] sm:$0xff]
        %v3562 = vld [vmem:[%s1135 + $0x62] sm:$0xff]
        %v3563 = vld [vmem:[%s1135 + $0x6a] sm:$0xff]
        %v3564 = vld [vmem:[%s1135 + $0x7a] sm:$0xff]
        %v3565 = vld [vmem:[%s1135 + $0x82] sm:$0xff]
        %v3566 = vld [vmem:[%s1135 + $0x92] sm:$0xff]
        %v3567 = vld [vmem:[%s1135 + $0x9a] sm:$0xff]
        %v3568 = vld [vmem:[%s1135 + $0xaa] sm:$0xff]
        %v3569 = vld [vmem:[%s1135 + $0xb2] sm:$0xff]
        %v3570 = vld [vmem:[%s1135 + $0xc2] sm:$0xff]
        %v3571 = vld [vmem:[%s1135 + $0xca] sm:$0xff]
        %v3572 = vld [vmem:[%s1135 + $0xda] sm:$0xff]
        %v3573 = vld [vmem:[%s1135 + $0xe2] sm:$0xff]
        %v3574 = vld [vmem:[%s1135 + $0xf2] sm:$0xff]
        %v3575 = vld [vmem:[%s1135 + $0xfa] sm:$0xff]
        %v3576 = vld [vmem:[%s1135 + $0x10a] sm:$0xff]
        %v3577 = vld [vmem:[%s1135 + $0x112] sm:$0xff]
        %v3578 = vld [vmem:[%s1135 + $0x122] sm:$0xff]
        %v3579 = vld [vmem:[%s1135 + $0x12a] sm:$0xff]
        %v3580 = vld [vmem:[%s1135 + $0x13a] sm:$0xff]
        %v3581 = vld [vmem:[%s1135 + $0x142] sm:$0xff]
        %v3582 = vld [vmem:[%s1135 + $0x152] sm:$0xff]
        %v3583 = vld [vmem:[%s1135 + $0x15a] sm:$0xff]
        %v3584 = vld [vmem:[%s1135 + $0x16a] sm:$0xff]
        %v3585 = vld [vmem:[%s1135 + $0x172] sm:$0xff]
        %3586 = vst.msk [vmem:[#allocation3 + $0x20] sm:$0xff] %vm223, %v3554
        %3587 = vst.msk [vmem:[#allocation3 + $0x48] sm:$0xff] %vm223, %v3555
        %3588 = vst.msk [vmem:[#allocation3 + $0x70] sm:$0xff] %vm223, %v3556
        %3589 = vst.msk [vmem:[#allocation3 + $0x98] sm:$0xff] %vm223, %v3557
        %3590 = vst.msk [vmem:[#allocation3 + $0xc0] sm:$0xff] %vm223, %v3558
        %3591 = vst.msk [vmem:[#allocation3 + $0xe8] sm:$0xff] %vm223, %v3559
        %3592 = vst.msk [vmem:[#allocation3 + $0x110] sm:$0xff] %vm223, %v3560
        %3593 = vst.msk [vmem:[#allocation3 + $0x138] sm:$0xff] %vm223, %v3561
        %3594 = vst.msk [vmem:[#allocation3 + $0x160] sm:$0xff] %vm223, %v3562
        %3595 = vst.msk [vmem:[#allocation3 + $0x188] sm:$0xff] %vm223, %v3563
        %3596 = vst.msk [vmem:[#allocation3 + $0x1b0] sm:$0xff] %vm223, %v3564
        %3597 = vst.msk [vmem:[#allocation3 + $0x1d8] sm:$0xff] %vm223, %v3565
        %3598 = vst.msk [vmem:[#allocation3 + $0x200] sm:$0xff] %vm223, %v3566
        %3599 = vst.msk [vmem:[#allocation3 + $0x228] sm:$0xff] %vm223, %v3567
        %3600 = vst.msk [vmem:[#allocation3 + $0x250] sm:$0xff] %vm223, %v3568
        %3601 = vst.msk [vmem:[#allocation3 + $0x278] sm:$0xff] %vm223, %v3569
        %3602 = vst.msk [vmem:[#allocation3 + $0x2a0] sm:$0xff] %vm223, %v3570
        %3603 = vst.msk [vmem:[#allocation3 + $0x2c8] sm:$0xff] %vm223, %v3571
        %3604 = vst.msk [vmem:[#allocation3 + $0x2f0] sm:$0xff] %vm223, %v3572
        %3605 = vst.msk [vmem:[#allocation3 + $0x318] sm:$0xff] %vm223, %v3573
        %3606 = vst.msk [vmem:[#allocation3 + $0x340] sm:$0xff] %vm223, %v3574
        %3607 = vst.msk [vmem:[#allocation3 + $0x368] sm:$0xff] %vm223, %v3575
        %3608 = vst.msk [vmem:[#allocation3 + $0x390] sm:$0xff] %vm223, %v3576
        %3609 = vst.msk [vmem:[#allocation3 + $0x3b8] sm:$0xff] %vm223, %v3577
        %3610 = vst.msk [vmem:[#allocation3 + $0x3e0] sm:$0xff] %vm223, %v3578
        %3611 = vst.msk [vmem:[#allocation3 + $0x408] sm:$0xff] %vm223, %v3579
        %3612 = vst.msk [vmem:[#allocation3 + $0x430] sm:$0xff] %vm223, %v3580
        %3613 = vst.msk [vmem:[#allocation3 + $0x458] sm:$0xff] %vm223, %v3581
        %3614 = vst.msk [vmem:[#allocation3 + $0x480] sm:$0xff] %vm223, %v3582
        %3615 = vst.msk [vmem:[#allocation3 + $0x4a8] sm:$0xff] %vm223, %v3583
        %3616 = vst.msk [vmem:[#allocation3 + $0x4d0] sm:$0xff] %vm223, %v3584
        %3617 = vst.msk [vmem:[#allocation3 + $0x4f8] sm:$0xff] %vm223, %v3585
        %v3618 = vld [vmem:[#allocation3] sm:$0xff]
        %v3619 = vld [vmem:[#allocation3 + $0x8] sm:$0xff]
        %v3620 = vld [vmem:[#allocation3 + $0x10] sm:$0xff]
        %v3621 = vld [vmem:[#allocation3 + $0x18] sm:$0xff]
        %v3622 = vld [vmem:[#allocation3 + $0x20] sm:$0xff]
        %v3623 = vld [vmem:[#allocation3 + $0x28] sm:$0xff]
        %v3624 = vld [vmem:[#allocation3 + $0x30] sm:$0xff]
        %v3625 = vld [vmem:[#allocation3 + $0x38] sm:$0xff]
        %v3626 = vld [vmem:[#allocation3 + $0x40] sm:$0xff]
        %v3627 = vld [vmem:[#allocation3 + $0x48] sm:$0xff]
        %v3628 = vld [vmem:[#allocation3 + $0x50] sm:$0xff]
        %v3629 = vld [vmem:[#allocation3 + $0x58] sm:$0xff]
        %v3630 = vld [vmem:[#allocation3 + $0x60] sm:$0xff]
        %v3631 = vld [vmem:[#allocation3 + $0x68] sm:$0xff]
        %v3632 = vld [vmem:[#allocation3 + $0x70] sm:$0xff]
        %v3633 = vld [vmem:[#allocation3 + $0x78] sm:$0xff]
        %v3634 = vld [vmem:[#allocation3 + $0x80] sm:$0xff]
        %v3635 = vld [vmem:[#allocation3 + $0x88] sm:$0xff]
        %v3636 = vld [vmem:[#allocation3 + $0x90] sm:$0xff]
        %v3637 = vld [vmem:[#allocation3 + $0x98] sm:$0xff]
        %v3638 = vld [vmem:[#allocation3 + $0xa0] sm:$0xff]
        %v3639 = vld [vmem:[#allocation3 + $0xa8] sm:$0xff]
        %v3640 = vld [vmem:[#allocation3 + $0xb0] sm:$0xff]
        %v3641 = vld [vmem:[#allocation3 + $0xb8] sm:$0xff]
        %v3642 = vld [vmem:[#allocation3 + $0xc0] sm:$0xff]
        %v3643 = vld [vmem:[#allocation3 + $0xc8] sm:$0xff]
        %v3644 = vld [vmem:[#allocation3 + $0xd0] sm:$0xff]
        %v3645 = vld [vmem:[#allocation3 + $0xd8] sm:$0xff]
        %v3646 = vld [vmem:[#allocation3 + $0xe0] sm:$0xff]
        %v3647 = vld [vmem:[#allocation3 + $0xe8] sm:$0xff]
        %v3648 = vld [vmem:[#allocation3 + $0xf0] sm:$0xff]
        %v3649 = vld [vmem:[#allocation3 + $0xf8] sm:$0xff]
        %v3650 = vld [vmem:[#allocation3 + $0x100] sm:$0xff]
        %v3651 = vld [vmem:[#allocation3 + $0x108] sm:$0xff]
        %v3652 = vld [vmem:[#allocation3 + $0x110] sm:$0xff]
        %v3653 = vld [vmem:[#allocation3 + $0x118] sm:$0xff]
        %v3654 = vld [vmem:[#allocation3 + $0x120] sm:$0xff]
        %v3655 = vld [vmem:[#allocation3 + $0x128] sm:$0xff]
        %v3656 = vld [vmem:[#allocation3 + $0x130] sm:$0xff]
        %v3657 = vld [vmem:[#allocation3 + $0x138] sm:$0xff]
        %v3658 = vld [vmem:[#allocation3 + $0x140] sm:$0xff]
        %v3659 = vld [vmem:[#allocation3 + $0x148] sm:$0xff]
        %v3660 = vld [vmem:[#allocation3 + $0x150] sm:$0xff]
        %v3661 = vld [vmem:[#allocation3 + $0x158] sm:$0xff]
        %v3662 = vld [vmem:[#allocation3 + $0x160] sm:$0xff]
        %v3663 = vld [vmem:[#allocation3 + $0x168] sm:$0xff]
        %v3664 = vld [vmem:[#allocation3 + $0x170] sm:$0xff]
        %v3665 = vld [vmem:[#allocation3 + $0x178] sm:$0xff]
        %v3666 = vld [vmem:[#allocation3 + $0x180] sm:$0xff]
        %v3667 = vld [vmem:[#allocation3 + $0x188] sm:$0xff]
        %v3668 = vld [vmem:[#allocation3 + $0x190] sm:$0xff]
        %v3669 = vld [vmem:[#allocation3 + $0x198] sm:$0xff]
        %v3670 = vld [vmem:[#allocation3 + $0x1a0] sm:$0xff]
        %v3671 = vld [vmem:[#allocation3 + $0x1a8] sm:$0xff]
        %v3672 = vld [vmem:[#allocation3 + $0x1b0] sm:$0xff]
        %v3673 = vld [vmem:[#allocation3 + $0x1b8] sm:$0xff]
        %v3674 = vld [vmem:[#allocation3 + $0x1c0] sm:$0xff]
        %v3675 = vld [vmem:[#allocation3 + $0x1c8] sm:$0xff]
        %v3676 = vld [vmem:[#allocation3 + $0x1d0] sm:$0xff]
        %v3677 = vld [vmem:[#allocation3 + $0x1d8] sm:$0xff]
        %v3678 = vld [vmem:[#allocation3 + $0x1e0] sm:$0xff]
        %v3679 = vld [vmem:[#allocation3 + $0x1e8] sm:$0xff]
        %v3680 = vld [vmem:[#allocation3 + $0x1f0] sm:$0xff]
        %v3681 = vld [vmem:[#allocation3 + $0x1f8] sm:$0xff]
        %v3682 = vld [vmem:[#allocation3 + $0x200] sm:$0xff]
        %v3683 = vld [vmem:[#allocation3 + $0x208] sm:$0xff]
        %v3684 = vld [vmem:[#allocation3 + $0x210] sm:$0xff]
        %v3685 = vld [vmem:[#allocation3 + $0x218] sm:$0xff]
        %v3686 = vld [vmem:[#allocation3 + $0x220] sm:$0xff]
        %v3687 = vld [vmem:[#allocation3 + $0x228] sm:$0xff]
        %v3688 = vld [vmem:[#allocation3 + $0x230] sm:$0xff]
        %v3689 = vld [vmem:[#allocation3 + $0x238] sm:$0xff]
        %v3690 = vld [vmem:[#allocation3 + $0x240] sm:$0xff]
        %v3691 = vld [vmem:[#allocation3 + $0x248] sm:$0xff]
        %v3692 = vld [vmem:[#allocation3 + $0x250] sm:$0xff]
        %v3693 = vld [vmem:[#allocation3 + $0x258] sm:$0xff]
        %v3694 = vld [vmem:[#allocation3 + $0x260] sm:$0xff]
        %v3695 = vld [vmem:[#allocation3 + $0x268] sm:$0xff]
        %v3696 = vld [vmem:[#allocation3 + $0x270] sm:$0xff]
        %v3697 = vld [vmem:[#allocation3 + $0x278] sm:$0xff]
        %v3698 = vld [vmem:[#allocation3 + $0x280] sm:$0xff]
        %v3699 = vld [vmem:[#allocation3 + $0x288] sm:$0xff]
        %v3700 = vld [vmem:[#allocation3 + $0x290] sm:$0xff]
        %v3701 = vld [vmem:[#allocation3 + $0x298] sm:$0xff]
        %v3702 = vld [vmem:[#allocation3 + $0x2a0] sm:$0xff]
        %v3703 = vld [vmem:[#allocation3 + $0x2a8] sm:$0xff]
        %v3704 = vld [vmem:[#allocation3 + $0x2b0] sm:$0xff]
        %v3705 = vld [vmem:[#allocation3 + $0x2b8] sm:$0xff]
        %v3706 = vld [vmem:[#allocation3 + $0x2c0] sm:$0xff]
        %v3707 = vld [vmem:[#allocation3 + $0x2c8] sm:$0xff]
        %v3708 = vld [vmem:[#allocation3 + $0x2d0] sm:$0xff]
        %v3709 = vld [vmem:[#allocation3 + $0x2d8] sm:$0xff]
        %v3710 = vld [vmem:[#allocation3 + $0x2e0] sm:$0xff]
        %v3711 = vld [vmem:[#allocation3 + $0x2e8] sm:$0xff]
        %v3712 = vld [vmem:[#allocation3 + $0x2f0] sm:$0xff]
        %v3713 = vld [vmem:[#allocation3 + $0x2f8] sm:$0xff]
        %v3714 = vld [vmem:[#allocation3 + $0x300] sm:$0xff]
        %v3715 = vld [vmem:[#allocation3 + $0x308] sm:$0xff]
        %v3716 = vld [vmem:[#allocation3 + $0x310] sm:$0xff]
        %v3717 = vld [vmem:[#allocation3 + $0x318] sm:$0xff]
        %v3718 = vld [vmem:[#allocation3 + $0x320] sm:$0xff]
        %v3719 = vld [vmem:[#allocation3 + $0x328] sm:$0xff]
        %v3720 = vld [vmem:[#allocation3 + $0x330] sm:$0xff]
        %v3721 = vld [vmem:[#allocation3 + $0x338] sm:$0xff]
        %v3722 = vld [vmem:[#allocation3 + $0x340] sm:$0xff]
        %v3723 = vld [vmem:[#allocation3 + $0x348] sm:$0xff]
        %v3724 = vld [vmem:[#allocation3 + $0x350] sm:$0xff]
        %v3725 = vld [vmem:[#allocation3 + $0x358] sm:$0xff]
        %v3726 = vld [vmem:[#allocation3 + $0x360] sm:$0xff]
        %v3727 = vld [vmem:[#allocation3 + $0x368] sm:$0xff]
        %v3728 = vld [vmem:[#allocation3 + $0x370] sm:$0xff]
        %v3729 = vld [vmem:[#allocation3 + $0x378] sm:$0xff]
        %v3730 = vld [vmem:[#allocation3 + $0x380] sm:$0xff]
        %v3731 = vld [vmem:[#allocation3 + $0x388] sm:$0xff]
        %v3732 = vld [vmem:[#allocation3 + $0x390] sm:$0xff]
        %v3733 = vld [vmem:[#allocation3 + $0x398] sm:$0xff]
        %v3734 = vld [vmem:[#allocation3 + $0x3a0] sm:$0xff]
        %v3735 = vld [vmem:[#allocation3 + $0x3a8] sm:$0xff]
        %v3736 = vld [vmem:[#allocation3 + $0x3b0] sm:$0xff]
        %v3737 = vld [vmem:[#allocation3 + $0x3b8] sm:$0xff]
        %v3738 = vld [vmem:[#allocation3 + $0x3c0] sm:$0xff]
        %v3739 = vld [vmem:[#allocation3 + $0x3c8] sm:$0xff]
        %v3740 = vld [vmem:[#allocation3 + $0x3d0] sm:$0xff]
        %v3741 = vld [vmem:[#allocation3 + $0x3d8] sm:$0xff]
        %v3742 = vld [vmem:[#allocation3 + $0x3e0] sm:$0xff]
        %v3743 = vld [vmem:[#allocation3 + $0x3e8] sm:$0xff]
        %v3744 = vld [vmem:[#allocation3 + $0x3f0] sm:$0xff]
        %v3745 = vld [vmem:[#allocation3 + $0x3f8] sm:$0xff]
        %v3746 = vld [vmem:[#allocation3 + $0x400] sm:$0xff]
        %v3747 = vld [vmem:[#allocation3 + $0x408] sm:$0xff]
        %v3748 = vld [vmem:[#allocation3 + $0x410] sm:$0xff]
        %v3749 = vld [vmem:[#allocation3 + $0x418] sm:$0xff]
        %v3750 = vld [vmem:[#allocation3 + $0x420] sm:$0xff]
        %v3751 = vld [vmem:[#allocation3 + $0x428] sm:$0xff]
        %v3752 = vld [vmem:[#allocation3 + $0x430] sm:$0xff]
        %v3753 = vld [vmem:[#allocation3 + $0x438] sm:$0xff]
        %v3754 = vld [vmem:[#allocation3 + $0x440] sm:$0xff]
        %v3755 = vld [vmem:[#allocation3 + $0x448] sm:$0xff]
        %v3756 = vld [vmem:[#allocation3 + $0x450] sm:$0xff]
        %v3757 = vld [vmem:[#allocation3 + $0x458] sm:$0xff]
        %v3758 = vld [vmem:[#allocation3 + $0x460] sm:$0xff]
        %v3759 = vld [vmem:[#allocation3 + $0x468] sm:$0xff]
        %v3760 = vld [vmem:[#allocation3 + $0x470] sm:$0xff]
        %v3761 = vld [vmem:[#allocation3 + $0x478] sm:$0xff]
        %v3762 = vld [vmem:[#allocation3 + $0x480] sm:$0xff]
        %v3763 = vld [vmem:[#allocation3 + $0x488] sm:$0xff]
        %v3764 = vld [vmem:[#allocation3 + $0x490] sm:$0xff]
        %v3765 = vld [vmem:[#allocation3 + $0x498] sm:$0xff]
        %v3766 = vld [vmem:[#allocation3 + $0x4a0] sm:$0xff]
        %v3767 = vld [vmem:[#allocation3 + $0x4a8] sm:$0xff]
        %v3768 = vld [vmem:[#allocation3 + $0x4b0] sm:$0xff]
        %v3769 = vld [vmem:[#allocation3 + $0x4b8] sm:$0xff]
        %v3770 = vld [vmem:[#allocation3 + $0x4c0] sm:$0xff]
        %v3771 = vld [vmem:[#allocation3 + $0x4c8] sm:$0xff]
        %v3772 = vld [vmem:[#allocation3 + $0x4d0] sm:$0xff]
        %v3773 = vld [vmem:[#allocation3 + $0x4d8] sm:$0xff]
        %v3774 = vld [vmem:[#allocation3 + $0x4e0] sm:$0xff]
        %v3775 = vld [vmem:[#allocation3 + $0x4e8] sm:$0xff]
        %v3776 = vld [vmem:[#allocation3 + $0x4f0] sm:$0xff]
        %v3777 = vld [vmem:[#allocation3 + $0x4f8] sm:$0xff]
        %v3778 = vld [vmem:[%s3] sm:$0xff]
        %v3779 = vld [vmem:[%s3 + $0x8] sm:$0xff]
        %v3780 = vld [vmem:[%s3 + $0x10] sm:$0xff]
        %v3781 = vld [vmem:[%s3 + $0x18] sm:$0xff]
        %v3782 = vld [vmem:[%s3 + $0x20] sm:$0xff]
        %v3783 = vld [vmem:[%s3 + $0x28] sm:$0xff]
        %v3784 = vld [vmem:[%s3 + $0x30] sm:$0xff]
        %v3785 = vld [vmem:[%s3 + $0x38] sm:$0xff]
        %v3786 = vld [vmem:[%s3 + $0x40] sm:$0xff]
        %v3787 = vld [vmem:[%s3 + $0x48] sm:$0xff]
        %v3788 = vld [vmem:[%s3 + $0x50] sm:$0xff]
        %v3789 = vld [vmem:[%s3 + $0x58] sm:$0xff]
        %v3790 = vld [vmem:[%s3 + $0x60] sm:$0xff]
        %v3791 = vld [vmem:[%s3 + $0x68] sm:$0xff]
        %v3792 = vld [vmem:[%s3 + $0x70] sm:$0xff]
        %v3793 = vld [vmem:[%s3 + $0x78] sm:$0xff]
        %v3794 = vld [vmem:[%s3 + $0x80] sm:$0xff]
        %v3795 = vld [vmem:[%s3 + $0x88] sm:$0xff]
        %v3796 = vld [vmem:[%s3 + $0x90] sm:$0xff]
        %v3797 = vld [vmem:[%s3 + $0x98] sm:$0xff]
        %v3798 = vld [vmem:[%s3 + $0xa0] sm:$0xff]
        %v3799 = vld [vmem:[%s3 + $0xa8] sm:$0xff]
        %v3800 = vld [vmem:[%s3 + $0xb0] sm:$0xff]
        %v3801 = vld [vmem:[%s3 + $0xb8] sm:$0xff]
        %v3802 = vld [vmem:[%s3 + $0xc0] sm:$0xff]
        %v3803 = vld [vmem:[%s3 + $0xc8] sm:$0xff]
        %v3804 = vld [vmem:[%s3 + $0xd0] sm:$0xff]
        %v3805 = vld [vmem:[%s3 + $0xd8] sm:$0xff]
        %v3806 = vld [vmem:[%s3 + $0xe0] sm:$0xff]
        %v3807 = vld [vmem:[%s3 + $0xe8] sm:$0xff]
        %v3808 = vld [vmem:[%s3 + $0xf0] sm:$0xff]
        %v3809 = vld [vmem:[%s3 + $0xf8] sm:$0xff]
        %v3810 = vld [vmem:[%s3 + $0x100] sm:$0xff]
        %v3811 = vld [vmem:[%s3 + $0x108] sm:$0xff]
        %v3812 = vld [vmem:[%s3 + $0x110] sm:$0xff]
        %v3813 = vld [vmem:[%s3 + $0x118] sm:$0xff]
        %v3814 = vld [vmem:[%s3 + $0x120] sm:$0xff]
        %v3815 = vld [vmem:[%s3 + $0x128] sm:$0xff]
        %v3816 = vld [vmem:[%s3 + $0x130] sm:$0xff]
        %v3817 = vld [vmem:[%s3 + $0x138] sm:$0xff]
        %v3818 = vld [vmem:[%s3 + $0x140] sm:$0xff]
        %v3819 = vld [vmem:[%s3 + $0x148] sm:$0xff]
        %v3820 = vld [vmem:[%s3 + $0x150] sm:$0xff]
        %v3821 = vld [vmem:[%s3 + $0x158] sm:$0xff]
        %v3822 = vld [vmem:[%s3 + $0x160] sm:$0xff]
        %v3823 = vld [vmem:[%s3 + $0x168] sm:$0xff]
        %v3824 = vld [vmem:[%s3 + $0x170] sm:$0xff]
        %v3825 = vld [vmem:[%s3 + $0x178] sm:$0xff]
        %v3826 = vld [vmem:[%s3 + $0x180] sm:$0xff]
        %v3827 = vld [vmem:[%s3 + $0x188] sm:$0xff]
        %v3828 = vld [vmem:[%s3 + $0x190] sm:$0xff]
        %v3829 = vld [vmem:[%s3 + $0x198] sm:$0xff]
        %v3830 = vld [vmem:[%s3 + $0x1a0] sm:$0xff]
        %v3831 = vld [vmem:[%s3 + $0x1a8] sm:$0xff]
        %v3832 = vld [vmem:[%s3 + $0x1b0] sm:$0xff]
        %v3833 = vld [vmem:[%s3 + $0x1b8] sm:$0xff]
        %v3834 = vld [vmem:[%s3 + $0x1c0] sm:$0xff]
        %v3835 = vld [vmem:[%s3 + $0x1c8] sm:$0xff]
        %v3836 = vld [vmem:[%s3 + $0x1d0] sm:$0xff]
        %v3837 = vld [vmem:[%s3 + $0x1d8] sm:$0xff]
        %v3838 = vld [vmem:[%s3 + $0x1e0] sm:$0xff]
        %v3839 = vld [vmem:[%s3 + $0x1e8] sm:$0xff]
        %v3840 = vld [vmem:[%s3 + $0x1f0] sm:$0xff]
        %v3841 = vld [vmem:[%s3 + $0x1f8] sm:$0xff]
        %v3842 = vld [vmem:[%s3 + $0x200] sm:$0xff]
        %v3843 = vld [vmem:[%s3 + $0x208] sm:$0xff]
        %v3844 = vld [vmem:[%s3 + $0x210] sm:$0xff]
        %v3845 = vld [vmem:[%s3 + $0x218] sm:$0xff]
        %v3846 = vld [vmem:[%s3 + $0x220] sm:$0xff]
        %v3847 = vld [vmem:[%s3 + $0x228] sm:$0xff]
        %v3848 = vld [vmem:[%s3 + $0x230] sm:$0xff]
        %v3849 = vld [vmem:[%s3 + $0x238] sm:$0xff]
        %v3850 = vld [vmem:[%s4] sm:$0x1]
        %v3852 = vlaneseq
        %v3853 = vshrl.u32 %v3852, 7
        %v3854 = vsub.s32 0, %v3853
        %v3855 = vrot.slane %v3850, %v3854
        %v3858 = vsel %vm223, %v3622, 0
        %v3861 = vsel %vm223, %v3627, 0
        %v3864 = vsel %vm223, %v3632, 0
        %v3867 = vsel %vm223, %v3637, 0
        %v3870 = vsel %vm223, %v3642, 0
        %v3873 = vsel %vm223, %v3647, 0
        %v3876 = vsel %vm223, %v3652, 0
        %v3879 = vsel %vm223, %v3657, 0
        %v3882 = vsel %vm223, %v3662, 0
        %v3885 = vsel %vm223, %v3667, 0
        %v3888 = vsel %vm223, %v3672, 0
        %v3891 = vsel %vm223, %v3677, 0
        %v3894 = vsel %vm223, %v3682, 0
        %v3897 = vsel %vm223, %v3687, 0
        %v3900 = vsel %vm223, %v3692, 0
        %v3903 = vsel %vm223, %v3697, 0
        %v3906 = vsel %vm223, %v3702, 0
        %v3909 = vsel %vm223, %v3707, 0
        %v3912 = vsel %vm223, %v3712, 0
        %v3915 = vsel %vm223, %v3717, 0
        %v3918 = vsel %vm223, %v3722, 0
        %v3921 = vsel %vm223, %v3727, 0
        %v3924 = vsel %vm223, %v3732, 0
        %v3927 = vsel %vm223, %v3737, 0
        %v3930 = vsel %vm223, %v3742, 0
        %v3933 = vsel %vm223, %v3747, 0
        %v3936 = vsel %vm223, %v3752, 0
        %v3939 = vsel %vm223, %v3757, 0
        %v3942 = vsel %vm223, %v3762, 0
        %v3945 = vsel %vm223, %v3767, 0
        %v3948 = vsel %vm223, %v3772, 0
        %v3951 = vsel %vm223, %v3777, 0
        %3953 = vmatprep.subr.mxu0 0.0
        %3954 = vmatpush1.msra.mxu0 %v3778
        %3955 = vmatprep.subr.mxu0 0.0
        %3956 = vmatpush1.msra.mxu0 %v3779
        %3957 = vmatprep.subr.mxu0 0.0
        %3958 = vmatpush1.msra.mxu0 %v3780
        %3959 = vmatprep.subr.mxu0 0.0
        %3960 = vmatpush1.msra.mxu0 %v3781
        %3961 = vmatprep.subr.mxu0 0.0
        %3962 = vmatpush1.msra.mxu0 %v3782
        %3963 = vmatprep.subr.mxu0 0.0
        %3964 = vmatpush1.msra.mxu0 %v3783
        %3965 = vmatprep.subr.mxu0 0.0
        %3966 = vmatpush1.msra.mxu0 %v3784
        %3967 = vmatprep.subr.mxu0 0.0
        %3968 = vmatpush1.msra.mxu0 %v3785
        %3969 = vmatprep.subr.mxu0 0.0
        %3970 = vmatpush1.msra.mxu0 %v3786
        %3971 = vmatprep.subr.mxu0 0.0
        %3972 = vmatpush1.msra.mxu0 %v3787
        %3973 = vmatprep.subr.mxu0 0.0
        %3974 = vmatpush1.msra.mxu0 %v3788
        %3975 = vmatprep.subr.mxu0 0.0
        %3976 = vmatpush1.msra.mxu0 %v3789
        %3977 = vmatprep.subr.mxu0 0.0
        %3978 = vmatpush1.msra.mxu0 %v3790
        %3979 = vmatprep.subr.mxu0 0.0
        %3980 = vmatpush1.msra.mxu0 %v3791
        %3981 = vmatprep.subr.mxu0 0.0
        %3982 = vmatpush1.msra.mxu0 %v3792
        %3983 = vmatprep.subr.mxu0 0.0
        %3984 = vmatpush1.msra.mxu0 %v3793
        %3985 = vmatprep.subr.mxu0 0.0
        %3986 = vmatpush1.msra.mxu0 %v3794
        %3987 = vmatprep.subr.mxu0 0.0
        %3988 = vmatpush1.msra.mxu0 %v3795
        %3989 = vmatprep.subr.mxu0 0.0
        %3990 = vmatpush1.msra.mxu0 %v3796
        %3991 = vmatprep.subr.mxu0 0.0
        %3992 = vmatpush1.msra.mxu0 %v3797
        %3993 = vmatprep.subr.mxu0 0.0
        %3994 = vmatpush1.msra.mxu0 %v3798
        %3995 = vmatprep.subr.mxu0 0.0
        %3996 = vmatpush1.msra.mxu0 %v3799
        %3997 = vmatprep.subr.mxu0 0.0
        %3998 = vmatpush1.msra.mxu0 %v3800
        %3999 = vmatprep.subr.mxu0 0.0
        %4000 = vmatpush1.msra.mxu0 %v3801
        %4001 = vmatprep.subr.mxu0 0.0
        %4002 = vmatpush1.msra.mxu0 %v3802
        %4003 = vmatprep.subr.mxu0 0.0
        %4004 = vmatpush1.msra.mxu0 %v3803
        %4005 = vmatprep.subr.mxu0 0.0
        %4006 = vmatpush1.msra.mxu0 %v3804
        %4007 = vmatprep.subr.mxu0 0.0
        %4008 = vmatpush1.msra.mxu0 %v3805
        %4009 = vmatprep.subr.mxu0 0.0
        %4010 = vmatpush1.msra.mxu0 %v3806
        %4011 = vmatprep.subr.mxu0 0.0
        %4012 = vmatpush1.msra.mxu0 %v3807
        %4013 = vmatprep.subr.mxu0 0.0
        %4014 = vmatpush1.msra.mxu0 %v3808
        %4015 = vmatprep.subr.mxu0 0.0
        %4016 = vmatpush1.msra.mxu0 %v3809
        %4017 = vmatprep.mubr.f32.mxu0 %v3619
        %4018 = vmatmul.mubr.f32.gmra.mrb[0].mxu0 %v3618
        %v4019 = vpop.f32.mrb[0].mxu0
        %v4020 = vadd.f32 %v3855, %v4019
        %v4021 = vpop.f32.mrb[0].mxu0
        %4022 = vmatprep.mubr.f32.mxu0 %v3624
        %4023 = vmatmul.mubr.f32.gmra.mrb[0].mxu0 %v3623
        %v4024 = vpop.f32.mrb[0].mxu0
        %v4025 = vadd.f32 %v3855, %v4024
        %v4026 = vpop.f32.mrb[0].mxu0
        %4027 = vmatprep.mubr.f32.mxu0 %v3629
        %4028 = vmatmul.mubr.f32.gmra.mrb[0].mxu0 %v3628
        %v4029 = vpop.f32.mrb[0].mxu0
        %v4030 = vadd.f32 %v3855, %v4029
        %v4031 = vpop.f32.mrb[0].mxu0
        %4032 = vmatprep.mubr.f32.mxu0 %v3634
        %4033 = vmatmul.mubr.f32.gmra.mrb[0].mxu0 %v3633
        %v4034 = vpop.f32.mrb[0].mxu0
        %v4035 = vadd.f32 %v3855, %v4034
        %v4036 = vpop.f32.mrb[0].mxu0
        %4037 = vmatprep.mubr.f32.mxu0 %v3639
        %4038 = vmatmul.mubr.f32.gmra.mrb[0].mxu0 %v3638
        %v4039 = vpop.f32.mrb[0].mxu0
        %v4040 = vadd.f32 %v3855, %v4039
        %v4041 = vpop.f32.mrb[0].mxu0
        %4042 = vmatprep.mubr.f32.mxu0 %v3644
        %4043 = vmatmul.mubr.f32.gmra.mrb[0].mxu0 %v3643
        %v4044 = vpop.f32.mrb[0].mxu0
        %v4045 = vadd.f32 %v3855, %v4044
        %v4046 = vpop.f32.mrb[0].mxu0
        %4047 = vmatprep.mubr.f32.mxu0 %v3649
        %4048 = vmatmul.mubr.f32.gmra.mrb[0].mxu0 %v3648
        %v4049 = vpop.f32.mrb[0].mxu0
        %v4050 = vadd.f32 %v3855, %v4049
        %v4051 = vpop.f32.mrb[0].mxu0
        %4052 = vmatprep.mubr.f32.mxu0 %v3654
        %4053 = vmatmul.mubr.f32.gmra.mrb[0].mxu0 %v3653
        %v4054 = vpop.f32.mrb[0].mxu0
        %v4055 = vadd.f32 %v3855, %v4054
        %v4056 = vpop.f32.mrb[0].mxu0
        %4057 = vmatprep.mubr.f32.mxu0 %v3659
        %4058 = vmatmul.mubr.f32.gmra.mrb[0].mxu0 %v3658
        %v4059 = vpop.f32.mrb[0].mxu0
        %v4060 = vadd.f32 %v3855, %v4059
        %v4061 = vpop.f32.mrb[0].mxu0
        %4062 = vmatprep.mubr.f32.mxu0 %v3664
        %4063 = vmatmul.mubr.f32.gmra.mrb[0].mxu0 %v3663
        %v4064 = vpop.f32.mrb[0].mxu0
        %v4065 = vadd.f32 %v3855, %v4064
        %v4066 = vpop.f32.mrb[0].mxu0
        %4067 = vmatprep.mubr.f32.mxu0 %v3669
        %4068 = vmatmul.mubr.f32.gmra.mrb[0].mxu0 %v3668
        %v4069 = vpop.f32.mrb[0].mxu0
        %v4070 = vadd.f32 %v3855, %v4069
        %v4071 = vpop.f32.mrb[0].mxu0
        %4072 = vmatprep.mubr.f32.mxu0 %v3674
        %4073 = vmatmul.mubr.f32.gmra.mrb[0].mxu0 %v3673
        %v4074 = vpop.f32.mrb[0].mxu0
        %v4075 = vadd.f32 %v3855, %v4074
        %v4076 = vpop.f32.mrb[0].mxu0
        %4077 = vmatprep.mubr.f32.mxu0 %v3679
        %4078 = vmatmul.mubr.f32.gmra.mrb[0].mxu0 %v3678
        %v4079 = vpop.f32.mrb[0].mxu0
        %v4080 = vadd.f32 %v3855, %v4079
        %v4081 = vpop.f32.mrb[0].mxu0
        %4082 = vmatprep.mubr.f32.mxu0 %v3684
        %4083 = vmatmul.mubr.f32.gmra.mrb[0].mxu0 %v3683
        %v4084 = vpop.f32.mrb[0].mxu0
        %v4085 = vadd.f32 %v3855, %v4084
        %v4086 = vpop.f32.mrb[0].mxu0
        %4087 = vmatprep.mubr.f32.mxu0 %v3689
        %4088 = vmatmul.mubr.f32.gmra.mrb[0].mxu0 %v3688
        %v4089 = vpop.f32.mrb[0].mxu0
        %v4090 = vadd.f32 %v3855, %v4089
        %v4091 = vpop.f32.mrb[0].mxu0
        %4092 = vmatprep.mubr.f32.mxu0 %v3694
        %4093 = vmatmul.mubr.f32.gmra.mrb[0].mxu0 %v3693
        %v4094 = vpop.f32.mrb[0].mxu0
        %v4095 = vadd.f32 %v3855, %v4094
        %v4096 = vpop.f32.mrb[0].mxu0
        %4097 = vmatprep.mubr.f32.mxu0 %v3699
        %4098 = vmatmul.mubr.f32.gmra.mrb[0].mxu0 %v3698
        %v4099 = vpop.f32.mrb[0].mxu0
        %v4100 = vadd.f32 %v3855, %v4099
        %v4101 = vpop.f32.mrb[0].mxu0
        %4102 = vmatprep.mubr.f32.mxu0 %v3704
        %4103 = vmatmul.mubr.f32.gmra.mrb[0].mxu0 %v3703
        %v4104 = vpop.f32.mrb[0].mxu0
        %v4105 = vadd.f32 %v3855, %v4104
        %v4106 = vpop.f32.mrb[0].mxu0
        %4107 = vmatprep.mubr.f32.mxu0 %v3709
        %4108 = vmatmul.mubr.f32.gmra.mrb[0].mxu0 %v3708
        %v4109 = vpop.f32.mrb[0].mxu0
        %v4110 = vadd.f32 %v3855, %v4109
        %v4111 = vpop.f32.mrb[0].mxu0
        %4112 = vmatprep.mubr.f32.mxu0 %v3714
        %4113 = vmatmul.mubr.f32.gmra.mrb[0].mxu0 %v3713
        %v4114 = vpop.f32.mrb[0].mxu0
        %v4115 = vadd.f32 %v3855, %v4114
        %v4116 = vpop.f32.mrb[0].mxu0
        %4117 = vmatprep.mubr.f32.mxu0 %v3719
        %4118 = vmatmul.mubr.f32.gmra.mrb[0].mxu0 %v3718
        %v4119 = vpop.f32.mrb[0].mxu0
        %v4120 = vadd.f32 %v3855, %v4119
        %v4121 = vpop.f32.mrb[0].mxu0
        %4122 = vmatprep.mubr.f32.mxu0 %v3724
        %4123 = vmatmul.mubr.f32.gmra.mrb[0].mxu0 %v3723
        %v4124 = vpop.f32.mrb[0].mxu0
        %v4125 = vadd.f32 %v3855, %v4124
        %v4126 = vpop.f32.mrb[0].mxu0
        %4127 = vmatprep.mubr.f32.mxu0 %v3729
        %4128 = vmatmul.mubr.f32.gmra.mrb[0].mxu0 %v3728
        %v4129 = vpop.f32.mrb[0].mxu0
        %v4130 = vadd.f32 %v3855, %v4129
        %v4131 = vpop.f32.mrb[0].mxu0
        %4132 = vmatprep.mubr.f32.mxu0 %v3734
        %4133 = vmatmul.mubr.f32.gmra.mrb[0].mxu0 %v3733
        %v4134 = vpop.f32.mrb[0].mxu0
        %v4135 = vadd.f32 %v3855, %v4134
        %v4136 = vpop.f32.mrb[0].mxu0
        %4137 = vmatprep.mubr.f32.mxu0 %v3739
        %4138 = vmatmul.mubr.f32.gmra.mrb[0].mxu0 %v3738
        %v4139 = vpop.f32.mrb[0].mxu0
        %v4140 = vadd.f32 %v3855, %v4139
        %v4141 = vpop.f32.mrb[0].mxu0
        %4142 = vmatprep.mubr.f32.mxu0 %v3744
        %4143 = vmatmul.mubr.f32.gmra.mrb[0].mxu0 %v3743
        %v4144 = vpop.f32.mrb[0].mxu0
        %v4145 = vadd.f32 %v3855, %v4144
        %v4146 = vpop.f32.mrb[0].mxu0
        %4147 = vmatprep.mubr.f32.mxu0 %v3749
        %4148 = vmatmul.mubr.f32.gmra.mrb[0].mxu0 %v3748
        %v4149 = vpop.f32.mrb[0].mxu0
        %v4150 = vadd.f32 %v3855, %v4149
        %v4151 = vpop.f32.mrb[0].mxu0
        %4152 = vmatprep.mubr.f32.mxu0 %v3754
        %4153 = vmatmul.mubr.f32.gmra.mrb[0].mxu0 %v3753
        %v4154 = vpop.f32.mrb[0].mxu0
        %v4155 = vadd.f32 %v3855, %v4154
        %v4156 = vpop.f32.mrb[0].mxu0
        %4157 = vmatprep.mubr.f32.mxu0 %v3759
        %4158 = vmatmul.mubr.f32.gmra.mrb[0].mxu0 %v3758
        %v4159 = vpop.f32.mrb[0].mxu0
        %v4160 = vadd.f32 %v3855, %v4159
        %v4161 = vpop.f32.mrb[0].mxu0
        %4162 = vmatprep.mubr.f32.mxu0 %v3764
        %4163 = vmatmul.mubr.f32.gmra.mrb[0].mxu0 %v3763
        %v4164 = vpop.f32.mrb[0].mxu0
        %v4165 = vadd.f32 %v3855, %v4164
        %v4166 = vpop.f32.mrb[0].mxu0
        %4167 = vmatprep.mubr.f32.mxu0 %v3769
        %4168 = vmatmul.mubr.f32.gmra.mrb[0].mxu0 %v3768
        %v4169 = vpop.f32.mrb[0].mxu0
        %v4170 = vadd.f32 %v3855, %v4169
        %v4171 = vpop.f32.mrb[0].mxu0
        %4172 = vmatprep.mubr.f32.mxu0 %v3774
        %4173 = vmatmul.mubr.f32.gmra.mrb[0].mxu0 %v3773
        %v4174 = vpop.f32.mrb[0].mxu0
        %v4175 = vadd.f32 %v3855, %v4174
        %v4176 = vpop.f32.mrb[0].mxu0
        %4177 = vdwg.mxu0
        %4178 = vmatprep.subr.mxu0 0.0
        %4179 = vmatpush1.msra.mxu0 %v3810
        %4180 = vmatprep.subr.mxu0 0.0
        %4181 = vmatpush1.msra.mxu0 %v3811
        %4182 = vmatprep.subr.mxu0 0.0
        %4183 = vmatpush1.msra.mxu0 %v3812
        %4184 = vmatprep.subr.mxu0 0.0
        %4185 = vmatpush1.msra.mxu0 %v3813
        %4186 = vmatprep.subr.mxu0 0.0
        %4187 = vmatpush1.msra.mxu0 %v3814
        %4188 = vmatprep.subr.mxu0 0.0
        %4189 = vmatpush1.msra.mxu0 %v3815
        %4190 = vmatprep.subr.mxu0 0.0
        %4191 = vmatpush1.msra.mxu0 %v3816
        %4192 = vmatprep.subr.mxu0 0.0
        %4193 = vmatpush1.msra.mxu0 %v3817
        %4194 = vmatprep.subr.mxu0 0.0
        %4195 = vmatpush1.msra.mxu0 %v3818
        %4196 = vmatprep.subr.mxu0 0.0
        %4197 = vmatpush1.msra.mxu0 %v3819
        %4198 = vmatprep.subr.mxu0 0.0
        %4199 = vmatpush1.msra.mxu0 %v3820
        %4200 = vmatprep.subr.mxu0 0.0
        %4201 = vmatpush1.msra.mxu0 %v3821
        %4202 = vmatprep.subr.mxu0 0.0
        %4203 = vmatpush1.msra.mxu0 %v3822
        %4204 = vmatprep.subr.mxu0 0.0
        %4205 = vmatpush1.msra.mxu0 %v3823
        %4206 = vmatprep.subr.mxu0 0.0
        %4207 = vmatpush1.msra.mxu0 %v3824
        %4208 = vmatprep.subr.mxu0 0.0
        %4209 = vmatpush1.msra.mxu0 %v3825
        %4210 = vmatprep.subr.mxu0 0.0
        %4211 = vmatpush1.msra.mxu0 %v3826
        %4212 = vmatprep.subr.mxu0 0.0
        %4213 = vmatpush1.msra.mxu0 %v3827
        %4214 = vmatprep.subr.mxu0 0.0
        %4215 = vmatpush1.msra.mxu0 %v3828
        %4216 = vmatprep.subr.mxu0 0.0
        %4217 = vmatpush1.msra.mxu0 %v3829
        %4218 = vmatprep.subr.mxu0 0.0
        %4219 = vmatpush1.msra.mxu0 %v3830
        %4220 = vmatprep.subr.mxu0 0.0
        %4221 = vmatpush1.msra.mxu0 %v3831
        %4222 = vmatprep.subr.mxu0 0.0
        %4223 = vmatpush1.msra.mxu0 %v3832
        %4224 = vmatprep.subr.mxu0 0.0
        %4225 = vmatpush1.msra.mxu0 %v3833
        %4226 = vmatprep.subr.mxu0 0.0
        %4227 = vmatpush1.msra.mxu0 %v3834
        %4228 = vmatprep.subr.mxu0 0.0
        %4229 = vmatpush1.msra.mxu0 %v3835
        %4230 = vmatprep.subr.mxu0 0.0
        %4231 = vmatpush1.msra.mxu0 %v3836
        %4232 = vmatprep.subr.mxu0 0.0
        %4233 = vmatpush1.msra.mxu0 %v3837
        %4234 = vmatprep.subr.mxu0 0.0
        %4235 = vmatpush1.msra.mxu0 %v3838
        %4236 = vmatprep.subr.mxu0 0.0
        %4237 = vmatpush1.msra.mxu0 %v3839
        %4238 = vmatprep.subr.mxu0 0.0
        %4239 = vmatpush1.msra.mxu0 %v3840
        %4240 = vmatprep.subr.mxu0 0.0
        %4241 = vmatpush1.msra.mxu0 %v3841
        %4242 = vmatprep.mubr.f32.mxu0 %v3621
        %4243 = vmatmul.mubr.f32.gmra.mrb[0].mxu0 %v3620
        %v4244 = vpop.f32.mrb[0].mxu0
        %v4245 = vadd.f32 %v4020, %v4244
        %v4246 = vpop.f32.mrb[0].mxu0
        %4247 = vmatprep.mubr.f32.mxu0 %v3626
        %4248 = vmatmul.mubr.f32.gmra.mrb[0].mxu0 %v3625
        %v4249 = vpop.f32.mrb[0].mxu0
        %v4250 = vadd.f32 %v4025, %v4249
        %v4251 = vpop.f32.mrb[0].mxu0
        %4252 = vmatprep.mubr.f32.mxu0 %v3631
        %4253 = vmatmul.mubr.f32.gmra.mrb[0].mxu0 %v3630
        %v4254 = vpop.f32.mrb[0].mxu0
        %v4255 = vadd.f32 %v4030, %v4254
        %v4256 = vpop.f32.mrb[0].mxu0
        %4257 = vmatprep.mubr.f32.mxu0 %v3636
        %4258 = vmatmul.mubr.f32.gmra.mrb[0].mxu0 %v3635
        %v4259 = vpop.f32.mrb[0].mxu0
        %v4260 = vadd.f32 %v4035, %v4259
        %v4261 = vpop.f32.mrb[0].mxu0
        %4262 = vmatprep.mubr.f32.mxu0 %v3641
        %4263 = vmatmul.mubr.f32.gmra.mrb[0].mxu0 %v3640
        %v4264 = vpop.f32.mrb[0].mxu0
        %v4265 = vadd.f32 %v4040, %v4264
        %v4266 = vpop.f32.mrb[0].mxu0
        %4267 = vmatprep.mubr.f32.mxu0 %v3646
        %4268 = vmatmul.mubr.f32.gmra.mrb[0].mxu0 %v3645
        %v4269 = vpop.f32.mrb[0].mxu0
        %v4270 = vadd.f32 %v4045, %v4269
        %v4271 = vpop.f32.mrb[0].mxu0
        %4272 = vmatprep.mubr.f32.mxu0 %v3651
        %4273 = vmatmul.mubr.f32.gmra.mrb[0].mxu0 %v3650
        %v4274 = vpop.f32.mrb[0].mxu0
        %v4275 = vadd.f32 %v4050, %v4274
        %v4276 = vpop.f32.mrb[0].mxu0
        %4277 = vmatprep.mubr.f32.mxu0 %v3656
        %4278 = vmatmul.mubr.f32.gmra.mrb[0].mxu0 %v3655
        %v4279 = vpop.f32.mrb[0].mxu0
        %v4280 = vadd.f32 %v4055, %v4279
        %v4281 = vpop.f32.mrb[0].mxu0
        %4282 = vmatprep.mubr.f32.mxu0 %v3661
        %4283 = vmatmul.mubr.f32.gmra.mrb[0].mxu0 %v3660
        %v4284 = vpop.f32.mrb[0].mxu0
        %v4285 = vadd.f32 %v4060, %v4284
        %v4286 = vpop.f32.mrb[0].mxu0
        %4287 = vmatprep.mubr.f32.mxu0 %v3666
        %4288 = vmatmul.mubr.f32.gmra.mrb[0].mxu0 %v3665
        %v4289 = vpop.f32.mrb[0].mxu0
        %v4290 = vadd.f32 %v4065, %v4289
        %v4291 = vpop.f32.mrb[0].mxu0
        %4292 = vmatprep.mubr.f32.mxu0 %v3671
        %4293 = vmatmul.mubr.f32.gmra.mrb[0].mxu0 %v3670
        %v4294 = vpop.f32.mrb[0].mxu0
        %v4295 = vadd.f32 %v4070, %v4294
        %v4296 = vpop.f32.mrb[0].mxu0
        %4297 = vmatprep.mubr.f32.mxu0 %v3676
        %4298 = vmatmul.mubr.f32.gmra.mrb[0].mxu0 %v3675
        %v4299 = vpop.f32.mrb[0].mxu0
        %v4300 = vadd.f32 %v4075, %v4299
        %v4301 = vpop.f32.mrb[0].mxu0
        %4302 = vmatprep.mubr.f32.mxu0 %v3681
        %4303 = vmatmul.mubr.f32.gmra.mrb[0].mxu0 %v3680
        %v4304 = vpop.f32.mrb[0].mxu0
        %v4305 = vadd.f32 %v4080, %v4304
        %v4306 = vpop.f32.mrb[0].mxu0
        %4307 = vmatprep.mubr.f32.mxu0 %v3686
        %4308 = vmatmul.mubr.f32.gmra.mrb[0].mxu0 %v3685
        %v4309 = vpop.f32.mrb[0].mxu0
        %v4310 = vadd.f32 %v4085, %v4309
        %v4311 = vpop.f32.mrb[0].mxu0
        %4312 = vmatprep.mubr.f32.mxu0 %v3691
        %4313 = vmatmul.mubr.f32.gmra.mrb[0].mxu0 %v3690
        %v4314 = vpop.f32.mrb[0].mxu0
        %v4315 = vadd.f32 %v4090, %v4314
        %v4316 = vpop.f32.mrb[0].mxu0
        %4317 = vmatprep.mubr.f32.mxu0 %v3696
        %4318 = vmatmul.mubr.f32.gmra.mrb[0].mxu0 %v3695
        %v4319 = vpop.f32.mrb[0].mxu0
        %v4320 = vadd.f32 %v4095, %v4319
        %v4321 = vpop.f32.mrb[0].mxu0
        %4322 = vmatprep.mubr.f32.mxu0 %v3701
        %4323 = vmatmul.mubr.f32.gmra.mrb[0].mxu0 %v3700
        %v4324 = vpop.f32.mrb[0].mxu0
        %v4325 = vadd.f32 %v4100, %v4324
        %v4326 = vpop.f32.mrb[0].mxu0
        %4327 = vmatprep.mubr.f32.mxu0 %v3706
        %4328 = vmatmul.mubr.f32.gmra.mrb[0].mxu0 %v3705
        %v4329 = vpop.f32.mrb[0].mxu0
        %v4330 = vadd.f32 %v4105, %v4329
        %v4331 = vpop.f32.mrb[0].mxu0
        %4332 = vmatprep.mubr.f32.mxu0 %v3711
        %4333 = vmatmul.mubr.f32.gmra.mrb[0].mxu0 %v3710
        %v4334 = vpop.f32.mrb[0].mxu0
        %v4335 = vadd.f32 %v4110, %v4334
        %v4336 = vpop.f32.mrb[0].mxu0
        %4337 = vmatprep.mubr.f32.mxu0 %v3716
        %4338 = vmatmul.mubr.f32.gmra.mrb[0].mxu0 %v3715
        %v4339 = vpop.f32.mrb[0].mxu0
        %v4340 = vadd.f32 %v4115, %v4339
        %v4341 = vpop.f32.mrb[0].mxu0
        %4342 = vmatprep.mubr.f32.mxu0 %v3721
        %4343 = vmatmul.mubr.f32.gmra.mrb[0].mxu0 %v3720
        %v4344 = vpop.f32.mrb[0].mxu0
        %v4345 = vadd.f32 %v4120, %v4344
        %v4346 = vpop.f32.mrb[0].mxu0
        %4347 = vmatprep.mubr.f32.mxu0 %v3726
        %4348 = vmatmul.mubr.f32.gmra.mrb[0].mxu0 %v3725
        %v4349 = vpop.f32.mrb[0].mxu0
        %v4350 = vadd.f32 %v4125, %v4349
        %v4351 = vpop.f32.mrb[0].mxu0
        %4352 = vmatprep.mubr.f32.mxu0 %v3731
        %4353 = vmatmul.mubr.f32.gmra.mrb[0].mxu0 %v3730
        %v4354 = vpop.f32.mrb[0].mxu0
        %v4355 = vadd.f32 %v4130, %v4354
        %v4356 = vpop.f32.mrb[0].mxu0
        %4357 = vmatprep.mubr.f32.mxu0 %v3736
        %4358 = vmatmul.mubr.f32.gmra.mrb[0].mxu0 %v3735
        %v4359 = vpop.f32.mrb[0].mxu0
        %v4360 = vadd.f32 %v4135, %v4359
        %v4361 = vpop.f32.mrb[0].mxu0
        %4362 = vmatprep.mubr.f32.mxu0 %v3741
        %4363 = vmatmul.mubr.f32.gmra.mrb[0].mxu0 %v3740
        %v4364 = vpop.f32.mrb[0].mxu0
        %v4365 = vadd.f32 %v4140, %v4364
        %v4366 = vpop.f32.mrb[0].mxu0
        %4367 = vmatprep.mubr.f32.mxu0 %v3746
        %4368 = vmatmul.mubr.f32.gmra.mrb[0].mxu0 %v3745
        %v4369 = vpop.f32.mrb[0].mxu0
        %v4370 = vadd.f32 %v4145, %v4369
        %v4371 = vpop.f32.mrb[0].mxu0
        %4372 = vmatprep.mubr.f32.mxu0 %v3751
        %4373 = vmatmul.mubr.f32.gmra.mrb[0].mxu0 %v3750
        %v4374 = vpop.f32.mrb[0].mxu0
        %v4375 = vadd.f32 %v4150, %v4374
        %v4376 = vpop.f32.mrb[0].mxu0
        %4377 = vmatprep.mubr.f32.mxu0 %v3756
        %4378 = vmatmul.mubr.f32.gmra.mrb[0].mxu0 %v3755
        %v4379 = vpop.f32.mrb[0].mxu0
        %v4380 = vadd.f32 %v4155, %v4379
        %v4381 = vpop.f32.mrb[0].mxu0
        %4382 = vmatprep.mubr.f32.mxu0 %v3761
        %4383 = vmatmul.mubr.f32.gmra.mrb[0].mxu0 %v3760
        %v4384 = vpop.f32.mrb[0].mxu0
        %v4385 = vadd.f32 %v4160, %v4384
        %v4386 = vpop.f32.mrb[0].mxu0
        %4387 = vmatprep.mubr.f32.mxu0 %v3766
        %4388 = vmatmul.mubr.f32.gmra.mrb[0].mxu0 %v3765
        %v4389 = vpop.f32.mrb[0].mxu0
        %v4390 = vadd.f32 %v4165, %v4389
        %v4391 = vpop.f32.mrb[0].mxu0
        %4392 = vmatprep.mubr.f32.mxu0 %v3771
        %4393 = vmatmul.mubr.f32.gmra.mrb[0].mxu0 %v3770
        %v4394 = vpop.f32.mrb[0].mxu0
        %v4395 = vadd.f32 %v4170, %v4394
        %v4396 = vpop.f32.mrb[0].mxu0
        %4397 = vmatprep.mubr.f32.mxu0 %v3776
        %4398 = vmatmul.mubr.f32.gmra.mrb[0].mxu0 %v3775
        %v4399 = vpop.f32.mrb[0].mxu0
        %v4400 = vadd.f32 %v4175, %v4399
        %v4401 = vpop.f32.mrb[0].mxu0
        %4402 = vdwg.mxu0
        %4403 = vmatprep.subr.mxu0 0.0
        %4404 = vmatpush1.msra.mxu0 %v3842
        %4405 = vmatprep.subr.mxu0 0.0
        %4406 = vmatpush1.msra.mxu0 %v3843
        %4407 = vmatprep.subr.mxu0 0.0
        %4408 = vmatpush1.msra.mxu0 %v3844
        %4409 = vmatprep.subr.mxu0 0.0
        %4410 = vmatpush1.msra.mxu0 %v3845
        %4411 = vmatprep.subr.mxu0 0.0
        %4412 = vmatpush1.msra.mxu0 %v3846
        %4413 = vmatprep.subr.mxu0 0.0
        %4414 = vmatpush1.msra.mxu0 %v3847
        %4415 = vmatprep.subr.mxu0 0.0
        %4416 = vmatpush1.msra.mxu0 %v3848
        %4417 = vmatprep.subr.mxu0 0.0
        %4418 = vmatpush1.msra.mxu0 %v3849
        %4419 = vmatprep.subr.mxu0 0.0
        %4420 = vmatpush1.msra.mxu0 0.0
        %4421 = vmatprep.subr.mxu0 0.0
        %4422 = vmatpush1.msra.mxu0 0.0
        %4423 = vmatprep.subr.mxu0 0.0
        %4424 = vmatpush1.msra.mxu0 0.0
        %4425 = vmatprep.subr.mxu0 0.0
        %4426 = vmatpush1.msra.mxu0 0.0
        %4427 = vmatprep.subr.mxu0 0.0
        %4428 = vmatpush1.msra.mxu0 0.0
        %4429 = vmatprep.subr.mxu0 0.0
        %4430 = vmatpush1.msra.mxu0 0.0
        %4431 = vmatprep.subr.mxu0 0.0
        %4432 = vmatpush1.msra.mxu0 0.0
        %4433 = vmatprep.subr.mxu0 0.0
        %4434 = vmatpush1.msra.mxu0 0.0
        %4435 = vmatprep.subr.mxu0 0.0
        %4436 = vmatpush1.msra.mxu0 0.0
        %4437 = vmatprep.subr.mxu0 0.0
        %4438 = vmatpush1.msra.mxu0 0.0
        %4439 = vmatprep.subr.mxu0 0.0
        %4440 = vmatpush1.msra.mxu0 0.0
        %4441 = vmatprep.subr.mxu0 0.0
        %4442 = vmatpush1.msra.mxu0 0.0
        %4443 = vmatprep.subr.mxu0 0.0
        %4444 = vmatpush1.msra.mxu0 0.0
        %4445 = vmatprep.subr.mxu0 0.0
        %4446 = vmatpush1.msra.mxu0 0.0
        %4447 = vmatprep.subr.mxu0 0.0
        %4448 = vmatpush1.msra.mxu0 0.0
        %4449 = vmatprep.subr.mxu0 0.0
        %4450 = vmatpush1.msra.mxu0 0.0
        %4451 = vmatprep.subr.mxu0 0.0
        %4452 = vmatpush1.msra.mxu0 0.0
        %4453 = vmatprep.subr.mxu0 0.0
        %4454 = vmatpush1.msra.mxu0 0.0
        %4455 = vmatprep.subr.mxu0 0.0
        %4456 = vmatpush1.msra.mxu0 0.0
        %4457 = vmatprep.subr.mxu0 0.0
        %4458 = vmatpush1.msra.mxu0 0.0
        %4459 = vmatprep.subr.mxu0 0.0
        %4460 = vmatpush1.msra.mxu0 0.0
        %4461 = vmatprep.subr.mxu0 0.0
        %4462 = vmatpush1.msra.mxu0 0.0
        %4463 = vmatprep.subr.mxu0 0.0
        %4464 = vmatpush1.msra.mxu0 0.0
        %4465 = vmatprep.subr.mxu0 0.0
        %4466 = vmatpush1.msra.mxu0 0.0
        %4467 = vmatprep.mubr.f32.mxu0 0.0
        %4468 = vmatmul.mubr.f32.gmra.mrb[0].mxu0 %v3858
        %v4469 = vpop.f32.mrb[0].mxu0
        %v4470 = vadd.f32 %v4245, %v4469
        %v4471 = vpop.f32.mrb[0].mxu0
        %4472 = vmatprep.mubr.f32.mxu0 0.0
        %4473 = vmatmul.mubr.f32.gmra.mrb[0].mxu0 %v3861
        %v4474 = vpop.f32.mrb[0].mxu0
        %v4475 = vadd.f32 %v4250, %v4474
        %v4476 = vpop.f32.mrb[0].mxu0
        %4477 = vmatprep.mubr.f32.mxu0 0.0
        %4478 = vmatmul.mubr.f32.gmra.mrb[0].mxu0 %v3864
        %v4479 = vpop.f32.mrb[0].mxu0
        %v4480 = vadd.f32 %v4255, %v4479
        %v4481 = vpop.f32.mrb[0].mxu0
        %4482 = vmatprep.mubr.f32.mxu0 0.0
        %4483 = vmatmul.mubr.f32.gmra.mrb[0].mxu0 %v3867
        %v4484 = vpop.f32.mrb[0].mxu0
        %v4485 = vadd.f32 %v4260, %v4484
        %v4486 = vpop.f32.mrb[0].mxu0
        %4487 = vmatprep.mubr.f32.mxu0 0.0
        %4488 = vmatmul.mubr.f32.gmra.mrb[0].mxu0 %v3870
        %v4489 = vpop.f32.mrb[0].mxu0
        %v4490 = vadd.f32 %v4265, %v4489
        %v4491 = vpop.f32.mrb[0].mxu0
        %4492 = vmatprep.mubr.f32.mxu0 0.0
        %4493 = vmatmul.mubr.f32.gmra.mrb[0].mxu0 %v3873
        %v4494 = vpop.f32.mrb[0].mxu0
        %v4495 = vadd.f32 %v4270, %v4494
        %v4496 = vpop.f32.mrb[0].mxu0
        %4497 = vmatprep.mubr.f32.mxu0 0.0
        %4498 = vmatmul.mubr.f32.gmra.mrb[0].mxu0 %v3876
        %v4499 = vpop.f32.mrb[0].mxu0
        %v4500 = vadd.f32 %v4275, %v4499
        %v4501 = vpop.f32.mrb[0].mxu0
        %4502 = vmatprep.mubr.f32.mxu0 0.0
        %4503 = vmatmul.mubr.f32.gmra.mrb[0].mxu0 %v3879
        %v4504 = vpop.f32.mrb[0].mxu0
        %v4505 = vadd.f32 %v4280, %v4504
        %v4506 = vpop.f32.mrb[0].mxu0
        %4507 = vmatprep.mubr.f32.mxu0 0.0
        %4508 = vmatmul.mubr.f32.gmra.mrb[0].mxu0 %v3882
        %v4509 = vpop.f32.mrb[0].mxu0
        %v4510 = vadd.f32 %v4285, %v4509
        %v4511 = vpop.f32.mrb[0].mxu0
        %4512 = vmatprep.mubr.f32.mxu0 0.0
        %4513 = vmatmul.mubr.f32.gmra.mrb[0].mxu0 %v3885
        %v4514 = vpop.f32.mrb[0].mxu0
        %v4515 = vadd.f32 %v4290, %v4514
        %v4516 = vpop.f32.mrb[0].mxu0
        %4517 = vmatprep.mubr.f32.mxu0 0.0
        %4518 = vmatmul.mubr.f32.gmra.mrb[0].mxu0 %v3888
        %v4519 = vpop.f32.mrb[0].mxu0
        %v4520 = vadd.f32 %v4295, %v4519
        %v4521 = vpop.f32.mrb[0].mxu0
        %4522 = vmatprep.mubr.f32.mxu0 0.0
        %4523 = vmatmul.mubr.f32.gmra.mrb[0].mxu0 %v3891
        %v4524 = vpop.f32.mrb[0].mxu0
        %v4525 = vadd.f32 %v4300, %v4524
        %v4526 = vpop.f32.mrb[0].mxu0
        %4527 = vmatprep.mubr.f32.mxu0 0.0
        %4528 = vmatmul.mubr.f32.gmra.mrb[0].mxu0 %v3894
        %v4529 = vpop.f32.mrb[0].mxu0
        %v4530 = vadd.f32 %v4305, %v4529
        %v4531 = vpop.f32.mrb[0].mxu0
        %4532 = vmatprep.mubr.f32.mxu0 0.0
        %4533 = vmatmul.mubr.f32.gmra.mrb[0].mxu0 %v3897
        %v4534 = vpop.f32.mrb[0].mxu0
        %v4535 = vadd.f32 %v4310, %v4534
        %v4536 = vpop.f32.mrb[0].mxu0
        %4537 = vmatprep.mubr.f32.mxu0 0.0
        %4538 = vmatmul.mubr.f32.gmra.mrb[0].mxu0 %v3900
        %v4539 = vpop.f32.mrb[0].mxu0
        %v4540 = vadd.f32 %v4315, %v4539
        %v4541 = vpop.f32.mrb[0].mxu0
        %4542 = vmatprep.mubr.f32.mxu0 0.0
        %4543 = vmatmul.mubr.f32.gmra.mrb[0].mxu0 %v3903
        %v4544 = vpop.f32.mrb[0].mxu0
        %v4545 = vadd.f32 %v4320, %v4544
        %v4546 = vpop.f32.mrb[0].mxu0
        %4547 = vmatprep.mubr.f32.mxu0 0.0
        %4548 = vmatmul.mubr.f32.gmra.mrb[0].mxu0 %v3906
        %v4549 = vpop.f32.mrb[0].mxu0
        %v4550 = vadd.f32 %v4325, %v4549
        %v4551 = vpop.f32.mrb[0].mxu0
        %4552 = vmatprep.mubr.f32.mxu0 0.0
        %4553 = vmatmul.mubr.f32.gmra.mrb[0].mxu0 %v3909
        %v4554 = vpop.f32.mrb[0].mxu0
        %v4555 = vadd.f32 %v4330, %v4554
        %v4556 = vpop.f32.mrb[0].mxu0
        %4557 = vmatprep.mubr.f32.mxu0 0.0
        %4558 = vmatmul.mubr.f32.gmra.mrb[0].mxu0 %v3912
        %v4559 = vpop.f32.mrb[0].mxu0
        %v4560 = vadd.f32 %v4335, %v4559
        %v4561 = vpop.f32.mrb[0].mxu0
        %4562 = vmatprep.mubr.f32.mxu0 0.0
        %4563 = vmatmul.mubr.f32.gmra.mrb[0].mxu0 %v3915
        %v4564 = vpop.f32.mrb[0].mxu0
        %v4565 = vadd.f32 %v4340, %v4564
        %v4566 = vpop.f32.mrb[0].mxu0
        %4567 = vmatprep.mubr.f32.mxu0 0.0
        %4568 = vmatmul.mubr.f32.gmra.mrb[0].mxu0 %v3918
        %v4569 = vpop.f32.mrb[0].mxu0
        %v4570 = vadd.f32 %v4345, %v4569
        %v4571 = vpop.f32.mrb[0].mxu0
        %4572 = vmatprep.mubr.f32.mxu0 0.0
        %4573 = vmatmul.mubr.f32.gmra.mrb[0].mxu0 %v3921
        %v4574 = vpop.f32.mrb[0].mxu0
        %v4575 = vadd.f32 %v4350, %v4574
        %v4576 = vpop.f32.mrb[0].mxu0
        %4577 = vmatprep.mubr.f32.mxu0 0.0
        %4578 = vmatmul.mubr.f32.gmra.mrb[0].mxu0 %v3924
        %v4579 = vpop.f32.mrb[0].mxu0
        %v4580 = vadd.f32 %v4355, %v4579
        %v4581 = vpop.f32.mrb[0].mxu0
        %4582 = vmatprep.mubr.f32.mxu0 0.0
        %4583 = vmatmul.mubr.f32.gmra.mrb[0].mxu0 %v3927
        %v4584 = vpop.f32.mrb[0].mxu0
        %v4585 = vadd.f32 %v4360, %v4584
        %v4586 = vpop.f32.mrb[0].mxu0
        %4587 = vmatprep.mubr.f32.mxu0 0.0
        %4588 = vmatmul.mubr.f32.gmra.mrb[0].mxu0 %v3930
        %v4589 = vpop.f32.mrb[0].mxu0
        %v4590 = vadd.f32 %v4365, %v4589
        %v4591 = vpop.f32.mrb[0].mxu0
        %4592 = vmatprep.mubr.f32.mxu0 0.0
        %4593 = vmatmul.mubr.f32.gmra.mrb[0].mxu0 %v3933
        %v4594 = vpop.f32.mrb[0].mxu0
        %v4595 = vadd.f32 %v4370, %v4594
        %v4596 = vpop.f32.mrb[0].mxu0
        %4597 = vmatprep.mubr.f32.mxu0 0.0
        %4598 = vmatmul.mubr.f32.gmra.mrb[0].mxu0 %v3936
        %v4599 = vpop.f32.mrb[0].mxu0
        %v4600 = vadd.f32 %v4375, %v4599
        %v4601 = vpop.f32.mrb[0].mxu0
        %4602 = vmatprep.mubr.f32.mxu0 0.0
        %4603 = vmatmul.mubr.f32.gmra.mrb[0].mxu0 %v3939
        %v4604 = vpop.f32.mrb[0].mxu0
        %v4605 = vadd.f32 %v4380, %v4604
        %v4606 = vpop.f32.mrb[0].mxu0
        %4607 = vmatprep.mubr.f32.mxu0 0.0
        %4608 = vmatmul.mubr.f32.gmra.mrb[0].mxu0 %v3942
        %v4609 = vpop.f32.mrb[0].mxu0
        %v4610 = vadd.f32 %v4385, %v4609
        %v4611 = vpop.f32.mrb[0].mxu0
        %4612 = vmatprep.mubr.f32.mxu0 0.0
        %4613 = vmatmul.mubr.f32.gmra.mrb[0].mxu0 %v3945
        %v4614 = vpop.f32.mrb[0].mxu0
        %v4615 = vadd.f32 %v4390, %v4614
        %v4616 = vpop.f32.mrb[0].mxu0
        %4617 = vmatprep.mubr.f32.mxu0 0.0
        %4618 = vmatmul.mubr.f32.gmra.mrb[0].mxu0 %v3948
        %v4619 = vpop.f32.mrb[0].mxu0
        %v4620 = vadd.f32 %v4395, %v4619
        %v4621 = vpop.f32.mrb[0].mxu0
        %4622 = vmatprep.mubr.f32.mxu0 0.0
        %4623 = vmatmul.mubr.f32.gmra.mrb[0].mxu0 %v3951
        %v4624 = vpop.f32.mrb[0].mxu0
        %v4625 = vadd.f32 %v4400, %v4624
        %v4626 = vpop.f32.mrb[0].mxu0
        %4627 = vdwg.mxu0
        %v4628 = vld [vmem:[%s222] sm:$0xff]
        %v4629 = vld [vmem:[%s222 + $0x8] sm:$0xff]
        %v4630 = vld [vmem:[%s222 + $0x10] sm:$0xff]
        %v4631 = vld [vmem:[%s222 + $0x18] sm:$0xff]
        %v4632 = vld [vmem:[%s222 + $0x20] sm:$0xff]
        %v4633 = vld [vmem:[%s222 + $0x28] sm:$0xff]
        %v4634 = vld [vmem:[%s222 + $0x30] sm:$0xff]
        %v4635 = vld [vmem:[%s222 + $0x38] sm:$0xff]
        %v4636 = vld [vmem:[%s222 + $0x40] sm:$0xff]
        %v4637 = vld [vmem:[%s222 + $0x48] sm:$0xff]
        %v4638 = vld [vmem:[%s222 + $0x50] sm:$0xff]
        %v4639 = vld [vmem:[%s222 + $0x58] sm:$0xff]
        %v4640 = vld [vmem:[%s222 + $0x60] sm:$0xff]
        %v4641 = vld [vmem:[%s222 + $0x68] sm:$0xff]
        %v4642 = vld [vmem:[%s222 + $0x70] sm:$0xff]
        %v4643 = vld [vmem:[%s222 + $0x78] sm:$0xff]
        %v4644 = vld [vmem:[%s222 + $0x80] sm:$0xff]
        %v4645 = vld [vmem:[%s222 + $0x88] sm:$0xff]
        %v4646 = vld [vmem:[%s222 + $0x90] sm:$0xff]
        %v4647 = vld [vmem:[%s222 + $0x98] sm:$0xff]
        %v4648 = vld [vmem:[%s222 + $0xa0] sm:$0xff]
        %v4649 = vld [vmem:[%s222 + $0xa8] sm:$0xff]
        %v4650 = vld [vmem:[%s222 + $0xb0] sm:$0xff]
        %v4651 = vld [vmem:[%s222 + $0xb8] sm:$0xff]
        %v4652 = vld [vmem:[%s222 + $0xc0] sm:$0xff]
        %v4653 = vld [vmem:[%s222 + $0xc8] sm:$0xff]
        %v4654 = vld [vmem:[%s222 + $0xd0] sm:$0xff]
        %v4655 = vld [vmem:[%s222 + $0xd8] sm:$0xff]
        %v4656 = vld [vmem:[%s222 + $0xe0] sm:$0xff]
        %v4657 = vld [vmem:[%s222 + $0xe8] sm:$0xff]
        %v4658 = vld [vmem:[%s222 + $0xf0] sm:$0xff]
        %v4659 = vld [vmem:[%s222 + $0xf8] sm:$0xff]
        %v4660 = vadd.f32 %v4470, %v4628
        %v4661 = vadd.f32 %v4475, %v4629
        %v4662 = vadd.f32 %v4480, %v4630
        %v4663 = vadd.f32 %v4485, %v4631
        %v4664 = vadd.f32 %v4490, %v4632
        %v4665 = vadd.f32 %v4495, %v4633
        %v4666 = vadd.f32 %v4500, %v4634
        %v4667 = vadd.f32 %v4505, %v4635
        %v4668 = vadd.f32 %v4510, %v4636
        %v4669 = vadd.f32 %v4515, %v4637
        %v4670 = vadd.f32 %v4520, %v4638
        %v4671 = vadd.f32 %v4525, %v4639
        %v4672 = vadd.f32 %v4530, %v4640
        %v4673 = vadd.f32 %v4535, %v4641
        %v4674 = vadd.f32 %v4540, %v4642
        %v4675 = vadd.f32 %v4545, %v4643
        %v4676 = vadd.f32 %v4550, %v4644
        %v4677 = vadd.f32 %v4555, %v4645
        %v4678 = vadd.f32 %v4560, %v4646
        %v4679 = vadd.f32 %v4565, %v4647
        %v4680 = vadd.f32 %v4570, %v4648
        %v4681 = vadd.f32 %v4575, %v4649
        %v4682 = vadd.f32 %v4580, %v4650
        %v4683 = vadd.f32 %v4585, %v4651
        %v4684 = vadd.f32 %v4590, %v4652
        %v4685 = vadd.f32 %v4595, %v4653
        %v4686 = vadd.f32 %v4600, %v4654
        %v4687 = vadd.f32 %v4605, %v4655
        %v4688 = vadd.f32 %v4610, %v4656
        %v4689 = vadd.f32 %v4615, %v4657
        %v4690 = vadd.f32 %v4620, %v4658
        %v4691 = vadd.f32 %v4625, %v4659
        %4692 = vst.msk [vmem:[%s217] sm:$0xff] %vm223, %v4660
        %4693 = vst.msk [vmem:[%s217 + $0x8] sm:$0xff] %vm223, %v4661
        %4694 = vst.msk [vmem:[%s217 + $0x10] sm:$0xff] %vm223, %v4662
        %4695 = vst.msk [vmem:[%s217 + $0x18] sm:$0xff] %vm223, %v4663
        %4696 = vst.msk [vmem:[%s217 + $0x20] sm:$0xff] %vm223, %v4664
        %4697 = vst.msk [vmem:[%s217 + $0x28] sm:$0xff] %vm223, %v4665
        %4698 = vst.msk [vmem:[%s217 + $0x30] sm:$0xff] %vm223, %v4666
        %4699 = vst.msk [vmem:[%s217 + $0x38] sm:$0xff] %vm223, %v4667
        %4700 = vst.msk [vmem:[%s217 + $0x40] sm:$0xff] %vm223, %v4668
        %4701 = vst.msk [vmem:[%s217 + $0x48] sm:$0xff] %vm223, %v4669
        %4702 = vst.msk [vmem:[%s217 + $0x50] sm:$0xff] %vm223, %v4670
        %4703 = vst.msk [vmem:[%s217 + $0x58] sm:$0xff] %vm223, %v4671
        %4704 = vst.msk [vmem:[%s217 + $0x60] sm:$0xff] %vm223, %v4672
        %4705 = vst.msk [vmem:[%s217 + $0x68] sm:$0xff] %vm223, %v4673
        %4706 = vst.msk [vmem:[%s217 + $0x70] sm:$0xff] %vm223, %v4674
        %4707 = vst.msk [vmem:[%s217 + $0x78] sm:$0xff] %vm223, %v4675
        %4708 = vst.msk [vmem:[%s217 + $0x80] sm:$0xff] %vm223, %v4676
        %4709 = vst.msk [vmem:[%s217 + $0x88] sm:$0xff] %vm223, %v4677
        %4710 = vst.msk [vmem:[%s217 + $0x90] sm:$0xff] %vm223, %v4678
        %4711 = vst.msk [vmem:[%s217 + $0x98] sm:$0xff] %vm223, %v4679
        %4712 = vst.msk [vmem:[%s217 + $0xa0] sm:$0xff] %vm223, %v4680
        %4713 = vst.msk [vmem:[%s217 + $0xa8] sm:$0xff] %vm223, %v4681
        %4714 = vst.msk [vmem:[%s217 + $0xb0] sm:$0xff] %vm223, %v4682
        %4715 = vst.msk [vmem:[%s217 + $0xb8] sm:$0xff] %vm223, %v4683
        %4716 = vst.msk [vmem:[%s217 + $0xc0] sm:$0xff] %vm223, %v4684
        %4717 = vst.msk [vmem:[%s217 + $0xc8] sm:$0xff] %vm223, %v4685
        %4718 = vst.msk [vmem:[%s217 + $0xd0] sm:$0xff] %vm223, %v4686
        %4719 = vst.msk [vmem:[%s217 + $0xd8] sm:$0xff] %vm223, %v4687
        %4720 = vst.msk [vmem:[%s217 + $0xe0] sm:$0xff] %vm223, %v4688
        %4721 = vst.msk [vmem:[%s217 + $0xe8] sm:$0xff] %vm223, %v4689
        %4722 = vst.msk [vmem:[%s217 + $0xf0] sm:$0xff] %vm223, %v4690
        %4723 = vst.msk [vmem:[%s217 + $0xf8] sm:$0xff] %vm223, %v4691
        %s4724 = sand.u32 %s137, 1
        %s4725 = scalar_lea.sflag [#allocation5], %s4724
        %s4726 = sand.u32 %s137, 1
        %s4727 = smul.addr %s4726, 256
        %s4728 = scalar_lea.vmem [#allocation4], %s4727
        // Predicated region
        $region41: #{tpu_custom_call.1} parent=39 // pred_check
          %p4729 = pneg %p147
        $region42: #{tpu_custom_call.1} parent=39 // pred_check_branch
          %4731 = sbr.rel (%p4729) target = $region44
        $region43: #{tpu_custom_call.1} parent=39 // pred_region
          %s4733 = ssub.s32 4096, 4096
          %4734 = vsyncadd %s4725, %s4733
          %s4735 = smul.addr %s19, 32
          %s4736 = smul.addr %s4735, 128
          %s4737 = scalar_lea.hbm %s5, %s4736
          %s4738 = sshll.u32 %s4728, 4
          %s4739 = int_to_ptr.vmem [resolvable:$true] %s4738
          %4744 = dma.vmem_to_hbm [thread:$0]  %s4739, 4096, %s4737, %s4725, 128, 128, 8
        $region44: #{tpu_custom_call.1} parent=39 // pred_fallthru
          _
      $region40: #{tpu_custom_call.1} parent=5 // pred_fallthru
        _
      %p4745 = scmp.le.s32.totalorder 2, %s14
      // Predicated region
      $region45: #{tpu_custom_call.1} parent=5 // pred_check
        %p4746 = pneg %p4745
      $region46: #{tpu_custom_call.1} parent=5 // pred_check_branch
        %4748 = sbr.rel (%p4746) target = $region48
      $region47: #{tpu_custom_call.1} parent=5 // pred_region
        %s4749 = ssub.s32 %s14, 2
        // Predicated region
        $region49: #{tpu_custom_call.1} parent=47 // pred_check
          %p4750 = pneg %p153
        $region50: #{tpu_custom_call.1} parent=47 // pred_check_branch
          %4752 = sbr.rel (%p4750) target = $region52
        $region51: #{tpu_custom_call.1} parent=47 // pred_region
          %s4753 = sand.u32 %s138, 1
          %s4754 = scalar_lea.sflag [#allocation5], %s4753
          %s4755 = sand.u32 %s138, 1
          %s4756 = smul.addr %s4755, 256
          %s4757 = scalar_lea.vmem [#allocation4], %s4756
          %4758 = dma.done %s4754, 4096
        $region52: #{tpu_custom_call.1} parent=47 // pred_fallthru
          _
      $region48: #{tpu_custom_call.1} parent=5 // pred_fallthru
        _
    $region6: #{tpu_custom_call.1} parent=1 // loop_footer
      %s18 = sadd.s32 1, %s14
    $region7: #{tpu_custom_call.1} parent=1 // loop_footer_branch
      %13 = sbr.rel target = $region3
    $region8: #{tpu_custom_call.1} parent=1 // loop_exit
      _
    %4759 = vsyncpa [#allocation5], 1
    %s4760 = scalar_lea.sflag [#allocation5], 1
    %4761 = vsyncpa %s4760, 1

// kernel: tpu_custom_call.1
$region0: #{tpu_custom_call.1}
  #allocation0 [shape = 'u32[]', space=smem, size = 0x4, offset = 0x4, fixed_abs, tag = 'smem constant byte address 0x4 - core index']
  #allocation1 [shape = 'u32[144,128]{1,0:T(1,128)}', space=vmem, size = 0x12000, scoped, tag = 'internal scratch']
  #allocation2 [shape = 'f32[18,18,64]{2,1,0:T(8,128)}', space=vmem, size = 0x36000, scoped, tag = 'scratch operand']
  #allocation3 [shape = 'f32[256,576]{1,0:T(8,128)}', space=vmem, size = 0xa0000, scoped, tag = 'scratch operand']
  %s0 = inlined_call_operand.vmem [shape: f32[2,16,16,64], index: 0, kind: input, shape index: {}]
  %s1 = inlined_call_operand.vmem [shape: f32[576,64], index: 1, kind: input, shape index: {}]
  %s2 = inlined_call_operand.vmem [shape: f32[1,64], index: 2, kind: input, shape index: {}]
  %s3 = inlined_call_operand.vmem [shape: f32[576,64], index: 3, kind: input, shape index: {}]
  %s4 = inlined_call_operand.vmem [shape: f32[1,64], index: 4, kind: input, shape index: {}]
  %s5 = inlined_call_operand.hbm [shape: f32[2,16,16,64], index: 5, kind: output, shape index: {}]
  %s6 = sld [smem:[#allocation0]]
  $region53: #{tpu_custom_call.1} parent=0
    _
  %s8 = ssub.s32 1, %s6
  %s9 = scalar_select 0, %s8, %s6
  $region1: #{tpu_custom_call.1} parent=0
    #allocation4 [shape = 'u8[262144]{0}', space=vmem, size = 0x40000, scoped, tag = 'output window, operand 0']
    #allocation5 [shape = 's32[2]{0}', space=sflag, size = 0x8, scoped, tag = 'scoped memory for tpu_custom_call.1']
    %10 = vsyncpa [#allocation5], 0
    %s11 = scalar_lea.sflag [#allocation5], 1
    %12 = vsyncpa %s11, 0
    loop: start=0, step=1, limit=4
    $region2: #{tpu_custom_call.1} parent=1 // loop_pre_header
      _
    $region3: #{tpu_custom_call.1} parent=1 // loop_header
      %s14 = sphi 0, %s18
      %p15 = scmp.ge.s32.totalorder %s14, 4
      %s24 = sphi 0, %s26
      %s27 = sphi 0, %s24
      %s28 = sphi 0, %s27
      %s44 = sphi 0, %s28
      %s48 = sphi 0, %s48
      %s50 = sphi 0, %s48
      %s51 = sphi 0, %s50
      %s65 = sphi 0, %s51
      %s69 = sphi 0, %s69
      %s71 = sphi 0, %s69
      %s72 = sphi 0, %s71
      %s86 = sphi 0, %s72
      %s90 = sphi 0, %s90
      %s92 = sphi 0, %s90
      %s93 = sphi 0, %s92
      %s107 = sphi 0, %s93
      %s111 = sphi 0, %s111
      %s113 = sphi 0, %s111
      %s114 = sphi 0, %s113
      %s128 = sphi 0, %s114
      %s134 = sphi 0, %s136
      %s137 = sphi 0, %s134
      %s138 = sphi 0, %s137
      %s154 = sphi 0, %s138
    $region4: #{tpu_custom_call.1} parent=1 // loop_header_branch
      %17 = sbr.rel (%p15) target = $region8
    $region5: #{tpu_custom_call.1} parent=1 // loop_body
      %s19 = ssub.s32 %s14, 1
      %s20 = ssub.s32 %s14, 2
      %s21 = sadd.s32 %s14, 1
      %s22 = ssub.s32 %s14, %s21
      %p23 = scmp.eq.s32.totalorder %s22, 0
      %s25 = sadd.s32 %s24, 1
      %s26 = scalar_select %p23, %s24, %s25
      %p29 = pneg %p23
      %p30 = scmp.eq.s32.totalorder %s14, 1
      %p31 = por %p29, %p30
      %p32 = scmp.ne.s32.totalorder %s24, %s27
      %p33 = scmp.eq.s32.totalorder %s14, 0
      %p34 = por %p32, %p33
      %p35 = scmp.ne.s32.totalorder %s24, %s27
      %p36 = scmp.eq.s32.totalorder %s19, 1
      %p37 = por %p35, %p36
      %p38 = scmp.ne.s32.totalorder %s27, %s28
      %p39 = scmp.eq.s32.totalorder %s19, 0
      %p40 = por %p38, %p39
      %p41 = scmp.ne.s32.totalorder %s27, %s28
      %p42 = scmp.eq.s32.totalorder %s20, 1
      %p43 = por %p41, %p42
      %p45 = scmp.ne.s32.totalorder %s28, %s44
      %p46 = scmp.eq.s32.totalorder %s20, 0
      %p47 = por %p45, %p46
      %s49 = sadd.s32 %s48, 1
      %p52 = scmp.eq.s32.totalorder %s14, 1
      %p53 = scmp.ne.s32.totalorder %s48, %s50
      %p54 = scmp.eq.s32.totalorder %s14, 0
      %p55 = por %p53, %p54
      %p56 = scmp.ne.s32.totalorder %s48, %s50
      %p57 = scmp.eq.s32.totalorder %s19, 1
      %p58 = por %p56, %p57
      %p59 = scmp.ne.s32.totalorder %s50, %s51
      %p60 = scmp.eq.s32.totalorder %s19, 0
      %p61 = por %p59, %p60
      %p62 = scmp.ne.s32.totalorder %s50, %s51
      %p63 = scmp.eq.s32.totalorder %s20, 1
      %p64 = por %p62, %p63
      %p66 = scmp.ne.s32.totalorder %s51, %s65
      %p67 = scmp.eq.s32.totalorder %s20, 0
      %p68 = por %p66, %p67
      %s70 = sadd.s32 %s69, 1
      %p73 = scmp.eq.s32.totalorder %s14, 1
      %p74 = scmp.ne.s32.totalorder %s69, %s71
      %p75 = scmp.eq.s32.totalorder %s14, 0
      %p76 = por %p74, %p75
      %p77 = scmp.ne.s32.totalorder %s69, %s71
      %p78 = scmp.eq.s32.totalorder %s19, 1
      %p79 = por %p77, %p78
      %p80 = scmp.ne.s32.totalorder %s71, %s72
      %p81 = scmp.eq.s32.totalorder %s19, 0
      %p82 = por %p80, %p81
      %p83 = scmp.ne.s32.totalorder %s71, %s72
      %p84 = scmp.eq.s32.totalorder %s20, 1
      %p85 = por %p83, %p84
      %p87 = scmp.ne.s32.totalorder %s72, %s86
      %p88 = scmp.eq.s32.totalorder %s20, 0
      %p89 = por %p87, %p88
      %s91 = sadd.s32 %s90, 1
      %p94 = scmp.eq.s32.totalorder %s14, 1
      %p95 = scmp.ne.s32.totalorder %s90, %s92
      %p96 = scmp.eq.s32.totalorder %s14, 0
      %p97 = por %p95, %p96
      %p98 = scmp.ne.s32.totalorder %s90, %s92
      %p99 = scmp.eq.s32.totalorder %s19, 1
      %p100 = por %p98, %p99
      %p101 = scmp.ne.s32.totalorder %s92, %s93
      %p102 = scmp.eq.s32.totalorder %s19, 0
      %p103 = por %p101, %p102
      %p104 = scmp.ne.s32.totalorder %s92, %s93
      %p105 = scmp.eq.s32.totalorder %s20, 1
      %p106 = por %p104, %p105
      %p108 = scmp.ne.s32.totalorder %s93, %s107
      %p109 = scmp.eq.s32.totalorder %s20, 0
      %p110 = por %p108, %p109
      %s112 = sadd.s32 %s111, 1
      %p115 = scmp.eq.s32.totalorder %s14, 1
      %p116 = scmp.ne.s32.totalorder %s111, %s113
      %p117 = scmp.eq.s32.totalorder %s14, 0
      %p118 = por %p116, %p117
      %p119 = scmp.ne.s32.totalorder %s111, %s113
      %p120 = scmp.eq.s32.totalorder %s19, 1
      %p121 = por %p119, %p120
      %p122 = scmp.ne.s32.totalorder %s113, %s114
      %p123 = scmp.eq.s32.totalorder %s19, 0
      %p124 = por %p122, %p123
      %p125 = scmp.ne.s32.totalorder %s113, %s114
      %p126 = scmp.eq.s32.totalorder %s20, 1
      %p127 = por %p125, %p126
      %p129 = scmp.ne.s32.totalorder %s114, %s128
      %p130 = scmp.eq.s32.totalorder %s20, 0
      %p131 = por %p129, %p130
      %s132 = ssub.s32 %s14, %s21
      %p133 = scmp.eq.s32.totalorder %s132, 0
      %s135 = sadd.s32 %s134, 1
      %s136 = scalar_select %p133, %s134, %s135
      %p139 = pneg %p133
      %p140 = scmp.eq.s32.totalorder %s14, 1
      %p141 = por %p139, %p140
      %p142 = scmp.ne.s32.totalorder %s134, %s137
      %p143 = scmp.eq.s32.totalorder %s14, 0
      %p144 = por %p142, %p143
      %p145 = scmp.ne.s32.totalorder %s134, %s137
      %p146 = scmp.eq.s32.totalorder %s19, 1
      %p147 = por %p145, %p146
      %p148 = scmp.ne.s32.totalorder %s137, %s138
      %p149 = scmp.eq.s32.totalorder %s19, 0
      %p150 = por %p148, %p149
      %p151 = scmp.ne.s32.totalorder %s137, %s138
      %p152 = scmp.eq.s32.totalorder %s20, 1
      %p153 = por %p151, %p152
      %p155 = scmp.ne.s32.totalorder %s138, %s154
      %p156 = scmp.eq.s32.totalorder %s20, 0
      %p157 = por %p155, %p156
      %p158 = scmp.le.s32.totalorder 1, %s14
      %p159 = scmp.lt.s32.totalorder %s14, 3
      %p160 = pnand %p158, %p159
      %p161 = pneg %p160
      // Predicated region
      $region9: #{tpu_custom_call.1} parent=5 // pred_check
        _
      $region10: #{tpu_custom_call.1} parent=5 // pred_check_branch
        %163 = sbr.rel (%p160) target = $region12
      $region11: #{tpu_custom_call.1} parent=5 // pred_region
        %s164 = ssub.s32 %s14, 1
        // Predicated region
        $region13: #{tpu_custom_call.1} parent=11 // pred_check
          %p165 = pneg %p61
        $region14: #{tpu_custom_call.1} parent=11 // pred_check_branch
          %167 = sbr.rel (%p165) target = $region16
        $region15: #{tpu_custom_call.1} parent=11 // pred_region
          _
        $region16: #{tpu_custom_call.1} parent=11 // pred_fallthru
          _
        // Predicated region
        $region17: #{tpu_custom_call.1} parent=11 // pred_check
          %p168 = pneg %p82
        $region18: #{tpu_custom_call.1} parent=11 // pred_check_branch
          %170 = sbr.rel (%p168) target = $region20
        $region19: #{tpu_custom_call.1} parent=11 // pred_region
          _
        $region20: #{tpu_custom_call.1} parent=11 // pred_fallthru
          _
        // Predicated region
        $region21: #{tpu_custom_call.1} parent=11 // pred_check
          %p171 = pneg %p103
        $region22: #{tpu_custom_call.1} parent=11 // pred_check_branch
          %173 = sbr.rel (%p171) target = $region24
        $region23: #{tpu_custom_call.1} parent=11 // pred_region
          _
        $region24: #{tpu_custom_call.1} parent=11 // pred_fallthru
          _
        // Predicated region
        $region25: #{tpu_custom_call.1} parent=11 // pred_check
          %p174 = pneg %p124
        $region26: #{tpu_custom_call.1} parent=11 // pred_check_branch
          %176 = sbr.rel (%p174) target = $region28
        $region27: #{tpu_custom_call.1} parent=11 // pred_region
          _
        $region28: #{tpu_custom_call.1} parent=11 // pred_fallthru
          _
      $region12: #{tpu_custom_call.1} parent=5 // pred_fallthru
        _
      %p177 = scmp.lt.s32.totalorder %s14, 2
      // Predicated region
      $region29: #{tpu_custom_call.1} parent=5 // pred_check
        %p178 = pneg %p177
      $region30: #{tpu_custom_call.1} parent=5 // pred_check_branch
        %180 = sbr.rel (%p178) target = $region32
      $region31: #{tpu_custom_call.1} parent=5 // pred_region
        // Predicated region
        $region33: #{tpu_custom_call.1} parent=31 // pred_check
          %p181 = pneg %p34
        $region34: #{tpu_custom_call.1} parent=31 // pred_check_branch
          %183 = sbr.rel (%p181) target = $region36
        $region35: #{tpu_custom_call.1} parent=31 // pred_region
          %p184 = scmp.lt.s32.totalorder %s14, 1
          %s185 = scalar_select %p184, %s14, 1
          %s186 = smul.addr %s185, 32
          %s187 = smul.addr %s186, 8
          %s188 = scalar_lea.vmem %s0, %s187
        $region36: #{tpu_custom_call.1} parent=31 // pred_fallthru
          _
      $region32: #{tpu_custom_call.1} parent=5 // pred_fallthru
        _
      %p189 = scmp.le.s32.totalorder 1, %s14
      %p190 = scmp.lt.s32.totalorder %s14, 3
      %p191 = pnand %p189, %p190
      %p192 = pneg %p191
      // Predicated region
      $region37: #{tpu_custom_call.1} parent=5 // pred_check
        _
      $region38: #{tpu_custom_call.1} parent=5 // pred_check_branch
        %194 = sbr.rel (%p191) target = $region40
      $region39: #{tpu_custom_call.1} parent=5 // pred_region
        %s195 = ssub.s32 %s14, 1
        %p196 = scmp.lt.s32.totalorder %s19, 1
        %s197 = scalar_select %p196, %s19, 1
        %s198 = smul.addr %s197, 32
        %s199 = smul.addr %s198, 8
        %s200 = scalar_lea.vmem %s0, %s199
        %p201 = pneg %p40
        %p202 = pneg %p37
        %p203 = pneg %p61
        %p204 = pneg %p58
        %p205 = pneg %p82
        %p206 = pneg %p79
        %p207 = pneg %p103
        %p208 = pneg %p100
        %p209 = pneg %p124
        %p210 = pneg %p121
        %p211 = pneg %p150
        %p212 = pneg %p147
        %s213 = sand.u32 %s137, 1
        %s214 = scalar_lea.sflag [#allocation5], %s213
        %s215 = sand.u32 %s137, 1
        %s216 = smul.addr %s215, 256
        %s217 = scalar_lea.vmem [#allocation4], %s216
        %p218 = scmp.lt.s32.totalorder %s19, 1
        %s219 = scalar_select %p218, %s19, 1
        %s220 = smul.addr %s219, 32
        %s221 = smul.addr %s220, 8
        %s222 = scalar_lea.vmem %s0, %s221
        %vm223 = vcmask 523264
        %224 = vst.msk [vmem:[#allocation2] sm:$0xff] %vm223, 0.0
        %225 = vst.msk [vmem:[#allocation2 + $0x8] sm:$0xff] %vm223, 0.0
        %vm226 = vcmask 517120
        %227 = vst.msk [vmem:[#allocation2 + $0x10] sm:$0x3] %vm226, 0.0
        %s228 = scalar_lea.vmem [#allocation2], 408
        %229 = vst.msk [vmem:[%s228] sm:$0xff] %vm223, 0.0
        %230 = vst.msk [vmem:[%s228 + $0x8] sm:$0xff] %vm223, 0.0
        %231 = vst.msk [vmem:[%s228 + $0x10] sm:$0x3] %vm226, 0.0
        %vm232 = vcmask 516096
        %233 = vst.msk [vmem:[#allocation2] sm:$0x1] %vm232, 0.0
        %234 = vst.msk [vmem:[#allocation2 + $0x18] sm:$0x1] %vm232, 0.0
        %235 = vst.msk [vmem:[#allocation2 + $0x30] sm:$0x1] %vm232, 0.0
        %236 = vst.msk [vmem:[#allocation2 + $0x48] sm:$0x1] %vm232, 0.0
        %237 = vst.msk [vmem:[#allocation2 + $0x60] sm:$0x1] %vm232, 0.0
        %238 = vst.msk [vmem:[#allocation2 + $0x78] sm:$0x1] %vm232, 0.0
        %239 = vst.msk [vmem:[#allocation2 + $0x90] sm:$0x1] %vm232, 0.0
        %240 = vst.msk [vmem:[#allocation2 + $0xa8] sm:$0x1] %vm232, 0.0
        %241 = vst.msk [vmem:[#allocation2 + $0xc0] sm:$0x1] %vm232, 0.0
        %242 = vst.msk [vmem:[#allocation2 + $0xd8] sm:$0x1] %vm232, 0.0
        %243 = vst.msk [vmem:[#allocation2 + $0xf0] sm:$0x1] %vm232, 0.0
        %244 = vst.msk [vmem:[#allocation2 + $0x108] sm:$0x1] %vm232, 0.0
        %245 = vst.msk [vmem:[#allocation2 + $0x120] sm:$0x1] %vm232, 0.0
        %246 = vst.msk [vmem:[#allocation2 + $0x138] sm:$0x1] %vm232, 0.0
        %247 = vst.msk [vmem:[#allocation2 + $0x150] sm:$0x1] %vm232, 0.0
        %248 = vst.msk [vmem:[#allocation2 + $0x168] sm:$0x1] %vm232, 0.0
        %249 = vst.msk [vmem:[#allocation2 + $0x180] sm:$0x1] %vm232, 0.0
        %250 = vst.msk [vmem:[#allocation2 + $0x198] sm:$0x1] %vm232, 0.0
        %251 = vst.msk [vmem:[#allocation2 + $0x11] sm:$0x1] %vm232, 0.0
        %252 = vst.msk [vmem:[#allocation2 + $0x29] sm:$0x1] %vm232, 0.0
        %253 = vst.msk [vmem:[#allocation2 + $0x41] sm:$0x1] %vm232, 0.0
        %254 = vst.msk [vmem:[#allocation2 + $0x59] sm:$0x1] %vm232, 0.0
        %255 = vst.msk [vmem:[#allocation2 + $0x71] sm:$0x1] %vm232, 0.0
        %256 = vst.msk [vmem:[#allocation2 + $0x89] sm:$0x1] %vm232, 0.0
        %257 = vst.msk [vmem:[#allocation2 + $0xa1] sm:$0x1] %vm232, 0.0
        %258 = vst.msk [vmem:[#allocation2 + $0xb9] sm:$0x1] %vm232, 0.0
        %259 = vst.msk [vmem:[#allocation2 + $0xd1] sm:$0x1] %vm232, 0.0
        %260 = vst.msk [vmem:[#allocation2 + $0xe9] sm:$0x1] %vm232, 0.0
        %261 = vst.msk [vmem:[#allocation2 + $0x101] sm:$0x1] %vm232, 0.0
        %262 = vst.msk [vmem:[#allocation2 + $0x119] sm:$0x1] %vm232, 0.0
        %263 = vst.msk [vmem:[#allocation2 + $0x131] sm:$0x1] %vm232, 0.0
        %264 = vst.msk [vmem:[#allocation2 + $0x149] sm:$0x1] %vm232, 0.0
        %265 = vst.msk [vmem:[#allocation2 + $0x161] sm:$0x1] %vm232, 0.0
        %266 = vst.msk [vmem:[#allocation2 + $0x179] sm:$0x1] %vm232, 0.0
        %267 = vst.msk [vmem:[#allocation2 + $0x191] sm:$0x1] %vm232, 0.0
        %268 = vst.msk [vmem:[#allocation2 + $0x1a9] sm:$0x1] %vm232, 0.0
        %v269 = vld [vmem:[%s222] sm:$0xff]
        %v270 = vld [vmem:[%s222 + $0x8] sm:$0xff]
        %v271 = vld [vmem:[%s222 + $0x10] sm:$0xff]
        %v272 = vld [vmem:[%s222 + $0x18] sm:$0xff]
        %v273 = vld [vmem:[%s222 + $0x20] sm:$0xff]
        %v274 = vld [vmem:[%s222 + $0x28] sm:$0xff]
        %v275 = vld [vmem:[%s222 + $0x30] sm:$0xff]
        %v276 = vld [vmem:[%s222 + $0x38] sm:$0xff]
        %v277 = vld [vmem:[%s222 + $0x40] sm:$0xff]
        %v278 = vld [vmem:[%s222 + $0x48] sm:$0xff]
        %v279 = vld [vmem:[%s222 + $0x50] sm:$0xff]
        %v280 = vld [vmem:[%s222 + $0x58] sm:$0xff]
        %v281 = vld [vmem:[%s222 + $0x60] sm:$0xff]
        %v282 = vld [vmem:[%s222 + $0x68] sm:$0xff]
        %v283 = vld [vmem:[%s222 + $0x70] sm:$0xff]
        %v284 = vld [vmem:[%s222 + $0x78] sm:$0xff]
        %v285 = vld [vmem:[%s222 + $0x80] sm:$0xff]
        %v286 = vld [vmem:[%s222 + $0x88] sm:$0xff]
        %v287 = vld [vmem:[%s222 + $0x90] sm:$0xff]
        %v288 = vld [vmem:[%s222 + $0x98] sm:$0xff]
        %v289 = vld [vmem:[%s222 + $0xa0] sm:$0xff]
        %v290 = vld [vmem:[%s222 + $0xa8] sm:$0xff]
        %v291 = vld [vmem:[%s222 + $0xb0] sm:$0xff]
        %v292 = vld [vmem:[%s222 + $0xb8] sm:$0xff]
        %v293 = vld [vmem:[%s222 + $0xc0] sm:$0xff]
        %v294 = vld [vmem:[%s222 + $0xc8] sm:$0xff]
        %v295 = vld [vmem:[%s222 + $0xd0] sm:$0xff]
        %v296 = vld [vmem:[%s222 + $0xd8] sm:$0xff]
        %v297 = vld [vmem:[%s222 + $0xe0] sm:$0xff]
        %v298 = vld [vmem:[%s222 + $0xe8] sm:$0xff]
        %v299 = vld [vmem:[%s222 + $0xf0] sm:$0xff]
        %v300 = vld [vmem:[%s222 + $0xf8] sm:$0xff]
        %v301 = vmax.f32 %v269, 0.0
        %v302 = vmax.f32 %v270, 0.0
        %v303 = vmax.f32 %v271, 0.0
        %v304 = vmax.f32 %v272, 0.0
        %v305 = vmax.f32 %v273, 0.0
        %v306 = vmax.f32 %v274, 0.0
        %v307 = vmax.f32 %v275, 0.0
        %v308 = vmax.f32 %v276, 0.0
        %v309 = vmax.f32 %v277, 0.0
        %v310 = vmax.f32 %v278, 0.0
        %v311 = vmax.f32 %v279, 0.0
        %v312 = vmax.f32 %v280, 0.0
        %v313 = vmax.f32 %v281, 0.0
        %v314 = vmax.f32 %v282, 0.0
        %v315 = vmax.f32 %v283, 0.0
        %v316 = vmax.f32 %v284, 0.0
        %v317 = vmax.f32 %v285, 0.0
        %v318 = vmax.f32 %v286, 0.0
        %v319 = vmax.f32 %v287, 0.0
        %v320 = vmax.f32 %v288, 0.0
        %v321 = vmax.f32 %v289, 0.0
        %v322 = vmax.f32 %v290, 0.0
        %v323 = vmax.f32 %v291, 0.0
        %v324 = vmax.f32 %v292, 0.0
        %v325 = vmax.f32 %v293, 0.0
        %v326 = vmax.f32 %v294, 0.0
        %v327 = vmax.f32 %v295, 0.0
        %v328 = vmax.f32 %v296, 0.0
        %v329 = vmax.f32 %v297, 0.0
        %v330 = vmax.f32 %v298, 0.0
        %v331 = vmax.f32 %v299, 0.0
        %v332 = vmax.f32 %v300, 0.0
        %s333 = scalar_lea.vmem [#allocation2], 24
        %334 = vst.msk [vmem:[%s333 + $0x1] sm:$0xff] %vm223, %v301
        %335 = vst.msk [vmem:[%s333 + $0x9] sm:$0xff] %vm223, %v302
        %336 = vst.msk [vmem:[%s333 + $0x19] sm:$0xff] %vm223, %v303
        %337 = vst.msk [vmem:[%s333 + $0x21] sm:$0xff] %vm223, %v304
        %338 = vst.msk [vmem:[%s333 + $0x31] sm:$0xff] %vm223, %v305
        %339 = vst.msk [vmem:[%s333 + $0x39] sm:$0xff] %vm223, %v306
        %340 = vst.msk [vmem:[%s333 + $0x49] sm:$0xff] %vm223, %v307
        %341 = vst.msk [vmem:[%s333 + $0x51] sm:$0xff] %vm223, %v308
        %342 = vst.msk [vmem:[%s333 + $0x61] sm:$0xff] %vm223, %v309
        %343 = vst.msk [vmem:[%s333 + $0x69] sm:$0xff] %vm223, %v310
        %344 = vst.msk [vmem:[%s333 + $0x79] sm:$0xff] %vm223, %v311
        %345 = vst.msk [vmem:[%s333 + $0x81] sm:$0xff] %vm223, %v312
        %346 = vst.msk [vmem:[%s333 + $0x91] sm:$0xff] %vm223, %v313
        %347 = vst.msk [vmem:[%s333 + $0x99] sm:$0xff] %vm223, %v314
        %348 = vst.msk [vmem:[%s333 + $0xa9] sm:$0xff] %vm223, %v315
        %349 = vst.msk [vmem:[%s333 + $0xb1] sm:$0xff] %vm223, %v316
        %350 = vst.msk [vmem:[%s333 + $0xc1] sm:$0xff] %vm223, %v317
        %351 = vst.msk [vmem:[%s333 + $0xc9] sm:$0xff] %vm223, %v318
        %352 = vst.msk [vmem:[%s333 + $0xd9] sm:$0xff] %vm223, %v319
        %353 = vst.msk [vmem:[%s333 + $0xe1] sm:$0xff] %vm223, %v320
        %354 = vst.msk [vmem:[%s333 + $0xf1] sm:$0xff] %vm223, %v321
        %355 = vst.msk [vmem:[%s333 + $0xf9] sm:$0xff] %vm223, %v322
        %356 = vst.msk [vmem:[%s333 + $0x109] sm:$0xff] %vm223, %v323
        %357 = vst.msk [vmem:[%s333 + $0x111] sm:$0xff] %vm223, %v324
        %358 = vst.msk [vmem:[%s333 + $0x121] sm:$0xff] %vm223, %v325
        %359 = vst.msk [vmem:[%s333 + $0x129] sm:$0xff] %vm223, %v326
        %360 = vst.msk [vmem:[%s333 + $0x139] sm:$0xff] %vm223, %v327
        %361 = vst.msk [vmem:[%s333 + $0x141] sm:$0xff] %vm223, %v328
        %362 = vst.msk [vmem:[%s333 + $0x151] sm:$0xff] %vm223, %v329
        %363 = vst.msk [vmem:[%s333 + $0x159] sm:$0xff] %vm223, %v330
        %364 = vst.msk [vmem:[%s333 + $0x169] sm:$0xff] %vm223, %v331
        %365 = vst.msk [vmem:[%s333 + $0x171] sm:$0xff] %vm223, %v332
        %v366 = vld [vmem:[#allocation2] sm:$0xff]
        %v367 = vld [vmem:[#allocation2 + $0x8] sm:$0xff]
        %v368 = vld [vmem:[#allocation2 + $0x18] sm:$0xff]
        %v369 = vld [vmem:[#allocation2 + $0x20] sm:$0xff]
        %v370 = vld [vmem:[#allocation2 + $0x30] sm:$0xff]
        %v371 = vld [vmem:[#allocation2 + $0x38] sm:$0xff]
        %v372 = vld [vmem:[#allocation2 + $0x48] sm:$0xff]
        %v373 = vld [vmem:[#allocation2 + $0x50] sm:$0xff]
        %v374 = vld [vmem:[#allocation2 + $0x60] sm:$0xff]
        %v375 = vld [vmem:[#allocation2 + $0x68] sm:$0xff]
        %v376 = vld [vmem:[#allocation2 + $0x78] sm:$0xff]
        %v377 = vld [vmem:[#allocation2 + $0x80] sm:$0xff]
        %v378 = vld [vmem:[#allocation2 + $0x90] sm:$0xff]
        %v379 = vld [vmem:[#allocation2 + $0x98] sm:$0xff]
        %v380 = vld [vmem:[#allocation2 + $0xa8] sm:$0xff]
        %v381 = vld [vmem:[#allocation2 + $0xb0] sm:$0xff]
        %v382 = vld [vmem:[#allocation2 + $0xc0] sm:$0xff]
        %v383 = vld [vmem:[#allocation2 + $0xc8] sm:$0xff]
        %v384 = vld [vmem:[#allocation2 + $0xd8] sm:$0xff]
        %v385 = vld [vmem:[#allocation2 + $0xe0] sm:$0xff]
        %v386 = vld [vmem:[#allocation2 + $0xf0] sm:$0xff]
        %v387 = vld [vmem:[#allocation2 + $0xf8] sm:$0xff]
        %v388 = vld [vmem:[#allocation2 + $0x108] sm:$0xff]
        %v389 = vld [vmem:[#allocation2 + $0x110] sm:$0xff]
        %v390 = vld [vmem:[#allocation2 + $0x120] sm:$0xff]
        %v391 = vld [vmem:[#allocation2 + $0x128] sm:$0xff]
        %v392 = vld [vmem:[#allocation2 + $0x138] sm:$0xff]
        %v393 = vld [vmem:[#allocation2 + $0x140] sm:$0xff]
        %v394 = vld [vmem:[#allocation2 + $0x150] sm:$0xff]
        %v395 = vld [vmem:[#allocation2 + $0x158] sm:$0xff]
        %v396 = vld [vmem:[#allocation2 + $0x168] sm:$0xff]
        %v397 = vld [vmem:[#allocation2 + $0x170] sm:$0xff]
        %398 = vst.msk [vmem:[#allocation3] sm:$0xff] %vm223, %v366
        %399 = vst.msk [vmem:[#allocation3 + $0x28] sm:$0xff] %vm223, %v367
        %400 = vst.msk [vmem:[#allocation3 + $0x50] sm:$0xff] %vm223, %v368
        %401 = vst.msk [vmem:[#allocation3 + $0x78] sm:$0xff] %vm223, %v369
        %402 = vst.msk [vmem:[#allocation3 + $0xa0] sm:$0xff] %vm223, %v370
        %403 = vst.msk [vmem:[#allocation3 + $0xc8] sm:$0xff] %vm223, %v371
        %404 = vst.msk [vmem:[#allocation3 + $0xf0] sm:$0xff] %vm223, %v372
        %405 = vst.msk [vmem:[#allocation3 + $0x118] sm:$0xff] %vm223, %v373
        %406 = vst.msk [vmem:[#allocation3 + $0x140] sm:$0xff] %vm223, %v374
        %407 = vst.msk [vmem:[#allocation3 + $0x168] sm:$0xff] %vm223, %v375
        %408 = vst.msk [vmem:[#allocation3 + $0x190] sm:$0xff] %vm223, %v376
        %409 = vst.msk [vmem:[#allocation3 + $0x1b8] sm:$0xff] %vm223, %v377
        %410 = vst.msk [vmem:[#allocation3 + $0x1e0] sm:$0xff] %vm223, %v378
        %411 = vst.msk [vmem:[#allocation3 + $0x208] sm:$0xff] %vm223, %v379
        %412 = vst.msk [vmem:[#allocation3 + $0x230] sm:$0xff] %vm223, %v380
        %413 = vst.msk [vmem:[#allocation3 + $0x258] sm:$0xff] %vm223, %v381
        %414 = vst.msk [vmem:[#allocation3 + $0x280] sm:$0xff] %vm223, %v382
        %415 = vst.msk [vmem:[#allocation3 + $0x2a8] sm:$0xff] %vm223, %v383
        %416 = vst.msk [vmem:[#allocation3 + $0x2d0] sm:$0xff] %vm223, %v384
        %417 = vst.msk [vmem:[#allocation3 + $0x2f8] sm:$0xff] %vm223, %v385
        %418 = vst.msk [vmem:[#allocation3 + $0x320] sm:$0xff] %vm223, %v386
        %419 = vst.msk [vmem:[#allocation3 + $0x348] sm:$0xff] %vm223, %v387
        %420 = vst.msk [vmem:[#allocation3 + $0x370] sm:$0xff] %vm223, %v388
        %421 = vst.msk [vmem:[#allocation3 + $0x398] sm:$0xff] %vm223, %v389
        %422 = vst.msk [vmem:[#allocation3 + $0x3c0] sm:$0xff] %vm223, %v390
        %423 = vst.msk [vmem:[#allocation3 + $0x3e8] sm:$0xff] %vm223, %v391
        %424 = vst.msk [vmem:[#allocation3 + $0x410] sm:$0xff] %vm223, %v392
        %425 = vst.msk [vmem:[#allocation3 + $0x438] sm:$0xff] %vm223, %v393
        %426 = vst.msk [vmem:[#allocation3 + $0x460] sm:$0xff] %vm223, %v394
        %427 = vst.msk [vmem:[#allocation3 + $0x488] sm:$0xff] %vm223, %v395
        %428 = vst.msk [vmem:[#allocation3 + $0x4b0] sm:$0xff] %vm223, %v396
        %429 = vst.msk [vmem:[#allocation3 + $0x4d8] sm:$0xff] %vm223, %v397
        %v430 = vld [vmem:[#allocation2 + $0x1] sm:$0xff]
        %v431 = vld [vmem:[#allocation2 + $0x9] sm:$0xff]
        %v432 = vld [vmem:[#allocation2 + $0x19] sm:$0xff]
        %v433 = vld [vmem:[#allocation2 + $0x21] sm:$0xff]
        %v434 = vld [vmem:[#allocation2 + $0x31] sm:$0xff]
        %v435 = vld [vmem:[#allocation2 + $0x39] sm:$0xff]
        %v436 = vld [vmem:[#allocation2 + $0x49] sm:$0xff]
        %v437 = vld [vmem:[#allocation2 + $0x51] sm:$0xff]
        %v438 = vld [vmem:[#allocation2 + $0x61] sm:$0xff]
        %v439 = vld [vmem:[#allocation2 + $0x69] sm:$0xff]
        %v440 = vld [vmem:[#allocation2 + $0x79] sm:$0xff]
        %v441 = vld [vmem:[#allocation2 + $0x81] sm:$0xff]
        %v442 = vld [vmem:[#allocation2 + $0x91] sm:$0xff]
        %v443 = vld [vmem:[#allocation2 + $0x99] sm:$0xff]
        %v444 = vld [vmem:[#allocation2 + $0xa9] sm:$0xff]
        %v445 = vld [vmem:[#allocation2 + $0xb1] sm:$0xff]
        %v446 = vld [vmem:[#allocation2 + $0xc1] sm:$0xff]
        %v447 = vld [vmem:[#allocation2 + $0xc9] sm:$0xff]
        %v448 = vld [vmem:[#allocation2 + $0xd9] sm:$0xff]
        %v449 = vld [vmem:[#allocation2 + $0xe1] sm:$0xff]
        %v450 = vld [vmem:[#allocation2 + $0xf1] sm:$0xff]
        %v451 = vld [vmem:[#allocation2 + $0xf9] sm:$0xff]
        %v452 = vld [vmem:[#allocation2 + $0x109] sm:$0xff]
        %v453 = vld [vmem:[#allocation2 + $0x111] sm:$0xff]
        %v454 = vld [vmem:[#allocation2 + $0x121] sm:$0xff]
        %v455 = vld [vmem:[#allocation2 + $0x129] sm:$0xff]
        %v456 = vld [vmem:[#allocation2 + $0x139] sm:$0xff]
        %v457 = vld [vmem:[#allocation2 + $0x141] sm:$0xff]
        %v458 = vld [vmem:[#allocation2 + $0x151] sm:$0xff]
        %v459 = vld [vmem:[#allocation2 + $0x159] sm:$0xff]
        %v460 = vld [vmem:[#allocation2 + $0x169] sm:$0xff]
        %v461 = vld [vmem:[#allocation2 + $0x171] sm:$0xff]
        %494 = vrot.lane.b32.xlu0 %v430, 64
        %v495 = vpop.permute.xlu0 %494
        %496 = vrot.lane.b32.xlu0 %v431, 64
        %v497 = vpop.permute.xlu0 %496
        %498 = vrot.lane.b32.xlu0 %v432, 64
        %v499 = vpop.permute.xlu0 %498
        %500 = vrot.lane.b32.xlu0 %v433, 64
        %v501 = vpop.permute.xlu0 %500
        %502 = vrot.lane.b32.xlu0 %v434, 64
        %v503 = vpop.permute.xlu0 %502
        %504 = vrot.lane.b32.xlu0 %v435, 64
        %v505 = vpop.permute.xlu0 %504
        %506 = vrot.lane.b32.xlu0 %v436, 64
        %v507 = vpop.permute.xlu0 %506
        %508 = vrot.lane.b32.xlu0 %v437, 64
        %v509 = vpop.permute.xlu0 %508
        %510 = vrot.lane.b32.xlu0 %v438, 64
        %v511 = vpop.permute.xlu0 %510
        %512 = vrot.lane.b32.xlu0 %v439, 64
        %v513 = vpop.permute.xlu0 %512
        %514 = vrot.lane.b32.xlu0 %v440, 64
        %v515 = vpop.permute.xlu0 %514
        %516 = vrot.lane.b32.xlu0 %v441, 64
        %v517 = vpop.permute.xlu0 %516
        %518 = vrot.lane.b32.xlu0 %v442, 64
        %v519 = vpop.permute.xlu0 %518
        %520 = vrot.lane.b32.xlu0 %v443, 64
        %v521 = vpop.permute.xlu0 %520
        %522 = vrot.lane.b32.xlu0 %v444, 64
        %v523 = vpop.permute.xlu0 %522
        %524 = vrot.lane.b32.xlu0 %v445, 64
        %v525 = vpop.permute.xlu0 %524
        %526 = vrot.lane.b32.xlu0 %v446, 64
        %v527 = vpop.permute.xlu0 %526
        %528 = vrot.lane.b32.xlu0 %v447, 64
        %v529 = vpop.permute.xlu0 %528
        %530 = vrot.lane.b32.xlu0 %v448, 64
        %v531 = vpop.permute.xlu0 %530
        %532 = vrot.lane.b32.xlu0 %v449, 64
        %v533 = vpop.permute.xlu0 %532
        %534 = vrot.lane.b32.xlu0 %v450, 64
        %v535 = vpop.permute.xlu0 %534
        %536 = vrot.lane.b32.xlu0 %v451, 64
        %v537 = vpop.permute.xlu0 %536
        %538 = vrot.lane.b32.xlu0 %v452, 64
        %v539 = vpop.permute.xlu0 %538
        %540 = vrot.lane.b32.xlu0 %v453, 64
        %v541 = vpop.permute.xlu0 %540
        %542 = vrot.lane.b32.xlu0 %v454, 64
        %v543 = vpop.permute.xlu0 %542
        %544 = vrot.lane.b32.xlu0 %v455, 64
        %v545 = vpop.permute.xlu0 %544
        %546 = vrot.lane.b32.xlu0 %v456, 64
        %v547 = vpop.permute.xlu0 %546
        %548 = vrot.lane.b32.xlu0 %v457, 64
        %v549 = vpop.permute.xlu0 %548
        %550 = vrot.lane.b32.xlu0 %v458, 64
        %v551 = vpop.permute.xlu0 %550
        %552 = vrot.lane.b32.xlu0 %v459, 64
        %v553 = vpop.permute.xlu0 %552
        %554 = vrot.lane.b32.xlu0 %v460, 64
        %v555 = vpop.permute.xlu0 %554
        %556 = vrot.lane.b32.xlu0 %v461, 64
        %v557 = vpop.permute.xlu0 %556
        %vm590 = vcmask 1048064
        %591 = vst.msk [vmem:[#allocation3] sm:$0xff] %vm590, %v495
        %592 = vst.msk [vmem:[#allocation3 + $0x28] sm:$0xff] %vm590, %v497
        %593 = vst.msk [vmem:[#allocation3 + $0x50] sm:$0xff] %vm590, %v499
        %594 = vst.msk [vmem:[#allocation3 + $0x78] sm:$0xff] %vm590, %v501
        %595 = vst.msk [vmem:[#allocation3 + $0xa0] sm:$0xff] %vm590, %v503
        %596 = vst.msk [vmem:[#allocation3 + $0xc8] sm:$0xff] %vm590, %v505
        %597 = vst.msk [vmem:[#allocation3 + $0xf0] sm:$0xff] %vm590, %v507
        %598 = vst.msk [vmem:[#allocation3 + $0x118] sm:$0xff] %vm590, %v509
        %599 = vst.msk [vmem:[#allocation3 + $0x140] sm:$0xff] %vm590, %v511
        %600 = vst.msk [vmem:[#allocation3 + $0x168] sm:$0xff] %vm590, %v513
        %601 = vst.msk [vmem:[#allocation3 + $0x190] sm:$0xff] %vm590, %v515
        %602 = vst.msk [vmem:[#allocation3 + $0x1b8] sm:$0xff] %vm590, %v517
        %603 = vst.msk [vmem:[#allocation3 + $0x1e0] sm:$0xff] %vm590, %v519
        %604 = vst.msk [vmem:[#allocation3 + $0x208] sm:$0xff] %vm590, %v521
        %605 = vst.msk [vmem:[#allocation3 + $0x230] sm:$0xff] %vm590, %v523
        %606 = vst.msk [vmem:[#allocation3 + $0x258] sm:$0xff] %vm590, %v525
        %607 = vst.msk [vmem:[#allocation3 + $0x280] sm:$0xff] %vm590, %v527
        %608 = vst.msk [vmem:[#allocation3 + $0x2a8] sm:$0xff] %vm590, %v529
        %609 = vst.msk [vmem:[#allocation3 + $0x2d0] sm:$0xff] %vm590, %v531
        %610 = vst.msk [vmem:[#allocation3 + $0x2f8] sm:$0xff] %vm590, %v533
        %611 = vst.msk [vmem:[#allocation3 + $0x320] sm:$0xff] %vm590, %v535
        %612 = vst.msk [vmem:[#allocation3 + $0x348] sm:$0xff] %vm590, %v537
        %613 = vst.msk [vmem:[#allocation3 + $0x370] sm:$0xff] %vm590, %v539
        %614 = vst.msk [vmem:[#allocation3 + $0x398] sm:$0xff] %vm590, %v541
        %615 = vst.msk [vmem:[#allocation3 + $0x3c0] sm:$0xff] %vm590, %v543
        %616 = vst.msk [vmem:[#allocation3 + $0x3e8] sm:$0xff] %vm590, %v545
        %617 = vst.msk [vmem:[#allocation3 + $0x410] sm:$0xff] %vm590, %v547
        %618 = vst.msk [vmem:[#allocation3 + $0x438] sm:$0xff] %vm590, %v549
        %619 = vst.msk [vmem:[#allocation3 + $0x460] sm:$0xff] %vm590, %v551
        %620 = vst.msk [vmem:[#allocation3 + $0x488] sm:$0xff] %vm590, %v553
        %621 = vst.msk [vmem:[#allocation3 + $0x4b0] sm:$0xff] %vm590, %v555
        %622 = vst.msk [vmem:[#allocation3 + $0x4d8] sm:$0xff] %vm590, %v557
        %v623 = vld [vmem:[#allocation2 + $0x2] sm:$0xff]
        %v624 = vld [vmem:[#allocation2 + $0xa] sm:$0xff]
        %v625 = vld [vmem:[#allocation2 + $0x1a] sm:$0xff]
        %v626 = vld [vmem:[#allocation2 + $0x22] sm:$0xff]
        %v627 = vld [vmem:[#allocation2 + $0x32] sm:$0xff]
        %v628 = vld [vmem:[#allocation2 + $0x3a] sm:$0xff]
        %v629 = vld [vmem:[#allocation2 + $0x4a] sm:$0xff]
        %v630 = vld [vmem:[#allocation2 + $0x52] sm:$0xff]
        %v631 = vld [vmem:[#allocation2 + $0x62] sm:$0xff]
        %v632 = vld [vmem:[#allocation2 + $0x6a] sm:$0xff]
        %v633 = vld [vmem:[#allocation2 + $0x7a] sm:$0xff]
        %v634 = vld [vmem:[#allocation2 + $0x82] sm:$0xff]
        %v635 = vld [vmem:[#allocation2 + $0x92] sm:$0xff]
        %v636 = vld [vmem:[#allocation2 + $0x9a] sm:$0xff]
        %v637 = vld [vmem:[#allocation2 + $0xaa] sm:$0xff]
        %v638 = vld [vmem:[#allocation2 + $0xb2] sm:$0xff]
        %v639 = vld [vmem:[#allocation2 + $0xc2] sm:$0xff]
        %v640 = vld [vmem:[#allocation2 + $0xca] sm:$0xff]
        %v641 = vld [vmem:[#allocation2 + $0xda] sm:$0xff]
        %v642 = vld [vmem:[#allocation2 + $0xe2] sm:$0xff]
        %v643 = vld [vmem:[#allocation2 + $0xf2] sm:$0xff]
        %v644 = vld [vmem:[#allocation2 + $0xfa] sm:$0xff]
        %v645 = vld [vmem:[#allocation2 + $0x10a] sm:$0xff]
        %v646 = vld [vmem:[#allocation2 + $0x112] sm:$0xff]
        %v647 = vld [vmem:[#allocation2 + $0x122] sm:$0xff]
        %v648 = vld [vmem:[#allocation2 + $0x12a] sm:$0xff]
        %v649 = vld [vmem:[#allocation2 + $0x13a] sm:$0xff]
        %v650 = vld [vmem:[#allocation2 + $0x142] sm:$0xff]
        %v651 = vld [vmem:[#allocation2 + $0x152] sm:$0xff]
        %v652 = vld [vmem:[#allocation2 + $0x15a] sm:$0xff]
        %v653 = vld [vmem:[#allocation2 + $0x16a] sm:$0xff]
        %v654 = vld [vmem:[#allocation2 + $0x172] sm:$0xff]
        %655 = vst.msk [vmem:[#allocation3 + $0x8] sm:$0xff] %vm223, %v623
        %656 = vst.msk [vmem:[#allocation3 + $0x30] sm:$0xff] %vm223, %v624
        %657 = vst.msk [vmem:[#allocation3 + $0x58] sm:$0xff] %vm223, %v625
        %658 = vst.msk [vmem:[#allocation3 + $0x80] sm:$0xff] %vm223, %v626
        %659 = vst.msk [vmem:[#allocation3 + $0xa8] sm:$0xff] %vm223, %v627
        %660 = vst.msk [vmem:[#allocation3 + $0xd0] sm:$0xff] %vm223, %v628
        %661 = vst.msk [vmem:[#allocation3 + $0xf8] sm:$0xff] %vm223, %v629
        %662 = vst.msk [vmem:[#allocation3 + $0x120] sm:$0xff] %vm223, %v630
        %663 = vst.msk [vmem:[#allocation3 + $0x148] sm:$0xff] %vm223, %v631
        %664 = vst.msk [vmem:[#allocation3 + $0x170] sm:$0xff] %vm223, %v632
        %665 = vst.msk [vmem:[#allocation3 + $0x198] sm:$0xff] %vm223, %v633
        %666 = vst.msk [vmem:[#allocation3 + $0x1c0] sm:$0xff] %vm223, %v634
        %667 = vst.msk [vmem:[#allocation3 + $0x1e8] sm:$0xff] %vm223, %v635
        %668 = vst.msk [vmem:[#allocation3 + $0x210] sm:$0xff] %vm223, %v636
        %669 = vst.msk [vmem:[#allocation3 + $0x238] sm:$0xff] %vm223, %v637
        %670 = vst.msk [vmem:[#allocation3 + $0x260] sm:$0xff] %vm223, %v638
        %671 = vst.msk [vmem:[#allocation3 + $0x288] sm:$0xff] %vm223, %v639
        %672 = vst.msk [vmem:[#allocation3 + $0x2b0] sm:$0xff] %vm223, %v640
        %673 = vst.msk [vmem:[#allocation3 + $0x2d8] sm:$0xff] %vm223, %v641
        %674 = vst.msk [vmem:[#allocation3 + $0x300] sm:$0xff] %vm223, %v642
        %675 = vst.msk [vmem:[#allocation3 + $0x328] sm:$0xff] %vm223, %v643
        %676 = vst.msk [vmem:[#allocation3 + $0x350] sm:$0xff] %vm223, %v644
        %677 = vst.msk [vmem:[#allocation3 + $0x378] sm:$0xff] %vm223, %v645
        %678 = vst.msk [vmem:[#allocation3 + $0x3a0] sm:$0xff] %vm223, %v646
        %679 = vst.msk [vmem:[#allocation3 + $0x3c8] sm:$0xff] %vm223, %v647
        %680 = vst.msk [vmem:[#allocation3 + $0x3f0] sm:$0xff] %vm223, %v648
        %681 = vst.msk [vmem:[#allocation3 + $0x418] sm:$0xff] %vm223, %v649
        %682 = vst.msk [vmem:[#allocation3 + $0x440] sm:$0xff] %vm223, %v650
        %683 = vst.msk [vmem:[#allocation3 + $0x468] sm:$0xff] %vm223, %v651
        %684 = vst.msk [vmem:[#allocation3 + $0x490] sm:$0xff] %vm223, %v652
        %685 = vst.msk [vmem:[#allocation3 + $0x4b8] sm:$0xff] %vm223, %v653
        %686 = vst.msk [vmem:[#allocation3 + $0x4e0] sm:$0xff] %vm223, %v654
        %v687 = vld [vmem:[%s333] sm:$0xff]
        %v688 = vld [vmem:[%s333 + $0x8] sm:$0xff]
        %v689 = vld [vmem:[%s333 + $0x18] sm:$0xff]
        %v690 = vld [vmem:[%s333 + $0x20] sm:$0xff]
        %v691 = vld [vmem:[%s333 + $0x30] sm:$0xff]
        %v692 = vld [vmem:[%s333 + $0x38] sm:$0xff]
        %v693 = vld [vmem:[%s333 + $0x48] sm:$0xff]
        %v694 = vld [vmem:[%s333 + $0x50] sm:$0xff]
        %v695 = vld [vmem:[%s333 + $0x60] sm:$0xff]
        %v696 = vld [vmem:[%s333 + $0x68] sm:$0xff]
        %v697 = vld [vmem:[%s333 + $0x78] sm:$0xff]
        %v698 = vld [vmem:[%s333 + $0x80] sm:$0xff]
        %v699 = vld [vmem:[%s333 + $0x90] sm:$0xff]
        %v700 = vld [vmem:[%s333 + $0x98] sm:$0xff]
        %v701 = vld [vmem:[%s333 + $0xa8] sm:$0xff]
        %v702 = vld [vmem:[%s333 + $0xb0] sm:$0xff]
        %v703 = vld [vmem:[%s333 + $0xc0] sm:$0xff]
        %v704 = vld [vmem:[%s333 + $0xc8] sm:$0xff]
        %v705 = vld [vmem:[%s333 + $0xd8] sm:$0xff]
        %v706 = vld [vmem:[%s333 + $0xe0] sm:$0xff]
        %v707 = vld [vmem:[%s333 + $0xf0] sm:$0xff]
        %v708 = vld [vmem:[%s333 + $0xf8] sm:$0xff]
        %v709 = vld [vmem:[%s333 + $0x108] sm:$0xff]
        %v710 = vld [vmem:[%s333 + $0x110] sm:$0xff]
        %v711 = vld [vmem:[%s333 + $0x120] sm:$0xff]
        %v712 = vld [vmem:[%s333 + $0x128] sm:$0xff]
        %v713 = vld [vmem:[%s333 + $0x138] sm:$0xff]
        %v714 = vld [vmem:[%s333 + $0x140] sm:$0xff]
        %v715 = vld [vmem:[%s333 + $0x150] sm:$0xff]
        %v716 = vld [vmem:[%s333 + $0x158] sm:$0xff]
        %v717 = vld [vmem:[%s333 + $0x168] sm:$0xff]
        %v718 = vld [vmem:[%s333 + $0x170] sm:$0xff]
        %751 = vrot.lane.b32.xlu0 %v687, 64
        %v752 = vpop.permute.xlu0 %751
        %753 = vrot.lane.b32.xlu0 %v688, 64
        %v754 = vpop.permute.xlu0 %753
        %755 = vrot.lane.b32.xlu0 %v689, 64
        %v756 = vpop.permute.xlu0 %755
        %757 = vrot.lane.b32.xlu0 %v690, 64
        %v758 = vpop.permute.xlu0 %757
        %759 = vrot.lane.b32.xlu0 %v691, 64
        %v760 = vpop.permute.xlu0 %759
        %761 = vrot.lane.b32.xlu0 %v692, 64
        %v762 = vpop.permute.xlu0 %761
        %763 = vrot.lane.b32.xlu0 %v693, 64
        %v764 = vpop.permute.xlu0 %763
        %765 = vrot.lane.b32.xlu0 %v694, 64
        %v766 = vpop.permute.xlu0 %765
        %767 = vrot.lane.b32.xlu0 %v695, 64
        %v768 = vpop.permute.xlu0 %767
        %769 = vrot.lane.b32.xlu0 %v696, 64
        %v770 = vpop.permute.xlu0 %769
        %771 = vrot.lane.b32.xlu0 %v697, 64
        %v772 = vpop.permute.xlu0 %771
        %773 = vrot.lane.b32.xlu0 %v698, 64
        %v774 = vpop.permute.xlu0 %773
        %775 = vrot.lane.b32.xlu0 %v699, 64
        %v776 = vpop.permute.xlu0 %775
        %777 = vrot.lane.b32.xlu0 %v700, 64
        %v778 = vpop.permute.xlu0 %777
        %779 = vrot.lane.b32.xlu0 %v701, 64
        %v780 = vpop.permute.xlu0 %779
        %781 = vrot.lane.b32.xlu0 %v702, 64
        %v782 = vpop.permute.xlu0 %781
        %783 = vrot.lane.b32.xlu0 %v703, 64
        %v784 = vpop.permute.xlu0 %783
        %785 = vrot.lane.b32.xlu0 %v704, 64
        %v786 = vpop.permute.xlu0 %785
        %787 = vrot.lane.b32.xlu0 %v705, 64
        %v788 = vpop.permute.xlu0 %787
        %789 = vrot.lane.b32.xlu0 %v706, 64
        %v790 = vpop.permute.xlu0 %789
        %791 = vrot.lane.b32.xlu0 %v707, 64
        %v792 = vpop.permute.xlu0 %791
        %793 = vrot.lane.b32.xlu0 %v708, 64
        %v794 = vpop.permute.xlu0 %793
        %795 = vrot.lane.b32.xlu0 %v709, 64
        %v796 = vpop.permute.xlu0 %795
        %797 = vrot.lane.b32.xlu0 %v710, 64
        %v798 = vpop.permute.xlu0 %797
        %799 = vrot.lane.b32.xlu0 %v711, 64
        %v800 = vpop.permute.xlu0 %799
        %801 = vrot.lane.b32.xlu0 %v712, 64
        %v802 = vpop.permute.xlu0 %801
        %803 = vrot.lane.b32.xlu0 %v713, 64
        %v804 = vpop.permute.xlu0 %803
        %805 = vrot.lane.b32.xlu0 %v714, 64
        %v806 = vpop.permute.xlu0 %805
        %807 = vrot.lane.b32.xlu0 %v715, 64
        %v808 = vpop.permute.xlu0 %807
        %809 = vrot.lane.b32.xlu0 %v716, 64
        %v810 = vpop.permute.xlu0 %809
        %811 = vrot.lane.b32.xlu0 %v717, 64
        %v812 = vpop.permute.xlu0 %811
        %813 = vrot.lane.b32.xlu0 %v718, 64
        %v814 = vpop.permute.xlu0 %813
        %847 = vst.msk [vmem:[#allocation3 + $0x8] sm:$0xff] %vm590, %v752
        %848 = vst.msk [vmem:[#allocation3 + $0x30] sm:$0xff] %vm590, %v754
        %849 = vst.msk [vmem:[#allocation3 + $0x58] sm:$0xff] %vm590, %v756
        %850 = vst.msk [vmem:[#allocation3 + $0x80] sm:$0xff] %vm590, %v758
        %851 = vst.msk [vmem:[#allocation3 + $0xa8] sm:$0xff] %vm590, %v760
        %852 = vst.msk [vmem:[#allocation3 + $0xd0] sm:$0xff] %vm590, %v762
        %853 = vst.msk [vmem:[#allocation3 + $0xf8] sm:$0xff] %vm590, %v764
        %854 = vst.msk [vmem:[#allocation3 + $0x120] sm:$0xff] %vm590, %v766
        %855 = vst.msk [vmem:[#allocation3 + $0x148] sm:$0xff] %vm590, %v768
        %856 = vst.msk [vmem:[#allocation3 + $0x170] sm:$0xff] %vm590, %v770
        %857 = vst.msk [vmem:[#allocation3 + $0x198] sm:$0xff] %vm590, %v772
        %858 = vst.msk [vmem:[#allocation3 + $0x1c0] sm:$0xff] %vm590, %v774
        %859 = vst.msk [vmem:[#allocation3 + $0x1e8] sm:$0xff] %vm590, %v776
        %860 = vst.msk [vmem:[#allocation3 + $0x210] sm:$0xff] %vm590, %v778
        %861 = vst.msk [vmem:[#allocation3 + $0x238] sm:$0xff] %vm590, %v780
        %862 = vst.msk [vmem:[#allocation3 + $0x260] sm:$0xff] %vm590, %v782
        %863 = vst.msk [vmem:[#allocation3 + $0x288] sm:$0xff] %vm590, %v784
        %864 = vst.msk [vmem:[#allocation3 + $0x2b0] sm:$0xff] %vm590, %v786
        %865 = vst.msk [vmem:[#allocation3 + $0x2d8] sm:$0xff] %vm590, %v788
        %866 = vst.msk [vmem:[#allocation3 + $0x300] sm:$0xff] %vm590, %v790
        %867 = vst.msk [vmem:[#allocation3 + $0x328] sm:$0xff] %vm590, %v792
        %868 = vst.msk [vmem:[#allocation3 + $0x350] sm:$0xff] %vm590, %v794
        %869 = vst.msk [vmem:[#allocation3 + $0x378] sm:$0xff] %vm590, %v796
        %870 = vst.msk [vmem:[#allocation3 + $0x3a0] sm:$0xff] %vm590, %v798
        %871 = vst.msk [vmem:[#allocation3 + $0x3c8] sm:$0xff] %vm590, %v800
        %872 = vst.msk [vmem:[#allocation3 + $0x3f0] sm:$0xff] %vm590, %v802
        %873 = vst.msk [vmem:[#allocation3 + $0x418] sm:$0xff] %vm590, %v804
        %874 = vst.msk [vmem:[#allocation3 + $0x440] sm:$0xff] %vm590, %v806
        %875 = vst.msk [vmem:[#allocation3 + $0x468] sm:$0xff] %vm590, %v808
        %876 = vst.msk [vmem:[#allocation3 + $0x490] sm:$0xff] %vm590, %v810
        %877 = vst.msk [vmem:[#allocation3 + $0x4b8] sm:$0xff] %vm590, %v812
        %878 = vst.msk [vmem:[#allocation3 + $0x4e0] sm:$0xff] %vm590, %v814
        %v879 = vld [vmem:[%s333 + $0x1] sm:$0xff]
        %v880 = vld [vmem:[%s333 + $0x9] sm:$0xff]
        %v881 = vld [vmem:[%s333 + $0x19] sm:$0xff]
        %v882 = vld [vmem:[%s333 + $0x21] sm:$0xff]
        %v883 = vld [vmem:[%s333 + $0x31] sm:$0xff]
        %v884 = vld [vmem:[%s333 + $0x39] sm:$0xff]
        %v885 = vld [vmem:[%s333 + $0x49] sm:$0xff]
        %v886 = vld [vmem:[%s333 + $0x51] sm:$0xff]
        %v887 = vld [vmem:[%s333 + $0x61] sm:$0xff]
        %v888 = vld [vmem:[%s333 + $0x69] sm:$0xff]
        %v889 = vld [vmem:[%s333 + $0x79] sm:$0xff]
        %v890 = vld [vmem:[%s333 + $0x81] sm:$0xff]
        %v891 = vld [vmem:[%s333 + $0x91] sm:$0xff]
        %v892 = vld [vmem:[%s333 + $0x99] sm:$0xff]
        %v893 = vld [vmem:[%s333 + $0xa9] sm:$0xff]
        %v894 = vld [vmem:[%s333 + $0xb1] sm:$0xff]
        %v895 = vld [vmem:[%s333 + $0xc1] sm:$0xff]
        %v896 = vld [vmem:[%s333 + $0xc9] sm:$0xff]
        %v897 = vld [vmem:[%s333 + $0xd9] sm:$0xff]
        %v898 = vld [vmem:[%s333 + $0xe1] sm:$0xff]
        %v899 = vld [vmem:[%s333 + $0xf1] sm:$0xff]
        %v900 = vld [vmem:[%s333 + $0xf9] sm:$0xff]
        %v901 = vld [vmem:[%s333 + $0x109] sm:$0xff]
        %v902 = vld [vmem:[%s333 + $0x111] sm:$0xff]
        %v903 = vld [vmem:[%s333 + $0x121] sm:$0xff]
        %v904 = vld [vmem:[%s333 + $0x129] sm:$0xff]
        %v905 = vld [vmem:[%s333 + $0x139] sm:$0xff]
        %v906 = vld [vmem:[%s333 + $0x141] sm:$0xff]
        %v907 = vld [vmem:[%s333 + $0x151] sm:$0xff]
        %v908 = vld [vmem:[%s333 + $0x159] sm:$0xff]
        %v909 = vld [vmem:[%s333 + $0x169] sm:$0xff]
        %v910 = vld [vmem:[%s333 + $0x171] sm:$0xff]
        %911 = vst.msk [vmem:[#allocation3 + $0x10] sm:$0xff] %vm223, %v879
        %912 = vst.msk [vmem:[#allocation3 + $0x38] sm:$0xff] %vm223, %v880
        %913 = vst.msk [vmem:[#allocation3 + $0x60] sm:$0xff] %vm223, %v881
        %914 = vst.msk [vmem:[#allocation3 + $0x88] sm:$0xff] %vm223, %v882
        %915 = vst.msk [vmem:[#allocation3 + $0xb0] sm:$0xff] %vm223, %v883
        %916 = vst.msk [vmem:[#allocation3 + $0xd8] sm:$0xff] %vm223, %v884
        %917 = vst.msk [vmem:[#allocation3 + $0x100] sm:$0xff] %vm223, %v885
        %918 = vst.msk [vmem:[#allocation3 + $0x128] sm:$0xff] %vm223, %v886
        %919 = vst.msk [vmem:[#allocation3 + $0x150] sm:$0xff] %vm223, %v887
        %920 = vst.msk [vmem:[#allocation3 + $0x178] sm:$0xff] %vm223, %v888
        %921 = vst.msk [vmem:[#allocation3 + $0x1a0] sm:$0xff] %vm223, %v889
        %922 = vst.msk [vmem:[#allocation3 + $0x1c8] sm:$0xff] %vm223, %v890
        %923 = vst.msk [vmem:[#allocation3 + $0x1f0] sm:$0xff] %vm223, %v891
        %924 = vst.msk [vmem:[#allocation3 + $0x218] sm:$0xff] %vm223, %v892
        %925 = vst.msk [vmem:[#allocation3 + $0x240] sm:$0xff] %vm223, %v893
        %926 = vst.msk [vmem:[#allocation3 + $0x268] sm:$0xff] %vm223, %v894
        %927 = vst.msk [vmem:[#allocation3 + $0x290] sm:$0xff] %vm223, %v895
        %928 = vst.msk [vmem:[#allocation3 + $0x2b8] sm:$0xff] %vm223, %v896
        %929 = vst.msk [vmem:[#allocation3 + $0x2e0] sm:$0xff] %vm223, %v897
        %930 = vst.msk [vmem:[#allocation3 + $0x308] sm:$0xff] %vm223, %v898
        %931 = vst.msk [vmem:[#allocation3 + $0x330] sm:$0xff] %vm223, %v899
        %932 = vst.msk [vmem:[#allocation3 + $0x358] sm:$0xff] %vm223, %v900
        %933 = vst.msk [vmem:[#allocation3 + $0x380] sm:$0xff] %vm223, %v901
        %934 = vst.msk [vmem:[#allocation3 + $0x3a8] sm:$0xff] %vm223, %v902
        %935 = vst.msk [vmem:[#allocation3 + $0x3d0] sm:$0xff] %vm223, %v903
        %936 = vst.msk [vmem:[#allocation3 + $0x3f8] sm:$0xff] %vm223, %v904
        %937 = vst.msk [vmem:[#allocation3 + $0x420] sm:$0xff] %vm223, %v905
        %938 = vst.msk [vmem:[#allocation3 + $0x448] sm:$0xff] %vm223, %v906
        %939 = vst.msk [vmem:[#allocation3 + $0x470] sm:$0xff] %vm223, %v907
        %940 = vst.msk [vmem:[#allocation3 + $0x498] sm:$0xff] %vm223, %v908
        %941 = vst.msk [vmem:[#allocation3 + $0x4c0] sm:$0xff] %vm223, %v909
        %942 = vst.msk [vmem:[#allocation3 + $0x4e8] sm:$0xff] %vm223, %v910
        %v943 = vld [vmem:[%s333 + $0x2] sm:$0xff]
        %v944 = vld [vmem:[%s333 + $0xa] sm:$0xff]
        %v945 = vld [vmem:[%s333 + $0x1a] sm:$0xff]
        %v946 = vld [vmem:[%s333 + $0x22] sm:$0xff]
        %v947 = vld [vmem:[%s333 + $0x32] sm:$0xff]
        %v948 = vld [vmem:[%s333 + $0x3a] sm:$0xff]
        %v949 = vld [vmem:[%s333 + $0x4a] sm:$0xff]
        %v950 = vld [vmem:[%s333 + $0x52] sm:$0xff]
        %v951 = vld [vmem:[%s333 + $0x62] sm:$0xff]
        %v952 = vld [vmem:[%s333 + $0x6a] sm:$0xff]
        %v953 = vld [vmem:[%s333 + $0x7a] sm:$0xff]
        %v954 = vld [vmem:[%s333 + $0x82] sm:$0xff]
        %v955 = vld [vmem:[%s333 + $0x92] sm:$0xff]
        %v956 = vld [vmem:[%s333 + $0x9a] sm:$0xff]
        %v957 = vld [vmem:[%s333 + $0xaa] sm:$0xff]
        %v958 = vld [vmem:[%s333 + $0xb2] sm:$0xff]
        %v959 = vld [vmem:[%s333 + $0xc2] sm:$0xff]
        %v960 = vld [vmem:[%s333 + $0xca] sm:$0xff]
        %v961 = vld [vmem:[%s333 + $0xda] sm:$0xff]
        %v962 = vld [vmem:[%s333 + $0xe2] sm:$0xff]
        %v963 = vld [vmem:[%s333 + $0xf2] sm:$0xff]
        %v964 = vld [vmem:[%s333 + $0xfa] sm:$0xff]
        %v965 = vld [vmem:[%s333 + $0x10a] sm:$0xff]
        %v966 = vld [vmem:[%s333 + $0x112] sm:$0xff]
        %v967 = vld [vmem:[%s333 + $0x122] sm:$0xff]
        %v968 = vld [vmem:[%s333 + $0x12a] sm:$0xff]
        %v969 = vld [vmem:[%s333 + $0x13a] sm:$0xff]
        %v970 = vld [vmem:[%s333 + $0x142] sm:$0xff]
        %v971 = vld [vmem:[%s333 + $0x152] sm:$0xff]
        %v972 = vld [vmem:[%s333 + $0x15a] sm:$0xff]
        %v973 = vld [vmem:[%s333 + $0x16a] sm:$0xff]
        %v974 = vld [vmem:[%s333 + $0x172] sm:$0xff]
        %1007 = vrot.lane.b32.xlu0 %v943, 64
        %v1008 = vpop.permute.xlu0 %1007
        %1009 = vrot.lane.b32.xlu0 %v944, 64
        %v1010 = vpop.permute.xlu0 %1009
        %1011 = vrot.lane.b32.xlu0 %v945, 64
        %v1012 = vpop.permute.xlu0 %1011
        %1013 = vrot.lane.b32.xlu0 %v946, 64
        %v1014 = vpop.permute.xlu0 %1013
        %1015 = vrot.lane.b32.xlu0 %v947, 64
        %v1016 = vpop.permute.xlu0 %1015
        %1017 = vrot.lane.b32.xlu0 %v948, 64
        %v1018 = vpop.permute.xlu0 %1017
        %1019 = vrot.lane.b32.xlu0 %v949, 64
        %v1020 = vpop.permute.xlu0 %1019
        %1021 = vrot.lane.b32.xlu0 %v950, 64
        %v1022 = vpop.permute.xlu0 %1021
        %1023 = vrot.lane.b32.xlu0 %v951, 64
        %v1024 = vpop.permute.xlu0 %1023
        %1025 = vrot.lane.b32.xlu0 %v952, 64
        %v1026 = vpop.permute.xlu0 %1025
        %1027 = vrot.lane.b32.xlu0 %v953, 64
        %v1028 = vpop.permute.xlu0 %1027
        %1029 = vrot.lane.b32.xlu0 %v954, 64
        %v1030 = vpop.permute.xlu0 %1029
        %1031 = vrot.lane.b32.xlu0 %v955, 64
        %v1032 = vpop.permute.xlu0 %1031
        %1033 = vrot.lane.b32.xlu0 %v956, 64
        %v1034 = vpop.permute.xlu0 %1033
        %1035 = vrot.lane.b32.xlu0 %v957, 64
        %v1036 = vpop.permute.xlu0 %1035
        %1037 = vrot.lane.b32.xlu0 %v958, 64
        %v1038 = vpop.permute.xlu0 %1037
        %1039 = vrot.lane.b32.xlu0 %v959, 64
        %v1040 = vpop.permute.xlu0 %1039
        %1041 = vrot.lane.b32.xlu0 %v960, 64
        %v1042 = vpop.permute.xlu0 %1041
        %1043 = vrot.lane.b32.xlu0 %v961, 64
        %v1044 = vpop.permute.xlu0 %1043
        %1045 = vrot.lane.b32.xlu0 %v962, 64
        %v1046 = vpop.permute.xlu0 %1045
        %1047 = vrot.lane.b32.xlu0 %v963, 64
        %v1048 = vpop.permute.xlu0 %1047
        %1049 = vrot.lane.b32.xlu0 %v964, 64
        %v1050 = vpop.permute.xlu0 %1049
        %1051 = vrot.lane.b32.xlu0 %v965, 64
        %v1052 = vpop.permute.xlu0 %1051
        %1053 = vrot.lane.b32.xlu0 %v966, 64
        %v1054 = vpop.permute.xlu0 %1053
        %1055 = vrot.lane.b32.xlu0 %v967, 64
        %v1056 = vpop.permute.xlu0 %1055
        %1057 = vrot.lane.b32.xlu0 %v968, 64
        %v1058 = vpop.permute.xlu0 %1057
        %1059 = vrot.lane.b32.xlu0 %v969, 64
        %v1060 = vpop.permute.xlu0 %1059
        %1061 = vrot.lane.b32.xlu0 %v970, 64
        %v1062 = vpop.permute.xlu0 %1061
        %1063 = vrot.lane.b32.xlu0 %v971, 64
        %v1064 = vpop.permute.xlu0 %1063
        %1065 = vrot.lane.b32.xlu0 %v972, 64
        %v1066 = vpop.permute.xlu0 %1065
        %1067 = vrot.lane.b32.xlu0 %v973, 64
        %v1068 = vpop.permute.xlu0 %1067
        %1069 = vrot.lane.b32.xlu0 %v974, 64
        %v1070 = vpop.permute.xlu0 %1069
        %1103 = vst.msk [vmem:[#allocation3 + $0x10] sm:$0xff] %vm590, %v1008
        %1104 = vst.msk [vmem:[#allocation3 + $0x38] sm:$0xff] %vm590, %v1010
        %1105 = vst.msk [vmem:[#allocation3 + $0x60] sm:$0xff] %vm590, %v1012
        %1106 = vst.msk [vmem:[#allocation3 + $0x88] sm:$0xff] %vm590, %v1014
        %1107 = vst.msk [vmem:[#allocation3 + $0xb0] sm:$0xff] %vm590, %v1016
        %1108 = vst.msk [vmem:[#allocation3 + $0xd8] sm:$0xff] %vm590, %v1018
        %1109 = vst.msk [vmem:[#allocation3 + $0x100] sm:$0xff] %vm590, %v1020
        %1110 = vst.msk [vmem:[#allocation3 + $0x128] sm:$0xff] %vm590, %v1022
        %1111 = vst.msk [vmem:[#allocation3 + $0x150] sm:$0xff] %vm590, %v1024
        %1112 = vst.msk [vmem:[#allocation3 + $0x178] sm:$0xff] %vm590, %v1026
        %1113 = vst.msk [vmem:[#allocation3 + $0x1a0] sm:$0xff] %vm590, %v1028
        %1114 = vst.msk [vmem:[#allocation3 + $0x1c8] sm:$0xff] %vm590, %v1030
        %1115 = vst.msk [vmem:[#allocation3 + $0x1f0] sm:$0xff] %vm590, %v1032
        %1116 = vst.msk [vmem:[#allocation3 + $0x218] sm:$0xff] %vm590, %v1034
        %1117 = vst.msk [vmem:[#allocation3 + $0x240] sm:$0xff] %vm590, %v1036
        %1118 = vst.msk [vmem:[#allocation3 + $0x268] sm:$0xff] %vm590, %v1038
        %1119 = vst.msk [vmem:[#allocation3 + $0x290] sm:$0xff] %vm590, %v1040
        %1120 = vst.msk [vmem:[#allocation3 + $0x2b8] sm:$0xff] %vm590, %v1042
        %1121 = vst.msk [vmem:[#allocation3 + $0x2e0] sm:$0xff] %vm590, %v1044
        %1122 = vst.msk [vmem:[#allocation3 + $0x308] sm:$0xff] %vm590, %v1046
        %1123 = vst.msk [vmem:[#allocation3 + $0x330] sm:$0xff] %vm590, %v1048
        %1124 = vst.msk [vmem:[#allocation3 + $0x358] sm:$0xff] %vm590, %v1050
        %1125 = vst.msk [vmem:[#allocation3 + $0x380] sm:$0xff] %vm590, %v1052
        %1126 = vst.msk [vmem:[#allocation3 + $0x3a8] sm:$0xff] %vm590, %v1054
        %1127 = vst.msk [vmem:[#allocation3 + $0x3d0] sm:$0xff] %vm590, %v1056
        %1128 = vst.msk [vmem:[#allocation3 + $0x3f8] sm:$0xff] %vm590, %v1058
        %1129 = vst.msk [vmem:[#allocation3 + $0x420] sm:$0xff] %vm590, %v1060
        %1130 = vst.msk [vmem:[#allocation3 + $0x448] sm:$0xff] %vm590, %v1062
        %1131 = vst.msk [vmem:[#allocation3 + $0x470] sm:$0xff] %vm590, %v1064
        %1132 = vst.msk [vmem:[#allocation3 + $0x498] sm:$0xff] %vm590, %v1066
        %1133 = vst.msk [vmem:[#allocation3 + $0x4c0] sm:$0xff] %vm590, %v1068
        %1134 = vst.msk [vmem:[#allocation3 + $0x4e8] sm:$0xff] %vm590, %v1070
        %s1135 = scalar_lea.vmem [#allocation2], 48
        %v1136 = vld [vmem:[%s1135] sm:$0xff]
        %v1137 = vld [vmem:[%s1135 + $0x8] sm:$0xff]
        %v1138 = vld [vmem:[%s1135 + $0x18] sm:$0xff]
        %v1139 = vld [vmem:[%s1135 + $0x20] sm:$0xff]
        %v1140 = vld [vmem:[%s1135 + $0x30] sm:$0xff]
        %v1141 = vld [vmem:[%s1135 + $0x38] sm:$0xff]
        %v1142 = vld [vmem:[%s1135 + $0x48] sm:$0xff]
        %v1143 = vld [vmem:[%s1135 + $0x50] sm:$0xff]
        %v1144 = vld [vmem:[%s1135 + $0x60] sm:$0xff]
        %v1145 = vld [vmem:[%s1135 + $0x68] sm:$0xff]
        %v1146 = vld [vmem:[%s1135 + $0x78] sm:$0xff]
        %v1147 = vld [vmem:[%s1135 + $0x80] sm:$0xff]
        %v1148 = vld [vmem:[%s1135 + $0x90] sm:$0xff]
        %v1149 = vld [vmem:[%s1135 + $0x98] sm:$0xff]
        %v1150 = vld [vmem:[%s1135 + $0xa8] sm:$0xff]
        %v1151 = vld [vmem:[%s1135 + $0xb0] sm:$0xff]
        %v1152 = vld [vmem:[%s1135 + $0xc0] sm:$0xff]
        %v1153 = vld [vmem:[%s1135 + $0xc8] sm:$0xff]
        %v1154 = vld [vmem:[%s1135 + $0xd8] sm:$0xff]
        %v1155 = vld [vmem:[%s1135 + $0xe0] sm:$0xff]
        %v1156 = vld [vmem:[%s1135 + $0xf0] sm:$0xff]
        %v1157 = vld [vmem:[%s1135 + $0xf8] sm:$0xff]
        %v1158 = vld [vmem:[%s1135 + $0x108] sm:$0xff]
        %v1159 = vld [vmem:[%s1135 + $0x110] sm:$0xff]
        %v1160 = vld [vmem:[%s1135 + $0x120] sm:$0xff]
        %v1161 = vld [vmem:[%s1135 + $0x128] sm:$0xff]
        %v1162 = vld [vmem:[%s1135 + $0x138] sm:$0xff]
        %v1163 = vld [vmem:[%s1135 + $0x140] sm:$0xff]
        %v1164 = vld [vmem:[%s1135 + $0x150] sm:$0xff]
        %v1165 = vld [vmem:[%s1135 + $0x158] sm:$0xff]
        %v1166 = vld [vmem:[%s1135 + $0x168] sm:$0xff]
        %v1167 = vld [vmem:[%s1135 + $0x170] sm:$0xff]
        %1168 = vst.msk [vmem:[#allocation3 + $0x18] sm:$0xff] %vm223, %v1136
        %1169 = vst.msk [vmem:[#allocation3 + $0x40] sm:$0xff] %vm223, %v1137
        %1170 = vst.msk [vmem:[#allocation3 + $0x68] sm:$0xff] %vm223, %v1138
        %1171 = vst.msk [vmem:[#allocation3 + $0x90] sm:$0xff] %vm223, %v1139
        %1172 = vst.msk [vmem:[#allocation3 + $0xb8] sm:$0xff] %vm223, %v1140
        %1173 = vst.msk [vmem:[#allocation3 + $0xe0] sm:$0xff] %vm223, %v1141
        %1174 = vst.msk [vmem:[#allocation3 + $0x108] sm:$0xff] %vm223, %v1142
        %1175 = vst.msk [vmem:[#allocation3 + $0x130] sm:$0xff] %vm223, %v1143
        %1176 = vst.msk [vmem:[#allocation3 + $0x158] sm:$0xff] %vm223, %v1144
        %1177 = vst.msk [vmem:[#allocation3 + $0x180] sm:$0xff] %vm223, %v1145
        %1178 = vst.msk [vmem:[#allocation3 + $0x1a8] sm:$0xff] %vm223, %v1146
        %1179 = vst.msk [vmem:[#allocation3 + $0x1d0] sm:$0xff] %vm223, %v1147
        %1180 = vst.msk [vmem:[#allocation3 + $0x1f8] sm:$0xff] %vm223, %v1148
        %1181 = vst.msk [vmem:[#allocation3 + $0x220] sm:$0xff] %vm223, %v1149
        %1182 = vst.msk [vmem:[#allocation3 + $0x248] sm:$0xff] %vm223, %v1150
        %1183 = vst.msk [vmem:[#allocation3 + $0x270] sm:$0xff] %vm223, %v1151
        %1184 = vst.msk [vmem:[#allocation3 + $0x298] sm:$0xff] %vm223, %v1152
        %1185 = vst.msk [vmem:[#allocation3 + $0x2c0] sm:$0xff] %vm223, %v1153
        %1186 = vst.msk [vmem:[#allocation3 + $0x2e8] sm:$0xff] %vm223, %v1154
        %1187 = vst.msk [vmem:[#allocation3 + $0x310] sm:$0xff] %vm223, %v1155
        %1188 = vst.msk [vmem:[#allocation3 + $0x338] sm:$0xff] %vm223, %v1156
        %1189 = vst.msk [vmem:[#allocation3 + $0x360] sm:$0xff] %vm223, %v1157
        %1190 = vst.msk [vmem:[#allocation3 + $0x388] sm:$0xff] %vm223, %v1158
        %1191 = vst.msk [vmem:[#allocation3 + $0x3b0] sm:$0xff] %vm223, %v1159
        %1192 = vst.msk [vmem:[#allocation3 + $0x3d8] sm:$0xff] %vm223, %v1160
        %1193 = vst.msk [vmem:[#allocation3 + $0x400] sm:$0xff] %vm223, %v1161
        %1194 = vst.msk [vmem:[#allocation3 + $0x428] sm:$0xff] %vm223, %v1162
        %1195 = vst.msk [vmem:[#allocation3 + $0x450] sm:$0xff] %vm223, %v1163
        %1196 = vst.msk [vmem:[#allocation3 + $0x478] sm:$0xff] %vm223, %v1164
        %1197 = vst.msk [vmem:[#allocation3 + $0x4a0] sm:$0xff] %vm223, %v1165
        %1198 = vst.msk [vmem:[#allocation3 + $0x4c8] sm:$0xff] %vm223, %v1166
        %1199 = vst.msk [vmem:[#allocation3 + $0x4f0] sm:$0xff] %vm223, %v1167
        %v1200 = vld [vmem:[%s1135 + $0x1] sm:$0xff]
        %v1201 = vld [vmem:[%s1135 + $0x9] sm:$0xff]
        %v1202 = vld [vmem:[%s1135 + $0x19] sm:$0xff]
        %v1203 = vld [vmem:[%s1135 + $0x21] sm:$0xff]
        %v1204 = vld [vmem:[%s1135 + $0x31] sm:$0xff]
        %v1205 = vld [vmem:[%s1135 + $0x39] sm:$0xff]
        %v1206 = vld [vmem:[%s1135 + $0x49] sm:$0xff]
        %v1207 = vld [vmem:[%s1135 + $0x51] sm:$0xff]
        %v1208 = vld [vmem:[%s1135 + $0x61] sm:$0xff]
        %v1209 = vld [vmem:[%s1135 + $0x69] sm:$0xff]
        %v1210 = vld [vmem:[%s1135 + $0x79] sm:$0xff]
        %v1211 = vld [vmem:[%s1135 + $0x81] sm:$0xff]
        %v1212 = vld [vmem:[%s1135 + $0x91] sm:$0xff]
        %v1213 = vld [vmem:[%s1135 + $0x99] sm:$0xff]
        %v1214 = vld [vmem:[%s1135 + $0xa9] sm:$0xff]
        %v1215 = vld [vmem:[%s1135 + $0xb1] sm:$0xff]
        %v1216 = vld [vmem:[%s1135 + $0xc1] sm:$0xff]
        %v1217 = vld [vmem:[%s1135 + $0xc9] sm:$0xff]
        %v1218 = vld [vmem:[%s1135 + $0xd9] sm:$0xff]
        %v1219 = vld [vmem:[%s1135 + $0xe1] sm:$0xff]
        %v1220 = vld [vmem:[%s1135 + $0xf1] sm:$0xff]
        %v1221 = vld [vmem:[%s1135 + $0xf9] sm:$0xff]
        %v1222 = vld [vmem:[%s1135 + $0x109] sm:$0xff]
        %v1223 = vld [vmem:[%s1135 + $0x111] sm:$0xff]
        %v1224 = vld [vmem:[%s1135 + $0x121] sm:$0xff]
        %v1225 = vld [vmem:[%s1135 + $0x129] sm:$0xff]
        %v1226 = vld [vmem:[%s1135 + $0x139] sm:$0xff]
        %v1227 = vld [vmem:[%s1135 + $0x141] sm:$0xff]
        %v1228 = vld [vmem:[%s1135 + $0x151] sm:$0xff]
        %v1229 = vld [vmem:[%s1135 + $0x159] sm:$0xff]
        %v1230 = vld [vmem:[%s1135 + $0x169] sm:$0xff]
        %v1231 = vld [vmem:[%s1135 + $0x171] sm:$0xff]
        %1264 = vrot.lane.b32.xlu0 %v1200, 64
        %v1265 = vpop.permute.xlu0 %1264
        %1266 = vrot.lane.b32.xlu0 %v1201, 64
        %v1267 = vpop.permute.xlu0 %1266
        %1268 = vrot.lane.b32.xlu0 %v1202, 64
        %v1269 = vpop.permute.xlu0 %1268
        %1270 = vrot.lane.b32.xlu0 %v1203, 64
        %v1271 = vpop.permute.xlu0 %1270
        %1272 = vrot.lane.b32.xlu0 %v1204, 64
        %v1273 = vpop.permute.xlu0 %1272
        %1274 = vrot.lane.b32.xlu0 %v1205, 64
        %v1275 = vpop.permute.xlu0 %1274
        %1276 = vrot.lane.b32.xlu0 %v1206, 64
        %v1277 = vpop.permute.xlu0 %1276
        %1278 = vrot.lane.b32.xlu0 %v1207, 64
        %v1279 = vpop.permute.xlu0 %1278
        %1280 = vrot.lane.b32.xlu0 %v1208, 64
        %v1281 = vpop.permute.xlu0 %1280
        %1282 = vrot.lane.b32.xlu0 %v1209, 64
        %v1283 = vpop.permute.xlu0 %1282
        %1284 = vrot.lane.b32.xlu0 %v1210, 64
        %v1285 = vpop.permute.xlu0 %1284
        %1286 = vrot.lane.b32.xlu0 %v1211, 64
        %v1287 = vpop.permute.xlu0 %1286
        %1288 = vrot.lane.b32.xlu0 %v1212, 64
        %v1289 = vpop.permute.xlu0 %1288
        %1290 = vrot.lane.b32.xlu0 %v1213, 64
        %v1291 = vpop.permute.xlu0 %1290
        %1292 = vrot.lane.b32.xlu0 %v1214, 64
        %v1293 = vpop.permute.xlu0 %1292
        %1294 = vrot.lane.b32.xlu0 %v1215, 64
        %v1295 = vpop.permute.xlu0 %1294
        %1296 = vrot.lane.b32.xlu0 %v1216, 64
        %v1297 = vpop.permute.xlu0 %1296
        %1298 = vrot.lane.b32.xlu0 %v1217, 64
        %v1299 = vpop.permute.xlu0 %1298
        %1300 = vrot.lane.b32.xlu0 %v1218, 64
        %v1301 = vpop.permute.xlu0 %1300
        %1302 = vrot.lane.b32.xlu0 %v1219, 64
        %v1303 = vpop.permute.xlu0 %1302
        %1304 = vrot.lane.b32.xlu0 %v1220, 64
        %v1305 = vpop.permute.xlu0 %1304
        %1306 = vrot.lane.b32.xlu0 %v1221, 64
        %v1307 = vpop.permute.xlu0 %1306
        %1308 = vrot.lane.b32.xlu0 %v1222, 64
        %v1309 = vpop.permute.xlu0 %1308
        %1310 = vrot.lane.b32.xlu0 %v1223, 64
        %v1311 = vpop.permute.xlu0 %1310
        %1312 = vrot.lane.b32.xlu0 %v1224, 64
        %v1313 = vpop.permute.xlu0 %1312
        %1314 = vrot.lane.b32.xlu0 %v1225, 64
        %v1315 = vpop.permute.xlu0 %1314
        %1316 = vrot.lane.b32.xlu0 %v1226, 64
        %v1317 = vpop.permute.xlu0 %1316
        %1318 = vrot.lane.b32.xlu0 %v1227, 64
        %v1319 = vpop.permute.xlu0 %1318
        %1320 = vrot.lane.b32.xlu0 %v1228, 64
        %v1321 = vpop.permute.xlu0 %1320
        %1322 = vrot.lane.b32.xlu0 %v1229, 64
        %v1323 = vpop.permute.xlu0 %1322
        %1324 = vrot.lane.b32.xlu0 %v1230, 64
        %v1325 = vpop.permute.xlu0 %1324
        %1326 = vrot.lane.b32.xlu0 %v1231, 64
        %v1327 = vpop.permute.xlu0 %1326
        %1360 = vst.msk [vmem:[#allocation3 + $0x18] sm:$0xff] %vm590, %v1265
        %1361 = vst.msk [vmem:[#allocation3 + $0x40] sm:$0xff] %vm590, %v1267
        %1362 = vst.msk [vmem:[#allocation3 + $0x68] sm:$0xff] %vm590, %v1269
        %1363 = vst.msk [vmem:[#allocation3 + $0x90] sm:$0xff] %vm590, %v1271
        %1364 = vst.msk [vmem:[#allocation3 + $0xb8] sm:$0xff] %vm590, %v1273
        %1365 = vst.msk [vmem:[#allocation3 + $0xe0] sm:$0xff] %vm590, %v1275
        %1366 = vst.msk [vmem:[#allocation3 + $0x108] sm:$0xff] %vm590, %v1277
        %1367 = vst.msk [vmem:[#allocation3 + $0x130] sm:$0xff] %vm590, %v1279
        %1368 = vst.msk [vmem:[#allocation3 + $0x158] sm:$0xff] %vm590, %v1281
        %1369 = vst.msk [vmem:[#allocation3 + $0x180] sm:$0xff] %vm590, %v1283
        %1370 = vst.msk [vmem:[#allocation3 + $0x1a8] sm:$0xff] %vm590, %v1285
        %1371 = vst.msk [vmem:[#allocation3 + $0x1d0] sm:$0xff] %vm590, %v1287
        %1372 = vst.msk [vmem:[#allocation3 + $0x1f8] sm:$0xff] %vm590, %v1289
        %1373 = vst.msk [vmem:[#allocation3 + $0x220] sm:$0xff] %vm590, %v1291
        %1374 = vst.msk [vmem:[#allocation3 + $0x248] sm:$0xff] %vm590, %v1293
        %1375 = vst.msk [vmem:[#allocation3 + $0x270] sm:$0xff] %vm590, %v1295
        %1376 = vst.msk [vmem:[#allocation3 + $0x298] sm:$0xff] %vm590, %v1297
        %1377 = vst.msk [vmem:[#allocation3 + $0x2c0] sm:$0xff] %vm590, %v1299
        %1378 = vst.msk [vmem:[#allocation3 + $0x2e8] sm:$0xff] %vm590, %v1301
        %1379 = vst.msk [vmem:[#allocation3 + $0x310] sm:$0xff] %vm590, %v1303
        %1380 = vst.msk [vmem:[#allocation3 + $0x338] sm:$0xff] %vm590, %v1305
        %1381 = vst.msk [vmem:[#allocation3 + $0x360] sm:$0xff] %vm590, %v1307
        %1382 = vst.msk [vmem:[#allocation3 + $0x388] sm:$0xff] %vm590, %v1309
        %1383 = vst.msk [vmem:[#allocation3 + $0x3b0] sm:$0xff] %vm590, %v1311
        %1384 = vst.msk [vmem:[#allocation3 + $0x3d8] sm:$0xff] %vm590, %v1313
        %1385 = vst.msk [vmem:[#allocation3 + $0x400] sm:$0xff] %vm590, %v1315
        %1386 = vst.msk [vmem:[#allocation3 + $0x428] sm:$0xff] %vm590, %v1317
        %1387 = vst.msk [vmem:[#allocation3 + $0x450] sm:$0xff] %vm590, %v1319
        %1388 = vst.msk [vmem:[#allocation3 + $0x478] sm:$0xff] %vm590, %v1321
        %1389 = vst.msk [vmem:[#allocation3 + $0x4a0] sm:$0xff] %vm590, %v1323
        %1390 = vst.msk [vmem:[#allocation3 + $0x4c8] sm:$0xff] %vm590, %v1325
        %1391 = vst.msk [vmem:[#allocation3 + $0x4f0] sm:$0xff] %vm590, %v1327
        %v1392 = vld [vmem:[%s1135 + $0x2] sm:$0xff]
        %v1393 = vld [vmem:[%s1135 + $0xa] sm:$0xff]
        %v1394 = vld [vmem:[%s1135 + $0x1a] sm:$0xff]
        %v1395 = vld [vmem:[%s1135 + $0x22] sm:$0xff]
        %v1396 = vld [vmem:[%s1135 + $0x32] sm:$0xff]
        %v1397 = vld [vmem:[%s1135 + $0x3a] sm:$0xff]
        %v1398 = vld [vmem:[%s1135 + $0x4a] sm:$0xff]
        %v1399 = vld [vmem:[%s1135 + $0x52] sm:$0xff]
        %v1400 = vld [vmem:[%s1135 + $0x62] sm:$0xff]
        %v1401 = vld [vmem:[%s1135 + $0x6a] sm:$0xff]
        %v1402 = vld [vmem:[%s1135 + $0x7a] sm:$0xff]
        %v1403 = vld [vmem:[%s1135 + $0x82] sm:$0xff]
        %v1404 = vld [vmem:[%s1135 + $0x92] sm:$0xff]
        %v1405 = vld [vmem:[%s1135 + $0x9a] sm:$0xff]
        %v1406 = vld [vmem:[%s1135 + $0xaa] sm:$0xff]
        %v1407 = vld [vmem:[%s1135 + $0xb2] sm:$0xff]
        %v1408 = vld [vmem:[%s1135 + $0xc2] sm:$0xff]
        %v1409 = vld [vmem:[%s1135 + $0xca] sm:$0xff]
        %v1410 = vld [vmem:[%s1135 + $0xda] sm:$0xff]
        %v1411 = vld [vmem:[%s1135 + $0xe2] sm:$0xff]
        %v1412 = vld [vmem:[%s1135 + $0xf2] sm:$0xff]
        %v1413 = vld [vmem:[%s1135 + $0xfa] sm:$0xff]
        %v1414 = vld [vmem:[%s1135 + $0x10a] sm:$0xff]
        %v1415 = vld [vmem:[%s1135 + $0x112] sm:$0xff]
        %v1416 = vld [vmem:[%s1135 + $0x122] sm:$0xff]
        %v1417 = vld [vmem:[%s1135 + $0x12a] sm:$0xff]
        %v1418 = vld [vmem:[%s1135 + $0x13a] sm:$0xff]
        %v1419 = vld [vmem:[%s1135 + $0x142] sm:$0xff]
        %v1420 = vld [vmem:[%s1135 + $0x152] sm:$0xff]
        %v1421 = vld [vmem:[%s1135 + $0x15a] sm:$0xff]
        %v1422 = vld [vmem:[%s1135 + $0x16a] sm:$0xff]
        %v1423 = vld [vmem:[%s1135 + $0x172] sm:$0xff]
        %1424 = vst.msk [vmem:[#allocation3 + $0x20] sm:$0xff] %vm223, %v1392
        %1425 = vst.msk [vmem:[#allocation3 + $0x48] sm:$0xff] %vm223, %v1393
        %1426 = vst.msk [vmem:[#allocation3 + $0x70] sm:$0xff] %vm223, %v1394
        %1427 = vst.msk [vmem:[#allocation3 + $0x98] sm:$0xff] %vm223, %v1395
        %1428 = vst.msk [vmem:[#allocation3 + $0xc0] sm:$0xff] %vm223, %v1396
        %1429 = vst.msk [vmem:[#allocation3 + $0xe8] sm:$0xff] %vm223, %v1397
        %1430 = vst.msk [vmem:[#allocation3 + $0x110] sm:$0xff] %vm223, %v1398
        %1431 = vst.msk [vmem:[#allocation3 + $0x138] sm:$0xff] %vm223, %v1399
        %1432 = vst.msk [vmem:[#allocation3 + $0x160] sm:$0xff] %vm223, %v1400
        %1433 = vst.msk [vmem:[#allocation3 + $0x188] sm:$0xff] %vm223, %v1401
        %1434 = vst.msk [vmem:[#allocation3 + $0x1b0] sm:$0xff] %vm223, %v1402
        %1435 = vst.msk [vmem:[#allocation3 + $0x1d8] sm:$0xff] %vm223, %v1403
        %1436 = vst.msk [vmem:[#allocation3 + $0x200] sm:$0xff] %vm223, %v1404
        %1437 = vst.msk [vmem:[#allocation3 + $0x228] sm:$0xff] %vm223, %v1405
        %1438 = vst.msk [vmem:[#allocation3 + $0x250] sm:$0xff] %vm223, %v1406
        %1439 = vst.msk [vmem:[#allocation3 + $0x278] sm:$0xff] %vm223, %v1407
        %1440 = vst.msk [vmem:[#allocation3 + $0x2a0] sm:$0xff] %vm223, %v1408
        %1441 = vst.msk [vmem:[#allocation3 + $0x2c8] sm:$0xff] %vm223, %v1409
        %1442 = vst.msk [vmem:[#allocation3 + $0x2f0] sm:$0xff] %vm223, %v1410
        %1443 = vst.msk [vmem:[#allocation3 + $0x318] sm:$0xff] %vm223, %v1411
        %1444 = vst.msk [vmem:[#allocation3 + $0x340] sm:$0xff] %vm223, %v1412
        %1445 = vst.msk [vmem:[#allocation3 + $0x368] sm:$0xff] %vm223, %v1413
        %1446 = vst.msk [vmem:[#allocation3 + $0x390] sm:$0xff] %vm223, %v1414
        %1447 = vst.msk [vmem:[#allocation3 + $0x3b8] sm:$0xff] %vm223, %v1415
        %1448 = vst.msk [vmem:[#allocation3 + $0x3e0] sm:$0xff] %vm223, %v1416
        %1449 = vst.msk [vmem:[#allocation3 + $0x408] sm:$0xff] %vm223, %v1417
        %1450 = vst.msk [vmem:[#allocation3 + $0x430] sm:$0xff] %vm223, %v1418
        %1451 = vst.msk [vmem:[#allocation3 + $0x458] sm:$0xff] %vm223, %v1419
        %1452 = vst.msk [vmem:[#allocation3 + $0x480] sm:$0xff] %vm223, %v1420
        %1453 = vst.msk [vmem:[#allocation3 + $0x4a8] sm:$0xff] %vm223, %v1421
        %1454 = vst.msk [vmem:[#allocation3 + $0x4d0] sm:$0xff] %vm223, %v1422
        %1455 = vst.msk [vmem:[#allocation3 + $0x4f8] sm:$0xff] %vm223, %v1423
        %v1456 = vld [vmem:[#allocation3] sm:$0xff]
        %v1457 = vld [vmem:[#allocation3 + $0x8] sm:$0xff]
        %v1458 = vld [vmem:[#allocation3 + $0x10] sm:$0xff]
        %v1459 = vld [vmem:[#allocation3 + $0x18] sm:$0xff]
        %v1460 = vld [vmem:[#allocation3 + $0x20] sm:$0xff]
        %v1461 = vld [vmem:[#allocation3 + $0x28] sm:$0xff]
        %v1462 = vld [vmem:[#allocation3 + $0x30] sm:$0xff]
        %v1463 = vld [vmem:[#allocation3 + $0x38] sm:$0xff]
        %v1464 = vld [vmem:[#allocation3 + $0x40] sm:$0xff]
        %v1465 = vld [vmem:[#allocation3 + $0x48] sm:$0xff]
        %v1466 = vld [vmem:[#allocation3 + $0x50] sm:$0xff]
        %v1467 = vld [vmem:[#allocation3 + $0x58] sm:$0xff]
        %v1468 = vld [vmem:[#allocation3 + $0x60] sm:$0xff]
        %v1469 = vld [vmem:[#allocation3 + $0x68] sm:$0xff]
        %v1470 = vld [vmem:[#allocation3 + $0x70] sm:$0xff]
        %v1471 = vld [vmem:[#allocation3 + $0x78] sm:$0xff]
        %v1472 = vld [vmem:[#allocation3 + $0x80] sm:$0xff]
        %v1473 = vld [vmem:[#allocation3 + $0x88] sm:$0xff]
        %v1474 = vld [vmem:[#allocation3 + $0x90] sm:$0xff]
        %v1475 = vld [vmem:[#allocation3 + $0x98] sm:$0xff]
        %v1476 = vld [vmem:[#allocation3 + $0xa0] sm:$0xff]
        %v1477 = vld [vmem:[#allocation3 + $0xa8] sm:$0xff]
        %v1478 = vld [vmem:[#allocation3 + $0xb0] sm:$0xff]
        %v1479 = vld [vmem:[#allocation3 + $0xb8] sm:$0xff]
        %v1480 = vld [vmem:[#allocation3 + $0xc0] sm:$0xff]
        %v1481 = vld [vmem:[#allocation3 + $0xc8] sm:$0xff]
        %v1482 = vld [vmem:[#allocation3 + $0xd0] sm:$0xff]
        %v1483 = vld [vmem:[#allocation3 + $0xd8] sm:$0xff]
        %v1484 = vld [vmem:[#allocation3 + $0xe0] sm:$0xff]
        %v1485 = vld [vmem:[#allocation3 + $0xe8] sm:$0xff]
        %v1486 = vld [vmem:[#allocation3 + $0xf0] sm:$0xff]
        %v1487 = vld [vmem:[#allocation3 + $0xf8] sm:$0xff]
        %v1488 = vld [vmem:[#allocation3 + $0x100] sm:$0xff]
        %v1489 = vld [vmem:[#allocation3 + $0x108] sm:$0xff]
        %v1490 = vld [vmem:[#allocation3 + $0x110] sm:$0xff]
        %v1491 = vld [vmem:[#allocation3 + $0x118] sm:$0xff]
        %v1492 = vld [vmem:[#allocation3 + $0x120] sm:$0xff]
        %v1493 = vld [vmem:[#allocation3 + $0x128] sm:$0xff]
        %v1494 = vld [vmem:[#allocation3 + $0x130] sm:$0xff]
        %v1495 = vld [vmem:[#allocation3 + $0x138] sm:$0xff]
        %v1496 = vld [vmem:[#allocation3 + $0x140] sm:$0xff]
        %v1497 = vld [vmem:[#allocation3 + $0x148] sm:$0xff]
        %v1498 = vld [vmem:[#allocation3 + $0x150] sm:$0xff]
        %v1499 = vld [vmem:[#allocation3 + $0x158] sm:$0xff]
        %v1500 = vld [vmem:[#allocation3 + $0x160] sm:$0xff]
        %v1501 = vld [vmem:[#allocation3 + $0x168] sm:$0xff]
        %v1502 = vld [vmem:[#allocation3 + $0x170] sm:$0xff]
        %v1503 = vld [vmem:[#allocation3 + $0x178] sm:$0xff]
        %v1504 = vld [vmem:[#allocation3 + $0x180] sm:$0xff]
        %v1505 = vld [vmem:[#allocation3 + $0x188] sm:$0xff]
        %v1506 = vld [vmem:[#allocation3 + $0x190] sm:$0xff]
        %v1507 = vld [vmem:[#allocation3 + $0x198] sm:$0xff]
        %v1508 = vld [vmem:[#allocation3 + $0x1a0] sm:$0xff]
        %v1509 = vld [vmem:[#allocation3 + $0x1a8] sm:$0xff]
        %v1510 = vld [vmem:[#allocation3 + $0x1b0] sm:$0xff]
        %v1511 = vld [vmem:[#allocation3 + $0x1b8] sm:$0xff]
        %v1512 = vld [vmem:[#allocation3 + $0x1c0] sm:$0xff]
        %v1513 = vld [vmem:[#allocation3 + $0x1c8] sm:$0xff]
        %v1514 = vld [vmem:[#allocation3 + $0x1d0] sm:$0xff]
        %v1515 = vld [vmem:[#allocation3 + $0x1d8] sm:$0xff]
        %v1516 = vld [vmem:[#allocation3 + $0x1e0] sm:$0xff]
        %v1517 = vld [vmem:[#allocation3 + $0x1e8] sm:$0xff]
        %v1518 = vld [vmem:[#allocation3 + $0x1f0] sm:$0xff]
        %v1519 = vld [vmem:[#allocation3 + $0x1f8] sm:$0xff]
        %v1520 = vld [vmem:[#allocation3 + $0x200] sm:$0xff]
        %v1521 = vld [vmem:[#allocation3 + $0x208] sm:$0xff]
        %v1522 = vld [vmem:[#allocation3 + $0x210] sm:$0xff]
        %v1523 = vld [vmem:[#allocation3 + $0x218] sm:$0xff]
        %v1524 = vld [vmem:[#allocation3 + $0x220] sm:$0xff]
        %v1525 = vld [vmem:[#allocation3 + $0x228] sm:$0xff]
        %v1526 = vld [vmem:[#allocation3 + $0x230] sm:$0xff]
        %v1527 = vld [vmem:[#allocation3 + $0x238] sm:$0xff]
        %v1528 = vld [vmem:[#allocation3 + $0x240] sm:$0xff]
        %v1529 = vld [vmem:[#allocation3 + $0x248] sm:$0xff]
        %v1530 = vld [vmem:[#allocation3 + $0x250] sm:$0xff]
        %v1531 = vld [vmem:[#allocation3 + $0x258] sm:$0xff]
        %v1532 = vld [vmem:[#allocation3 + $0x260] sm:$0xff]
        %v1533 = vld [vmem:[#allocation3 + $0x268] sm:$0xff]
        %v1534 = vld [vmem:[#allocation3 + $0x270] sm:$0xff]
        %v1535 = vld [vmem:[#allocation3 + $0x278] sm:$0xff]
        %v1536 = vld [vmem:[#allocation3 + $0x280] sm:$0xff]
        %v1537 = vld [vmem:[#allocation3 + $0x288] sm:$0xff]
        %v1538 = vld [vmem:[#allocation3 + $0x290] sm:$0xff]
        %v1539 = vld [vmem:[#allocation3 + $0x298] sm:$0xff]
        %v1540 = vld [vmem:[#allocation3 + $0x2a0] sm:$0xff]
        %v1541 = vld [vmem:[#allocation3 + $0x2a8] sm:$0xff]
        %v1542 = vld [vmem:[#allocation3 + $0x2b0] sm:$0xff]
        %v1543 = vld [vmem:[#allocation3 + $0x2b8] sm:$0xff]
        %v1544 = vld [vmem:[#allocation3 + $0x2c0] sm:$0xff]
        %v1545 = vld [vmem:[#allocation3 + $0x2c8] sm:$0xff]
        %v1546 = vld [vmem:[#allocation3 + $0x2d0] sm:$0xff]
        %v1547 = vld [vmem:[#allocation3 + $0x2d8] sm:$0xff]
        %v1548 = vld [vmem:[#allocation3 + $0x2e0] sm:$0xff]
        %v1549 = vld [vmem:[#allocation3 + $0x2e8] sm:$0xff]
        %v1550 = vld [vmem:[#allocation3 + $0x2f0] sm:$0xff]
        %v1551 = vld [vmem:[#allocation3 + $0x2f8] sm:$0xff]
        %v1552 = vld [vmem:[#allocation3 + $0x300] sm:$0xff]
        %v1553 = vld [vmem:[#allocation3 + $0x308] sm:$0xff]
        %v1554 = vld [vmem:[#allocation3 + $0x310] sm:$0xff]
        %v1555 = vld [vmem:[#allocation3 + $0x318] sm:$0xff]
        %v1556 = vld [vmem:[#allocation3 + $0x320] sm:$0xff]
        %v1557 = vld [vmem:[#allocation3 + $0x328] sm:$0xff]
        %v1558 = vld [vmem:[#allocation3 + $0x330] sm:$0xff]
        %v1559 = vld [vmem:[#allocation3 + $0x338] sm:$0xff]
        %v1560 = vld [vmem:[#allocation3 + $0x340] sm:$0xff]
        %v1561 = vld [vmem:[#allocation3 + $0x348] sm:$0xff]
        %v1562 = vld [vmem:[#allocation3 + $0x350] sm:$0xff]
        %v1563 = vld [vmem:[#allocation3 + $0x358] sm:$0xff]
        %v1564 = vld [vmem:[#allocation3 + $0x360] sm:$0xff]
        %v1565 = vld [vmem:[#allocation3 + $0x368] sm:$0xff]
        %v1566 = vld [vmem:[#allocation3 + $0x370] sm:$0xff]
        %v1567 = vld [vmem:[#allocation3 + $0x378] sm:$0xff]
        %v1568 = vld [vmem:[#allocation3 + $0x380] sm:$0xff]
        %v1569 = vld [vmem:[#allocation3 + $0x388] sm:$0xff]
        %v1570 = vld [vmem:[#allocation3 + $0x390] sm:$0xff]
        %v1571 = vld [vmem:[#allocation3 + $0x398] sm:$0xff]
        %v1572 = vld [vmem:[#allocation3 + $0x3a0] sm:$0xff]
        %v1573 = vld [vmem:[#allocation3 + $0x3a8] sm:$0xff]
        %v1574 = vld [vmem:[#allocation3 + $0x3b0] sm:$0xff]
        %v1575 = vld [vmem:[#allocation3 + $0x3b8] sm:$0xff]
        %v1576 = vld [vmem:[#allocation3 + $0x3c0] sm:$0xff]
        %v1577 = vld [vmem:[#allocation3 + $0x3c8] sm:$0xff]
        %v1578 = vld [vmem:[#allocation3 + $0x3d0] sm:$0xff]
        %v1579 = vld [vmem:[#allocation3 + $0x3d8] sm:$0xff]
        %v1580 = vld [vmem:[#allocation3 + $0x3e0] sm:$0xff]
        %v1581 = vld [vmem:[#allocation3 + $0x3e8] sm:$0xff]
        %v1582 = vld [vmem:[#allocation3 + $0x3f0] sm:$0xff]
        %v1583 = vld [vmem:[#allocation3 + $0x3f8] sm:$0xff]
        %v1584 = vld [vmem:[#allocation3 + $0x400] sm:$0xff]
        %v1585 = vld [vmem:[#allocation3 + $0x408] sm:$0xff]
        %v1586 = vld [vmem:[#allocation3 + $0x410] sm:$0xff]
        %v1587 = vld [vmem:[#allocation3 + $0x418] sm:$0xff]
        %v1588 = vld [vmem:[#allocation3 + $0x420] sm:$0xff]
        %v1589 = vld [vmem:[#allocation3 + $0x428] sm:$0xff]
        %v1590 = vld [vmem:[#allocation3 + $0x430] sm:$0xff]
        %v1591 = vld [vmem:[#allocation3 + $0x438] sm:$0xff]
        %v1592 = vld [vmem:[#allocation3 + $0x440] sm:$0xff]
        %v1593 = vld [vmem:[#allocation3 + $0x448] sm:$0xff]
        %v1594 = vld [vmem:[#allocation3 + $0x450] sm:$0xff]
        %v1595 = vld [vmem:[#allocation3 + $0x458] sm:$0xff]
        %v1596 = vld [vmem:[#allocation3 + $0x460] sm:$0xff]
        %v1597 = vld [vmem:[#allocation3 + $0x468] sm:$0xff]
        %v1598 = vld [vmem:[#allocation3 + $0x470] sm:$0xff]
        %v1599 = vld [vmem:[#allocation3 + $0x478] sm:$0xff]
        %v1600 = vld [vmem:[#allocation3 + $0x480] sm:$0xff]
        %v1601 = vld [vmem:[#allocation3 + $0x488] sm:$0xff]
        %v1602 = vld [vmem:[#allocation3 + $0x490] sm:$0xff]
        %v1603 = vld [vmem:[#allocation3 + $0x498] sm:$0xff]
        %v1604 = vld [vmem:[#allocation3 + $0x4a0] sm:$0xff]
        %v1605 = vld [vmem:[#allocation3 + $0x4a8] sm:$0xff]
        %v1606 = vld [vmem:[#allocation3 + $0x4b0] sm:$0xff]
        %v1607 = vld [vmem:[#allocation3 + $0x4b8] sm:$0xff]
        %v1608 = vld [vmem:[#allocation3 + $0x4c0] sm:$0xff]
        %v1609 = vld [vmem:[#allocation3 + $0x4c8] sm:$0xff]
        %v1610 = vld [vmem:[#allocation3 + $0x4d0] sm:$0xff]
        %v1611 = vld [vmem:[#allocation3 + $0x4d8] sm:$0xff]
        %v1612 = vld [vmem:[#allocation3 + $0x4e0] sm:$0xff]
        %v1613 = vld [vmem:[#allocation3 + $0x4e8] sm:$0xff]
        %v1614 = vld [vmem:[#allocation3 + $0x4f0] sm:$0xff]
        %v1615 = vld [vmem:[#allocation3 + $0x4f8] sm:$0xff]
        %v1616 = vld [vmem:[%s1] sm:$0xff]
        %v1617 = vld [vmem:[%s1 + $0x8] sm:$0xff]
        %v1618 = vld [vmem:[%s1 + $0x10] sm:$0xff]
        %v1619 = vld [vmem:[%s1 + $0x18] sm:$0xff]
        %v1620 = vld [vmem:[%s1 + $0x20] sm:$0xff]
        %v1621 = vld [vmem:[%s1 + $0x28] sm:$0xff]
        %v1622 = vld [vmem:[%s1 + $0x30] sm:$0xff]
        %v1623 = vld [vmem:[%s1 + $0x38] sm:$0xff]
        %v1624 = vld [vmem:[%s1 + $0x40] sm:$0xff]
        %v1625 = vld [vmem:[%s1 + $0x48] sm:$0xff]
        %v1626 = vld [vmem:[%s1 + $0x50] sm:$0xff]
        %v1627 = vld [vmem:[%s1 + $0x58] sm:$0xff]
        %v1628 = vld [vmem:[%s1 + $0x60] sm:$0xff]
        %v1629 = vld [vmem:[%s1 + $0x68] sm:$0xff]
        %v1630 = vld [vmem:[%s1 + $0x70] sm:$0xff]
        %v1631 = vld [vmem:[%s1 + $0x78] sm:$0xff]
        %v1632 = vld [vmem:[%s1 + $0x80] sm:$0xff]
        %v1633 = vld [vmem:[%s1 + $0x88] sm:$0xff]
        %v1634 = vld [vmem:[%s1 + $0x90] sm:$0xff]
        %v1635 = vld [vmem:[%s1 + $0x98] sm:$0xff]
        %v1636 = vld [vmem:[%s1 + $0xa0] sm:$0xff]
        %v1637 = vld [vmem:[%s1 + $0xa8] sm:$0xff]
        %v1638 = vld [vmem:[%s1 + $0xb0] sm:$0xff]
        %v1639 = vld [vmem:[%s1 + $0xb8] sm:$0xff]
        %v1640 = vld [vmem:[%s1 + $0xc0] sm:$0xff]
        %v1641 = vld [vmem:[%s1 + $0xc8] sm:$0xff]
        %v1642 = vld [vmem:[%s1 + $0xd0] sm:$0xff]
        %v1643 = vld [vmem:[%s1 + $0xd8] sm:$0xff]
        %v1644 = vld [vmem:[%s1 + $0xe0] sm:$0xff]
        %v1645 = vld [vmem:[%s1 + $0xe8] sm:$0xff]
        %v1646 = vld [vmem:[%s1 + $0xf0] sm:$0xff]
        %v1647 = vld [vmem:[%s1 + $0xf8] sm:$0xff]
        %v1648 = vld [vmem:[%s1 + $0x100] sm:$0xff]
        %v1649 = vld [vmem:[%s1 + $0x108] sm:$0xff]
        %v1650 = vld [vmem:[%s1 + $0x110] sm:$0xff]
        %v1651 = vld [vmem:[%s1 + $0x118] sm:$0xff]
        %v1652 = vld [vmem:[%s1 + $0x120] sm:$0xff]
        %v1653 = vld [vmem:[%s1 + $0x128] sm:$0xff]
        %v1654 = vld [vmem:[%s1 + $0x130] sm:$0xff]
        %v1655 = vld [vmem:[%s1 + $0x138] sm:$0xff]
        %v1656 = vld [vmem:[%s1 + $0x140] sm:$0xff]
        %v1657 = vld [vmem:[%s1 + $0x148] sm:$0xff]
        %v1658 = vld [vmem:[%s1 + $0x150] sm:$0xff]
        %v1659 = vld [vmem:[%s1 + $0x158] sm:$0xff]
        %v1660 = vld [vmem:[%s1 + $0x160] sm:$0xff]
        %v1661 = vld [vmem:[%s1 + $0x168] sm:$0xff]
        %v1662 = vld [vmem:[%s1 + $0x170] sm:$0xff]
        %v1663 = vld [vmem:[%s1 + $0x178] sm:$0xff]
        %v1664 = vld [vmem:[%s1 + $0x180] sm:$0xff]
        %v1665 = vld [vmem:[%s1 + $0x188] sm:$0xff]
        %v1666 = vld [vmem:[%s1 + $0x190] sm:$0xff]
        %v1667 = vld [vmem:[%s1 + $0x198] sm:$0xff]
        %v1668 = vld [vmem:[%s1 + $0x1a0] sm:$0xff]
        %v1669 = vld [vmem:[%s1 + $0x1a8] sm:$0xff]
        %v1670 = vld [vmem:[%s1 + $0x1b0] sm:$0xff]
        %v1671 = vld [vmem:[%s1 + $0x1b8] sm:$0xff]
        %v1672 = vld [vmem:[%s1 + $0x1c0] sm:$0xff]
        %v1673 = vld [vmem:[%s1 + $0x1c8] sm:$0xff]
        %v1674 = vld [vmem:[%s1 + $0x1d0] sm:$0xff]
        %v1675 = vld [vmem:[%s1 + $0x1d8] sm:$0xff]
        %v1676 = vld [vmem:[%s1 + $0x1e0] sm:$0xff]
        %v1677 = vld [vmem:[%s1 + $0x1e8] sm:$0xff]
        %v1678 = vld [vmem:[%s1 + $0x1f0] sm:$0xff]
        %v1679 = vld [vmem:[%s1 + $0x1f8] sm:$0xff]
        %v1680 = vld [vmem:[%s1 + $0x200] sm:$0xff]
        %v1681 = vld [vmem:[%s1 + $0x208] sm:$0xff]
        %v1682 = vld [vmem:[%s1 + $0x210] sm:$0xff]
        %v1683 = vld [vmem:[%s1 + $0x218] sm:$0xff]
        %v1684 = vld [vmem:[%s1 + $0x220] sm:$0xff]
        %v1685 = vld [vmem:[%s1 + $0x228] sm:$0xff]
        %v1686 = vld [vmem:[%s1 + $0x230] sm:$0xff]
        %v1687 = vld [vmem:[%s1 + $0x238] sm:$0xff]
        %v1688 = vld [vmem:[%s2] sm:$0x1]
        %v1690 = vlaneseq
        %v1691 = vshrl.u32 %v1690, 7
        %v1692 = vsub.s32 0, %v1691
        %v1693 = vrot.slane %v1688, %v1692
        %v1696 = vsel %vm223, %v1460, 0
        %v1699 = vsel %vm223, %v1465, 0
        %v1702 = vsel %vm223, %v1470, 0
        %v1705 = vsel %vm223, %v1475, 0
        %v1708 = vsel %vm223, %v1480, 0
        %v1711 = vsel %vm223, %v1485, 0
        %v1714 = vsel %vm223, %v1490, 0
        %v1717 = vsel %vm223, %v1495, 0
        %v1720 = vsel %vm223, %v1500, 0
        %v1723 = vsel %vm223, %v1505, 0
        %v1726 = vsel %vm223, %v1510, 0
        %v1729 = vsel %vm223, %v1515, 0
        %v1732 = vsel %vm223, %v1520, 0
        %v1735 = vsel %vm223, %v1525, 0
        %v1738 = vsel %vm223, %v1530, 0
        %v1741 = vsel %vm223, %v1535, 0
        %v1744 = vsel %vm223, %v1540, 0
        %v1747 = vsel %vm223, %v1545, 0
        %v1750 = vsel %vm223, %v1550, 0
        %v1753 = vsel %vm223, %v1555, 0
        %v1756 = vsel %vm223, %v1560, 0
        %v1759 = vsel %vm223, %v1565, 0
        %v1762 = vsel %vm223, %v1570, 0
        %v1765 = vsel %vm223, %v1575, 0
        %v1768 = vsel %vm223, %v1580, 0
        %v1771 = vsel %vm223, %v1585, 0
        %v1774 = vsel %vm223, %v1590, 0
        %v1777 = vsel %vm223, %v1595, 0
        %v1780 = vsel %vm223, %v1600, 0
        %v1783 = vsel %vm223, %v1605, 0
        %v1786 = vsel %vm223, %v1610, 0
        %v1789 = vsel %vm223, %v1615, 0
        %1791 = vmatprep.subr.mxu0 0.0
        %1792 = vmatpush1.msra.mxu0 %v1616
        %1793 = vmatprep.subr.mxu0 0.0
        %1794 = vmatpush1.msra.mxu0 %v1617
        %1795 = vmatprep.subr.mxu0 0.0
        %1796 = vmatpush1.msra.mxu0 %v1618
        %1797 = vmatprep.subr.mxu0 0.0
        %1798 = vmatpush1.msra.mxu0 %v1619
        %1799 = vmatprep.subr.mxu0 0.0
        %1800 = vmatpush1.msra.mxu0 %v1620
        %1801 = vmatprep.subr.mxu0 0.0
        %1802 = vmatpush1.msra.mxu0 %v1621
        %1803 = vmatprep.subr.mxu0 0.0
        %1804 = vmatpush1.msra.mxu0 %v1622
        %1805 = vmatprep.subr.mxu0 0.0
        %1806 = vmatpush1.msra.mxu0 %v1623
        %1807 = vmatprep.subr.mxu0 0.0
        %1808 = vmatpush1.msra.mxu0 %v1624
        %1809 = vmatprep.subr.mxu0 0.0
        %1810 = vmatpush1.msra.mxu0 %v1625
        %1811 = vmatprep.subr.mxu0 0.0
        %1812 = vmatpush1.msra.mxu0 %v1626
        %1813 = vmatprep.subr.mxu0 0.0
        %1814 = vmatpush1.msra.mxu0 %v1627
        %1815 = vmatprep.subr.mxu0 0.0
        %1816 = vmatpush1.msra.mxu0 %v1628
        %1817 = vmatprep.subr.mxu0 0.0
        %1818 = vmatpush1.msra.mxu0 %v1629
        %1819 = vmatprep.subr.mxu0 0.0
        %1820 = vmatpush1.msra.mxu0 %v1630
        %1821 = vmatprep.subr.mxu0 0.0
        %1822 = vmatpush1.msra.mxu0 %v1631
        %1823 = vmatprep.subr.mxu0 0.0
        %1824 = vmatpush1.msra.mxu0 %v1632
        %1825 = vmatprep.subr.mxu0 0.0
        %1826 = vmatpush1.msra.mxu0 %v1633
        %1827 = vmatprep.subr.mxu0 0.0
        %1828 = vmatpush1.msra.mxu0 %v1634
        %1829 = vmatprep.subr.mxu0 0.0
        %1830 = vmatpush1.msra.mxu0 %v1635
        %1831 = vmatprep.subr.mxu0 0.0
        %1832 = vmatpush1.msra.mxu0 %v1636
        %1833 = vmatprep.subr.mxu0 0.0
        %1834 = vmatpush1.msra.mxu0 %v1637
        %1835 = vmatprep.subr.mxu0 0.0
        %1836 = vmatpush1.msra.mxu0 %v1638
        %1837 = vmatprep.subr.mxu0 0.0
        %1838 = vmatpush1.msra.mxu0 %v1639
        %1839 = vmatprep.subr.mxu0 0.0
        %1840 = vmatpush1.msra.mxu0 %v1640
        %1841 = vmatprep.subr.mxu0 0.0
        %1842 = vmatpush1.msra.mxu0 %v1641
        %1843 = vmatprep.subr.mxu0 0.0
        %1844 = vmatpush1.msra.mxu0 %v1642
        %1845 = vmatprep.subr.mxu0 0.0
        %1846 = vmatpush1.msra.mxu0 %v1643
        %1847 = vmatprep.subr.mxu0 0.0
        %1848 = vmatpush1.msra.mxu0 %v1644
        %1849 = vmatprep.subr.mxu0 0.0
        %1850 = vmatpush1.msra.mxu0 %v1645
        %1851 = vmatprep.subr.mxu0 0.0
        %1852 = vmatpush1.msra.mxu0 %v1646
        %1853 = vmatprep.subr.mxu0 0.0
        %1854 = vmatpush1.msra.mxu0 %v1647
        %1855 = vmatprep.mubr.f32.mxu0 %v1457
        %1856 = vmatmul.mubr.f32.gmra.mrb[0].mxu0 %v1456
        %v1857 = vpop.f32.mrb[0].mxu0
        %v1858 = vadd.f32 %v1693, %v1857
        %v1859 = vpop.f32.mrb[0].mxu0
        %1860 = vmatprep.mubr.f32.mxu0 %v1462
        %1861 = vmatmul.mubr.f32.gmra.mrb[0].mxu0 %v1461
        %v1862 = vpop.f32.mrb[0].mxu0
        %v1863 = vadd.f32 %v1693, %v1862
        %v1864 = vpop.f32.mrb[0].mxu0
        %1865 = vmatprep.mubr.f32.mxu0 %v1467
        %1866 = vmatmul.mubr.f32.gmra.mrb[0].mxu0 %v1466
        %v1867 = vpop.f32.mrb[0].mxu0
        %v1868 = vadd.f32 %v1693, %v1867
        %v1869 = vpop.f32.mrb[0].mxu0
        %1870 = vmatprep.mubr.f32.mxu0 %v1472
        %1871 = vmatmul.mubr.f32.gmra.mrb[0].mxu0 %v1471
        %v1872 = vpop.f32.mrb[0].mxu0
        %v1873 = vadd.f32 %v1693, %v1872
        %v1874 = vpop.f32.mrb[0].mxu0
        %1875 = vmatprep.mubr.f32.mxu0 %v1477
        %1876 = vmatmul.mubr.f32.gmra.mrb[0].mxu0 %v1476
        %v1877 = vpop.f32.mrb[0].mxu0
        %v1878 = vadd.f32 %v1693, %v1877
        %v1879 = vpop.f32.mrb[0].mxu0
        %1880 = vmatprep.mubr.f32.mxu0 %v1482
        %1881 = vmatmul.mubr.f32.gmra.mrb[0].mxu0 %v1481
        %v1882 = vpop.f32.mrb[0].mxu0
        %v1883 = vadd.f32 %v1693, %v1882
        %v1884 = vpop.f32.mrb[0].mxu0
        %1885 = vmatprep.mubr.f32.mxu0 %v1487
        %1886 = vmatmul.mubr.f32.gmra.mrb[0].mxu0 %v1486
        %v1887 = vpop.f32.mrb[0].mxu0
        %v1888 = vadd.f32 %v1693, %v1887
        %v1889 = vpop.f32.mrb[0].mxu0
        %1890 = vmatprep.mubr.f32.mxu0 %v1492
        %1891 = vmatmul.mubr.f32.gmra.mrb[0].mxu0 %v1491
        %v1892 = vpop.f32.mrb[0].mxu0
        %v1893 = vadd.f32 %v1693, %v1892
        %v1894 = vpop.f32.mrb[0].mxu0
        %1895 = vmatprep.mubr.f32.mxu0 %v1497
        %1896 = vmatmul.mubr.f32.gmra.mrb[0].mxu0 %v1496
        %v1897 = vpop.f32.mrb[0].mxu0
        %v1898 = vadd.f32 %v1693, %v1897
        %v1899 = vpop.f32.mrb[0].mxu0
        %1900 = vmatprep.mubr.f32.mxu0 %v1502
        %1901 = vmatmul.mubr.f32.gmra.mrb[0].mxu0 %v1501
        %v1902 = vpop.f32.mrb[0].mxu0
        %v1903 = vadd.f32 %v1693, %v1902
        %v1904 = vpop.f32.mrb[0].mxu0
        %1905 = vmatprep.mubr.f32.mxu0 %v1507
        %1906 = vmatmul.mubr.f32.gmra.mrb[0].mxu0 %v1506
        %v1907 = vpop.f32.mrb[0].mxu0
        %v1908 = vadd.f32 %v1693, %v1907
        %v1909 = vpop.f32.mrb[0].mxu0
        %1910 = vmatprep.mubr.f32.mxu0 %v1512
        %1911 = vmatmul.mubr.f32.gmra.mrb[0].mxu0 %v1511
        %v1912 = vpop.f32.mrb[0].mxu0
        %v1913 = vadd.f32 %v1693, %v1912
        %v1914 = vpop.f32.mrb[0].mxu0
        %1915 = vmatprep.mubr.f32.mxu0 %v1517
        %1916 = vmatmul.mubr.f32.gmra.mrb[0].mxu0 %v1516
        %v1917 = vpop.f32.mrb[0].mxu0
        %v1918 = vadd.f32 %v1693, %v1917
        %v1919 = vpop.f32.mrb[0].mxu0
        %1920 = vmatprep.mubr.f32.mxu0 %v1522
        %1921 = vmatmul.mubr.f32.gmra.mrb[0].mxu0 %v1521
        %v1922 = vpop.f32.mrb[0].mxu0
        %v1923 = vadd.f32 %v1693, %v1922
        %v1924 = vpop.f32.mrb[0].mxu0
        %1925 = vmatprep.mubr.f32.mxu0 %v1527
        %1926 = vmatmul.mubr.f32.gmra.mrb[0].mxu0 %v1526
        %v1927 = vpop.f32.mrb[0].mxu0
        %v1928 = vadd.f32 %v1693, %v1927
        %v1929 = vpop.f32.mrb[0].mxu0
        %1930 = vmatprep.mubr.f32.mxu0 %v1532
        %1931 = vmatmul.mubr.f32.gmra.mrb[0].mxu0 %v1531
        %v1932 = vpop.f32.mrb[0].mxu0
        %v1933 = vadd.f32 %v1693, %v1932
        %v1934 = vpop.f32.mrb[0].mxu0
        %1935 = vmatprep.mubr.f32.mxu0 %v1537
        %1936 = vmatmul.mubr.f32.gmra.mrb[0].mxu0 %v1536
        %v1937 = vpop.f32.mrb[0].mxu0
        %v1938 = vadd.f32 %v1693, %v1937
        %v1939 = vpop.f32.mrb[0].mxu0
        %1940 = vmatprep.mubr.f32.mxu0 %v1542
        %1941 = vmatmul.mubr.f32.gmra.mrb[0].mxu0 %v1541
        %v1942 = vpop.f32.mrb[0].mxu0
        %v1943 = vadd.f32 %v1693, %v1942
        %v1944 = vpop.f32.mrb[0].mxu0
        %1945 = vmatprep.mubr.f32.mxu0 %v1547
        %1946 = vmatmul.mubr.f32.gmra.mrb[0].mxu0 %v1546
        %v1947 = vpop.f32.mrb[0].mxu0
        %v1948 = vadd.f32 %v1693, %v1947
        %v1949 = vpop.f32.mrb[0].mxu0
        %1950 = vmatprep.mubr.f32.mxu0 %v1552
        %1951 = vmatmul.mubr.f32.gmra.mrb[0].mxu0 %v1551
        %v1952 = vpop.f32.mrb[0].mxu0
        %v1953 = vadd.f32 %v1693, %v1952
        %v1954 = vpop.f32.mrb[0].mxu0
        %1955 = vmatprep.mubr.f32.mxu0 %v1557
        %1956 = vmatmul.mubr.f32.gmra.mrb[0].mxu0 %v1556
        %v1957 = vpop.f32.mrb[0].mxu0
        %v1958 = vadd.f32 %v1693, %v1957
        %v1959 = vpop.f32.mrb[0].mxu0
        %1960 = vmatprep.mubr.f32.mxu0 %v1562
        %1961 = vmatmul.mubr.f32.gmra.mrb[0].mxu0 %v1561
        %v1962 = vpop.f32.mrb[0].mxu0
        %v1963 = vadd.f32 %v1693, %v1962
        %v1964 = vpop.f32.mrb[0].mxu0
        %1965 = vmatprep.mubr.f32.mxu0 %v1567
        %1966 = vmatmul.mubr.f32.gmra.mrb[0].mxu0 %v1566
        %v1967 = vpop.f32.mrb[0].mxu0
        %v1968 = vadd.f32 %v1693, %v1967
        %v1969 = vpop.f32.mrb[0].mxu0
        %1970 = vmatprep.mubr.f32.mxu0 %v1572
        %1971 = vmatmul.mubr.f32.gmra.mrb[0].mxu0 %v1571
        %v1972 = vpop.f32.mrb[0].mxu0
        %v1973 = vadd.f32 %v1693, %v1972
        %v1974 = vpop.f32.mrb[0].mxu0
        %1975 = vmatprep.mubr.f32.mxu0 %v1577
        %1976 = vmatmul.mubr.f32.gmra.mrb[0].mxu0 %v1576
        %v1977 = vpop.f32.mrb[0].mxu0
        %v1978 = vadd.f32 %v1693, %v1977
        %v1979 = vpop.f32.mrb[0].mxu0
        %1980 = vmatprep.mubr.f32.mxu0 %v1582
        %1981 = vmatmul.mubr.f32.gmra.mrb[0].mxu0 %v1581
        %v1982 = vpop.f32.mrb[0].mxu0
        %v1983 = vadd.f32 %v1693, %v1982
        %v1984 = vpop.f32.mrb[0].mxu0
        %1985 = vmatprep.mubr.f32.mxu0 %v1587
        %1986 = vmatmul.mubr.f32.gmra.mrb[0].mxu0 %v1586
        %v1987 = vpop.f32.mrb[0].mxu0
        %v1988 = vadd.f32 %v1693, %v1987
        %v1989 = vpop.f32.mrb[0].mxu0
        %1990 = vmatprep.mubr.f32.mxu0 %v1592
        %1991 = vmatmul.mubr.f32.gmra.mrb[0].mxu0 %v1591
        %v1992 = vpop.f32.mrb[0].mxu0
        %v1993 = vadd.f32 %v1693, %v1992
        %v1994 = vpop.f32.mrb[0].mxu0
        %1995 = vmatprep.mubr.f32.mxu0 %v1597
        %1996 = vmatmul.mubr.f32.gmra.mrb[0].mxu0 %v1596
        %v1997 = vpop.f32.mrb[0].mxu0
        %v1998 = vadd.f32 %v1693, %v1997
        %v1999 = vpop.f32.mrb[0].mxu0
        %2000 = vmatprep.mubr.f32.mxu0 %v1602
        %2001 = vmatmul.mubr.f32.gmra.mrb[0].mxu0 %v1601
        %v2002 = vpop.f32.mrb[0].mxu0
        %v2003 = vadd.f32 %v1693, %v2002
        %v2004 = vpop.f32.mrb[0].mxu0
        %2005 = vmatprep.mubr.f32.mxu0 %v1607
        %2006 = vmatmul.mubr.f32.gmra.mrb[0].mxu0 %v1606
        %v2007 = vpop.f32.mrb[0].mxu0
        %v2008 = vadd.f32 %v1693, %v2007
        %v2009 = vpop.f32.mrb[0].mxu0
        %2010 = vmatprep.mubr.f32.mxu0 %v1612
        %2011 = vmatmul.mubr.f32.gmra.mrb[0].mxu0 %v1611
        %v2012 = vpop.f32.mrb[0].mxu0
        %v2013 = vadd.f32 %v1693, %v2012
        %v2014 = vpop.f32.mrb[0].mxu0
        %2015 = vdwg.mxu0
        %2016 = vmatprep.subr.mxu0 0.0
        %2017 = vmatpush1.msra.mxu0 %v1648
        %2018 = vmatprep.subr.mxu0 0.0
        %2019 = vmatpush1.msra.mxu0 %v1649
        %2020 = vmatprep.subr.mxu0 0.0
        %2021 = vmatpush1.msra.mxu0 %v1650
        %2022 = vmatprep.subr.mxu0 0.0
        %2023 = vmatpush1.msra.mxu0 %v1651
        %2024 = vmatprep.subr.mxu0 0.0
        %2025 = vmatpush1.msra.mxu0 %v1652
        %2026 = vmatprep.subr.mxu0 0.0
        %2027 = vmatpush1.msra.mxu0 %v1653
        %2028 = vmatprep.subr.mxu0 0.0
        %2029 = vmatpush1.msra.mxu0 %v1654
        %2030 = vmatprep.subr.mxu0 0.0
        %2031 = vmatpush1.msra.mxu0 %v1655
        %2032 = vmatprep.subr.mxu0 0.0
        %2033 = vmatpush1.msra.mxu0 %v1656
        %2034 = vmatprep.subr.mxu0 0.0
        %2035 = vmatpush1.msra.mxu0 %v1657
        %2036 = vmatprep.subr.mxu0 0.0
        %2037 = vmatpush1.msra.mxu0 %v1658
        %2038 = vmatprep.subr.mxu0 0.0
        %2039 = vmatpush1.msra.mxu0 %v1659
        %2040 = vmatprep.subr.mxu0 0.0
        %2041 = vmatpush1.msra.mxu0 %v1660
        %2042 = vmatprep.subr.mxu0 0.0
        %2043 = vmatpush1.msra.mxu0 %v1661
        %2044 = vmatprep.subr.mxu0 0.0
        %2045 = vmatpush1.msra.mxu0 %v1662
        %2046 = vmatprep.subr.mxu0 0.0
        %2047 = vmatpush1.msra.mxu0 %v1663
        %2048 = vmatprep.subr.mxu0 0.0
        %2049 = vmatpush1.msra.mxu0 %v1664
        %2050 = vmatprep.subr.mxu0 0.0
        %2051 = vmatpush1.msra.mxu0 %v1665
        %2052 = vmatprep.subr.mxu0 0.0
        %2053 = vmatpush1.msra.mxu0 %v1666
        %2054 = vmatprep.subr.mxu0 0.0
        %2055 = vmatpush1.msra.mxu0 %v1667
        %2056 = vmatprep.subr.mxu0 0.0
        %2057 = vmatpush1.msra.mxu0 %v1668
        %2058 = vmatprep.subr.mxu0 0.0
        %2059 = vmatpush1.msra.mxu0 %v1669
        %2060 = vmatprep.subr.mxu0 0.0
        %2061 = vmatpush1.msra.mxu0 %v1670
        %2062 = vmatprep.subr.mxu0 0.0
        %2063 = vmatpush1.msra.mxu0 %v1671
        %2064 = vmatprep.subr.mxu0 0.0
        %2065 = vmatpush1.msra.mxu0 %v1672
        %2066 = vmatprep.subr.mxu0 0.0
        %2067 = vmatpush1.msra.mxu0 %v1673
        %2068 = vmatprep.subr.mxu0 0.0
        %2069 = vmatpush1.msra.mxu0 %v1674
        %2070 = vmatprep.subr.mxu0 0.0
        %2071 = vmatpush1.msra.mxu0 %v1675
        %2072 = vmatprep.subr.mxu0 0.0
        %2073 = vmatpush1.msra.mxu0 %v1676
        %2074 = vmatprep.subr.mxu0 0.0
        %2075 = vmatpush1.msra.mxu0 %v1677
        %2076 = vmatprep.subr.mxu0 0.0
        %2077 = vmatpush1.msra.mxu0 %v1678
        %2078 = vmatprep.subr.mxu0 0.0
        %2079 = vmatpush1.msra.mxu0 %v1679
        %2080 = vmatprep.mubr.f32.mxu0 %v1459
        %2081 = vmatmul.mubr.f32.gmra.mrb[0].mxu0 %v1458
        %v2082 = vpop.f32.mrb[0].mxu0
        %v2083 = vadd.f32 %v1858, %v2082
        %v2084 = vpop.f32.mrb[0].mxu0
        %2085 = vmatprep.mubr.f32.mxu0 %v1464
        %2086 = vmatmul.mubr.f32.gmra.mrb[0].mxu0 %v1463
        %v2087 = vpop.f32.mrb[0].mxu0
        %v2088 = vadd.f32 %v1863, %v2087
        %v2089 = vpop.f32.mrb[0].mxu0
        %2090 = vmatprep.mubr.f32.mxu0 %v1469
        %2091 = vmatmul.mubr.f32.gmra.mrb[0].mxu0 %v1468
        %v2092 = vpop.f32.mrb[0].mxu0
        %v2093 = vadd.f32 %v1868, %v2092
        %v2094 = vpop.f32.mrb[0].mxu0
        %2095 = vmatprep.mubr.f32.mxu0 %v1474
        %2096 = vmatmul.mubr.f32.gmra.mrb[0].mxu0 %v1473
        %v2097 = vpop.f32.mrb[0].mxu0
        %v2098 = vadd.f32 %v1873, %v2097
        %v2099 = vpop.f32.mrb[0].mxu0
        %2100 = vmatprep.mubr.f32.mxu0 %v1479
        %2101 = vmatmul.mubr.f32.gmra.mrb[0].mxu0 %v1478
        %v2102 = vpop.f32.mrb[0].mxu0
        %v2103 = vadd.f32 %v1878, %v2102
        %v2104 = vpop.f32.mrb[0].mxu0
        %2105 = vmatprep.mubr.f32.mxu0 %v1484
        %2106 = vmatmul.mubr.f32.gmra.mrb[0].mxu0 %v1483
        %v2107 = vpop.f32.mrb[0].mxu0
        %v2108 = vadd.f32 %v1883, %v2107
        %v2109 = vpop.f32.mrb[0].mxu0
        %2110 = vmatprep.mubr.f32.mxu0 %v1489
        %2111 = vmatmul.mubr.f32.gmra.mrb[0].mxu0 %v1488
        %v2112 = vpop.f32.mrb[0].mxu0
        %v2113 = vadd.f32 %v1888, %v2112
        %v2114 = vpop.f32.mrb[0].mxu0
        %2115 = vmatprep.mubr.f32.mxu0 %v1494
        %2116 = vmatmul.mubr.f32.gmra.mrb[0].mxu0 %v1493
        %v2117 = vpop.f32.mrb[0].mxu0
        %v2118 = vadd.f32 %v1893, %v2117
        %v2119 = vpop.f32.mrb[0].mxu0
        %2120 = vmatprep.mubr.f32.mxu0 %v1499
        %2121 = vmatmul.mubr.f32.gmra.mrb[0].mxu0 %v1498
        %v2122 = vpop.f32.mrb[0].mxu0
        %v2123 = vadd.f32 %v1898, %v2122
        %v2124 = vpop.f32.mrb[0].mxu0
        %2125 = vmatprep.mubr.f32.mxu0 %v1504
        %2126 = vmatmul.mubr.f32.gmra.mrb[0].mxu0 %v1503
        %v2127 = vpop.f32.mrb[0].mxu0
        %v2128 = vadd.f32 %v1903, %v2127
        %v2129 = vpop.f32.mrb[0].mxu0
        %2130 = vmatprep.mubr.f32.mxu0 %v1509
        %2131 = vmatmul.mubr.f32.gmra.mrb[0].mxu0 %v1508
        %v2132 = vpop.f32.mrb[0].mxu0
        %v2133 = vadd.f32 %v1908, %v2132
        %v2134 = vpop.f32.mrb[0].mxu0
        %2135 = vmatprep.mubr.f32.mxu0 %v1514
        %2136 = vmatmul.mubr.f32.gmra.mrb[0].mxu0 %v1513
        %v2137 = vpop.f32.mrb[0].mxu0
        %v2138 = vadd.f32 %v1913, %v2137
        %v2139 = vpop.f32.mrb[0].mxu0
        %2140 = vmatprep.mubr.f32.mxu0 %v1519
        %2141 = vmatmul.mubr.f32.gmra.mrb[0].mxu0 %v1518
        %v2142 = vpop.f32.mrb[0].mxu0
        %v2143 = vadd.f32 %v1918, %v2142
        %v2144 = vpop.f32.mrb[0].mxu0
        %2145 = vmatprep.mubr.f32.mxu0 %v1524
        %2146 = vmatmul.mubr.f32.gmra.mrb[0].mxu0 %v1523
        %v2147 = vpop.f32.mrb[0].mxu0
        %v2148 = vadd.f32 %v1923, %v2147
        %v2149 = vpop.f32.mrb[0].mxu0
        %2150 = vmatprep.mubr.f32.mxu0 %v1529
        %2151 = vmatmul.mubr.f32.gmra.mrb[0].mxu0 %v1528
        %v2152 = vpop.f32.mrb[0].mxu0
        %v2153 = vadd.f32 %v1928, %v2152
        %v2154 = vpop.f32.mrb[0].mxu0
        %2155 = vmatprep.mubr.f32.mxu0 %v1534
        %2156 = vmatmul.mubr.f32.gmra.mrb[0].mxu0 %v1533
        %v2157 = vpop.f32.mrb[0].mxu0
        %v2158 = vadd.f32 %v1933, %v2157
        %v2159 = vpop.f32.mrb[0].mxu0
        %2160 = vmatprep.mubr.f32.mxu0 %v1539
        %2161 = vmatmul.mubr.f32.gmra.mrb[0].mxu0 %v1538
        %v2162 = vpop.f32.mrb[0].mxu0
        %v2163 = vadd.f32 %v1938, %v2162
        %v2164 = vpop.f32.mrb[0].mxu0
        %2165 = vmatprep.mubr.f32.mxu0 %v1544
        %2166 = vmatmul.mubr.f32.gmra.mrb[0].mxu0 %v1543
        %v2167 = vpop.f32.mrb[0].mxu0
        %v2168 = vadd.f32 %v1943, %v2167
        %v2169 = vpop.f32.mrb[0].mxu0
        %2170 = vmatprep.mubr.f32.mxu0 %v1549
        %2171 = vmatmul.mubr.f32.gmra.mrb[0].mxu0 %v1548
        %v2172 = vpop.f32.mrb[0].mxu0
        %v2173 = vadd.f32 %v1948, %v2172
        %v2174 = vpop.f32.mrb[0].mxu0
        %2175 = vmatprep.mubr.f32.mxu0 %v1554
        %2176 = vmatmul.mubr.f32.gmra.mrb[0].mxu0 %v1553
        %v2177 = vpop.f32.mrb[0].mxu0
        %v2178 = vadd.f32 %v1953, %v2177
        %v2179 = vpop.f32.mrb[0].mxu0
        %2180 = vmatprep.mubr.f32.mxu0 %v1559
        %2181 = vmatmul.mubr.f32.gmra.mrb[0].mxu0 %v1558
        %v2182 = vpop.f32.mrb[0].mxu0
        %v2183 = vadd.f32 %v1958, %v2182
        %v2184 = vpop.f32.mrb[0].mxu0
        %2185 = vmatprep.mubr.f32.mxu0 %v1564
        %2186 = vmatmul.mubr.f32.gmra.mrb[0].mxu0 %v1563
        %v2187 = vpop.f32.mrb[0].mxu0
        %v2188 = vadd.f32 %v1963, %v2187
        %v2189 = vpop.f32.mrb[0].mxu0
        %2190 = vmatprep.mubr.f32.mxu0 %v1569
        %2191 = vmatmul.mubr.f32.gmra.mrb[0].mxu0 %v1568
        %v2192 = vpop.f32.mrb[0].mxu0
        %v2193 = vadd.f32 %v1968, %v2192
        %v2194 = vpop.f32.mrb[0].mxu0
        %2195 = vmatprep.mubr.f32.mxu0 %v1574
        %2196 = vmatmul.mubr.f32.gmra.mrb[0].mxu0 %v1573
        %v2197 = vpop.f32.mrb[0].mxu0
        %v2198 = vadd.f32 %v1973, %v2197
        %v2199 = vpop.f32.mrb[0].mxu0
        %2200 = vmatprep.mubr.f32.mxu0 %v1579
        %2201 = vmatmul.mubr.f32.gmra.mrb[0].mxu0 %v1578
        %v2202 = vpop.f32.mrb[0].mxu0
        %v2203 = vadd.f32 %v1978, %v2202
        %v2204 = vpop.f32.mrb[0].mxu0
        %2205 = vmatprep.mubr.f32.mxu0 %v1584
        %2206 = vmatmul.mubr.f32.gmra.mrb[0].mxu0 %v1583
        %v2207 = vpop.f32.mrb[0].mxu0
        %v2208 = vadd.f32 %v1983, %v2207
        %v2209 = vpop.f32.mrb[0].mxu0
        %2210 = vmatprep.mubr.f32.mxu0 %v1589
        %2211 = vmatmul.mubr.f32.gmra.mrb[0].mxu0 %v1588
        %v2212 = vpop.f32.mrb[0].mxu0
        %v2213 = vadd.f32 %v1988, %v2212
        %v2214 = vpop.f32.mrb[0].mxu0
        %2215 = vmatprep.mubr.f32.mxu0 %v1594
        %2216 = vmatmul.mubr.f32.gmra.mrb[0].mxu0 %v1593
        %v2217 = vpop.f32.mrb[0].mxu0
        %v2218 = vadd.f32 %v1993, %v2217
        %v2219 = vpop.f32.mrb[0].mxu0
        %2220 = vmatprep.mubr.f32.mxu0 %v1599
        %2221 = vmatmul.mubr.f32.gmra.mrb[0].mxu0 %v1598
        %v2222 = vpop.f32.mrb[0].mxu0
        %v2223 = vadd.f32 %v1998, %v2222
        %v2224 = vpop.f32.mrb[0].mxu0
        %2225 = vmatprep.mubr.f32.mxu0 %v1604
        %2226 = vmatmul.mubr.f32.gmra.mrb[0].mxu0 %v1603
        %v2227 = vpop.f32.mrb[0].mxu0
        %v2228 = vadd.f32 %v2003, %v2227
        %v2229 = vpop.f32.mrb[0].mxu0
        %2230 = vmatprep.mubr.f32.mxu0 %v1609
        %2231 = vmatmul.mubr.f32.gmra.mrb[0].mxu0 %v1608
        %v2232 = vpop.f32.mrb[0].mxu0
        %v2233 = vadd.f32 %v2008, %v2232
        %v2234 = vpop.f32.mrb[0].mxu0
        %2235 = vmatprep.mubr.f32.mxu0 %v1614
        %2236 = vmatmul.mubr.f32.gmra.mrb[0].mxu0 %v1613
        %v2237 = vpop.f32.mrb[0].mxu0
        %v2238 = vadd.f32 %v2013, %v2237
        %v2239 = vpop.f32.mrb[0].mxu0
        %2240 = vdwg.mxu0
        %2241 = vmatprep.subr.mxu0 0.0
        %2242 = vmatpush1.msra.mxu0 %v1680
        %2243 = vmatprep.subr.mxu0 0.0
        %2244 = vmatpush1.msra.mxu0 %v1681
        %2245 = vmatprep.subr.mxu0 0.0
        %2246 = vmatpush1.msra.mxu0 %v1682
        %2247 = vmatprep.subr.mxu0 0.0
        %2248 = vmatpush1.msra.mxu0 %v1683
        %2249 = vmatprep.subr.mxu0 0.0
        %2250 = vmatpush1.msra.mxu0 %v1684
        %2251 = vmatprep.subr.mxu0 0.0
        %2252 = vmatpush1.msra.mxu0 %v1685
        %2253 = vmatprep.subr.mxu0 0.0
        %2254 = vmatpush1.msra.mxu0 %v1686
        %2255 = vmatprep.subr.mxu0 0.0
        %2256 = vmatpush1.msra.mxu0 %v1687
        %2257 = vmatprep.subr.mxu0 0.0
        %2258 = vmatpush1.msra.mxu0 0.0
        %2259 = vmatprep.subr.mxu0 0.0
        %2260 = vmatpush1.msra.mxu0 0.0
        %2261 = vmatprep.subr.mxu0 0.0
        %2262 = vmatpush1.msra.mxu0 0.0
        %2263 = vmatprep.subr.mxu0 0.0
        %2264 = vmatpush1.msra.mxu0 0.0
        %2265 = vmatprep.subr.mxu0 0.0
        %2266 = vmatpush1.msra.mxu0 0.0
        %2267 = vmatprep.subr.mxu0 0.0
        %2268 = vmatpush1.msra.mxu0 0.0
        %2269 = vmatprep.subr.mxu0 0.0
        %2270 = vmatpush1.msra.mxu0 0.0
        %2271 = vmatprep.subr.mxu0 0.0
        %2272 = vmatpush1.msra.mxu0 0.0
        %2273 = vmatprep.subr.mxu0 0.0
        %2274 = vmatpush1.msra.mxu0 0.0
        %2275 = vmatprep.subr.mxu0 0.0
        %2276 = vmatpush1.msra.mxu0 0.0
        %2277 = vmatprep.subr.mxu0 0.0
        %2278 = vmatpush1.msra.mxu0 0.0
        %2279 = vmatprep.subr.mxu0 0.0
        %2280 = vmatpush1.msra.mxu0 0.0
        %2281 = vmatprep.subr.mxu0 0.0
        %2282 = vmatpush1.msra.mxu0 0.0
        %2283 = vmatprep.subr.mxu0 0.0
        %2284 = vmatpush1.msra.mxu0 0.0
        %2285 = vmatprep.subr.mxu0 0.0
        %2286 = vmatpush1.msra.mxu0 0.0
        %2287 = vmatprep.subr.mxu0 0.0
        %2288 = vmatpush1.msra.mxu0 0.0
        %2289 = vmatprep.subr.mxu0 0.0
        %2290 = vmatpush1.msra.mxu0 0.0
        %2291 = vmatprep.subr.mxu0 0.0
        %2292 = vmatpush1.msra.mxu0 0.0
        %2293 = vmatprep.subr.mxu0 0.0
        %2294 = vmatpush1.msra.mxu0 0.0
        %2295 = vmatprep.subr.mxu0 0.0
        %2296 = vmatpush1.msra.mxu0 0.0
        %2297 = vmatprep.subr.mxu0 0.0
        %2298 = vmatpush1.msra.mxu0 0.0
        %2299 = vmatprep.subr.mxu0 0.0
        %2300 = vmatpush1.msra.mxu0 0.0
        %2301 = vmatprep.subr.mxu0 0.0
        %2302 = vmatpush1.msra.mxu0 0.0
        %2303 = vmatprep.subr.mxu0 0.0
        %2304 = vmatpush1.msra.mxu0 0.0
        %2305 = vmatprep.mubr.f32.mxu0 0.0
        %2306 = vmatmul.mubr.f32.gmra.mrb[0].mxu0 %v1696
        %v2307 = vpop.f32.mrb[0].mxu0
        %v2308 = vadd.f32 %v2083, %v2307
        %v2309 = vpop.f32.mrb[0].mxu0
        %2310 = vmatprep.mubr.f32.mxu0 0.0
        %2311 = vmatmul.mubr.f32.gmra.mrb[0].mxu0 %v1699
        %v2312 = vpop.f32.mrb[0].mxu0
        %v2313 = vadd.f32 %v2088, %v2312
        %v2314 = vpop.f32.mrb[0].mxu0
        %2315 = vmatprep.mubr.f32.mxu0 0.0
        %2316 = vmatmul.mubr.f32.gmra.mrb[0].mxu0 %v1702
        %v2317 = vpop.f32.mrb[0].mxu0
        %v2318 = vadd.f32 %v2093, %v2317
        %v2319 = vpop.f32.mrb[0].mxu0
        %2320 = vmatprep.mubr.f32.mxu0 0.0
        %2321 = vmatmul.mubr.f32.gmra.mrb[0].mxu0 %v1705
        %v2322 = vpop.f32.mrb[0].mxu0
        %v2323 = vadd.f32 %v2098, %v2322
        %v2324 = vpop.f32.mrb[0].mxu0
        %2325 = vmatprep.mubr.f32.mxu0 0.0
        %2326 = vmatmul.mubr.f32.gmra.mrb[0].mxu0 %v1708
        %v2327 = vpop.f32.mrb[0].mxu0
        %v2328 = vadd.f32 %v2103, %v2327
        %v2329 = vpop.f32.mrb[0].mxu0
        %2330 = vmatprep.mubr.f32.mxu0 0.0
        %2331 = vmatmul.mubr.f32.gmra.mrb[0].mxu0 %v1711
        %v2332 = vpop.f32.mrb[0].mxu0
        %v2333 = vadd.f32 %v2108, %v2332
        %v2334 = vpop.f32.mrb[0].mxu0
        %2335 = vmatprep.mubr.f32.mxu0 0.0
        %2336 = vmatmul.mubr.f32.gmra.mrb[0].mxu0 %v1714
        %v2337 = vpop.f32.mrb[0].mxu0
        %v2338 = vadd.f32 %v2113, %v2337
        %v2339 = vpop.f32.mrb[0].mxu0
        %2340 = vmatprep.mubr.f32.mxu0 0.0
        %2341 = vmatmul.mubr.f32.gmra.mrb[0].mxu0 %v1717
        %v2342 = vpop.f32.mrb[0].mxu0
        %v2343 = vadd.f32 %v2118, %v2342
        %v2344 = vpop.f32.mrb[0].mxu0
        %2345 = vmatprep.mubr.f32.mxu0 0.0
        %2346 = vmatmul.mubr.f32.gmra.mrb[0].mxu0 %v1720
        %v2347 = vpop.f32.mrb[0].mxu0
        %v2348 = vadd.f32 %v2123, %v2347
        %v2349 = vpop.f32.mrb[0].mxu0
        %2350 = vmatprep.mubr.f32.mxu0 0.0
        %2351 = vmatmul.mubr.f32.gmra.mrb[0].mxu0 %v1723
        %v2352 = vpop.f32.mrb[0].mxu0
        %v2353 = vadd.f32 %v2128, %v2352
        %v2354 = vpop.f32.mrb[0].mxu0
        %2355 = vmatprep.mubr.f32.mxu0 0.0
        %2356 = vmatmul.mubr.f32.gmra.mrb[0].mxu0 %v1726
        %v2357 = vpop.f32.mrb[0].mxu0
        %v2358 = vadd.f32 %v2133, %v2357
        %v2359 = vpop.f32.mrb[0].mxu0
        %2360 = vmatprep.mubr.f32.mxu0 0.0
        %2361 = vmatmul.mubr.f32.gmra.mrb[0].mxu0 %v1729
        %v2362 = vpop.f32.mrb[0].mxu0
        %v2363 = vadd.f32 %v2138, %v2362
        %v2364 = vpop.f32.mrb[0].mxu0
        %2365 = vmatprep.mubr.f32.mxu0 0.0
        %2366 = vmatmul.mubr.f32.gmra.mrb[0].mxu0 %v1732
        %v2367 = vpop.f32.mrb[0].mxu0
        %v2368 = vadd.f32 %v2143, %v2367
        %v2369 = vpop.f32.mrb[0].mxu0
        %2370 = vmatprep.mubr.f32.mxu0 0.0
        %2371 = vmatmul.mubr.f32.gmra.mrb[0].mxu0 %v1735
        %v2372 = vpop.f32.mrb[0].mxu0
        %v2373 = vadd.f32 %v2148, %v2372
        %v2374 = vpop.f32.mrb[0].mxu0
        %2375 = vmatprep.mubr.f32.mxu0 0.0
        %2376 = vmatmul.mubr.f32.gmra.mrb[0].mxu0 %v1738
        %v2377 = vpop.f32.mrb[0].mxu0
        %v2378 = vadd.f32 %v2153, %v2377
        %v2379 = vpop.f32.mrb[0].mxu0
        %2380 = vmatprep.mubr.f32.mxu0 0.0
        %2381 = vmatmul.mubr.f32.gmra.mrb[0].mxu0 %v1741
        %v2382 = vpop.f32.mrb[0].mxu0
        %v2383 = vadd.f32 %v2158, %v2382
        %v2384 = vpop.f32.mrb[0].mxu0
        %2385 = vmatprep.mubr.f32.mxu0 0.0
        %2386 = vmatmul.mubr.f32.gmra.mrb[0].mxu0 %v1744
        %v2387 = vpop.f32.mrb[0].mxu0
        %v2388 = vadd.f32 %v2163, %v2387
        %v2389 = vpop.f32.mrb[0].mxu0
        %2390 = vmatprep.mubr.f32.mxu0 0.0
        %2391 = vmatmul.mubr.f32.gmra.mrb[0].mxu0 %v1747
        %v2392 = vpop.f32.mrb[0].mxu0
        %v2393 = vadd.f32 %v2168, %v2392
        %v2394 = vpop.f32.mrb[0].mxu0
        %2395 = vmatprep.mubr.f32.mxu0 0.0
        %2396 = vmatmul.mubr.f32.gmra.mrb[0].mxu0 %v1750
        %v2397 = vpop.f32.mrb[0].mxu0
        %v2398 = vadd.f32 %v2173, %v2397
        %v2399 = vpop.f32.mrb[0].mxu0
        %2400 = vmatprep.mubr.f32.mxu0 0.0
        %2401 = vmatmul.mubr.f32.gmra.mrb[0].mxu0 %v1753
        %v2402 = vpop.f32.mrb[0].mxu0
        %v2403 = vadd.f32 %v2178, %v2402
        %v2404 = vpop.f32.mrb[0].mxu0
        %2405 = vmatprep.mubr.f32.mxu0 0.0
        %2406 = vmatmul.mubr.f32.gmra.mrb[0].mxu0 %v1756
        %v2407 = vpop.f32.mrb[0].mxu0
        %v2408 = vadd.f32 %v2183, %v2407
        %v2409 = vpop.f32.mrb[0].mxu0
        %2410 = vmatprep.mubr.f32.mxu0 0.0
        %2411 = vmatmul.mubr.f32.gmra.mrb[0].mxu0 %v1759
        %v2412 = vpop.f32.mrb[0].mxu0
        %v2413 = vadd.f32 %v2188, %v2412
        %v2414 = vpop.f32.mrb[0].mxu0
        %2415 = vmatprep.mubr.f32.mxu0 0.0
        %2416 = vmatmul.mubr.f32.gmra.mrb[0].mxu0 %v1762
        %v2417 = vpop.f32.mrb[0].mxu0
        %v2418 = vadd.f32 %v2193, %v2417
        %v2419 = vpop.f32.mrb[0].mxu0
        %2420 = vmatprep.mubr.f32.mxu0 0.0
        %2421 = vmatmul.mubr.f32.gmra.mrb[0].mxu0 %v1765
        %v2422 = vpop.f32.mrb[0].mxu0
        %v2423 = vadd.f32 %v2198, %v2422
        %v2424 = vpop.f32.mrb[0].mxu0
        %2425 = vmatprep.mubr.f32.mxu0 0.0
        %2426 = vmatmul.mubr.f32.gmra.mrb[0].mxu0 %v1768
        %v2427 = vpop.f32.mrb[0].mxu0
        %v2428 = vadd.f32 %v2203, %v2427
        %v2429 = vpop.f32.mrb[0].mxu0
        %2430 = vmatprep.mubr.f32.mxu0 0.0
        %2431 = vmatmul.mubr.f32.gmra.mrb[0].mxu0 %v1771
        %v2432 = vpop.f32.mrb[0].mxu0
        %v2433 = vadd.f32 %v2208, %v2432
        %v2434 = vpop.f32.mrb[0].mxu0
        %2435 = vmatprep.mubr.f32.mxu0 0.0
        %2436 = vmatmul.mubr.f32.gmra.mrb[0].mxu0 %v1774
        %v2437 = vpop.f32.mrb[0].mxu0
        %v2438 = vadd.f32 %v2213, %v2437
        %v2439 = vpop.f32.mrb[0].mxu0
        %2440 = vmatprep.mubr.f32.mxu0 0.0
        %2441 = vmatmul.mubr.f32.gmra.mrb[0].mxu0 %v1777
        %v2442 = vpop.f32.mrb[0].mxu0
        %v2443 = vadd.f32 %v2218, %v2442
        %v2444 = vpop.f32.mrb[0].mxu0
        %2445 = vmatprep.mubr.f32.mxu0 0.0
        %2446 = vmatmul.mubr.f32.gmra.mrb[0].mxu0 %v1780
        %v2447 = vpop.f32.mrb[0].mxu0
        %v2448 = vadd.f32 %v2223, %v2447
        %v2449 = vpop.f32.mrb[0].mxu0
        %2450 = vmatprep.mubr.f32.mxu0 0.0
        %2451 = vmatmul.mubr.f32.gmra.mrb[0].mxu0 %v1783
        %v2452 = vpop.f32.mrb[0].mxu0
        %v2453 = vadd.f32 %v2228, %v2452
        %v2454 = vpop.f32.mrb[0].mxu0
        %2455 = vmatprep.mubr.f32.mxu0 0.0
        %2456 = vmatmul.mubr.f32.gmra.mrb[0].mxu0 %v1786
        %v2457 = vpop.f32.mrb[0].mxu0
        %v2458 = vadd.f32 %v2233, %v2457
        %v2459 = vpop.f32.mrb[0].mxu0
        %2460 = vmatprep.mubr.f32.mxu0 0.0
        %2461 = vmatmul.mubr.f32.gmra.mrb[0].mxu0 %v1789
        %v2462 = vpop.f32.mrb[0].mxu0
        %v2463 = vadd.f32 %v2238, %v2462
        %v2464 = vpop.f32.mrb[0].mxu0
        %2465 = vdwg.mxu0
        %v2466 = vmax.f32 %v2308, 0.0
        %v2467 = vmax.f32 %v2313, 0.0
        %v2468 = vmax.f32 %v2318, 0.0
        %v2469 = vmax.f32 %v2323, 0.0
        %v2470 = vmax.f32 %v2328, 0.0
        %v2471 = vmax.f32 %v2333, 0.0
        %v2472 = vmax.f32 %v2338, 0.0
        %v2473 = vmax.f32 %v2343, 0.0
        %v2474 = vmax.f32 %v2348, 0.0
        %v2475 = vmax.f32 %v2353, 0.0
        %v2476 = vmax.f32 %v2358, 0.0
        %v2477 = vmax.f32 %v2363, 0.0
        %v2478 = vmax.f32 %v2368, 0.0
        %v2479 = vmax.f32 %v2373, 0.0
        %v2480 = vmax.f32 %v2378, 0.0
        %v2481 = vmax.f32 %v2383, 0.0
        %v2482 = vmax.f32 %v2388, 0.0
        %v2483 = vmax.f32 %v2393, 0.0
        %v2484 = vmax.f32 %v2398, 0.0
        %v2485 = vmax.f32 %v2403, 0.0
        %v2486 = vmax.f32 %v2408, 0.0
        %v2487 = vmax.f32 %v2413, 0.0
        %v2488 = vmax.f32 %v2418, 0.0
        %v2489 = vmax.f32 %v2423, 0.0
        %v2490 = vmax.f32 %v2428, 0.0
        %v2491 = vmax.f32 %v2433, 0.0
        %v2492 = vmax.f32 %v2438, 0.0
        %v2493 = vmax.f32 %v2443, 0.0
        %v2494 = vmax.f32 %v2448, 0.0
        %v2495 = vmax.f32 %v2453, 0.0
        %v2496 = vmax.f32 %v2458, 0.0
        %v2497 = vmax.f32 %v2463, 0.0
        %2498 = vst.msk [vmem:[%s333 + $0x1] sm:$0xff] %vm223, %v2466
        %2499 = vst.msk [vmem:[%s333 + $0x9] sm:$0xff] %vm223, %v2467
        %2500 = vst.msk [vmem:[%s333 + $0x19] sm:$0xff] %vm223, %v2468
        %2501 = vst.msk [vmem:[%s333 + $0x21] sm:$0xff] %vm223, %v2469
        %2502 = vst.msk [vmem:[%s333 + $0x31] sm:$0xff] %vm223, %v2470
        %2503 = vst.msk [vmem:[%s333 + $0x39] sm:$0xff] %vm223, %v2471
        %2504 = vst.msk [vmem:[%s333 + $0x49] sm:$0xff] %vm223, %v2472
        %2505 = vst.msk [vmem:[%s333 + $0x51] sm:$0xff] %vm223, %v2473
        %2506 = vst.msk [vmem:[%s333 + $0x61] sm:$0xff] %vm223, %v2474
        %2507 = vst.msk [vmem:[%s333 + $0x69] sm:$0xff] %vm223, %v2475
        %2508 = vst.msk [vmem:[%s333 + $0x79] sm:$0xff] %vm223, %v2476
        %2509 = vst.msk [vmem:[%s333 + $0x81] sm:$0xff] %vm223, %v2477
        %2510 = vst.msk [vmem:[%s333 + $0x91] sm:$0xff] %vm223, %v2478
        %2511 = vst.msk [vmem:[%s333 + $0x99] sm:$0xff] %vm223, %v2479
        %2512 = vst.msk [vmem:[%s333 + $0xa9] sm:$0xff] %vm223, %v2480
        %2513 = vst.msk [vmem:[%s333 + $0xb1] sm:$0xff] %vm223, %v2481
        %2514 = vst.msk [vmem:[%s333 + $0xc1] sm:$0xff] %vm223, %v2482
        %2515 = vst.msk [vmem:[%s333 + $0xc9] sm:$0xff] %vm223, %v2483
        %2516 = vst.msk [vmem:[%s333 + $0xd9] sm:$0xff] %vm223, %v2484
        %2517 = vst.msk [vmem:[%s333 + $0xe1] sm:$0xff] %vm223, %v2485
        %2518 = vst.msk [vmem:[%s333 + $0xf1] sm:$0xff] %vm223, %v2486
        %2519 = vst.msk [vmem:[%s333 + $0xf9] sm:$0xff] %vm223, %v2487
        %2520 = vst.msk [vmem:[%s333 + $0x109] sm:$0xff] %vm223, %v2488
        %2521 = vst.msk [vmem:[%s333 + $0x111] sm:$0xff] %vm223, %v2489
        %2522 = vst.msk [vmem:[%s333 + $0x121] sm:$0xff] %vm223, %v2490
        %2523 = vst.msk [vmem:[%s333 + $0x129] sm:$0xff] %vm223, %v2491
        %2524 = vst.msk [vmem:[%s333 + $0x139] sm:$0xff] %vm223, %v2492
        %2525 = vst.msk [vmem:[%s333 + $0x141] sm:$0xff] %vm223, %v2493
        %2526 = vst.msk [vmem:[%s333 + $0x151] sm:$0xff] %vm223, %v2494
        %2527 = vst.msk [vmem:[%s333 + $0x159] sm:$0xff] %vm223, %v2495
        %2528 = vst.msk [vmem:[%s333 + $0x169] sm:$0xff] %vm223, %v2496
        %2529 = vst.msk [vmem:[%s333 + $0x171] sm:$0xff] %vm223, %v2497
        %v2530 = vld [vmem:[#allocation2] sm:$0xff]
        %v2531 = vld [vmem:[#allocation2 + $0x8] sm:$0xff]
        %v2532 = vld [vmem:[#allocation2 + $0x18] sm:$0xff]
        %v2533 = vld [vmem:[#allocation2 + $0x20] sm:$0xff]
        %v2534 = vld [vmem:[#allocation2 + $0x30] sm:$0xff]
        %v2535 = vld [vmem:[#allocation2 + $0x38] sm:$0xff]
        %v2536 = vld [vmem:[#allocation2 + $0x48] sm:$0xff]
        %v2537 = vld [vmem:[#allocation2 + $0x50] sm:$0xff]
        %v2538 = vld [vmem:[#allocation2 + $0x60] sm:$0xff]
        %v2539 = vld [vmem:[#allocation2 + $0x68] sm:$0xff]
        %v2540 = vld [vmem:[#allocation2 + $0x78] sm:$0xff]
        %v2541 = vld [vmem:[#allocation2 + $0x80] sm:$0xff]
        %v2542 = vld [vmem:[#allocation2 + $0x90] sm:$0xff]
        %v2543 = vld [vmem:[#allocation2 + $0x98] sm:$0xff]
        %v2544 = vld [vmem:[#allocation2 + $0xa8] sm:$0xff]
        %v2545 = vld [vmem:[#allocation2 + $0xb0] sm:$0xff]
        %v2546 = vld [vmem:[#allocation2 + $0xc0] sm:$0xff]
        %v2547 = vld [vmem:[#allocation2 + $0xc8] sm:$0xff]
        %v2548 = vld [vmem:[#allocation2 + $0xd8] sm:$0xff]
        %v2549 = vld [vmem:[#allocation2 + $0xe0] sm:$0xff]
        %v2550 = vld [vmem:[#allocation2 + $0xf0] sm:$0xff]
        %v2551 = vld [vmem:[#allocation2 + $0xf8] sm:$0xff]
        %v2552 = vld [vmem:[#allocation2 + $0x108] sm:$0xff]
        %v2553 = vld [vmem:[#allocation2 + $0x110] sm:$0xff]
        %v2554 = vld [vmem:[#allocation2 + $0x120] sm:$0xff]
        %v2555 = vld [vmem:[#allocation2 + $0x128] sm:$0xff]
        %v2556 = vld [vmem:[#allocation2 + $0x138] sm:$0xff]
        %v2557 = vld [vmem:[#allocation2 + $0x140] sm:$0xff]
        %v2558 = vld [vmem:[#allocation2 + $0x150] sm:$0xff]
        %v2559 = vld [vmem:[#allocation2 + $0x158] sm:$0xff]
        %v2560 = vld [vmem:[#allocation2 + $0x168] sm:$0xff]
        %v2561 = vld [vmem:[#allocation2 + $0x170] sm:$0xff]
        %2562 = vst.msk [vmem:[#allocation3] sm:$0xff] %vm223, %v2530
        %2563 = vst.msk [vmem:[#allocation3 + $0x28] sm:$0xff] %vm223, %v2531
        %2564 = vst.msk [vmem:[#allocation3 + $0x50] sm:$0xff] %vm223, %v2532
        %2565 = vst.msk [vmem:[#allocation3 + $0x78] sm:$0xff] %vm223, %v2533
        %2566 = vst.msk [vmem:[#allocation3 + $0xa0] sm:$0xff] %vm223, %v2534
        %2567 = vst.msk [vmem:[#allocation3 + $0xc8] sm:$0xff] %vm223, %v2535
        %2568 = vst.msk [vmem:[#allocation3 + $0xf0] sm:$0xff] %vm223, %v2536
        %2569 = vst.msk [vmem:[#allocation3 + $0x118] sm:$0xff] %vm223, %v2537
        %2570 = vst.msk [vmem:[#allocation3 + $0x140] sm:$0xff] %vm223, %v2538
        %2571 = vst.msk [vmem:[#allocation3 + $0x168] sm:$0xff] %vm223, %v2539
        %2572 = vst.msk [vmem:[#allocation3 + $0x190] sm:$0xff] %vm223, %v2540
        %2573 = vst.msk [vmem:[#allocation3 + $0x1b8] sm:$0xff] %vm223, %v2541
        %2574 = vst.msk [vmem:[#allocation3 + $0x1e0] sm:$0xff] %vm223, %v2542
        %2575 = vst.msk [vmem:[#allocation3 + $0x208] sm:$0xff] %vm223, %v2543
        %2576 = vst.msk [vmem:[#allocation3 + $0x230] sm:$0xff] %vm223, %v2544
        %2577 = vst.msk [vmem:[#allocation3 + $0x258] sm:$0xff] %vm223, %v2545
        %2578 = vst.msk [vmem:[#allocation3 + $0x280] sm:$0xff] %vm223, %v2546
        %2579 = vst.msk [vmem:[#allocation3 + $0x2a8] sm:$0xff] %vm223, %v2547
        %2580 = vst.msk [vmem:[#allocation3 + $0x2d0] sm:$0xff] %vm223, %v2548
        %2581 = vst.msk [vmem:[#allocation3 + $0x2f8] sm:$0xff] %vm223, %v2549
        %2582 = vst.msk [vmem:[#allocation3 + $0x320] sm:$0xff] %vm223, %v2550
        %2583 = vst.msk [vmem:[#allocation3 + $0x348] sm:$0xff] %vm223, %v2551
        %2584 = vst.msk [vmem:[#allocation3 + $0x370] sm:$0xff] %vm223, %v2552
        %2585 = vst.msk [vmem:[#allocation3 + $0x398] sm:$0xff] %vm223, %v2553
        %2586 = vst.msk [vmem:[#allocation3 + $0x3c0] sm:$0xff] %vm223, %v2554
        %2587 = vst.msk [vmem:[#allocation3 + $0x3e8] sm:$0xff] %vm223, %v2555
        %2588 = vst.msk [vmem:[#allocation3 + $0x410] sm:$0xff] %vm223, %v2556
        %2589 = vst.msk [vmem:[#allocation3 + $0x438] sm:$0xff] %vm223, %v2557
        %2590 = vst.msk [vmem:[#allocation3 + $0x460] sm:$0xff] %vm223, %v2558
        %2591 = vst.msk [vmem:[#allocation3 + $0x488] sm:$0xff] %vm223, %v2559
        %2592 = vst.msk [vmem:[#allocation3 + $0x4b0] sm:$0xff] %vm223, %v2560
        %2593 = vst.msk [vmem:[#allocation3 + $0x4d8] sm:$0xff] %vm223, %v2561
        %v2594 = vld [vmem:[#allocation2 + $0x1] sm:$0xff]
        %v2595 = vld [vmem:[#allocation2 + $0x9] sm:$0xff]
        %v2596 = vld [vmem:[#allocation2 + $0x19] sm:$0xff]
        %v2597 = vld [vmem:[#allocation2 + $0x21] sm:$0xff]
        %v2598 = vld [vmem:[#allocation2 + $0x31] sm:$0xff]
        %v2599 = vld [vmem:[#allocation2 + $0x39] sm:$0xff]
        %v2600 = vld [vmem:[#allocation2 + $0x49] sm:$0xff]
        %v2601 = vld [vmem:[#allocation2 + $0x51] sm:$0xff]
        %v2602 = vld [vmem:[#allocation2 + $0x61] sm:$0xff]
        %v2603 = vld [vmem:[#allocation2 + $0x69] sm:$0xff]
        %v2604 = vld [vmem:[#allocation2 + $0x79] sm:$0xff]
        %v2605 = vld [vmem:[#allocation2 + $0x81] sm:$0xff]
        %v2606 = vld [vmem:[#allocation2 + $0x91] sm:$0xff]
        %v2607 = vld [vmem:[#allocation2 + $0x99] sm:$0xff]
        %v2608 = vld [vmem:[#allocation2 + $0xa9] sm:$0xff]
        %v2609 = vld [vmem:[#allocation2 + $0xb1] sm:$0xff]
        %v2610 = vld [vmem:[#allocation2 + $0xc1] sm:$0xff]
        %v2611 = vld [vmem:[#allocation2 + $0xc9] sm:$0xff]
        %v2612 = vld [vmem:[#allocation2 + $0xd9] sm:$0xff]
        %v2613 = vld [vmem:[#allocation2 + $0xe1] sm:$0xff]
        %v2614 = vld [vmem:[#allocation2 + $0xf1] sm:$0xff]
        %v2615 = vld [vmem:[#allocation2 + $0xf9] sm:$0xff]
        %v2616 = vld [vmem:[#allocation2 + $0x109] sm:$0xff]
        %v2617 = vld [vmem:[#allocation2 + $0x111] sm:$0xff]
        %v2618 = vld [vmem:[#allocation2 + $0x121] sm:$0xff]
        %v2619 = vld [vmem:[#allocation2 + $0x129] sm:$0xff]
        %v2620 = vld [vmem:[#allocation2 + $0x139] sm:$0xff]
        %v2621 = vld [vmem:[#allocation2 + $0x141] sm:$0xff]
        %v2622 = vld [vmem:[#allocation2 + $0x151] sm:$0xff]
        %v2623 = vld [vmem:[#allocation2 + $0x159] sm:$0xff]
        %v2624 = vld [vmem:[#allocation2 + $0x169] sm:$0xff]
        %v2625 = vld [vmem:[#allocation2 + $0x171] sm:$0xff]
        %2658 = vrot.lane.b32.xlu0 %v2594, 64
        %v2659 = vpop.permute.xlu0 %2658
        %2660 = vrot.lane.b32.xlu0 %v2595, 64
        %v2661 = vpop.permute.xlu0 %2660
        %2662 = vrot.lane.b32.xlu0 %v2596, 64
        %v2663 = vpop.permute.xlu0 %2662
        %2664 = vrot.lane.b32.xlu0 %v2597, 64
        %v2665 = vpop.permute.xlu0 %2664
        %2666 = vrot.lane.b32.xlu0 %v2598, 64
        %v2667 = vpop.permute.xlu0 %2666
        %2668 = vrot.lane.b32.xlu0 %v2599, 64
        %v2669 = vpop.permute.xlu0 %2668
        %2670 = vrot.lane.b32.xlu0 %v2600, 64
        %v2671 = vpop.permute.xlu0 %2670
        %2672 = vrot.lane.b32.xlu0 %v2601, 64
        %v2673 = vpop.permute.xlu0 %2672
        %2674 = vrot.lane.b32.xlu0 %v2602, 64
        %v2675 = vpop.permute.xlu0 %2674
        %2676 = vrot.lane.b32.xlu0 %v2603, 64
        %v2677 = vpop.permute.xlu0 %2676
        %2678 = vrot.lane.b32.xlu0 %v2604, 64
        %v2679 = vpop.permute.xlu0 %2678
        %2680 = vrot.lane.b32.xlu0 %v2605, 64
        %v2681 = vpop.permute.xlu0 %2680
        %2682 = vrot.lane.b32.xlu0 %v2606, 64
        %v2683 = vpop.permute.xlu0 %2682
        %2684 = vrot.lane.b32.xlu0 %v2607, 64
        %v2685 = vpop.permute.xlu0 %2684
        %2686 = vrot.lane.b32.xlu0 %v2608, 64
        %v2687 = vpop.permute.xlu0 %2686
        %2688 = vrot.lane.b32.xlu0 %v2609, 64
        %v2689 = vpop.permute.xlu0 %2688
        %2690 = vrot.lane.b32.xlu0 %v2610, 64
        %v2691 = vpop.permute.xlu0 %2690
        %2692 = vrot.lane.b32.xlu0 %v2611, 64
        %v2693 = vpop.permute.xlu0 %2692
        %2694 = vrot.lane.b32.xlu0 %v2612, 64
        %v2695 = vpop.permute.xlu0 %2694
        %2696 = vrot.lane.b32.xlu0 %v2613, 64
        %v2697 = vpop.permute.xlu0 %2696
        %2698 = vrot.lane.b32.xlu0 %v2614, 64
        %v2699 = vpop.permute.xlu0 %2698
        %2700 = vrot.lane.b32.xlu0 %v2615, 64
        %v2701 = vpop.permute.xlu0 %2700
        %2702 = vrot.lane.b32.xlu0 %v2616, 64
        %v2703 = vpop.permute.xlu0 %2702
        %2704 = vrot.lane.b32.xlu0 %v2617, 64
        %v2705 = vpop.permute.xlu0 %2704
        %2706 = vrot.lane.b32.xlu0 %v2618, 64
        %v2707 = vpop.permute.xlu0 %2706
        %2708 = vrot.lane.b32.xlu0 %v2619, 64
        %v2709 = vpop.permute.xlu0 %2708
        %2710 = vrot.lane.b32.xlu0 %v2620, 64
        %v2711 = vpop.permute.xlu0 %2710
        %2712 = vrot.lane.b32.xlu0 %v2621, 64
        %v2713 = vpop.permute.xlu0 %2712
        %2714 = vrot.lane.b32.xlu0 %v2622, 64
        %v2715 = vpop.permute.xlu0 %2714
        %2716 = vrot.lane.b32.xlu0 %v2623, 64
        %v2717 = vpop.permute.xlu0 %2716
        %2718 = vrot.lane.b32.xlu0 %v2624, 64
        %v2719 = vpop.permute.xlu0 %2718
        %2720 = vrot.lane.b32.xlu0 %v2625, 64
        %v2721 = vpop.permute.xlu0 %2720
        %2754 = vst.msk [vmem:[#allocation3] sm:$0xff] %vm590, %v2659
        %2755 = vst.msk [vmem:[#allocation3 + $0x28] sm:$0xff] %vm590, %v2661
        %2756 = vst.msk [vmem:[#allocation3 + $0x50] sm:$0xff] %vm590, %v2663
        %2757 = vst.msk [vmem:[#allocation3 + $0x78] sm:$0xff] %vm590, %v2665
        %2758 = vst.msk [vmem:[#allocation3 + $0xa0] sm:$0xff] %vm590, %v2667
        %2759 = vst.msk [vmem:[#allocation3 + $0xc8] sm:$0xff] %vm590, %v2669
        %2760 = vst.msk [vmem:[#allocation3 + $0xf0] sm:$0xff] %vm590, %v2671
        %2761 = vst.msk [vmem:[#allocation3 + $0x118] sm:$0xff] %vm590, %v2673
        %2762 = vst.msk [vmem:[#allocation3 + $0x140] sm:$0xff] %vm590, %v2675
        %2763 = vst.msk [vmem:[#allocation3 + $0x168] sm:$0xff] %vm590, %v2677
        %2764 = vst.msk [vmem:[#allocation3 + $0x190] sm:$0xff] %vm590, %v2679
        %2765 = vst.msk [vmem:[#allocation3 + $0x1b8] sm:$0xff] %vm590, %v2681
        %2766 = vst.msk [vmem:[#allocation3 + $0x1e0] sm:$0xff] %vm590, %v2683
        %2767 = vst.msk [vmem:[#allocation3 + $0x208] sm:$0xff] %vm590, %v2685
        %2768 = vst.msk [vmem:[#allocation3 + $0x230] sm:$0xff] %vm590, %v2687
        %2769 = vst.msk [vmem:[#allocation3 + $0x258] sm:$0xff] %vm590, %v2689
        %2770 = vst.msk [vmem:[#allocation3 + $0x280] sm:$0xff] %vm590, %v2691
        %2771 = vst.msk [vmem:[#allocation3 + $0x2a8] sm:$0xff] %vm590, %v2693
        %2772 = vst.msk [vmem:[#allocation3 + $0x2d0] sm:$0xff] %vm590, %v2695
        %2773 = vst.msk [vmem:[#allocation3 + $0x2f8] sm:$0xff] %vm590, %v2697
        %2774 = vst.msk [vmem:[#allocation3 + $0x320] sm:$0xff] %vm590, %v2699
        %2775 = vst.msk [vmem:[#allocation3 + $0x348] sm:$0xff] %vm590, %v2701
        %2776 = vst.msk [vmem:[#allocation3 + $0x370] sm:$0xff] %vm590, %v2703
        %2777 = vst.msk [vmem:[#allocation3 + $0x398] sm:$0xff] %vm590, %v2705
        %2778 = vst.msk [vmem:[#allocation3 + $0x3c0] sm:$0xff] %vm590, %v2707
        %2779 = vst.msk [vmem:[#allocation3 + $0x3e8] sm:$0xff] %vm590, %v2709
        %2780 = vst.msk [vmem:[#allocation3 + $0x410] sm:$0xff] %vm590, %v2711
        %2781 = vst.msk [vmem:[#allocation3 + $0x438] sm:$0xff] %vm590, %v2713
        %2782 = vst.msk [vmem:[#allocation3 + $0x460] sm:$0xff] %vm590, %v2715
        %2783 = vst.msk [vmem:[#allocation3 + $0x488] sm:$0xff] %vm590, %v2717
        %2784 = vst.msk [vmem:[#allocation3 + $0x4b0] sm:$0xff] %vm590, %v2719
        %2785 = vst.msk [vmem:[#allocation3 + $0x4d8] sm:$0xff] %vm590, %v2721
        %v2786 = vld [vmem:[#allocation2 + $0x2] sm:$0xff]
        %v2787 = vld [vmem:[#allocation2 + $0xa] sm:$0xff]
        %v2788 = vld [vmem:[#allocation2 + $0x1a] sm:$0xff]
        %v2789 = vld [vmem:[#allocation2 + $0x22] sm:$0xff]
        %v2790 = vld [vmem:[#allocation2 + $0x32] sm:$0xff]
        %v2791 = vld [vmem:[#allocation2 + $0x3a] sm:$0xff]
        %v2792 = vld [vmem:[#allocation2 + $0x4a] sm:$0xff]
        %v2793 = vld [vmem:[#allocation2 + $0x52] sm:$0xff]
        %v2794 = vld [vmem:[#allocation2 + $0x62] sm:$0xff]
        %v2795 = vld [vmem:[#allocation2 + $0x6a] sm:$0xff]
        %v2796 = vld [vmem:[#allocation2 + $0x7a] sm:$0xff]
        %v2797 = vld [vmem:[#allocation2 + $0x82] sm:$0xff]
        %v2798 = vld [vmem:[#allocation2 + $0x92] sm:$0xff]
        %v2799 = vld [vmem:[#allocation2 + $0x9a] sm:$0xff]
        %v2800 = vld [vmem:[#allocation2 + $0xaa] sm:$0xff]
        %v2801 = vld [vmem:[#allocation2 + $0xb2] sm:$0xff]
        %v2802 = vld [vmem:[#allocation2 + $0xc2] sm:$0xff]
        %v2803 = vld [vmem:[#allocation2 + $0xca] sm:$0xff]
        %v2804 = vld [vmem:[#allocation2 + $0xda] sm:$0xff]
        %v2805 = vld [vmem:[#allocation2 + $0xe2] sm:$0xff]
        %v2806 = vld [vmem:[#allocation2 + $0xf2] sm:$0xff]
        %v2807 = vld [vmem:[#allocation2 + $0xfa] sm:$0xff]
        %v2808 = vld [vmem:[#allocation2 + $0x10a] sm:$0xff]
        %v2809 = vld [vmem:[#allocation2 + $0x112] sm:$0xff]
        %v2810 = vld [vmem:[#allocation2 + $0x122] sm:$0xff]
        %v2811 = vld [vmem:[#allocation2 + $0x12a] sm:$0xff]
        %v2812 = vld [vmem:[#allocation2 + $0x13a] sm:$0xff]
        %v2813 = vld [vmem:[#allocation2 + $0x142] sm:$0xff]
        %v2814 = vld [vmem:[#allocation2 + $0x152] sm:$0xff]
        %v2815 = vld [vmem:[#allocation2 + $0x15a] sm:$0xff]
        %v2816 = vld [vmem:[#allocation2 + $0x16a] sm:$0xff]
        %v2817 = vld [vmem:[#allocation2 + $0x172] sm:$0xff]
        %2818 = vst.msk [vmem:[#allocation3 + $0x8] sm:$0xff] %vm223, %v2786
        %2819 = vst.msk [vmem:[#allocation3 + $0x30] sm:$0xff] %vm223, %v2787
        %2820 = vst.msk [vmem:[#allocation3 + $0x58] sm:$0xff] %vm223, %v2788
        %2821 = vst.msk [vmem:[#allocation3 + $0x80] sm:$0xff] %vm223, %v2789
        %2822 = vst.msk [vmem:[#allocation3 + $0xa8] sm:$0xff] %vm223, %v2790
        %2823 = vst.msk [vmem:[#allocation3 + $0xd0] sm:$0xff] %vm223, %v2791
        %2824 = vst.msk [vmem:[#allocation3 + $0xf8] sm:$0xff] %vm223, %v2792
        %2825 = vst.msk [vmem:[#allocation3 + $0x120] sm:$0xff] %vm223, %v2793
        %2826 = vst.msk [vmem:[#allocation3 + $0x148] sm:$0xff] %vm223, %v2794
        %2827 = vst.msk [vmem:[#allocation3 + $0x170] sm:$0xff] %vm223, %v2795
        %2828 = vst.msk [vmem:[#allocation3 + $0x198] sm:$0xff] %vm223, %v2796
        %2829 = vst.msk [vmem:[#allocation3 + $0x1c0] sm:$0xff] %vm223, %v2797
        %2830 = vst.msk [vmem:[#allocation3 + $0x1e8] sm:$0xff] %vm223, %v2798
        %2831 = vst.msk [vmem:[#allocation3 + $0x210] sm:$0xff] %vm223, %v2799
        %2832 = vst.msk [vmem:[#allocation3 + $0x238] sm:$0xff] %vm223, %v2800
        %2833 = vst.msk [vmem:[#allocation3 + $0x260] sm:$0xff] %vm223, %v2801
        %2834 = vst.msk [vmem:[#allocation3 + $0x288] sm:$0xff] %vm223, %v2802
        %2835 = vst.msk [vmem:[#allocation3 + $0x2b0] sm:$0xff] %vm223, %v2803
        %2836 = vst.msk [vmem:[#allocation3 + $0x2d8] sm:$0xff] %vm223, %v2804
        %2837 = vst.msk [vmem:[#allocation3 + $0x300] sm:$0xff] %vm223, %v2805
        %2838 = vst.msk [vmem:[#allocation3 + $0x328] sm:$0xff] %vm223, %v2806
        %2839 = vst.msk [vmem:[#allocation3 + $0x350] sm:$0xff] %vm223, %v2807
        %2840 = vst.msk [vmem:[#allocation3 + $0x378] sm:$0xff] %vm223, %v2808
        %2841 = vst.msk [vmem:[#allocation3 + $0x3a0] sm:$0xff] %vm223, %v2809
        %2842 = vst.msk [vmem:[#allocation3 + $0x3c8] sm:$0xff] %vm223, %v2810
        %2843 = vst.msk [vmem:[#allocation3 + $0x3f0] sm:$0xff] %vm223, %v2811
        %2844 = vst.msk [vmem:[#allocation3 + $0x418] sm:$0xff] %vm223, %v2812
        %2845 = vst.msk [vmem:[#allocation3 + $0x440] sm:$0xff] %vm223, %v2813
        %2846 = vst.msk [vmem:[#allocation3 + $0x468] sm:$0xff] %vm223, %v2814
        %2847 = vst.msk [vmem:[#allocation3 + $0x490] sm:$0xff] %vm223, %v2815
        %2848 = vst.msk [vmem:[#allocation3 + $0x4b8] sm:$0xff] %vm223, %v2816
        %2849 = vst.msk [vmem:[#allocation3 + $0x4e0] sm:$0xff] %vm223, %v2817
        %v2850 = vld [vmem:[%s333] sm:$0xff]
        %v2851 = vld [vmem:[%s333 + $0x8] sm:$0xff]
        %v2852 = vld [vmem:[%s333 + $0x18] sm:$0xff]
        %v2853 = vld [vmem:[%s333 + $0x20] sm:$0xff]
        %v2854 = vld [vmem:[%s333 + $0x30] sm:$0xff]
        %v2855 = vld [vmem:[%s333 + $0x38] sm:$0xff]
        %v2856 = vld [vmem:[%s333 + $0x48] sm:$0xff]
        %v2857 = vld [vmem:[%s333 + $0x50] sm:$0xff]
        %v2858 = vld [vmem:[%s333 + $0x60] sm:$0xff]
        %v2859 = vld [vmem:[%s333 + $0x68] sm:$0xff]
        %v2860 = vld [vmem:[%s333 + $0x78] sm:$0xff]
        %v2861 = vld [vmem:[%s333 + $0x80] sm:$0xff]
        %v2862 = vld [vmem:[%s333 + $0x90] sm:$0xff]
        %v2863 = vld [vmem:[%s333 + $0x98] sm:$0xff]
        %v2864 = vld [vmem:[%s333 + $0xa8] sm:$0xff]
        %v2865 = vld [vmem:[%s333 + $0xb0] sm:$0xff]
        %v2866 = vld [vmem:[%s333 + $0xc0] sm:$0xff]
        %v2867 = vld [vmem:[%s333 + $0xc8] sm:$0xff]
        %v2868 = vld [vmem:[%s333 + $0xd8] sm:$0xff]
        %v2869 = vld [vmem:[%s333 + $0xe0] sm:$0xff]
        %v2870 = vld [vmem:[%s333 + $0xf0] sm:$0xff]
        %v2871 = vld [vmem:[%s333 + $0xf8] sm:$0xff]
        %v2872 = vld [vmem:[%s333 + $0x108] sm:$0xff]
        %v2873 = vld [vmem:[%s333 + $0x110] sm:$0xff]
        %v2874 = vld [vmem:[%s333 + $0x120] sm:$0xff]
        %v2875 = vld [vmem:[%s333 + $0x128] sm:$0xff]
        %v2876 = vld [vmem:[%s333 + $0x138] sm:$0xff]
        %v2877 = vld [vmem:[%s333 + $0x140] sm:$0xff]
        %v2878 = vld [vmem:[%s333 + $0x150] sm:$0xff]
        %v2879 = vld [vmem:[%s333 + $0x158] sm:$0xff]
        %v2880 = vld [vmem:[%s333 + $0x168] sm:$0xff]
        %v2881 = vld [vmem:[%s333 + $0x170] sm:$0xff]
        %2914 = vrot.lane.b32.xlu0 %v2850, 64
        %v2915 = vpop.permute.xlu0 %2914
        %2916 = vrot.lane.b32.xlu0 %v2851, 64
        %v2917 = vpop.permute.xlu0 %2916
        %2918 = vrot.lane.b32.xlu0 %v2852, 64
        %v2919 = vpop.permute.xlu0 %2918
        %2920 = vrot.lane.b32.xlu0 %v2853, 64
        %v2921 = vpop.permute.xlu0 %2920
        %2922 = vrot.lane.b32.xlu0 %v2854, 64
        %v2923 = vpop.permute.xlu0 %2922
        %2924 = vrot.lane.b32.xlu0 %v2855, 64
        %v2925 = vpop.permute.xlu0 %2924
        %2926 = vrot.lane.b32.xlu0 %v2856, 64
        %v2927 = vpop.permute.xlu0 %2926
        %2928 = vrot.lane.b32.xlu0 %v2857, 64
        %v2929 = vpop.permute.xlu0 %2928
        %2930 = vrot.lane.b32.xlu0 %v2858, 64
        %v2931 = vpop.permute.xlu0 %2930
        %2932 = vrot.lane.b32.xlu0 %v2859, 64
        %v2933 = vpop.permute.xlu0 %2932
        %2934 = vrot.lane.b32.xlu0 %v2860, 64
        %v2935 = vpop.permute.xlu0 %2934
        %2936 = vrot.lane.b32.xlu0 %v2861, 64
        %v2937 = vpop.permute.xlu0 %2936
        %2938 = vrot.lane.b32.xlu0 %v2862, 64
        %v2939 = vpop.permute.xlu0 %2938
        %2940 = vrot.lane.b32.xlu0 %v2863, 64
        %v2941 = vpop.permute.xlu0 %2940
        %2942 = vrot.lane.b32.xlu0 %v2864, 64
        %v2943 = vpop.permute.xlu0 %2942
        %2944 = vrot.lane.b32.xlu0 %v2865, 64
        %v2945 = vpop.permute.xlu0 %2944
        %2946 = vrot.lane.b32.xlu0 %v2866, 64
        %v2947 = vpop.permute.xlu0 %2946
        %2948 = vrot.lane.b32.xlu0 %v2867, 64
        %v2949 = vpop.permute.xlu0 %2948
        %2950 = vrot.lane.b32.xlu0 %v2868, 64
        %v2951 = vpop.permute.xlu0 %2950
        %2952 = vrot.lane.b32.xlu0 %v2869, 64
        %v2953 = vpop.permute.xlu0 %2952
        %2954 = vrot.lane.b32.xlu0 %v2870, 64
        %v2955 = vpop.permute.xlu0 %2954
        %2956 = vrot.lane.b32.xlu0 %v2871, 64
        %v2957 = vpop.permute.xlu0 %2956
        %2958 = vrot.lane.b32.xlu0 %v2872, 64
        %v2959 = vpop.permute.xlu0 %2958
        %2960 = vrot.lane.b32.xlu0 %v2873, 64
        %v2961 = vpop.permute.xlu0 %2960
        %2962 = vrot.lane.b32.xlu0 %v2874, 64
        %v2963 = vpop.permute.xlu0 %2962
        %2964 = vrot.lane.b32.xlu0 %v2875, 64
        %v2965 = vpop.permute.xlu0 %2964
        %2966 = vrot.lane.b32.xlu0 %v2876, 64
        %v2967 = vpop.permute.xlu0 %2966
        %2968 = vrot.lane.b32.xlu0 %v2877, 64
        %v2969 = vpop.permute.xlu0 %2968
        %2970 = vrot.lane.b32.xlu0 %v2878, 64
        %v2971 = vpop.permute.xlu0 %2970
        %2972 = vrot.lane.b32.xlu0 %v2879, 64
        %v2973 = vpop.permute.xlu0 %2972
        %2974 = vrot.lane.b32.xlu0 %v2880, 64
        %v2975 = vpop.permute.xlu0 %2974
        %2976 = vrot.lane.b32.xlu0 %v2881, 64
        %v2977 = vpop.permute.xlu0 %2976
        %3010 = vst.msk [vmem:[#allocation3 + $0x8] sm:$0xff] %vm590, %v2915
        %3011 = vst.msk [vmem:[#allocation3 + $0x30] sm:$0xff] %vm590, %v2917
        %3012 = vst.msk [vmem:[#allocation3 + $0x58] sm:$0xff] %vm590, %v2919
        %3013 = vst.msk [vmem:[#allocation3 + $0x80] sm:$0xff] %vm590, %v2921
        %3014 = vst.msk [vmem:[#allocation3 + $0xa8] sm:$0xff] %vm590, %v2923
        %3015 = vst.msk [vmem:[#allocation3 + $0xd0] sm:$0xff] %vm590, %v2925
        %3016 = vst.msk [vmem:[#allocation3 + $0xf8] sm:$0xff] %vm590, %v2927
        %3017 = vst.msk [vmem:[#allocation3 + $0x120] sm:$0xff] %vm590, %v2929
        %3018 = vst.msk [vmem:[#allocation3 + $0x148] sm:$0xff] %vm590, %v2931
        %3019 = vst.msk [vmem:[#allocation3 + $0x170] sm:$0xff] %vm590, %v2933
        %3020 = vst.msk [vmem:[#allocation3 + $0x198] sm:$0xff] %vm590, %v2935
        %3021 = vst.msk [vmem:[#allocation3 + $0x1c0] sm:$0xff] %vm590, %v2937
        %3022 = vst.msk [vmem:[#allocation3 + $0x1e8] sm:$0xff] %vm590, %v2939
        %3023 = vst.msk [vmem:[#allocation3 + $0x210] sm:$0xff] %vm590, %v2941
        %3024 = vst.msk [vmem:[#allocation3 + $0x238] sm:$0xff] %vm590, %v2943
        %3025 = vst.msk [vmem:[#allocation3 + $0x260] sm:$0xff] %vm590, %v2945
        %3026 = vst.msk [vmem:[#allocation3 + $0x288] sm:$0xff] %vm590, %v2947
        %3027 = vst.msk [vmem:[#allocation3 + $0x2b0] sm:$0xff] %vm590, %v2949
        %3028 = vst.msk [vmem:[#allocation3 + $0x2d8] sm:$0xff] %vm590, %v2951
        %3029 = vst.msk [vmem:[#allocation3 + $0x300] sm:$0xff] %vm590, %v2953
        %3030 = vst.msk [vmem:[#allocation3 + $0x328] sm:$0xff] %vm590, %v2955
        %3031 = vst.msk [vmem:[#allocation3 + $0x350] sm:$0xff] %vm590, %v2957
        %3032 = vst.msk [vmem:[#allocation3 + $0x378] sm:$0xff] %vm590, %v2959
        %3033 = vst.msk [vmem:[#allocation3 + $0x3a0] sm:$0xff] %vm590, %v2961
        %3034 = vst.msk [vmem:[#allocation3 + $0x3c8] sm:$0xff] %vm590, %v2963
        %3035 = vst.msk [vmem:[#allocation3 + $0x3f0] sm:$0xff] %vm590, %v2965
        %3036 = vst.msk [vmem:[#allocation3 + $0x418] sm:$0xff] %vm590, %v2967
        %3037 = vst.msk [vmem:[#allocation3 + $0x440] sm:$0xff] %vm590, %v2969
        %3038 = vst.msk [vmem:[#allocation3 + $0x468] sm:$0xff] %vm590, %v2971
        %3039 = vst.msk [vmem:[#allocation3 + $0x490] sm:$0xff] %vm590, %v2973
        %3040 = vst.msk [vmem:[#allocation3 + $0x4b8] sm:$0xff] %vm590, %v2975
        %3041 = vst.msk [vmem:[#allocation3 + $0x4e0] sm:$0xff] %vm590, %v2977
        %v3042 = vld [vmem:[%s333 + $0x1] sm:$0xff]
        %v3043 = vld [vmem:[%s333 + $0x9] sm:$0xff]
        %v3044 = vld [vmem:[%s333 + $0x19] sm:$0xff]
        %v3045 = vld [vmem:[%s333 + $0x21] sm:$0xff]
        %v3046 = vld [vmem:[%s333 + $0x31] sm:$0xff]
        %v3047 = vld [vmem:[%s333 + $0x39] sm:$0xff]
        %v3048 = vld [vmem:[%s333 + $0x49] sm:$0xff]
        %v3049 = vld [vmem:[%s333 + $0x51] sm:$0xff]
        %v3050 = vld [vmem:[%s333 + $0x61] sm:$0xff]
        %v3051 = vld [vmem:[%s333 + $0x69] sm:$0xff]
        %v3052 = vld [vmem:[%s333 + $0x79] sm:$0xff]
        %v3053 = vld [vmem:[%s333 + $0x81] sm:$0xff]
        %v3054 = vld [vmem:[%s333 + $0x91] sm:$0xff]
        %v3055 = vld [vmem:[%s333 + $0x99] sm:$0xff]
        %v3056 = vld [vmem:[%s333 + $0xa9] sm:$0xff]
        %v3057 = vld [vmem:[%s333 + $0xb1] sm:$0xff]
        %v3058 = vld [vmem:[%s333 + $0xc1] sm:$0xff]
        %v3059 = vld [vmem:[%s333 + $0xc9] sm:$0xff]
        %v3060 = vld [vmem:[%s333 + $0xd9] sm:$0xff]
        %v3061 = vld [vmem:[%s333 + $0xe1] sm:$0xff]
        %v3062 = vld [vmem:[%s333 + $0xf1] sm:$0xff]
        %v3063 = vld [vmem:[%s333 + $0xf9] sm:$0xff]
        %v3064 = vld [vmem:[%s333 + $0x109] sm:$0xff]
        %v3065 = vld [vmem:[%s333 + $0x111] sm:$0xff]
        %v3066 = vld [vmem:[%s333 + $0x121] sm:$0xff]
        %v3067 = vld [vmem:[%s333 + $0x129] sm:$0xff]
        %v3068 = vld [vmem:[%s333 + $0x139] sm:$0xff]
        %v3069 = vld [vmem:[%s333 + $0x141] sm:$0xff]
        %v3070 = vld [vmem:[%s333 + $0x151] sm:$0xff]
        %v3071 = vld [vmem:[%s333 + $0x159] sm:$0xff]
        %v3072 = vld [vmem:[%s333 + $0x169] sm:$0xff]
        %v3073 = vld [vmem:[%s333 + $0x171] sm:$0xff]
        %3074 = vst.msk [vmem:[#allocation3 + $0x10] sm:$0xff] %vm223, %v3042
        %3075 = vst.msk [vmem:[#allocation3 + $0x38] sm:$0xff] %vm223, %v3043
        %3076 = vst.msk [vmem:[#allocation3 + $0x60] sm:$0xff] %vm223, %v3044
        %3077 = vst.msk [vmem:[#allocation3 + $0x88] sm:$0xff] %vm223, %v3045
        %3078 = vst.msk [vmem:[#allocation3 + $0xb0] sm:$0xff] %vm223, %v3046
        %3079 = vst.msk [vmem:[#allocation3 + $0xd8] sm:$0xff] %vm223, %v3047
        %3080 = vst.msk [vmem:[#allocation3 + $0x100] sm:$0xff] %vm223, %v3048
        %3081 = vst.msk [vmem:[#allocation3 + $0x128] sm:$0xff] %vm223, %v3049
        %3082 = vst.msk [vmem:[#allocation3 + $0x150] sm:$0xff] %vm223, %v3050
        %3083 = vst.msk [vmem:[#allocation3 + $0x178] sm:$0xff] %vm223, %v3051
        %3084 = vst.msk [vmem:[#allocation3 + $0x1a0] sm:$0xff] %vm223, %v3052
        %3085 = vst.msk [vmem:[#allocation3 + $0x1c8] sm:$0xff] %vm223, %v3053
        %3086 = vst.msk [vmem:[#allocation3 + $0x1f0] sm:$0xff] %vm223, %v3054
        %3087 = vst.msk [vmem:[#allocation3 + $0x218] sm:$0xff] %vm223, %v3055
        %3088 = vst.msk [vmem:[#allocation3 + $0x240] sm:$0xff] %vm223, %v3056
        %3089 = vst.msk [vmem:[#allocation3 + $0x268] sm:$0xff] %vm223, %v3057
        %3090 = vst.msk [vmem:[#allocation3 + $0x290] sm:$0xff] %vm223, %v3058
        %3091 = vst.msk [vmem:[#allocation3 + $0x2b8] sm:$0xff] %vm223, %v3059
        %3092 = vst.msk [vmem:[#allocation3 + $0x2e0] sm:$0xff] %vm223, %v3060
        %3093 = vst.msk [vmem:[#allocation3 + $0x308] sm:$0xff] %vm223, %v3061
        %3094 = vst.msk [vmem:[#allocation3 + $0x330] sm:$0xff] %vm223, %v3062
        %3095 = vst.msk [vmem:[#allocation3 + $0x358] sm:$0xff] %vm223, %v3063
        %3096 = vst.msk [vmem:[#allocation3 + $0x380] sm:$0xff] %vm223, %v3064
        %3097 = vst.msk [vmem:[#allocation3 + $0x3a8] sm:$0xff] %vm223, %v3065
        %3098 = vst.msk [vmem:[#allocation3 + $0x3d0] sm:$0xff] %vm223, %v3066
        %3099 = vst.msk [vmem:[#allocation3 + $0x3f8] sm:$0xff] %vm223, %v3067
        %3100 = vst.msk [vmem:[#allocation3 + $0x420] sm:$0xff] %vm223, %v3068
        %3101 = vst.msk [vmem:[#allocation3 + $0x448] sm:$0xff] %vm223, %v3069
        %3102 = vst.msk [vmem:[#allocation3 + $0x470] sm:$0xff] %vm223, %v3070
        %3103 = vst.msk [vmem:[#allocation3 + $0x498] sm:$0xff] %vm223, %v3071
        %3104 = vst.msk [vmem:[#allocation3 + $0x4c0] sm:$0xff] %vm223, %v3072
        %3105 = vst.msk [vmem:[#allocation3 + $0x4e8] sm:$0xff] %vm223, %v3073
        %v3106 = vld [vmem:[%s333 + $0x2] sm:$0xff]
        %v3107 = vld [vmem:[%s333 + $0xa] sm:$0xff]
        %v3108 = vld [vmem:[%s333 + $0x1a] sm:$0xff]
        %v3109 = vld [vmem:[%s333 + $0x22] sm:$0xff]
        %v3110 = vld [vmem:[%s333 + $0x32] sm:$0xff]
        %v3111 = vld [vmem:[%s333 + $0x3a] sm:$0xff]
        %v3112 = vld [vmem:[%s333 + $0x4a] sm:$0xff]
        %v3113 = vld [vmem:[%s333 + $0x52] sm:$0xff]
        %v3114 = vld [vmem:[%s333 + $0x62] sm:$0xff]
        %v3115 = vld [vmem:[%s333 + $0x6a] sm:$0xff]
        %v3116 = vld [vmem:[%s333 + $0x7a] sm:$0xff]
        %v3117 = vld [vmem:[%s333 + $0x82] sm:$0xff]
        %v3118 = vld [vmem:[%s333 + $0x92] sm:$0xff]
        %v3119 = vld [vmem:[%s333 + $0x9a] sm:$0xff]
        %v3120 = vld [vmem:[%s333 + $0xaa] sm:$0xff]
        %v3121 = vld [vmem:[%s333 + $0xb2] sm:$0xff]
        %v3122 = vld [vmem:[%s333 + $0xc2] sm:$0xff]
        %v3123 = vld [vmem:[%s333 + $0xca] sm:$0xff]
        %v3124 = vld [vmem:[%s333 + $0xda] sm:$0xff]
        %v3125 = vld [vmem:[%s333 + $0xe2] sm:$0xff]
        %v3126 = vld [vmem:[%s333 + $0xf2] sm:$0xff]
        %v3127 = vld [vmem:[%s333 + $0xfa] sm:$0xff]
        %v3128 = vld [vmem:[%s333 + $0x10a] sm:$0xff]
        %v3129 = vld [vmem:[%s333 + $0x112] sm:$0xff]
        %v3130 = vld [vmem:[%s333 + $0x122] sm:$0xff]
        %v3131 = vld [vmem:[%s333 + $0x12a] sm:$0xff]
        %v3132 = vld [vmem:[%s333 + $0x13a] sm:$0xff]
        %v3133 = vld [vmem:[%s333 + $0x142] sm:$0xff]
        %v3134 = vld [vmem:[%s333 + $0x152] sm:$0xff]
        %v3135 = vld [vmem:[%s333 + $0x15a] sm:$0xff]
        %v3136 = vld [vmem:[%s333 + $0x16a] sm:$0xff]
        %v3137 = vld [vmem:[%s333 + $0x172] sm:$0xff]
        %3170 = vrot.lane.b32.xlu0 %v3106, 64
        %v3171 = vpop.permute.xlu0 %3170
        %3172 = vrot.lane.b32.xlu0 %v3107, 64
        %v3173 = vpop.permute.xlu0 %3172
        %3174 = vrot.lane.b32.xlu0 %v3108, 64
        %v3175 = vpop.permute.xlu0 %3174
        %3176 = vrot.lane.b32.xlu0 %v3109, 64
        %v3177 = vpop.permute.xlu0 %3176
        %3178 = vrot.lane.b32.xlu0 %v3110, 64
        %v3179 = vpop.permute.xlu0 %3178
        %3180 = vrot.lane.b32.xlu0 %v3111, 64
        %v3181 = vpop.permute.xlu0 %3180
        %3182 = vrot.lane.b32.xlu0 %v3112, 64
        %v3183 = vpop.permute.xlu0 %3182
        %3184 = vrot.lane.b32.xlu0 %v3113, 64
        %v3185 = vpop.permute.xlu0 %3184
        %3186 = vrot.lane.b32.xlu0 %v3114, 64
        %v3187 = vpop.permute.xlu0 %3186
        %3188 = vrot.lane.b32.xlu0 %v3115, 64
        %v3189 = vpop.permute.xlu0 %3188
        %3190 = vrot.lane.b32.xlu0 %v3116, 64
        %v3191 = vpop.permute.xlu0 %3190
        %3192 = vrot.lane.b32.xlu0 %v3117, 64
        %v3193 = vpop.permute.xlu0 %3192
        %3194 = vrot.lane.b32.xlu0 %v3118, 64
        %v3195 = vpop.permute.xlu0 %3194
        %3196 = vrot.lane.b32.xlu0 %v3119, 64
        %v3197 = vpop.permute.xlu0 %3196
        %3198 = vrot.lane.b32.xlu0 %v3120, 64
        %v3199 = vpop.permute.xlu0 %3198
        %3200 = vrot.lane.b32.xlu0 %v3121, 64
        %v3201 = vpop.permute.xlu0 %3200
        %3202 = vrot.lane.b32.xlu0 %v3122, 64
        %v3203 = vpop.permute.xlu0 %3202
        %3204 = vrot.lane.b32.xlu0 %v3123, 64
        %v3205 = vpop.permute.xlu0 %3204
        %3206 = vrot.lane.b32.xlu0 %v3124, 64
        %v3207 = vpop.permute.xlu0 %3206
        %3208 = vrot.lane.b32.xlu0 %v3125, 64
        %v3209 = vpop.permute.xlu0 %3208
        %3210 = vrot.lane.b32.xlu0 %v3126, 64
        %v3211 = vpop.permute.xlu0 %3210
        %3212 = vrot.lane.b32.xlu0 %v3127, 64
        %v3213 = vpop.permute.xlu0 %3212
        %3214 = vrot.lane.b32.xlu0 %v3128, 64
        %v3215 = vpop.permute.xlu0 %3214
        %3216 = vrot.lane.b32.xlu0 %v3129, 64
        %v3217 = vpop.permute.xlu0 %3216
        %3218 = vrot.lane.b32.xlu0 %v3130, 64
        %v3219 = vpop.permute.xlu0 %3218
        %3220 = vrot.lane.b32.xlu0 %v3131, 64
        %v3221 = vpop.permute.xlu0 %3220
        %3222 = vrot.lane.b32.xlu0 %v3132, 64
        %v3223 = vpop.permute.xlu0 %3222
        %3224 = vrot.lane.b32.xlu0 %v3133, 64
        %v3225 = vpop.permute.xlu0 %3224
        %3226 = vrot.lane.b32.xlu0 %v3134, 64
        %v3227 = vpop.permute.xlu0 %3226
        %3228 = vrot.lane.b32.xlu0 %v3135, 64
        %v3229 = vpop.permute.xlu0 %3228
        %3230 = vrot.lane.b32.xlu0 %v3136, 64
        %v3231 = vpop.permute.xlu0 %3230
        %3232 = vrot.lane.b32.xlu0 %v3137, 64
        %v3233 = vpop.permute.xlu0 %3232
        %3266 = vst.msk [vmem:[#allocation3 + $0x10] sm:$0xff] %vm590, %v3171
        %3267 = vst.msk [vmem:[#allocation3 + $0x38] sm:$0xff] %vm590, %v3173
        %3268 = vst.msk [vmem:[#allocation3 + $0x60] sm:$0xff] %vm590, %v3175
        %3269 = vst.msk [vmem:[#allocation3 + $0x88] sm:$0xff] %vm590, %v3177
        %3270 = vst.msk [vmem:[#allocation3 + $0xb0] sm:$0xff] %vm590, %v3179
        %3271 = vst.msk [vmem:[#allocation3 + $0xd8] sm:$0xff] %vm590, %v3181
        %3272 = vst.msk [vmem:[#allocation3 + $0x100] sm:$0xff] %vm590, %v3183
        %3273 = vst.msk [vmem:[#allocation3 + $0x128] sm:$0xff] %vm590, %v3185
        %3274 = vst.msk [vmem:[#allocation3 + $0x150] sm:$0xff] %vm590, %v3187
        %3275 = vst.msk [vmem:[#allocation3 + $0x178] sm:$0xff] %vm590, %v3189
        %3276 = vst.msk [vmem:[#allocation3 + $0x1a0] sm:$0xff] %vm590, %v3191
        %3277 = vst.msk [vmem:[#allocation3 + $0x1c8] sm:$0xff] %vm590, %v3193
        %3278 = vst.msk [vmem:[#allocation3 + $0x1f0] sm:$0xff] %vm590, %v3195
        %3279 = vst.msk [vmem:[#allocation3 + $0x218] sm:$0xff] %vm590, %v3197
        %3280 = vst.msk [vmem:[#allocation3 + $0x240] sm:$0xff] %vm590, %v3199
        %3281 = vst.msk [vmem:[#allocation3 + $0x268] sm:$0xff] %vm590, %v3201
        %3282 = vst.msk [vmem:[#allocation3 + $0x290] sm:$0xff] %vm590, %v3203
        %3283 = vst.msk [vmem:[#allocation3 + $0x2b8] sm:$0xff] %vm590, %v3205
        %3284 = vst.msk [vmem:[#allocation3 + $0x2e0] sm:$0xff] %vm590, %v3207
        %3285 = vst.msk [vmem:[#allocation3 + $0x308] sm:$0xff] %vm590, %v3209
        %3286 = vst.msk [vmem:[#allocation3 + $0x330] sm:$0xff] %vm590, %v3211
        %3287 = vst.msk [vmem:[#allocation3 + $0x358] sm:$0xff] %vm590, %v3213
        %3288 = vst.msk [vmem:[#allocation3 + $0x380] sm:$0xff] %vm590, %v3215
        %3289 = vst.msk [vmem:[#allocation3 + $0x3a8] sm:$0xff] %vm590, %v3217
        %3290 = vst.msk [vmem:[#allocation3 + $0x3d0] sm:$0xff] %vm590, %v3219
        %3291 = vst.msk [vmem:[#allocation3 + $0x3f8] sm:$0xff] %vm590, %v3221
        %3292 = vst.msk [vmem:[#allocation3 + $0x420] sm:$0xff] %vm590, %v3223
        %3293 = vst.msk [vmem:[#allocation3 + $0x448] sm:$0xff] %vm590, %v3225
        %3294 = vst.msk [vmem:[#allocation3 + $0x470] sm:$0xff] %vm590, %v3227
        %3295 = vst.msk [vmem:[#allocation3 + $0x498] sm:$0xff] %vm590, %v3229
        %3296 = vst.msk [vmem:[#allocation3 + $0x4c0] sm:$0xff] %vm590, %v3231
        %3297 = vst.msk [vmem:[#allocation3 + $0x4e8] sm:$0xff] %vm590, %v3233
        %v3298 = vld [vmem:[%s1135] sm:$0xff]
        %v3299 = vld [vmem:[%s1135 + $0x8] sm:$0xff]
        %v3300 = vld [vmem:[%s1135 + $0x18] sm:$0xff]
        %v3301 = vld [vmem:[%s1135 + $0x20] sm:$0xff]
        %v3302 = vld [vmem:[%s1135 + $0x30] sm:$0xff]
        %v3303 = vld [vmem:[%s1135 + $0x38] sm:$0xff]
        %v3304 = vld [vmem:[%s1135 + $0x48] sm:$0xff]
        %v3305 = vld [vmem:[%s1135 + $0x50] sm:$0xff]
        %v3306 = vld [vmem:[%s1135 + $0x60] sm:$0xff]
        %v3307 = vld [vmem:[%s1135 + $0x68] sm:$0xff]
        %v3308 = vld [vmem:[%s1135 + $0x78] sm:$0xff]
        %v3309 = vld [vmem:[%s1135 + $0x80] sm:$0xff]
        %v3310 = vld [vmem:[%s1135 + $0x90] sm:$0xff]
        %v3311 = vld [vmem:[%s1135 + $0x98] sm:$0xff]
        %v3312 = vld [vmem:[%s1135 + $0xa8] sm:$0xff]
        %v3313 = vld [vmem:[%s1135 + $0xb0] sm:$0xff]
        %v3314 = vld [vmem:[%s1135 + $0xc0] sm:$0xff]
        %v3315 = vld [vmem:[%s1135 + $0xc8] sm:$0xff]
        %v3316 = vld [vmem:[%s1135 + $0xd8] sm:$0xff]
        %v3317 = vld [vmem:[%s1135 + $0xe0] sm:$0xff]
        %v3318 = vld [vmem:[%s1135 + $0xf0] sm:$0xff]
        %v3319 = vld [vmem:[%s1135 + $0xf8] sm:$0xff]
        %v3320 = vld [vmem:[%s1135 + $0x108] sm:$0xff]
        %v3321 = vld [vmem:[%s1135 + $0x110] sm:$0xff]
        %v3322 = vld [vmem:[%s1135 + $0x120] sm:$0xff]
        %v3323 = vld [vmem:[%s1135 + $0x128] sm:$0xff]
        %v3324 = vld [vmem:[%s1135 + $0x138] sm:$0xff]
        %v3325 = vld [vmem:[%s1135 + $0x140] sm:$0xff]
        %v3326 = vld [vmem:[%s1135 + $0x150] sm:$0xff]
        %v3327 = vld [vmem:[%s1135 + $0x158] sm:$0xff]
        %v3328 = vld [vmem:[%s1135 + $0x168] sm:$0xff]
        %v3329 = vld [vmem:[%s1135 + $0x170] sm:$0xff]
        %3330 = vst.msk [vmem:[#allocation3 + $0x18] sm:$0xff] %vm223, %v3298
        %3331 = vst.msk [vmem:[#allocation3 + $0x40] sm:$0xff] %vm223, %v3299
        %3332 = vst.msk [vmem:[#allocation3 + $0x68] sm:$0xff] %vm223, %v3300
        %3333 = vst.msk [vmem:[#allocation3 + $0x90] sm:$0xff] %vm223, %v3301
        %3334 = vst.msk [vmem:[#allocation3 + $0xb8] sm:$0xff] %vm223, %v3302
        %3335 = vst.msk [vmem:[#allocation3 + $0xe0] sm:$0xff] %vm223, %v3303
        %3336 = vst.msk [vmem:[#allocation3 + $0x108] sm:$0xff] %vm223, %v3304
        %3337 = vst.msk [vmem:[#allocation3 + $0x130] sm:$0xff] %vm223, %v3305
        %3338 = vst.msk [vmem:[#allocation3 + $0x158] sm:$0xff] %vm223, %v3306
        %3339 = vst.msk [vmem:[#allocation3 + $0x180] sm:$0xff] %vm223, %v3307
        %3340 = vst.msk [vmem:[#allocation3 + $0x1a8] sm:$0xff] %vm223, %v3308
        %3341 = vst.msk [vmem:[#allocation3 + $0x1d0] sm:$0xff] %vm223, %v3309
        %3342 = vst.msk [vmem:[#allocation3 + $0x1f8] sm:$0xff] %vm223, %v3310
        %3343 = vst.msk [vmem:[#allocation3 + $0x220] sm:$0xff] %vm223, %v3311
        %3344 = vst.msk [vmem:[#allocation3 + $0x248] sm:$0xff] %vm223, %v3312
        %3345 = vst.msk [vmem:[#allocation3 + $0x270] sm:$0xff] %vm223, %v3313
        %3346 = vst.msk [vmem:[#allocation3 + $0x298] sm:$0xff] %vm223, %v3314
        %3347 = vst.msk [vmem:[#allocation3 + $0x2c0] sm:$0xff] %vm223, %v3315
        %3348 = vst.msk [vmem:[#allocation3 + $0x2e8] sm:$0xff] %vm223, %v3316
        %3349 = vst.msk [vmem:[#allocation3 + $0x310] sm:$0xff] %vm223, %v3317
        %3350 = vst.msk [vmem:[#allocation3 + $0x338] sm:$0xff] %vm223, %v3318
        %3351 = vst.msk [vmem:[#allocation3 + $0x360] sm:$0xff] %vm223, %v3319
        %3352 = vst.msk [vmem:[#allocation3 + $0x388] sm:$0xff] %vm223, %v3320
        %3353 = vst.msk [vmem:[#allocation3 + $0x3b0] sm:$0xff] %vm223, %v3321
        %3354 = vst.msk [vmem:[#allocation3 + $0x3d8] sm:$0xff] %vm223, %v3322
        %3355 = vst.msk [vmem:[#allocation3 + $0x400] sm:$0xff] %vm223, %v3323
        %3356 = vst.msk [vmem:[#allocation3 + $0x428] sm:$0xff] %vm223, %v3324
        %3357 = vst.msk [vmem:[#allocation3 + $0x450] sm:$0xff] %vm223, %v3325
        %3358 = vst.msk [vmem:[#allocation3 + $0x478] sm:$0xff] %vm223, %v3326
        %3359 = vst.msk [vmem:[#allocation3 + $0x4a0] sm:$0xff] %vm223, %v3327
        %3360 = vst.msk [vmem:[#allocation3 + $0x4c8] sm:$0xff] %vm223, %v3328
        %3361 = vst.msk [vmem:[#allocation3 + $0x4f0] sm:$0xff] %vm223, %v3329
        %v3362 = vld [vmem:[%s1135 + $0x1] sm:$0xff]
        %v3363 = vld [vmem:[%s1135 + $0x9] sm:$0xff]
        %v3364 = vld [vmem:[%s1135 + $0x19] sm:$0xff]
        %v3365 = vld [vmem:[%s1135 + $0x21] sm:$0xff]
        %v3366 = vld [vmem:[%s1135 + $0x31] sm:$0xff]
        %v3367 = vld [vmem:[%s1135 + $0x39] sm:$0xff]
        %v3368 = vld [vmem:[%s1135 + $0x49] sm:$0xff]
        %v3369 = vld [vmem:[%s1135 + $0x51] sm:$0xff]
        %v3370 = vld [vmem:[%s1135 + $0x61] sm:$0xff]
        %v3371 = vld [vmem:[%s1135 + $0x69] sm:$0xff]
        %v3372 = vld [vmem:[%s1135 + $0x79] sm:$0xff]
        %v3373 = vld [vmem:[%s1135 + $0x81] sm:$0xff]
        %v3374 = vld [vmem:[%s1135 + $0x91] sm:$0xff]
        %v3375 = vld [vmem:[%s1135 + $0x99] sm:$0xff]
        %v3376 = vld [vmem:[%s1135 + $0xa9] sm:$0xff]
        %v3377 = vld [vmem:[%s1135 + $0xb1] sm:$0xff]
        %v3378 = vld [vmem:[%s1135 + $0xc1] sm:$0xff]
        %v3379 = vld [vmem:[%s1135 + $0xc9] sm:$0xff]
        %v3380 = vld [vmem:[%s1135 + $0xd9] sm:$0xff]
        %v3381 = vld [vmem:[%s1135 + $0xe1] sm:$0xff]
        %v3382 = vld [vmem:[%s1135 + $0xf1] sm:$0xff]
        %v3383 = vld [vmem:[%s1135 + $0xf9] sm:$0xff]
        %v3384 = vld [vmem:[%s1135 + $0x109] sm:$0xff]
        %v3385 = vld [vmem:[%s1135 + $0x111] sm:$0xff]
        %v3386 = vld [vmem:[%s1135 + $0x121] sm:$0xff]
        %v3387 = vld [vmem:[%s1135 + $0x129] sm:$0xff]
        %v3388 = vld [vmem:[%s1135 + $0x139] sm:$0xff]
        %v3389 = vld [vmem:[%s1135 + $0x141] sm:$0xff]
        %v3390 = vld [vmem:[%s1135 + $0x151] sm:$0xff]
        %v3391 = vld [vmem:[%s1135 + $0x159] sm:$0xff]
        %v3392 = vld [vmem:[%s1135 + $0x169] sm:$0xff]
        %v3393 = vld [vmem:[%s1135 + $0x171] sm:$0xff]
        %3426 = vrot.lane.b32.xlu0 %v3362, 64
        %v3427 = vpop.permute.xlu0 %3426
        %3428 = vrot.lane.b32.xlu0 %v3363, 64
        %v3429 = vpop.permute.xlu0 %3428
        %3430 = vrot.lane.b32.xlu0 %v3364, 64
        %v3431 = vpop.permute.xlu0 %3430
        %3432 = vrot.lane.b32.xlu0 %v3365, 64
        %v3433 = vpop.permute.xlu0 %3432
        %3434 = vrot.lane.b32.xlu0 %v3366, 64
        %v3435 = vpop.permute.xlu0 %3434
        %3436 = vrot.lane.b32.xlu0 %v3367, 64
        %v3437 = vpop.permute.xlu0 %3436
        %3438 = vrot.lane.b32.xlu0 %v3368, 64
        %v3439 = vpop.permute.xlu0 %3438
        %3440 = vrot.lane.b32.xlu0 %v3369, 64
        %v3441 = vpop.permute.xlu0 %3440
        %3442 = vrot.lane.b32.xlu0 %v3370, 64
        %v3443 = vpop.permute.xlu0 %3442
        %3444 = vrot.lane.b32.xlu0 %v3371, 64
        %v3445 = vpop.permute.xlu0 %3444
        %3446 = vrot.lane.b32.xlu0 %v3372, 64
        %v3447 = vpop.permute.xlu0 %3446
        %3448 = vrot.lane.b32.xlu0 %v3373, 64
        %v3449 = vpop.permute.xlu0 %3448
        %3450 = vrot.lane.b32.xlu0 %v3374, 64
        %v3451 = vpop.permute.xlu0 %3450
        %3452 = vrot.lane.b32.xlu0 %v3375, 64
        %v3453 = vpop.permute.xlu0 %3452
        %3454 = vrot.lane.b32.xlu0 %v3376, 64
        %v3455 = vpop.permute.xlu0 %3454
        %3456 = vrot.lane.b32.xlu0 %v3377, 64
        %v3457 = vpop.permute.xlu0 %3456
        %3458 = vrot.lane.b32.xlu0 %v3378, 64
        %v3459 = vpop.permute.xlu0 %3458
        %3460 = vrot.lane.b32.xlu0 %v3379, 64
        %v3461 = vpop.permute.xlu0 %3460
        %3462 = vrot.lane.b32.xlu0 %v3380, 64
        %v3463 = vpop.permute.xlu0 %3462
        %3464 = vrot.lane.b32.xlu0 %v3381, 64
        %v3465 = vpop.permute.xlu0 %3464
        %3466 = vrot.lane.b32.xlu0 %v3382, 64
        %v3467 = vpop.permute.xlu0 %3466
        %3468 = vrot.lane.b32.xlu0 %v3383, 64
        %v3469 = vpop.permute.xlu0 %3468
        %3470 = vrot.lane.b32.xlu0 %v3384, 64
        %v3471 = vpop.permute.xlu0 %3470
        %3472 = vrot.lane.b32.xlu0 %v3385, 64
        %v3473 = vpop.permute.xlu0 %3472
        %3474 = vrot.lane.b32.xlu0 %v3386, 64
        %v3475 = vpop.permute.xlu0 %3474
        %3476 = vrot.lane.b32.xlu0 %v3387, 64
        %v3477 = vpop.permute.xlu0 %3476
        %3478 = vrot.lane.b32.xlu0 %v3388, 64
        %v3479 = vpop.permute.xlu0 %3478
        %3480 = vrot.lane.b32.xlu0 %v3389, 64
        %v3481 = vpop.permute.xlu0 %3480
        %3482 = vrot.lane.b32.xlu0 %v3390, 64
        %v3483 = vpop.permute.xlu0 %3482
        %3484 = vrot.lane.b32.xlu0 %v3391, 64
        %v3485 = vpop.permute.xlu0 %3484
        %3486 = vrot.lane.b32.xlu0 %v3392, 64
        %v3487 = vpop.permute.xlu0 %3486
        %3488 = vrot.lane.b32.xlu0 %v3393, 64
        %v3489 = vpop.permute.xlu0 %3488
        %3522 = vst.msk [vmem:[#allocation3 + $0x18] sm:$0xff] %vm590, %v3427
        %3523 = vst.msk [vmem:[#allocation3 + $0x40] sm:$0xff] %vm590, %v3429
        %3524 = vst.msk [vmem:[#allocation3 + $0x68] sm:$0xff] %vm590, %v3431
        %3525 = vst.msk [vmem:[#allocation3 + $0x90] sm:$0xff] %vm590, %v3433
        %3526 = vst.msk [vmem:[#allocation3 + $0xb8] sm:$0xff] %vm590, %v3435
        %3527 = vst.msk [vmem:[#allocation3 + $0xe0] sm:$0xff] %vm590, %v3437
        %3528 = vst.msk [vmem:[#allocation3 + $0x108] sm:$0xff] %vm590, %v3439
        %3529 = vst.msk [vmem:[#allocation3 + $0x130] sm:$0xff] %vm590, %v3441
        %3530 = vst.msk [vmem:[#allocation3 + $0x158] sm:$0xff] %vm590, %v3443
        %3531 = vst.msk [vmem:[#allocation3 + $0x180] sm:$0xff] %vm590, %v3445
        %3532 = vst.msk [vmem:[#allocation3 + $0x1a8] sm:$0xff] %vm590, %v3447
        %3533 = vst.msk [vmem:[#allocation3 + $0x1d0] sm:$0xff] %vm590, %v3449
        %3534 = vst.msk [vmem:[#allocation3 + $0x1f8] sm:$0xff] %vm590, %v3451
        %3535 = vst.msk [vmem:[#allocation3 + $0x220] sm:$0xff] %vm590, %v3453
        %3536 = vst.msk [vmem:[#allocation3 + $0x248] sm:$0xff] %vm590, %v3455
        %3537 = vst.msk [vmem:[#allocation3 + $0x270] sm:$0xff] %vm590, %v3457
        %3538 = vst.msk [vmem:[#allocation3 + $0x298] sm:$0xff] %vm590, %v3459
        %3539 = vst.msk [vmem:[#allocation3 + $0x2c0] sm:$0xff] %vm590, %v3461
        %3540 = vst.msk [vmem:[#allocation3 + $0x2e8] sm:$0xff] %vm590, %v3463
        %3541 = vst.msk [vmem:[#allocation3 + $0x310] sm:$0xff] %vm590, %v3465
        %3542 = vst.msk [vmem:[#allocation3 + $0x338] sm:$0xff] %vm590, %v3467
        %3543 = vst.msk [vmem:[#allocation3 + $0x360] sm:$0xff] %vm590, %v3469
        %3544 = vst.msk [vmem:[#allocation3 + $0x388] sm:$0xff] %vm590, %v3471
        %3545 = vst.msk [vmem:[#allocation3 + $0x3b0] sm:$0xff] %vm590, %v3473
        %3546 = vst.msk [vmem:[#allocation3 + $0x3d8] sm:$0xff] %vm590, %v3475
        %3547 = vst.msk [vmem:[#allocation3 + $0x400] sm:$0xff] %vm590, %v3477
        %3548 = vst.msk [vmem:[#allocation3 + $0x428] sm:$0xff] %vm590, %v3479
        %3549 = vst.msk [vmem:[#allocation3 + $0x450] sm:$0xff] %vm590, %v3481
        %3550 = vst.msk [vmem:[#allocation3 + $0x478] sm:$0xff] %vm590, %v3483
        %3551 = vst.msk [vmem:[#allocation3 + $0x4a0] sm:$0xff] %vm590, %v3485
        %3552 = vst.msk [vmem:[#allocation3 + $0x4c8] sm:$0xff] %vm590, %v3487
        %3553 = vst.msk [vmem:[#allocation3 + $0x4f0] sm:$0xff] %vm590, %v3489
        %v3554 = vld [vmem:[%s1135 + $0x2] sm:$0xff]
        %v3555 = vld [vmem:[%s1135 + $0xa] sm:$0xff]
        %v3556 = vld [vmem:[%s1135 + $0x1a] sm:$0xff]
        %v3557 = vld [vmem:[%s1135 + $0x22] sm:$0xff]
        %v3558 = vld [vmem:[%s1135 + $0x32] sm:$0xff]
        %v3559 = vld [vmem:[%s1135 + $0x3a] sm:$0xff]
        %v3560 = vld [vmem:[%s1135 + $0x4a] sm:$0xff]
        %v3561 = vld [vmem:[%s1135 + $0x52] sm:$0xff]
        %v3562 = vld [vmem:[%s1135 + $0x62] sm:$0xff]
        %v3563 = vld [vmem:[%s1135 + $0x6a] sm:$0xff]
        %v3564 = vld [vmem:[%s1135 + $0x7a] sm:$0xff]
        %v3565 = vld [vmem:[%s1135 + $0x82] sm:$0xff]
        %v3566 = vld [vmem:[%s1135 + $0x92] sm:$0xff]
        %v3567 = vld [vmem:[%s1135 + $0x9a] sm:$0xff]
        %v3568 = vld [vmem:[%s1135 + $0xaa] sm:$0xff]
        %v3569 = vld [vmem:[%s1135 + $0xb2] sm:$0xff]
        %v3570 = vld [vmem:[%s1135 + $0xc2] sm:$0xff]
        %v3571 = vld [vmem:[%s1135 + $0xca] sm:$0xff]
        %v3572 = vld [vmem:[%s1135 + $0xda] sm:$0xff]
        %v3573 = vld [vmem:[%s1135 + $0xe2] sm:$0xff]
        %v3574 = vld [vmem:[%s1135 + $0xf2] sm:$0xff]
        %v3575 = vld [vmem:[%s1135 + $0xfa] sm:$0xff]
        %v3576 = vld [vmem:[%s1135 + $0x10a] sm:$0xff]
        %v3577 = vld [vmem:[%s1135 + $0x112] sm:$0xff]
        %v3578 = vld [vmem:[%s1135 + $0x122] sm:$0xff]
        %v3579 = vld [vmem:[%s1135 + $0x12a] sm:$0xff]
        %v3580 = vld [vmem:[%s1135 + $0x13a] sm:$0xff]
        %v3581 = vld [vmem:[%s1135 + $0x142] sm:$0xff]
        %v3582 = vld [vmem:[%s1135 + $0x152] sm:$0xff]
        %v3583 = vld [vmem:[%s1135 + $0x15a] sm:$0xff]
        %v3584 = vld [vmem:[%s1135 + $0x16a] sm:$0xff]
        %v3585 = vld [vmem:[%s1135 + $0x172] sm:$0xff]
        %3586 = vst.msk [vmem:[#allocation3 + $0x20] sm:$0xff] %vm223, %v3554
        %3587 = vst.msk [vmem:[#allocation3 + $0x48] sm:$0xff] %vm223, %v3555
        %3588 = vst.msk [vmem:[#allocation3 + $0x70] sm:$0xff] %vm223, %v3556
        %3589 = vst.msk [vmem:[#allocation3 + $0x98] sm:$0xff] %vm223, %v3557
        %3590 = vst.msk [vmem:[#allocation3 + $0xc0] sm:$0xff] %vm223, %v3558
        %3591 = vst.msk [vmem:[#allocation3 + $0xe8] sm:$0xff] %vm223, %v3559
        %3592 = vst.msk [vmem:[#allocation3 + $0x110] sm:$0xff] %vm223, %v3560
        %3593 = vst.msk [vmem:[#allocation3 + $0x138] sm:$0xff] %vm223, %v3561
        %3594 = vst.msk [vmem:[#allocation3 + $0x160] sm:$0xff] %vm223, %v3562
        %3595 = vst.msk [vmem:[#allocation3 + $0x188] sm:$0xff] %vm223, %v3563
        %3596 = vst.msk [vmem:[#allocation3 + $0x1b0] sm:$0xff] %vm223, %v3564
        %3597 = vst.msk [vmem:[#allocation3 + $0x1d8] sm:$0xff] %vm223, %v3565
        %3598 = vst.msk [vmem:[#allocation3 + $0x200] sm:$0xff] %vm223, %v3566
        %3599 = vst.msk [vmem:[#allocation3 + $0x228] sm:$0xff] %vm223, %v3567
        %3600 = vst.msk [vmem:[#allocation3 + $0x250] sm:$0xff] %vm223, %v3568
        %3601 = vst.msk [vmem:[#allocation3 + $0x278] sm:$0xff] %vm223, %v3569
        %3602 = vst.msk [vmem:[#allocation3 + $0x2a0] sm:$0xff] %vm223, %v3570
        %3603 = vst.msk [vmem:[#allocation3 + $0x2c8] sm:$0xff] %vm223, %v3571
        %3604 = vst.msk [vmem:[#allocation3 + $0x2f0] sm:$0xff] %vm223, %v3572
        %3605 = vst.msk [vmem:[#allocation3 + $0x318] sm:$0xff] %vm223, %v3573
        %3606 = vst.msk [vmem:[#allocation3 + $0x340] sm:$0xff] %vm223, %v3574
        %3607 = vst.msk [vmem:[#allocation3 + $0x368] sm:$0xff] %vm223, %v3575
        %3608 = vst.msk [vmem:[#allocation3 + $0x390] sm:$0xff] %vm223, %v3576
        %3609 = vst.msk [vmem:[#allocation3 + $0x3b8] sm:$0xff] %vm223, %v3577
        %3610 = vst.msk [vmem:[#allocation3 + $0x3e0] sm:$0xff] %vm223, %v3578
        %3611 = vst.msk [vmem:[#allocation3 + $0x408] sm:$0xff] %vm223, %v3579
        %3612 = vst.msk [vmem:[#allocation3 + $0x430] sm:$0xff] %vm223, %v3580
        %3613 = vst.msk [vmem:[#allocation3 + $0x458] sm:$0xff] %vm223, %v3581
        %3614 = vst.msk [vmem:[#allocation3 + $0x480] sm:$0xff] %vm223, %v3582
        %3615 = vst.msk [vmem:[#allocation3 + $0x4a8] sm:$0xff] %vm223, %v3583
        %3616 = vst.msk [vmem:[#allocation3 + $0x4d0] sm:$0xff] %vm223, %v3584
        %3617 = vst.msk [vmem:[#allocation3 + $0x4f8] sm:$0xff] %vm223, %v3585
        %v3618 = vld [vmem:[#allocation3] sm:$0xff]
        %v3619 = vld [vmem:[#allocation3 + $0x8] sm:$0xff]
        %v3620 = vld [vmem:[#allocation3 + $0x10] sm:$0xff]
        %v3621 = vld [vmem:[#allocation3 + $0x18] sm:$0xff]
        %v3622 = vld [vmem:[#allocation3 + $0x20] sm:$0xff]
        %v3623 = vld [vmem:[#allocation3 + $0x28] sm:$0xff]
        %v3624 = vld [vmem:[#allocation3 + $0x30] sm:$0xff]
        %v3625 = vld [vmem:[#allocation3 + $0x38] sm:$0xff]
        %v3626 = vld [vmem:[#allocation3 + $0x40] sm:$0xff]
        %v3627 = vld [vmem:[#allocation3 + $0x48] sm:$0xff]
        %v3628 = vld [vmem:[#allocation3 + $0x50] sm:$0xff]
        %v3629 = vld [vmem:[#allocation3 + $0x58] sm:$0xff]
        %v3630 = vld [vmem:[#allocation3 + $0x60] sm:$0xff]
        %v3631 = vld [vmem:[#allocation3 + $0x68] sm:$0xff]
        %v3632 = vld [vmem:[#allocation3 + $0x70] sm:$0xff]
        %v3633 = vld [vmem:[#allocation3 + $0x78] sm:$0xff]
        %v3634 = vld [vmem:[#allocation3 + $0x80] sm:$0xff]
        %v3635 = vld [vmem:[#allocation3 + $0x88] sm:$0xff]
        %v3636 = vld [vmem:[#allocation3 + $0x90] sm:$0xff]
        %v3637 = vld [vmem:[#allocation3 + $0x98] sm:$0xff]
        %v3638 = vld [vmem:[#allocation3 + $0xa0] sm:$0xff]
        %v3639 = vld [vmem:[#allocation3 + $0xa8] sm:$0xff]
        %v3640 = vld [vmem:[#allocation3 + $0xb0] sm:$0xff]
        %v3641 = vld [vmem:[#allocation3 + $0xb8] sm:$0xff]
        %v3642 = vld [vmem:[#allocation3 + $0xc0] sm:$0xff]
        %v3643 = vld [vmem:[#allocation3 + $0xc8] sm:$0xff]
        %v3644 = vld [vmem:[#allocation3 + $0xd0] sm:$0xff]
        %v3645 = vld [vmem:[#allocation3 + $0xd8] sm:$0xff]
        %v3646 = vld [vmem:[#allocation3 + $0xe0] sm:$0xff]
        %v3647 = vld [vmem:[#allocation3 + $0xe8] sm:$0xff]
        %v3648 = vld [vmem:[#allocation3 + $0xf0] sm:$0xff]
        %v3649 = vld [vmem:[#allocation3 + $0xf8] sm:$0xff]
        %v3650 = vld [vmem:[#allocation3 + $0x100] sm:$0xff]
        %v3651 = vld [vmem:[#allocation3 + $0x108] sm:$0xff]
        %v3652 = vld [vmem:[#allocation3 + $0x110] sm:$0xff]
        %v3653 = vld [vmem:[#allocation3 + $0x118] sm:$0xff]
        %v3654 = vld [vmem:[#allocation3 + $0x120] sm:$0xff]
        %v3655 = vld [vmem:[#allocation3 + $0x128] sm:$0xff]
        %v3656 = vld [vmem:[#allocation3 + $0x130] sm:$0xff]
        %v3657 = vld [vmem:[#allocation3 + $0x138] sm:$0xff]
        %v3658 = vld [vmem:[#allocation3 + $0x140] sm:$0xff]
        %v3659 = vld [vmem:[#allocation3 + $0x148] sm:$0xff]
        %v3660 = vld [vmem:[#allocation3 + $0x150] sm:$0xff]
        %v3661 = vld [vmem:[#allocation3 + $0x158] sm:$0xff]
        %v3662 = vld [vmem:[#allocation3 + $0x160] sm:$0xff]
        %v3663 = vld [vmem:[#allocation3 + $0x168] sm:$0xff]
        %v3664 = vld [vmem:[#allocation3 + $0x170] sm:$0xff]
        %v3665 = vld [vmem:[#allocation3 + $0x178] sm:$0xff]
        %v3666 = vld [vmem:[#allocation3 + $0x180] sm:$0xff]
        %v3667 = vld [vmem:[#allocation3 + $0x188] sm:$0xff]
        %v3668 = vld [vmem:[#allocation3 + $0x190] sm:$0xff]
        %v3669 = vld [vmem:[#allocation3 + $0x198] sm:$0xff]
        %v3670 = vld [vmem:[#allocation3 + $0x1a0] sm:$0xff]
        %v3671 = vld [vmem:[#allocation3 + $0x1a8] sm:$0xff]
        %v3672 = vld [vmem:[#allocation3 + $0x1b0] sm:$0xff]
        %v3673 = vld [vmem:[#allocation3 + $0x1b8] sm:$0xff]
        %v3674 = vld [vmem:[#allocation3 + $0x1c0] sm:$0xff]
        %v3675 = vld [vmem:[#allocation3 + $0x1c8] sm:$0xff]
        %v3676 = vld [vmem:[#allocation3 + $0x1d0] sm:$0xff]
        %v3677 = vld [vmem:[#allocation3 + $0x1d8] sm:$0xff]
        %v3678 = vld [vmem:[#allocation3 + $0x1e0] sm:$0xff]
        %v3679 = vld [vmem:[#allocation3 + $0x1e8] sm:$0xff]
        %v3680 = vld [vmem:[#allocation3 + $0x1f0] sm:$0xff]
        %v3681 = vld [vmem:[#allocation3 + $0x1f8] sm:$0xff]
        %v3682 = vld [vmem:[#allocation3 + $0x200] sm:$0xff]
        %v3683 = vld [vmem:[#allocation3 + $0x208] sm:$0xff]
        %v3684 = vld [vmem:[#allocation3 + $0x210] sm:$0xff]
        %v3685 = vld [vmem:[#allocation3 + $0x218] sm:$0xff]
        %v3686 = vld [vmem:[#allocation3 + $0x220] sm:$0xff]
        %v3687 = vld [vmem:[#allocation3 + $0x228] sm:$0xff]
        %v3688 = vld [vmem:[#allocation3 + $0x230] sm:$0xff]
        %v3689 = vld [vmem:[#allocation3 + $0x238] sm:$0xff]
        %v3690 = vld [vmem:[#allocation3 + $0x240] sm:$0xff]
        %v3691 = vld [vmem:[#allocation3 + $0x248] sm:$0xff]
        %v3692 = vld [vmem:[#allocation3 + $0x250] sm:$0xff]
        %v3693 = vld [vmem:[#allocation3 + $0x258] sm:$0xff]
        %v3694 = vld [vmem:[#allocation3 + $0x260] sm:$0xff]
        %v3695 = vld [vmem:[#allocation3 + $0x268] sm:$0xff]
        %v3696 = vld [vmem:[#allocation3 + $0x270] sm:$0xff]
        %v3697 = vld [vmem:[#allocation3 + $0x278] sm:$0xff]
        %v3698 = vld [vmem:[#allocation3 + $0x280] sm:$0xff]
        %v3699 = vld [vmem:[#allocation3 + $0x288] sm:$0xff]
        %v3700 = vld [vmem:[#allocation3 + $0x290] sm:$0xff]
        %v3701 = vld [vmem:[#allocation3 + $0x298] sm:$0xff]
        %v3702 = vld [vmem:[#allocation3 + $0x2a0] sm:$0xff]
        %v3703 = vld [vmem:[#allocation3 + $0x2a8] sm:$0xff]
        %v3704 = vld [vmem:[#allocation3 + $0x2b0] sm:$0xff]
        %v3705 = vld [vmem:[#allocation3 + $0x2b8] sm:$0xff]
        %v3706 = vld [vmem:[#allocation3 + $0x2c0] sm:$0xff]
        %v3707 = vld [vmem:[#allocation3 + $0x2c8] sm:$0xff]
        %v3708 = vld [vmem:[#allocation3 + $0x2d0] sm:$0xff]
        %v3709 = vld [vmem:[#allocation3 + $0x2d8] sm:$0xff]
        %v3710 = vld [vmem:[#allocation3 + $0x2e0] sm:$0xff]
        %v3711 = vld [vmem:[#allocation3 + $0x2e8] sm:$0xff]
        %v3712 = vld [vmem:[#allocation3 + $0x2f0] sm:$0xff]
        %v3713 = vld [vmem:[#allocation3 + $0x2f8] sm:$0xff]
        %v3714 = vld [vmem:[#allocation3 + $0x300] sm:$0xff]
        %v3715 = vld [vmem:[#allocation3 + $0x308] sm:$0xff]
        %v3716 = vld [vmem:[#allocation3 + $0x310] sm:$0xff]
        %v3717 = vld [vmem:[#allocation3 + $0x318] sm:$0xff]
        %v3718 = vld [vmem:[#allocation3 + $0x320] sm:$0xff]
        %v3719 = vld [vmem:[#allocation3 + $0x328] sm:$0xff]
        %v3720 = vld [vmem:[#allocation3 + $0x330] sm:$0xff]
        %v3721 = vld [vmem:[#allocation3 + $0x338] sm:$0xff]
        %v3722 = vld [vmem:[#allocation3 + $0x340] sm:$0xff]
        %v3723 = vld [vmem:[#allocation3 + $0x348] sm:$0xff]
        %v3724 = vld [vmem:[#allocation3 + $0x350] sm:$0xff]
        %v3725 = vld [vmem:[#allocation3 + $0x358] sm:$0xff]
        %v3726 = vld [vmem:[#allocation3 + $0x360] sm:$0xff]
        %v3727 = vld [vmem:[#allocation3 + $0x368] sm:$0xff]
        %v3728 = vld [vmem:[#allocation3 + $0x370] sm:$0xff]
        %v3729 = vld [vmem:[#allocation3 + $0x378] sm:$0xff]
        %v3730 = vld [vmem:[#allocation3 + $0x380] sm:$0xff]
        %v3731 = vld [vmem:[#allocation3 + $0x388] sm:$0xff]
        %v3732 = vld [vmem:[#allocation3 + $0x390] sm:$0xff]
        %v3733 = vld [vmem:[#allocation3 + $0x398] sm:$0xff]
        %v3734 = vld [vmem:[#allocation3 + $0x3a0] sm:$0xff]
        %v3735 = vld [vmem:[#allocation3 + $0x3a8] sm:$0xff]
        %v3736 = vld [vmem:[#allocation3 + $0x3b0] sm:$0xff]
        %v3737 = vld [vmem:[#allocation3 + $0x3b8] sm:$0xff]
        %v3738 = vld [vmem:[#allocation3 + $0x3c0] sm:$0xff]
        %v3739 = vld [vmem:[#allocation3 + $0x3c8] sm:$0xff]
        %v3740 = vld [vmem:[#allocation3 + $0x3d0] sm:$0xff]
        %v3741 = vld [vmem:[#allocation3 + $0x3d8] sm:$0xff]
        %v3742 = vld [vmem:[#allocation3 + $0x3e0] sm:$0xff]
        %v3743 = vld [vmem:[#allocation3 + $0x3e8] sm:$0xff]
        %v3744 = vld [vmem:[#allocation3 + $0x3f0] sm:$0xff]
        %v3745 = vld [vmem:[#allocation3 + $0x3f8] sm:$0xff]
        %v3746 = vld [vmem:[#allocation3 + $0x400] sm:$0xff]
        %v3747 = vld [vmem:[#allocation3 + $0x408] sm:$0xff]
        %v3748 = vld [vmem:[#allocation3 + $0x410] sm:$0xff]
        %v3749 = vld [vmem:[#allocation3 + $0x418] sm:$0xff]
        %v3750 = vld [vmem:[#allocation3 + $0x420] sm:$0xff]
        %v3751 = vld [vmem:[#allocation3 + $0x428] sm:$0xff]
        %v3752 = vld [vmem:[#allocation3 + $0x430] sm:$0xff]
        %v3753 = vld [vmem:[#allocation3 + $0x438] sm:$0xff]
        %v3754 = vld [vmem:[#allocation3 + $0x440] sm:$0xff]
        %v3755 = vld [vmem:[#allocation3 + $0x448] sm:$0xff]
        %v3756 = vld [vmem:[#allocation3 + $0x450] sm:$0xff]
        %v3757 = vld [vmem:[#allocation3 + $0x458] sm:$0xff]
        %v3758 = vld [vmem:[#allocation3 + $0x460] sm:$0xff]
        %v3759 = vld [vmem:[#allocation3 + $0x468] sm:$0xff]
        %v3760 = vld [vmem:[#allocation3 + $0x470] sm:$0xff]
        %v3761 = vld [vmem:[#allocation3 + $0x478] sm:$0xff]
        %v3762 = vld [vmem:[#allocation3 + $0x480] sm:$0xff]
        %v3763 = vld [vmem:[#allocation3 + $0x488] sm:$0xff]
        %v3764 = vld [vmem:[#allocation3 + $0x490] sm:$0xff]
        %v3765 = vld [vmem:[#allocation3 + $0x498] sm:$0xff]
        %v3766 = vld [vmem:[#allocation3 + $0x4a0] sm:$0xff]
        %v3767 = vld [vmem:[#allocation3 + $0x4a8] sm:$0xff]
        %v3768 = vld [vmem:[#allocation3 + $0x4b0] sm:$0xff]
        %v3769 = vld [vmem:[#allocation3 + $0x4b8] sm:$0xff]
        %v3770 = vld [vmem:[#allocation3 + $0x4c0] sm:$0xff]
        %v3771 = vld [vmem:[#allocation3 + $0x4c8] sm:$0xff]
        %v3772 = vld [vmem:[#allocation3 + $0x4d0] sm:$0xff]
        %v3773 = vld [vmem:[#allocation3 + $0x4d8] sm:$0xff]
        %v3774 = vld [vmem:[#allocation3 + $0x4e0] sm:$0xff]
        %v3775 = vld [vmem:[#allocation3 + $0x4e8] sm:$0xff]
        %v3776 = vld [vmem:[#allocation3 + $0x4f0] sm:$0xff]
        %v3777 = vld [vmem:[#allocation3 + $0x4f8] sm:$0xff]
        %v3778 = vld [vmem:[%s3] sm:$0xff]
        %v3779 = vld [vmem:[%s3 + $0x8] sm:$0xff]
        %v3780 = vld [vmem:[%s3 + $0x10] sm:$0xff]
        %v3781 = vld [vmem:[%s3 + $0x18] sm:$0xff]
        %v3782 = vld [vmem:[%s3 + $0x20] sm:$0xff]
        %v3783 = vld [vmem:[%s3 + $0x28] sm:$0xff]
        %v3784 = vld [vmem:[%s3 + $0x30] sm:$0xff]
        %v3785 = vld [vmem:[%s3 + $0x38] sm:$0xff]
        %v3786 = vld [vmem:[%s3 + $0x40] sm:$0xff]
        %v3787 = vld [vmem:[%s3 + $0x48] sm:$0xff]
        %v3788 = vld [vmem:[%s3 + $0x50] sm:$0xff]
        %v3789 = vld [vmem:[%s3 + $0x58] sm:$0xff]
        %v3790 = vld [vmem:[%s3 + $0x60] sm:$0xff]
        %v3791 = vld [vmem:[%s3 + $0x68] sm:$0xff]
        %v3792 = vld [vmem:[%s3 + $0x70] sm:$0xff]
        %v3793 = vld [vmem:[%s3 + $0x78] sm:$0xff]
        %v3794 = vld [vmem:[%s3 + $0x80] sm:$0xff]
        %v3795 = vld [vmem:[%s3 + $0x88] sm:$0xff]
        %v3796 = vld [vmem:[%s3 + $0x90] sm:$0xff]
        %v3797 = vld [vmem:[%s3 + $0x98] sm:$0xff]
        %v3798 = vld [vmem:[%s3 + $0xa0] sm:$0xff]
        %v3799 = vld [vmem:[%s3 + $0xa8] sm:$0xff]
        %v3800 = vld [vmem:[%s3 + $0xb0] sm:$0xff]
        %v3801 = vld [vmem:[%s3 + $0xb8] sm:$0xff]
        %v3802 = vld [vmem:[%s3 + $0xc0] sm:$0xff]
        %v3803 = vld [vmem:[%s3 + $0xc8] sm:$0xff]
        %v3804 = vld [vmem:[%s3 + $0xd0] sm:$0xff]
        %v3805 = vld [vmem:[%s3 + $0xd8] sm:$0xff]
        %v3806 = vld [vmem:[%s3 + $0xe0] sm:$0xff]
        %v3807 = vld [vmem:[%s3 + $0xe8] sm:$0xff]
        %v3808 = vld [vmem:[%s3 + $0xf0] sm:$0xff]
        %v3809 = vld [vmem:[%s3 + $0xf8] sm:$0xff]
        %v3810 = vld [vmem:[%s3 + $0x100] sm:$0xff]
        %v3811 = vld [vmem:[%s3 + $0x108] sm:$0xff]
        %v3812 = vld [vmem:[%s3 + $0x110] sm:$0xff]
        %v3813 = vld [vmem:[%s3 + $0x118] sm:$0xff]
        %v3814 = vld [vmem:[%s3 + $0x120] sm:$0xff]
        %v3815 = vld [vmem:[%s3 + $0x128] sm:$0xff]
        %v3816 = vld [vmem:[%s3 + $0x130] sm:$0xff]
        %v3817 = vld [vmem:[%s3 + $0x138] sm:$0xff]
        %v3818 = vld [vmem:[%s3 + $0x140] sm:$0xff]
        %v3819 = vld [vmem:[%s3 + $0x148] sm:$0xff]
        %v3820 = vld [vmem:[%s3 + $0x150] sm:$0xff]
        %v3821 = vld [vmem:[%s3 + $0x158] sm:$0xff]
        %v3822 = vld [vmem:[%s3 + $0x160] sm:$0xff]
        %v3823 = vld [vmem:[%s3 + $0x168] sm:$0xff]
        %v3824 = vld [vmem:[%s3 + $0x170] sm:$0xff]
        %v3825 = vld [vmem:[%s3 + $0x178] sm:$0xff]
        %v3826 = vld [vmem:[%s3 + $0x180] sm:$0xff]
        %v3827 = vld [vmem:[%s3 + $0x188] sm:$0xff]
        %v3828 = vld [vmem:[%s3 + $0x190] sm:$0xff]
        %v3829 = vld [vmem:[%s3 + $0x198] sm:$0xff]
        %v3830 = vld [vmem:[%s3 + $0x1a0] sm:$0xff]
        %v3831 = vld [vmem:[%s3 + $0x1a8] sm:$0xff]
        %v3832 = vld [vmem:[%s3 + $0x1b0] sm:$0xff]
        %v3833 = vld [vmem:[%s3 + $0x1b8] sm:$0xff]
        %v3834 = vld [vmem:[%s3 + $0x1c0] sm:$0xff]
        %v3835 = vld [vmem:[%s3 + $0x1c8] sm:$0xff]
        %v3836 = vld [vmem:[%s3 + $0x1d0] sm:$0xff]
        %v3837 = vld [vmem:[%s3 + $0x1d8] sm:$0xff]
        %v3838 = vld [vmem:[%s3 + $0x1e0] sm:$0xff]
        %v3839 = vld [vmem:[%s3 + $0x1e8] sm:$0xff]
        %v3840 = vld [vmem:[%s3 + $0x1f0] sm:$0xff]
        %v3841 = vld [vmem:[%s3 + $0x1f8] sm:$0xff]
        %v3842 = vld [vmem:[%s3 + $0x200] sm:$0xff]
        %v3843 = vld [vmem:[%s3 + $0x208] sm:$0xff]
        %v3844 = vld [vmem:[%s3 + $0x210] sm:$0xff]
        %v3845 = vld [vmem:[%s3 + $0x218] sm:$0xff]
        %v3846 = vld [vmem:[%s3 + $0x220] sm:$0xff]
        %v3847 = vld [vmem:[%s3 + $0x228] sm:$0xff]
        %v3848 = vld [vmem:[%s3 + $0x230] sm:$0xff]
        %v3849 = vld [vmem:[%s3 + $0x238] sm:$0xff]
        %v3850 = vld [vmem:[%s4] sm:$0x1]
        %v3852 = vlaneseq
        %v3853 = vshrl.u32 %v3852, 7
        %v3854 = vsub.s32 0, %v3853
        %v3855 = vrot.slane %v3850, %v3854
        %v3858 = vsel %vm223, %v3622, 0
        %v3861 = vsel %vm223, %v3627, 0
        %v3864 = vsel %vm223, %v3632, 0
        %v3867 = vsel %vm223, %v3637, 0
        %v3870 = vsel %vm223, %v3642, 0
        %v3873 = vsel %vm223, %v3647, 0
        %v3876 = vsel %vm223, %v3652, 0
        %v3879 = vsel %vm223, %v3657, 0
        %v3882 = vsel %vm223, %v3662, 0
        %v3885 = vsel %vm223, %v3667, 0
        %v3888 = vsel %vm223, %v3672, 0
        %v3891 = vsel %vm223, %v3677, 0
        %v3894 = vsel %vm223, %v3682, 0
        %v3897 = vsel %vm223, %v3687, 0
        %v3900 = vsel %vm223, %v3692, 0
        %v3903 = vsel %vm223, %v3697, 0
        %v3906 = vsel %vm223, %v3702, 0
        %v3909 = vsel %vm223, %v3707, 0
        %v3912 = vsel %vm223, %v3712, 0
        %v3915 = vsel %vm223, %v3717, 0
        %v3918 = vsel %vm223, %v3722, 0
        %v3921 = vsel %vm223, %v3727, 0
        %v3924 = vsel %vm223, %v3732, 0
        %v3927 = vsel %vm223, %v3737, 0
        %v3930 = vsel %vm223, %v3742, 0
        %v3933 = vsel %vm223, %v3747, 0
        %v3936 = vsel %vm223, %v3752, 0
        %v3939 = vsel %vm223, %v3757, 0
        %v3942 = vsel %vm223, %v3762, 0
        %v3945 = vsel %vm223, %v3767, 0
        %v3948 = vsel %vm223, %v3772, 0
        %v3951 = vsel %vm223, %v3777, 0
        %3953 = vmatprep.subr.mxu0 0.0
        %3954 = vmatpush1.msra.mxu0 %v3778
        %3955 = vmatprep.subr.mxu0 0.0
        %3956 = vmatpush1.msra.mxu0 %v3779
        %3957 = vmatprep.subr.mxu0 0.0
        %3958 = vmatpush1.msra.mxu0 %v3780
        %3959 = vmatprep.subr.mxu0 0.0
        %3960 = vmatpush1.msra.mxu0 %v3781
        %3961 = vmatprep.subr.mxu0 0.0
        %3962 = vmatpush1.msra.mxu0 %v3782
        %3963 = vmatprep.subr.mxu0 0.0
        %3964 = vmatpush1.msra.mxu0 %v3783
        %3965 = vmatprep.subr.mxu0 0.0
        %3966 = vmatpush1.msra.mxu0 %v3784
        %3967 = vmatprep.subr.mxu0 0.0
        %3968 = vmatpush1.msra.mxu0 %v3785
        %3969 = vmatprep.subr.mxu0 0.0
        %3970 = vmatpush1.msra.mxu0 %v3786
        %3971 = vmatprep.subr.mxu0 0.0
        %3972 = vmatpush1.msra.mxu0 %v3787
        %3973 = vmatprep.subr.mxu0 0.0
        %3974 = vmatpush1.msra.mxu0 %v3788
        %3975 = vmatprep.subr.mxu0 0.0
        %3976 = vmatpush1.msra.mxu0 %v3789
        %3977 = vmatprep.subr.mxu0 0.0
        %3978 = vmatpush1.msra.mxu0 %v3790
        %3979 = vmatprep.subr.mxu0 0.0
        %3980 = vmatpush1.msra.mxu0 %v3791
        %3981 = vmatprep.subr.mxu0 0.0
        %3982 = vmatpush1.msra.mxu0 %v3792
        %3983 = vmatprep.subr.mxu0 0.0
        %3984 = vmatpush1.msra.mxu0 %v3793
        %3985 = vmatprep.subr.mxu0 0.0
        %3986 = vmatpush1.msra.mxu0 %v3794
        %3987 = vmatprep.subr.mxu0 0.0
        %3988 = vmatpush1.msra.mxu0 %v3795
        %3989 = vmatprep.subr.mxu0 0.0
        %3990 = vmatpush1.msra.mxu0 %v3796
        %3991 = vmatprep.subr.mxu0 0.0
        %3992 = vmatpush1.msra.mxu0 %v3797
        %3993 = vmatprep.subr.mxu0 0.0
        %3994 = vmatpush1.msra.mxu0 %v3798
        %3995 = vmatprep.subr.mxu0 0.0
        %3996 = vmatpush1.msra.mxu0 %v3799
        %3997 = vmatprep.subr.mxu0 0.0
        %3998 = vmatpush1.msra.mxu0 %v3800
        %3999 = vmatprep.subr.mxu0 0.0
        %4000 = vmatpush1.msra.mxu0 %v3801
        %4001 = vmatprep.subr.mxu0 0.0
        %4002 = vmatpush1.msra.mxu0 %v3802
        %4003 = vmatprep.subr.mxu0 0.0
        %4004 = vmatpush1.msra.mxu0 %v3803
        %4005 = vmatprep.subr.mxu0 0.0
        %4006 = vmatpush1.msra.mxu0 %v3804
        %4007 = vmatprep.subr.mxu0 0.0
        %4008 = vmatpush1.msra.mxu0 %v3805
        %4009 = vmatprep.subr.mxu0 0.0
        %4010 = vmatpush1.msra.mxu0 %v3806
        %4011 = vmatprep.subr.mxu0 0.0
        %4012 = vmatpush1.msra.mxu0 %v3807
        %4013 = vmatprep.subr.mxu0 0.0
        %4014 = vmatpush1.msra.mxu0 %v3808
        %4015 = vmatprep.subr.mxu0 0.0
        %4016 = vmatpush1.msra.mxu0 %v3809
        %4017 = vmatprep.mubr.f32.mxu0 %v3619
        %4018 = vmatmul.mubr.f32.gmra.mrb[0].mxu0 %v3618
        %v4019 = vpop.f32.mrb[0].mxu0
        %v4020 = vadd.f32 %v3855, %v4019
        %v4021 = vpop.f32.mrb[0].mxu0
        %4022 = vmatprep.mubr.f32.mxu0 %v3624
        %4023 = vmatmul.mubr.f32.gmra.mrb[0].mxu0 %v3623
        %v4024 = vpop.f32.mrb[0].mxu0
        %v4025 = vadd.f32 %v3855, %v4024
        %v4026 = vpop.f32.mrb[0].mxu0
        %4027 = vmatprep.mubr.f32.mxu0 %v3629
        %4028 = vmatmul.mubr.f32.gmra.mrb[0].mxu0 %v3628
        %v4029 = vpop.f32.mrb[0].mxu0
        %v4030 = vadd.f32 %v3855, %v4029
        %v4031 = vpop.f32.mrb[0].mxu0
        %4032 = vmatprep.mubr.f32.mxu0 %v3634
        %4033 = vmatmul.mubr.f32.gmra.mrb[0].mxu0 %v3633
        %v4034 = vpop.f32.mrb[0].mxu0
        %v4035 = vadd.f32 %v3855, %v4034
        %v4036 = vpop.f32.mrb[0].mxu0
        %4037 = vmatprep.mubr.f32.mxu0 %v3639
        %4038 = vmatmul.mubr.f32.gmra.mrb[0].mxu0 %v3638
        %v4039 = vpop.f32.mrb[0].mxu0
        %v4040 = vadd.f32 %v3855, %v4039
        %v4041 = vpop.f32.mrb[0].mxu0
        %4042 = vmatprep.mubr.f32.mxu0 %v3644
        %4043 = vmatmul.mubr.f32.gmra.mrb[0].mxu0 %v3643
        %v4044 = vpop.f32.mrb[0].mxu0
        %v4045 = vadd.f32 %v3855, %v4044
        %v4046 = vpop.f32.mrb[0].mxu0
        %4047 = vmatprep.mubr.f32.mxu0 %v3649
        %4048 = vmatmul.mubr.f32.gmra.mrb[0].mxu0 %v3648
        %v4049 = vpop.f32.mrb[0].mxu0
        %v4050 = vadd.f32 %v3855, %v4049
        %v4051 = vpop.f32.mrb[0].mxu0
        %4052 = vmatprep.mubr.f32.mxu0 %v3654
        %4053 = vmatmul.mubr.f32.gmra.mrb[0].mxu0 %v3653
        %v4054 = vpop.f32.mrb[0].mxu0
        %v4055 = vadd.f32 %v3855, %v4054
        %v4056 = vpop.f32.mrb[0].mxu0
        %4057 = vmatprep.mubr.f32.mxu0 %v3659
        %4058 = vmatmul.mubr.f32.gmra.mrb[0].mxu0 %v3658
        %v4059 = vpop.f32.mrb[0].mxu0
        %v4060 = vadd.f32 %v3855, %v4059
        %v4061 = vpop.f32.mrb[0].mxu0
        %4062 = vmatprep.mubr.f32.mxu0 %v3664
        %4063 = vmatmul.mubr.f32.gmra.mrb[0].mxu0 %v3663
        %v4064 = vpop.f32.mrb[0].mxu0
        %v4065 = vadd.f32 %v3855, %v4064
        %v4066 = vpop.f32.mrb[0].mxu0
        %4067 = vmatprep.mubr.f32.mxu0 %v3669
        %4068 = vmatmul.mubr.f32.gmra.mrb[0].mxu0 %v3668
        %v4069 = vpop.f32.mrb[0].mxu0
        %v4070 = vadd.f32 %v3855, %v4069
        %v4071 = vpop.f32.mrb[0].mxu0
        %4072 = vmatprep.mubr.f32.mxu0 %v3674
        %4073 = vmatmul.mubr.f32.gmra.mrb[0].mxu0 %v3673
        %v4074 = vpop.f32.mrb[0].mxu0
        %v4075 = vadd.f32 %v3855, %v4074
        %v4076 = vpop.f32.mrb[0].mxu0
        %4077 = vmatprep.mubr.f32.mxu0 %v3679
        %4078 = vmatmul.mubr.f32.gmra.mrb[0].mxu0 %v3678
        %v4079 = vpop.f32.mrb[0].mxu0
        %v4080 = vadd.f32 %v3855, %v4079
        %v4081 = vpop.f32.mrb[0].mxu0
        %4082 = vmatprep.mubr.f32.mxu0 %v3684
        %4083 = vmatmul.mubr.f32.gmra.mrb[0].mxu0 %v3683
        %v4084 = vpop.f32.mrb[0].mxu0
        %v4085 = vadd.f32 %v3855, %v4084
        %v4086 = vpop.f32.mrb[0].mxu0
        %4087 = vmatprep.mubr.f32.mxu0 %v3689
        %4088 = vmatmul.mubr.f32.gmra.mrb[0].mxu0 %v3688
        %v4089 = vpop.f32.mrb[0].mxu0
        %v4090 = vadd.f32 %v3855, %v4089
        %v4091 = vpop.f32.mrb[0].mxu0
        %4092 = vmatprep.mubr.f32.mxu0 %v3694
        %4093 = vmatmul.mubr.f32.gmra.mrb[0].mxu0 %v3693
        %v4094 = vpop.f32.mrb[0].mxu0
        %v4095 = vadd.f32 %v3855, %v4094
        %v4096 = vpop.f32.mrb[0].mxu0
        %4097 = vmatprep.mubr.f32.mxu0 %v3699
        %4098 = vmatmul.mubr.f32.gmra.mrb[0].mxu0 %v3698
        %v4099 = vpop.f32.mrb[0].mxu0
        %v4100 = vadd.f32 %v3855, %v4099
        %v4101 = vpop.f32.mrb[0].mxu0
        %4102 = vmatprep.mubr.f32.mxu0 %v3704
        %4103 = vmatmul.mubr.f32.gmra.mrb[0].mxu0 %v3703
        %v4104 = vpop.f32.mrb[0].mxu0
        %v4105 = vadd.f32 %v3855, %v4104
        %v4106 = vpop.f32.mrb[0].mxu0
        %4107 = vmatprep.mubr.f32.mxu0 %v3709
        %4108 = vmatmul.mubr.f32.gmra.mrb[0].mxu0 %v3708
        %v4109 = vpop.f32.mrb[0].mxu0
        %v4110 = vadd.f32 %v3855, %v4109
        %v4111 = vpop.f32.mrb[0].mxu0
        %4112 = vmatprep.mubr.f32.mxu0 %v3714
        %4113 = vmatmul.mubr.f32.gmra.mrb[0].mxu0 %v3713
        %v4114 = vpop.f32.mrb[0].mxu0
        %v4115 = vadd.f32 %v3855, %v4114
        %v4116 = vpop.f32.mrb[0].mxu0
        %4117 = vmatprep.mubr.f32.mxu0 %v3719
        %4118 = vmatmul.mubr.f32.gmra.mrb[0].mxu0 %v3718
        %v4119 = vpop.f32.mrb[0].mxu0
        %v4120 = vadd.f32 %v3855, %v4119
        %v4121 = vpop.f32.mrb[0].mxu0
        %4122 = vmatprep.mubr.f32.mxu0 %v3724
        %4123 = vmatmul.mubr.f32.gmra.mrb[0].mxu0 %v3723
        %v4124 = vpop.f32.mrb[0].mxu0
        %v4125 = vadd.f32 %v3855, %v4124
        %v4126 = vpop.f32.mrb[0].mxu0
        %4127 = vmatprep.mubr.f32.mxu0 %v3729
        %4128 = vmatmul.mubr.f32.gmra.mrb[0].mxu0 %v3728
        %v4129 = vpop.f32.mrb[0].mxu0
        %v4130 = vadd.f32 %v3855, %v4129
        %v4131 = vpop.f32.mrb[0].mxu0
        %4132 = vmatprep.mubr.f32.mxu0 %v3734
        %4133 = vmatmul.mubr.f32.gmra.mrb[0].mxu0 %v3733
        %v4134 = vpop.f32.mrb[0].mxu0
        %v4135 = vadd.f32 %v3855, %v4134
        %v4136 = vpop.f32.mrb[0].mxu0
        %4137 = vmatprep.mubr.f32.mxu0 %v3739
        %4138 = vmatmul.mubr.f32.gmra.mrb[0].mxu0 %v3738
        %v4139 = vpop.f32.mrb[0].mxu0
        %v4140 = vadd.f32 %v3855, %v4139
        %v4141 = vpop.f32.mrb[0].mxu0
        %4142 = vmatprep.mubr.f32.mxu0 %v3744
        %4143 = vmatmul.mubr.f32.gmra.mrb[0].mxu0 %v3743
        %v4144 = vpop.f32.mrb[0].mxu0
        %v4145 = vadd.f32 %v3855, %v4144
        %v4146 = vpop.f32.mrb[0].mxu0
        %4147 = vmatprep.mubr.f32.mxu0 %v3749
        %4148 = vmatmul.mubr.f32.gmra.mrb[0].mxu0 %v3748
        %v4149 = vpop.f32.mrb[0].mxu0
        %v4150 = vadd.f32 %v3855, %v4149
        %v4151 = vpop.f32.mrb[0].mxu0
        %4152 = vmatprep.mubr.f32.mxu0 %v3754
        %4153 = vmatmul.mubr.f32.gmra.mrb[0].mxu0 %v3753
        %v4154 = vpop.f32.mrb[0].mxu0
        %v4155 = vadd.f32 %v3855, %v4154
        %v4156 = vpop.f32.mrb[0].mxu0
        %4157 = vmatprep.mubr.f32.mxu0 %v3759
        %4158 = vmatmul.mubr.f32.gmra.mrb[0].mxu0 %v3758
        %v4159 = vpop.f32.mrb[0].mxu0
        %v4160 = vadd.f32 %v3855, %v4159
        %v4161 = vpop.f32.mrb[0].mxu0
        %4162 = vmatprep.mubr.f32.mxu0 %v3764
        %4163 = vmatmul.mubr.f32.gmra.mrb[0].mxu0 %v3763
        %v4164 = vpop.f32.mrb[0].mxu0
        %v4165 = vadd.f32 %v3855, %v4164
        %v4166 = vpop.f32.mrb[0].mxu0
        %4167 = vmatprep.mubr.f32.mxu0 %v3769
        %4168 = vmatmul.mubr.f32.gmra.mrb[0].mxu0 %v3768
        %v4169 = vpop.f32.mrb[0].mxu0
        %v4170 = vadd.f32 %v3855, %v4169
        %v4171 = vpop.f32.mrb[0].mxu0
        %4172 = vmatprep.mubr.f32.mxu0 %v3774
        %4173 = vmatmul.mubr.f32.gmra.mrb[0].mxu0 %v3773
        %v4174 = vpop.f32.mrb[0].mxu0
        %v4175 = vadd.f32 %v3855, %v4174
        %v4176 = vpop.f32.mrb[0].mxu0
        %4177 = vdwg.mxu0
        %4178 = vmatprep.subr.mxu0 0.0
        %4179 = vmatpush1.msra.mxu0 %v3810
        %4180 = vmatprep.subr.mxu0 0.0
        %4181 = vmatpush1.msra.mxu0 %v3811
        %4182 = vmatprep.subr.mxu0 0.0
        %4183 = vmatpush1.msra.mxu0 %v3812
        %4184 = vmatprep.subr.mxu0 0.0
        %4185 = vmatpush1.msra.mxu0 %v3813
        %4186 = vmatprep.subr.mxu0 0.0
        %4187 = vmatpush1.msra.mxu0 %v3814
        %4188 = vmatprep.subr.mxu0 0.0
        %4189 = vmatpush1.msra.mxu0 %v3815
        %4190 = vmatprep.subr.mxu0 0.0
        %4191 = vmatpush1.msra.mxu0 %v3816
        %4192 = vmatprep.subr.mxu0 0.0
        %4193 = vmatpush1.msra.mxu0 %v3817
        %4194 = vmatprep.subr.mxu0 0.0
        %4195 = vmatpush1.msra.mxu0 %v3818
        %4196 = vmatprep.subr.mxu0 0.0
        %4197 = vmatpush1.msra.mxu0 %v3819
        %4198 = vmatprep.subr.mxu0 0.0
        %4199 = vmatpush1.msra.mxu0 %v3820
        %4200 = vmatprep.subr.mxu0 0.0
        %4201 = vmatpush1.msra.mxu0 %v3821
        %4202 = vmatprep.subr.mxu0 0.0
        %4203 = vmatpush1.msra.mxu0 %v3822
        %4204 = vmatprep.subr.mxu0 0.0
        %4205 = vmatpush1.msra.mxu0 %v3823
        %4206 = vmatprep.subr.mxu0 0.0
        %4207 = vmatpush1.msra.mxu0 %v3824
        %4208 = vmatprep.subr.mxu0 0.0
        %4209 = vmatpush1.msra.mxu0 %v3825
        %4210 = vmatprep.subr.mxu0 0.0
        %4211 = vmatpush1.msra.mxu0 %v3826
        %4212 = vmatprep.subr.mxu0 0.0
        %4213 = vmatpush1.msra.mxu0 %v3827
        %4214 = vmatprep.subr.mxu0 0.0
        %4215 = vmatpush1.msra.mxu0 %v3828
        %4216 = vmatprep.subr.mxu0 0.0
        %4217 = vmatpush1.msra.mxu0 %v3829
        %4218 = vmatprep.subr.mxu0 0.0
        %4219 = vmatpush1.msra.mxu0 %v3830
        %4220 = vmatprep.subr.mxu0 0.0
        %4221 = vmatpush1.msra.mxu0 %v3831
        %4222 = vmatprep.subr.mxu0 0.0
        %4223 = vmatpush1.msra.mxu0 %v3832
        %4224 = vmatprep.subr.mxu0 0.0
        %4225 = vmatpush1.msra.mxu0 %v3833
        %4226 = vmatprep.subr.mxu0 0.0
        %4227 = vmatpush1.msra.mxu0 %v3834
        %4228 = vmatprep.subr.mxu0 0.0
        %4229 = vmatpush1.msra.mxu0 %v3835
        %4230 = vmatprep.subr.mxu0 0.0
        %4231 = vmatpush1.msra.mxu0 %v3836
        %4232 = vmatprep.subr.mxu0 0.0
        %4233 = vmatpush1.msra.mxu0 %v3837
        %4234 = vmatprep.subr.mxu0 0.0
        %4235 = vmatpush1.msra.mxu0 %v3838
        %4236 = vmatprep.subr.mxu0 0.0
        %4237 = vmatpush1.msra.mxu0 %v3839
        %4238 = vmatprep.subr.mxu0 0.0
        %4239 = vmatpush1.msra.mxu0 %v3840
        %4240 = vmatprep.subr.mxu0 0.0
        %4241 = vmatpush1.msra.mxu0 %v3841
        %4242 = vmatprep.mubr.f32.mxu0 %v3621
        %4243 = vmatmul.mubr.f32.gmra.mrb[0].mxu0 %v3620
        %v4244 = vpop.f32.mrb[0].mxu0
        %v4245 = vadd.f32 %v4020, %v4244
        %v4246 = vpop.f32.mrb[0].mxu0
        %4247 = vmatprep.mubr.f32.mxu0 %v3626
        %4248 = vmatmul.mubr.f32.gmra.mrb[0].mxu0 %v3625
        %v4249 = vpop.f32.mrb[0].mxu0
        %v4250 = vadd.f32 %v4025, %v4249
        %v4251 = vpop.f32.mrb[0].mxu0
        %4252 = vmatprep.mubr.f32.mxu0 %v3631
        %4253 = vmatmul.mubr.f32.gmra.mrb[0].mxu0 %v3630
        %v4254 = vpop.f32.mrb[0].mxu0
        %v4255 = vadd.f32 %v4030, %v4254
        %v4256 = vpop.f32.mrb[0].mxu0
        %4257 = vmatprep.mubr.f32.mxu0 %v3636
        %4258 = vmatmul.mubr.f32.gmra.mrb[0].mxu0 %v3635
        %v4259 = vpop.f32.mrb[0].mxu0
        %v4260 = vadd.f32 %v4035, %v4259
        %v4261 = vpop.f32.mrb[0].mxu0
        %4262 = vmatprep.mubr.f32.mxu0 %v3641
        %4263 = vmatmul.mubr.f32.gmra.mrb[0].mxu0 %v3640
        %v4264 = vpop.f32.mrb[0].mxu0
        %v4265 = vadd.f32 %v4040, %v4264
        %v4266 = vpop.f32.mrb[0].mxu0
        %4267 = vmatprep.mubr.f32.mxu0 %v3646
        %4268 = vmatmul.mubr.f32.gmra.mrb[0].mxu0 %v3645
        %v4269 = vpop.f32.mrb[0].mxu0
        %v4270 = vadd.f32 %v4045, %v4269
        %v4271 = vpop.f32.mrb[0].mxu0
        %4272 = vmatprep.mubr.f32.mxu0 %v3651
        %4273 = vmatmul.mubr.f32.gmra.mrb[0].mxu0 %v3650
        %v4274 = vpop.f32.mrb[0].mxu0
        %v4275 = vadd.f32 %v4050, %v4274
        %v4276 = vpop.f32.mrb[0].mxu0
        %4277 = vmatprep.mubr.f32.mxu0 %v3656
        %4278 = vmatmul.mubr.f32.gmra.mrb[0].mxu0 %v3655
        %v4279 = vpop.f32.mrb[0].mxu0
        %v4280 = vadd.f32 %v4055, %v4279
        %v4281 = vpop.f32.mrb[0].mxu0
        %4282 = vmatprep.mubr.f32.mxu0 %v3661
        %4283 = vmatmul.mubr.f32.gmra.mrb[0].mxu0 %v3660
        %v4284 = vpop.f32.mrb[0].mxu0
        %v4285 = vadd.f32 %v4060, %v4284
        %v4286 = vpop.f32.mrb[0].mxu0
        %4287 = vmatprep.mubr.f32.mxu0 %v3666
        %4288 = vmatmul.mubr.f32.gmra.mrb[0].mxu0 %v3665
        %v4289 = vpop.f32.mrb[0].mxu0
        %v4290 = vadd.f32 %v4065, %v4289
        %v4291 = vpop.f32.mrb[0].mxu0
        %4292 = vmatprep.mubr.f32.mxu0 %v3671
        %4293 = vmatmul.mubr.f32.gmra.mrb[0].mxu0 %v3670
        %v4294 = vpop.f32.mrb[0].mxu0
        %v4295 = vadd.f32 %v4070, %v4294
        %v4296 = vpop.f32.mrb[0].mxu0
        %4297 = vmatprep.mubr.f32.mxu0 %v3676
        %4298 = vmatmul.mubr.f32.gmra.mrb[0].mxu0 %v3675
        %v4299 = vpop.f32.mrb[0].mxu0
        %v4300 = vadd.f32 %v4075, %v4299
        %v4301 = vpop.f32.mrb[0].mxu0
        %4302 = vmatprep.mubr.f32.mxu0 %v3681
        %4303 = vmatmul.mubr.f32.gmra.mrb[0].mxu0 %v3680
        %v4304 = vpop.f32.mrb[0].mxu0
        %v4305 = vadd.f32 %v4080, %v4304
        %v4306 = vpop.f32.mrb[0].mxu0
        %4307 = vmatprep.mubr.f32.mxu0 %v3686
        %4308 = vmatmul.mubr.f32.gmra.mrb[0].mxu0 %v3685
        %v4309 = vpop.f32.mrb[0].mxu0
        %v4310 = vadd.f32 %v4085, %v4309
        %v4311 = vpop.f32.mrb[0].mxu0
        %4312 = vmatprep.mubr.f32.mxu0 %v3691
        %4313 = vmatmul.mubr.f32.gmra.mrb[0].mxu0 %v3690
        %v4314 = vpop.f32.mrb[0].mxu0
        %v4315 = vadd.f32 %v4090, %v4314
        %v4316 = vpop.f32.mrb[0].mxu0
        %4317 = vmatprep.mubr.f32.mxu0 %v3696
        %4318 = vmatmul.mubr.f32.gmra.mrb[0].mxu0 %v3695
        %v4319 = vpop.f32.mrb[0].mxu0
        %v4320 = vadd.f32 %v4095, %v4319
        %v4321 = vpop.f32.mrb[0].mxu0
        %4322 = vmatprep.mubr.f32.mxu0 %v3701
        %4323 = vmatmul.mubr.f32.gmra.mrb[0].mxu0 %v3700
        %v4324 = vpop.f32.mrb[0].mxu0
        %v4325 = vadd.f32 %v4100, %v4324
        %v4326 = vpop.f32.mrb[0].mxu0
        %4327 = vmatprep.mubr.f32.mxu0 %v3706
        %4328 = vmatmul.mubr.f32.gmra.mrb[0].mxu0 %v3705
        %v4329 = vpop.f32.mrb[0].mxu0
        %v4330 = vadd.f32 %v4105, %v4329
        %v4331 = vpop.f32.mrb[0].mxu0
        %4332 = vmatprep.mubr.f32.mxu0 %v3711
        %4333 = vmatmul.mubr.f32.gmra.mrb[0].mxu0 %v3710
        %v4334 = vpop.f32.mrb[0].mxu0
        %v4335 = vadd.f32 %v4110, %v4334
        %v4336 = vpop.f32.mrb[0].mxu0
        %4337 = vmatprep.mubr.f32.mxu0 %v3716
        %4338 = vmatmul.mubr.f32.gmra.mrb[0].mxu0 %v3715
        %v4339 = vpop.f32.mrb[0].mxu0
        %v4340 = vadd.f32 %v4115, %v4339
        %v4341 = vpop.f32.mrb[0].mxu0
        %4342 = vmatprep.mubr.f32.mxu0 %v3721
        %4343 = vmatmul.mubr.f32.gmra.mrb[0].mxu0 %v3720
        %v4344 = vpop.f32.mrb[0].mxu0
        %v4345 = vadd.f32 %v4120, %v4344
        %v4346 = vpop.f32.mrb[0].mxu0
        %4347 = vmatprep.mubr.f32.mxu0 %v3726
        %4348 = vmatmul.mubr.f32.gmra.mrb[0].mxu0 %v3725
        %v4349 = vpop.f32.mrb[0].mxu0
        %v4350 = vadd.f32 %v4125, %v4349
        %v4351 = vpop.f32.mrb[0].mxu0
        %4352 = vmatprep.mubr.f32.mxu0 %v3731
        %4353 = vmatmul.mubr.f32.gmra.mrb[0].mxu0 %v3730
        %v4354 = vpop.f32.mrb[0].mxu0
        %v4355 = vadd.f32 %v4130, %v4354
        %v4356 = vpop.f32.mrb[0].mxu0
        %4357 = vmatprep.mubr.f32.mxu0 %v3736
        %4358 = vmatmul.mubr.f32.gmra.mrb[0].mxu0 %v3735
        %v4359 = vpop.f32.mrb[0].mxu0
        %v4360 = vadd.f32 %v4135, %v4359
        %v4361 = vpop.f32.mrb[0].mxu0
        %4362 = vmatprep.mubr.f32.mxu0 %v3741
        %4363 = vmatmul.mubr.f32.gmra.mrb[0].mxu0 %v3740
        %v4364 = vpop.f32.mrb[0].mxu0
        %v4365 = vadd.f32 %v4140, %v4364
        %v4366 = vpop.f32.mrb[0].mxu0
        %4367 = vmatprep.mubr.f32.mxu0 %v3746
        %4368 = vmatmul.mubr.f32.gmra.mrb[0].mxu0 %v3745
        %v4369 = vpop.f32.mrb[0].mxu0
        %v4370 = vadd.f32 %v4145, %v4369
        %v4371 = vpop.f32.mrb[0].mxu0
        %4372 = vmatprep.mubr.f32.mxu0 %v3751
        %4373 = vmatmul.mubr.f32.gmra.mrb[0].mxu0 %v3750
        %v4374 = vpop.f32.mrb[0].mxu0
        %v4375 = vadd.f32 %v4150, %v4374
        %v4376 = vpop.f32.mrb[0].mxu0
        %4377 = vmatprep.mubr.f32.mxu0 %v3756
        %4378 = vmatmul.mubr.f32.gmra.mrb[0].mxu0 %v3755
        %v4379 = vpop.f32.mrb[0].mxu0
        %v4380 = vadd.f32 %v4155, %v4379
        %v4381 = vpop.f32.mrb[0].mxu0
        %4382 = vmatprep.mubr.f32.mxu0 %v3761
        %4383 = vmatmul.mubr.f32.gmra.mrb[0].mxu0 %v3760
        %v4384 = vpop.f32.mrb[0].mxu0
        %v4385 = vadd.f32 %v4160, %v4384
        %v4386 = vpop.f32.mrb[0].mxu0
        %4387 = vmatprep.mubr.f32.mxu0 %v3766
        %4388 = vmatmul.mubr.f32.gmra.mrb[0].mxu0 %v3765
        %v4389 = vpop.f32.mrb[0].mxu0
        %v4390 = vadd.f32 %v4165, %v4389
        %v4391 = vpop.f32.mrb[0].mxu0
        %4392 = vmatprep.mubr.f32.mxu0 %v3771
        %4393 = vmatmul.mubr.f32.gmra.mrb[0].mxu0 %v3770
        %v4394 = vpop.f32.mrb[0].mxu0
        %v4395 = vadd.f32 %v4170, %v4394
        %v4396 = vpop.f32.mrb[0].mxu0
        %4397 = vmatprep.mubr.f32.mxu0 %v3776
        %4398 = vmatmul.mubr.f32.gmra.mrb[0].mxu0 %v3775
        %v4399 = vpop.f32.mrb[0].mxu0
        %v4400 = vadd.f32 %v4175, %v4399
        %v4401 = vpop.f32.mrb[0].mxu0
        %4402 = vdwg.mxu0
        %4403 = vmatprep.subr.mxu0 0.0
        %4404 = vmatpush1.msra.mxu0 %v3842
        %4405 = vmatprep.subr.mxu0 0.0
        %4406 = vmatpush1.msra.mxu0 %v3843
        %4407 = vmatprep.subr.mxu0 0.0
        %4408 = vmatpush1.msra.mxu0 %v3844
        %4409 = vmatprep.subr.mxu0 0.0
        %4410 = vmatpush1.msra.mxu0 %v3845
        %4411 = vmatprep.subr.mxu0 0.0
        %4412 = vmatpush1.msra.mxu0 %v3846
        %4413 = vmatprep.subr.mxu0 0.0
        %4414 = vmatpush1.msra.mxu0 %v3847
        %4415 = vmatprep.subr.mxu0 0.0
        %4416 = vmatpush1.msra.mxu0 %v3848
        %4417 = vmatprep.subr.mxu0 0.0
        %4418 = vmatpush1.msra.mxu0 %v3849
        %4419 = vmatprep.subr.mxu0 0.0
        %4420 = vmatpush1.msra.mxu0 0.0
        %4421 = vmatprep.subr.mxu0 0.0
        %4422 = vmatpush1.msra.mxu0 0.0
        %4423 = vmatprep.subr.mxu0 0.0
        %4424 = vmatpush1.msra.mxu0 0.0
        %4425 = vmatprep.subr.mxu0 0.0
        %4426 = vmatpush1.msra.mxu0 0.0
        %4427 = vmatprep.subr.mxu0 0.0
        %4428 = vmatpush1.msra.mxu0 0.0
        %4429 = vmatprep.subr.mxu0 0.0
        %4430 = vmatpush1.msra.mxu0 0.0
        %4431 = vmatprep.subr.mxu0 0.0
        %4432 = vmatpush1.msra.mxu0 0.0
        %4433 = vmatprep.subr.mxu0 0.0
        %4434 = vmatpush1.msra.mxu0 0.0
        %4435 = vmatprep.subr.mxu0 0.0
        %4436 = vmatpush1.msra.mxu0 0.0
        %4437 = vmatprep.subr.mxu0 0.0
        %4438 = vmatpush1.msra.mxu0 0.0
        %4439 = vmatprep.subr.mxu0 0.0
        %4440 = vmatpush1.msra.mxu0 0.0
        %4441 = vmatprep.subr.mxu0 0.0
        %4442 = vmatpush1.msra.mxu0 0.0
        %4443 = vmatprep.subr.mxu0 0.0
        %4444 = vmatpush1.msra.mxu0 0.0
        %4445 = vmatprep.subr.mxu0 0.0
        %4446 = vmatpush1.msra.mxu0 0.0
        %4447 = vmatprep.subr.mxu0 0.0
        %4448 = vmatpush1.msra.mxu0 0.0
        %4449 = vmatprep.subr.mxu0 0.0
        %4450 = vmatpush1.msra.mxu0 0.0
        %4451 = vmatprep.subr.mxu0 0.0
        %4452 = vmatpush1.msra.mxu0 0.0
        %4453 = vmatprep.subr.mxu0 0.0
        %4454 = vmatpush1.msra.mxu0 0.0
        %4455 = vmatprep.subr.mxu0 0.0
        %4456 = vmatpush1.msra.mxu0 0.0
        %4457 = vmatprep.subr.mxu0 0.0
        %4458 = vmatpush1.msra.mxu0 0.0
        %4459 = vmatprep.subr.mxu0 0.0
        %4460 = vmatpush1.msra.mxu0 0.0
        %4461 = vmatprep.subr.mxu0 0.0
        %4462 = vmatpush1.msra.mxu0 0.0
        %4463 = vmatprep.subr.mxu0 0.0
        %4464 = vmatpush1.msra.mxu0 0.0
        %4465 = vmatprep.subr.mxu0 0.0
        %4466 = vmatpush1.msra.mxu0 0.0
        %4467 = vmatprep.mubr.f32.mxu0 0.0
        %4468 = vmatmul.mubr.f32.gmra.mrb[0].mxu0 %v3858
        %v4469 = vpop.f32.mrb[0].mxu0
        %v4470 = vadd.f32 %v4245, %v4469
        %v4471 = vpop.f32.mrb[0].mxu0
        %4472 = vmatprep.mubr.f32.mxu0 0.0
        %4473 = vmatmul.mubr.f32.gmra.mrb[0].mxu0 %v3861
        %v4474 = vpop.f32.mrb[0].mxu0
        %v4475 = vadd.f32 %v4250, %v4474
        %v4476 = vpop.f32.mrb[0].mxu0
        %4477 = vmatprep.mubr.f32.mxu0 0.0
        %4478 = vmatmul.mubr.f32.gmra.mrb[0].mxu0 %v3864
        %v4479 = vpop.f32.mrb[0].mxu0
        %v4480 = vadd.f32 %v4255, %v4479
        %v4481 = vpop.f32.mrb[0].mxu0
        %4482 = vmatprep.mubr.f32.mxu0 0.0
        %4483 = vmatmul.mubr.f32.gmra.mrb[0].mxu0 %v3867
        %v4484 = vpop.f32.mrb[0].mxu0
        %v4485 = vadd.f32 %v4260, %v4484
        %v4486 = vpop.f32.mrb[0].mxu0
        %4487 = vmatprep.mubr.f32.mxu0 0.0
        %4488 = vmatmul.mubr.f32.gmra.mrb[0].mxu0 %v3870
        %v4489 = vpop.f32.mrb[0].mxu0
        %v4490 = vadd.f32 %v4265, %v4489
        %v4491 = vpop.f32.mrb[0].mxu0
        %4492 = vmatprep.mubr.f32.mxu0 0.0
        %4493 = vmatmul.mubr.f32.gmra.mrb[0].mxu0 %v3873
        %v4494 = vpop.f32.mrb[0].mxu0
        %v4495 = vadd.f32 %v4270, %v4494
        %v4496 = vpop.f32.mrb[0].mxu0
        %4497 = vmatprep.mubr.f32.mxu0 0.0
        %4498 = vmatmul.mubr.f32.gmra.mrb[0].mxu0 %v3876
        %v4499 = vpop.f32.mrb[0].mxu0
        %v4500 = vadd.f32 %v4275, %v4499
        %v4501 = vpop.f32.mrb[0].mxu0
        %4502 = vmatprep.mubr.f32.mxu0 0.0
        %4503 = vmatmul.mubr.f32.gmra.mrb[0].mxu0 %v3879
        %v4504 = vpop.f32.mrb[0].mxu0
        %v4505 = vadd.f32 %v4280, %v4504
        %v4506 = vpop.f32.mrb[0].mxu0
        %4507 = vmatprep.mubr.f32.mxu0 0.0
        %4508 = vmatmul.mubr.f32.gmra.mrb[0].mxu0 %v3882
        %v4509 = vpop.f32.mrb[0].mxu0
        %v4510 = vadd.f32 %v4285, %v4509
        %v4511 = vpop.f32.mrb[0].mxu0
        %4512 = vmatprep.mubr.f32.mxu0 0.0
        %4513 = vmatmul.mubr.f32.gmra.mrb[0].mxu0 %v3885
        %v4514 = vpop.f32.mrb[0].mxu0
        %v4515 = vadd.f32 %v4290, %v4514
        %v4516 = vpop.f32.mrb[0].mxu0
        %4517 = vmatprep.mubr.f32.mxu0 0.0
        %4518 = vmatmul.mubr.f32.gmra.mrb[0].mxu0 %v3888
        %v4519 = vpop.f32.mrb[0].mxu0
        %v4520 = vadd.f32 %v4295, %v4519
        %v4521 = vpop.f32.mrb[0].mxu0
        %4522 = vmatprep.mubr.f32.mxu0 0.0
        %4523 = vmatmul.mubr.f32.gmra.mrb[0].mxu0 %v3891
        %v4524 = vpop.f32.mrb[0].mxu0
        %v4525 = vadd.f32 %v4300, %v4524
        %v4526 = vpop.f32.mrb[0].mxu0
        %4527 = vmatprep.mubr.f32.mxu0 0.0
        %4528 = vmatmul.mubr.f32.gmra.mrb[0].mxu0 %v3894
        %v4529 = vpop.f32.mrb[0].mxu0
        %v4530 = vadd.f32 %v4305, %v4529
        %v4531 = vpop.f32.mrb[0].mxu0
        %4532 = vmatprep.mubr.f32.mxu0 0.0
        %4533 = vmatmul.mubr.f32.gmra.mrb[0].mxu0 %v3897
        %v4534 = vpop.f32.mrb[0].mxu0
        %v4535 = vadd.f32 %v4310, %v4534
        %v4536 = vpop.f32.mrb[0].mxu0
        %4537 = vmatprep.mubr.f32.mxu0 0.0
        %4538 = vmatmul.mubr.f32.gmra.mrb[0].mxu0 %v3900
        %v4539 = vpop.f32.mrb[0].mxu0
        %v4540 = vadd.f32 %v4315, %v4539
        %v4541 = vpop.f32.mrb[0].mxu0
        %4542 = vmatprep.mubr.f32.mxu0 0.0
        %4543 = vmatmul.mubr.f32.gmra.mrb[0].mxu0 %v3903
        %v4544 = vpop.f32.mrb[0].mxu0
        %v4545 = vadd.f32 %v4320, %v4544
        %v4546 = vpop.f32.mrb[0].mxu0
        %4547 = vmatprep.mubr.f32.mxu0 0.0
        %4548 = vmatmul.mubr.f32.gmra.mrb[0].mxu0 %v3906
        %v4549 = vpop.f32.mrb[0].mxu0
        %v4550 = vadd.f32 %v4325, %v4549
        %v4551 = vpop.f32.mrb[0].mxu0
        %4552 = vmatprep.mubr.f32.mxu0 0.0
        %4553 = vmatmul.mubr.f32.gmra.mrb[0].mxu0 %v3909
        %v4554 = vpop.f32.mrb[0].mxu0
        %v4555 = vadd.f32 %v4330, %v4554
        %v4556 = vpop.f32.mrb[0].mxu0
        %4557 = vmatprep.mubr.f32.mxu0 0.0
        %4558 = vmatmul.mubr.f32.gmra.mrb[0].mxu0 %v3912
        %v4559 = vpop.f32.mrb[0].mxu0
        %v4560 = vadd.f32 %v4335, %v4559
        %v4561 = vpop.f32.mrb[0].mxu0
        %4562 = vmatprep.mubr.f32.mxu0 0.0
        %4563 = vmatmul.mubr.f32.gmra.mrb[0].mxu0 %v3915
        %v4564 = vpop.f32.mrb[0].mxu0
        %v4565 = vadd.f32 %v4340, %v4564
        %v4566 = vpop.f32.mrb[0].mxu0
        %4567 = vmatprep.mubr.f32.mxu0 0.0
        %4568 = vmatmul.mubr.f32.gmra.mrb[0].mxu0 %v3918
        %v4569 = vpop.f32.mrb[0].mxu0
        %v4570 = vadd.f32 %v4345, %v4569
        %v4571 = vpop.f32.mrb[0].mxu0
        %4572 = vmatprep.mubr.f32.mxu0 0.0
        %4573 = vmatmul.mubr.f32.gmra.mrb[0].mxu0 %v3921
        %v4574 = vpop.f32.mrb[0].mxu0
        %v4575 = vadd.f32 %v4350, %v4574
        %v4576 = vpop.f32.mrb[0].mxu0
        %4577 = vmatprep.mubr.f32.mxu0 0.0
        %4578 = vmatmul.mubr.f32.gmra.mrb[0].mxu0 %v3924
        %v4579 = vpop.f32.mrb[0].mxu0
        %v4580 = vadd.f32 %v4355, %v4579
        %v4581 = vpop.f32.mrb[0].mxu0
        %4582 = vmatprep.mubr.f32.mxu0 0.0
        %4583 = vmatmul.mubr.f32.gmra.mrb[0].mxu0 %v3927
        %v4584 = vpop.f32.mrb[0].mxu0
        %v4585 = vadd.f32 %v4360, %v4584
        %v4586 = vpop.f32.mrb[0].mxu0
        %4587 = vmatprep.mubr.f32.mxu0 0.0
        %4588 = vmatmul.mubr.f32.gmra.mrb[0].mxu0 %v3930
        %v4589 = vpop.f32.mrb[0].mxu0
        %v4590 = vadd.f32 %v4365, %v4589
        %v4591 = vpop.f32.mrb[0].mxu0
        %4592 = vmatprep.mubr.f32.mxu0 0.0
        %4593 = vmatmul.mubr.f32.gmra.mrb[0].mxu0 %v3933
        %v4594 = vpop.f32.mrb[0].mxu0
        %v4595 = vadd.f32 %v4370, %v4594
        %v4596 = vpop.f32.mrb[0].mxu0
        %4597 = vmatprep.mubr.f32.mxu0 0.0
        %4598 = vmatmul.mubr.f32.gmra.mrb[0].mxu0 %v3936
        %v4599 = vpop.f32.mrb[0].mxu0
        %v4600 = vadd.f32 %v4375, %v4599
        %v4601 = vpop.f32.mrb[0].mxu0
        %4602 = vmatprep.mubr.f32.mxu0 0.0
        %4603 = vmatmul.mubr.f32.gmra.mrb[0].mxu0 %v3939
        %v4604 = vpop.f32.mrb[0].mxu0
        %v4605 = vadd.f32 %v4380, %v4604
        %v4606 = vpop.f32.mrb[0].mxu0
        %4607 = vmatprep.mubr.f32.mxu0 0.0
        %4608 = vmatmul.mubr.f32.gmra.mrb[0].mxu0 %v3942
        %v4609 = vpop.f32.mrb[0].mxu0
        %v4610 = vadd.f32 %v4385, %v4609
        %v4611 = vpop.f32.mrb[0].mxu0
        %4612 = vmatprep.mubr.f32.mxu0 0.0
        %4613 = vmatmul.mubr.f32.gmra.mrb[0].mxu0 %v3945
        %v4614 = vpop.f32.mrb[0].mxu0
        %v4615 = vadd.f32 %v4390, %v4614
        %v4616 = vpop.f32.mrb[0].mxu0
        %4617 = vmatprep.mubr.f32.mxu0 0.0
        %4618 = vmatmul.mubr.f32.gmra.mrb[0].mxu0 %v3948
        %v4619 = vpop.f32.mrb[0].mxu0
        %v4620 = vadd.f32 %v4395, %v4619
        %v4621 = vpop.f32.mrb[0].mxu0
        %4622 = vmatprep.mubr.f32.mxu0 0.0
        %4623 = vmatmul.mubr.f32.gmra.mrb[0].mxu0 %v3951
        %v4624 = vpop.f32.mrb[0].mxu0
        %v4625 = vadd.f32 %v4400, %v4624
        %v4626 = vpop.f32.mrb[0].mxu0
        %4627 = vdwg.mxu0
        %v4628 = vld [vmem:[%s222] sm:$0xff]
        %v4629 = vld [vmem:[%s222 + $0x8] sm:$0xff]
        %v4630 = vld [vmem:[%s222 + $0x10] sm:$0xff]
        %v4631 = vld [vmem:[%s222 + $0x18] sm:$0xff]
        %v4632 = vld [vmem:[%s222 + $0x20] sm:$0xff]
        %v4633 = vld [vmem:[%s222 + $0x28] sm:$0xff]
        %v4634 = vld [vmem:[%s222 + $0x30] sm:$0xff]
        %v4635 = vld [vmem:[%s222 + $0x38] sm:$0xff]
        %v4636 = vld [vmem:[%s222 + $0x40] sm:$0xff]
        %v4637 = vld [vmem:[%s222 + $0x48] sm:$0xff]
        %v4638 = vld [vmem:[%s222 + $0x50] sm:$0xff]
        %v4639 = vld [vmem:[%s222 + $0x58] sm:$0xff]
        %v4640 = vld [vmem:[%s222 + $0x60] sm:$0xff]
        %v4641 = vld [vmem:[%s222 + $0x68] sm:$0xff]
        %v4642 = vld [vmem:[%s222 + $0x70] sm:$0xff]
        %v4643 = vld [vmem:[%s222 + $0x78] sm:$0xff]
        %v4644 = vld [vmem:[%s222 + $0x80] sm:$0xff]
        %v4645 = vld [vmem:[%s222 + $0x88] sm:$0xff]
        %v4646 = vld [vmem:[%s222 + $0x90] sm:$0xff]
        %v4647 = vld [vmem:[%s222 + $0x98] sm:$0xff]
        %v4648 = vld [vmem:[%s222 + $0xa0] sm:$0xff]
        %v4649 = vld [vmem:[%s222 + $0xa8] sm:$0xff]
        %v4650 = vld [vmem:[%s222 + $0xb0] sm:$0xff]
        %v4651 = vld [vmem:[%s222 + $0xb8] sm:$0xff]
        %v4652 = vld [vmem:[%s222 + $0xc0] sm:$0xff]
        %v4653 = vld [vmem:[%s222 + $0xc8] sm:$0xff]
        %v4654 = vld [vmem:[%s222 + $0xd0] sm:$0xff]
        %v4655 = vld [vmem:[%s222 + $0xd8] sm:$0xff]
        %v4656 = vld [vmem:[%s222 + $0xe0] sm:$0xff]
        %v4657 = vld [vmem:[%s222 + $0xe8] sm:$0xff]
        %v4658 = vld [vmem:[%s222 + $0xf0] sm:$0xff]
        %v4659 = vld [vmem:[%s222 + $0xf8] sm:$0xff]
        %v4660 = vadd.f32 %v4470, %v4628
        %v4661 = vadd.f32 %v4475, %v4629
        %v4662 = vadd.f32 %v4480, %v4630
        %v4663 = vadd.f32 %v4485, %v4631
        %v4664 = vadd.f32 %v4490, %v4632
        %v4665 = vadd.f32 %v4495, %v4633
        %v4666 = vadd.f32 %v4500, %v4634
        %v4667 = vadd.f32 %v4505, %v4635
        %v4668 = vadd.f32 %v4510, %v4636
        %v4669 = vadd.f32 %v4515, %v4637
        %v4670 = vadd.f32 %v4520, %v4638
        %v4671 = vadd.f32 %v4525, %v4639
        %v4672 = vadd.f32 %v4530, %v4640
        %v4673 = vadd.f32 %v4535, %v4641
        %v4674 = vadd.f32 %v4540, %v4642
        %v4675 = vadd.f32 %v4545, %v4643
        %v4676 = vadd.f32 %v4550, %v4644
        %v4677 = vadd.f32 %v4555, %v4645
        %v4678 = vadd.f32 %v4560, %v4646
        %v4679 = vadd.f32 %v4565, %v4647
        %v4680 = vadd.f32 %v4570, %v4648
        %v4681 = vadd.f32 %v4575, %v4649
        %v4682 = vadd.f32 %v4580, %v4650
        %v4683 = vadd.f32 %v4585, %v4651
        %v4684 = vadd.f32 %v4590, %v4652
        %v4685 = vadd.f32 %v4595, %v4653
        %v4686 = vadd.f32 %v4600, %v4654
        %v4687 = vadd.f32 %v4605, %v4655
        %v4688 = vadd.f32 %v4610, %v4656
        %v4689 = vadd.f32 %v4615, %v4657
        %v4690 = vadd.f32 %v4620, %v4658
        %v4691 = vadd.f32 %v4625, %v4659
        %4692 = vst.msk [vmem:[%s217] sm:$0xff] %vm223, %v4660
        %4693 = vst.msk [vmem:[%s217 + $0x8] sm:$0xff] %vm223, %v4661
        %4694 = vst.msk [vmem:[%s217 + $0x10] sm:$0xff] %vm223, %v4662
        %4695 = vst.msk [vmem:[%s217 + $0x18] sm:$0xff] %vm223, %v4663
        %4696 = vst.msk [vmem:[%s217 + $0x20] sm:$0xff] %vm223, %v4664
        %4697 = vst.msk [vmem:[%s217 + $0x28] sm:$0xff] %vm223, %v4665
        %4698 = vst.msk [vmem:[%s217 + $0x30] sm:$0xff] %vm223, %v4666
        %4699 = vst.msk [vmem:[%s217 + $0x38] sm:$0xff] %vm223, %v4667
        %4700 = vst.msk [vmem:[%s217 + $0x40] sm:$0xff] %vm223, %v4668
        %4701 = vst.msk [vmem:[%s217 + $0x48] sm:$0xff] %vm223, %v4669
        %4702 = vst.msk [vmem:[%s217 + $0x50] sm:$0xff] %vm223, %v4670
        %4703 = vst.msk [vmem:[%s217 + $0x58] sm:$0xff] %vm223, %v4671
        %4704 = vst.msk [vmem:[%s217 + $0x60] sm:$0xff] %vm223, %v4672
        %4705 = vst.msk [vmem:[%s217 + $0x68] sm:$0xff] %vm223, %v4673
        %4706 = vst.msk [vmem:[%s217 + $0x70] sm:$0xff] %vm223, %v4674
        %4707 = vst.msk [vmem:[%s217 + $0x78] sm:$0xff] %vm223, %v4675
        %4708 = vst.msk [vmem:[%s217 + $0x80] sm:$0xff] %vm223, %v4676
        %4709 = vst.msk [vmem:[%s217 + $0x88] sm:$0xff] %vm223, %v4677
        %4710 = vst.msk [vmem:[%s217 + $0x90] sm:$0xff] %vm223, %v4678
        %4711 = vst.msk [vmem:[%s217 + $0x98] sm:$0xff] %vm223, %v4679
        %4712 = vst.msk [vmem:[%s217 + $0xa0] sm:$0xff] %vm223, %v4680
        %4713 = vst.msk [vmem:[%s217 + $0xa8] sm:$0xff] %vm223, %v4681
        %4714 = vst.msk [vmem:[%s217 + $0xb0] sm:$0xff] %vm223, %v4682
        %4715 = vst.msk [vmem:[%s217 + $0xb8] sm:$0xff] %vm223, %v4683
        %4716 = vst.msk [vmem:[%s217 + $0xc0] sm:$0xff] %vm223, %v4684
        %4717 = vst.msk [vmem:[%s217 + $0xc8] sm:$0xff] %vm223, %v4685
        %4718 = vst.msk [vmem:[%s217 + $0xd0] sm:$0xff] %vm223, %v4686
        %4719 = vst.msk [vmem:[%s217 + $0xd8] sm:$0xff] %vm223, %v4687
        %4720 = vst.msk [vmem:[%s217 + $0xe0] sm:$0xff] %vm223, %v4688
        %4721 = vst.msk [vmem:[%s217 + $0xe8] sm:$0xff] %vm223, %v4689
        %4722 = vst.msk [vmem:[%s217 + $0xf0] sm:$0xff] %vm223, %v4690
        %4723 = vst.msk [vmem:[%s217 + $0xf8] sm:$0xff] %vm223, %v4691
        %s4724 = sand.u32 %s137, 1
        %s4725 = scalar_lea.sflag [#allocation5], %s4724
        %s4726 = sand.u32 %s137, 1
        %s4727 = smul.addr %s4726, 256
        %s4728 = scalar_lea.vmem [#allocation4], %s4727
        // Predicated region
        $region41: #{tpu_custom_call.1} parent=39 // pred_check
          %p4729 = pneg %p147
        $region42: #{tpu_custom_call.1} parent=39 // pred_check_branch
          %4731 = sbr.rel (%p4729) target = $region44
        $region43: #{tpu_custom_call.1} parent=39 // pred_region
          %s4733 = ssub.s32 4096, 4096
          %4734 = vsyncadd %s4725, %s4733
          %s4735 = smul.addr %s19, 32
          %s4736 = smul.addr %s4735, 128
          %s4737 = scalar_lea.hbm %s5, %s4736
          %s4738 = sshll.u32 %s4728, 4
          %s4739 = int_to_ptr.vmem [resolvable:$true] %s4738
          %4744 = dma.vmem_to_hbm [thread:$0]  %s4739, 4096, %s4737, %s4725, 128, 128, 8
        $region44: #{tpu_custom_call.1} parent=39 // pred_fallthru
          _
      $region40: #{tpu_custom_call.1} parent=5 // pred_fallthru
        _
      %p4745 = scmp.le.s32.totalorder 2, %s14
      // Predicated region
      $region45: #{tpu_custom_call.1} parent=5 // pred_check
        %p4746 = pneg %p4745
      $region46: #{tpu_custom_call.1} parent=5 // pred_check_branch
        %4748 = sbr.rel (%p4746) target = $region48
      $region47: #{tpu_custom_call.1} parent=5 // pred_region
        %s4749 = ssub.s32 %s14, 2
        // Predicated region
        $region49: #{tpu_custom_call.1} parent=47 // pred_check
          %p4750 = pneg %p153
        $region50: #{tpu_custom_call.1} parent=47 // pred_check_branch
          %4752 = sbr.rel (%p4750) target = $region52
        $region51: #{tpu_custom_call.1} parent=47 // pred_region
          %s4753 = sand.u32 %s138, 1
          %s4754 = scalar_lea.sflag [#allocation5], %s4753
          %s4755 = sand.u32 %s138, 1
          %s4756 = smul.addr %s4755, 256
          %s4757 = scalar_lea.vmem [#allocation4], %s4756
          %4758 = dma.done %s4754, 4096
        $region52: #{tpu_custom_call.1} parent=47 // pred_fallthru
          _
      $region48: #{tpu_custom_call.1} parent=5 // pred_fallthru
        _
    $region6: #{tpu_custom_call.1} parent=1 // loop_footer
      %s18 = sadd.s32 1, %s14
    $region7: #{tpu_custom_call.1} parent=1 // loop_footer_branch
      %13 = sbr.rel target = $region3
    $region8: #{tpu_custom_call.1} parent=1 // loop_exit
      _
    %4759 = vsyncpa [#allocation5], 1
    %s4760 = scalar_lea.sflag [#allocation5], 1
    %4761 = vsyncpa %s4760, 1

</llo_original>
